<compile_context>
chip_gen: v6e
topology: v6e:2x2x1
jax: 0.10.0
libtpu: 0.0.40
codegen_flags: <defaults>
</compile_context>

<pallas_src>
import jax
import jax.numpy as jnp
from jax.experimental import pallas as pl
from jax.experimental.pallas import tpu as pltpu

CHANNELS   = [64, 64, 96, 96, 128, 128, 64, 64, 64]
IN_CHS     = [1, 32, 32, 48, 48, 64, 64, 32, 32]
KSIZES     = [5, 1, 3, 1, 3, 1, 3, 1, 3]
POOL_AFTER = [True, False, True, False, True, False, False, False, True]
BN_AFTER   = [False, True, True, True, False, True, True, True, False]

_STEM_K = 32               # 5*5*1 = 25 taps, zero-padded to 32 (lane-friendly loads)
_BN_EPS = 1e-5
_VMEM_LIMIT = 32 * 1024 * 1024


# ---------------- fused kernel builder ----------------

def _build_lcnn_kernel(H0, W0):
    """Build the single fused per-image kernel + its scratch shapes (all static)."""
    assert H0 % 16 == 0 and W0 % 16 == 0, (
        "fused LCNN kernel assumes spatial dims divisible by 16 (four exact 2x2 pools)")
    # TODO(synk): odd sizes at pool boundaries (PyTorch floor-truncation) not handled.

    metas = []
    scratch_shapes = []
    sidx = {}
    h, w = H0, W0
    for i, (cin, cout, k, pool) in enumerate(zip(IN_CHS, CHANNELS, KSIZES, POOL_AFTER)):
        ca = cout // 2
        metas.append((i, k, cin, ca, h, w, pool))
        if k == 3:
            sidx[(i, "pad")] = len(scratch_shapes)
            scratch_shapes.append(pltpu.VMEM((h + 2, w + 2, cin), jnp.float32))
            sidx[(i, "patch")] = len(scratch_shapes)
            scratch_shapes.append(pltpu.VMEM((h * w, 9 * cin), jnp.bfloat16))
        if pool:
            sidx[(i, "pool")] = len(scratch_shapes)
            scratch_shapes.append(pltpu.VMEM(((h // 2) * w, ca), jnp.float32))
            h, w = h // 2, w // 2
    hf, wf, cf = h, w, CHANNELS[-1] // 2
    n = len(metas)

    def kernel(*refs):
        x_ref = refs[0]
        w_refs = refs[1:1 + n]
        b_refs = refs[1 + n:1 + 2 * n]
        o_ref = refs[1 + 2 * n]
        scratch = refs[2 + 2 * n:]

        # Stem taps arrive pre-expanded & lane-padded: (H, W, 32) -> flat rows (h, w).
        act = x_ref[...].reshape(H0 * W0, _STEM_K)
        z = act
        for (i, k, cin, ca, h, w, pool) in metas:
            if k == 3:
                # In-VMEM im2col: zero-padded halo scratch + 9 shifted slices packed
                # into a (h*w, 9*cin) patch matrix -> ONE deep MXU contraction.
                pad_ref = scratch[sidx[(i, "pad")]]
                patch_ref = scratch[sidx[(i, "patch")]]
                pad_ref[...] = jnp.zeros((h + 2, w + 2, cin), jnp.float32)
                pad_ref[1:1 + h, 1:1 + w, :] = act.reshape(h, w, cin).astype(jnp.float32)
                t = 0
                for dh in range(3):
                    for dw in range(3):
                        piece = pad_ref[dh:dh + h, dw:dw + w, :]
                        patch_ref[:, t * cin:(t + 1) * cin] = (
                            piece.reshape(h * w, cin).astype(jnp.bfloat16))
                        t += 1
                lhs = patch_ref[...]
            else:
                # 1x1 conv (and the tap-expanded 5x5 stem): plain flat matmul.
                lhs = act
            # Conv + bias with BOTH MFM halves in one merged matmul (f32 accumulation);
            # MaxFeatureMap2D = lane-half max on the (n, cout) result.
            y = (jnp.dot(lhs, w_refs[i][...], preferred_element_type=jnp.float32)
                 + b_refs[i][...])
            z = jnp.maximum(y[:, :ca], y[:, ca:])                     # (h*w, ca) f32
            if pool:
                # Fused 2x2 max-pool epilogue: H-pairs via leading-dim split,
                # W-pairs via stride-2 sublane reads of a small f32 VMEM buffer.
                pbuf = scratch[sidx[(i, "pool")]]
                ho, wo = h // 2, w // 2
                z4 = z.reshape(ho, 2, w, ca)
                pbuf[...] = jnp.maximum(z4[:, 0], z4[:, 1]).reshape(ho * w, ca)
                z = jnp.maximum(pbuf[pl.ds(0, ho * wo, 2), :],
                                pbuf[pl.ds(1, ho * wo, 2), :])        # (ho*wo, ca)
            act = z.astype(jnp.bfloat16)                              # next layer input
        o_ref[...] = z.reshape(hf, wf, cf).astype(o_ref.dtype)

    return kernel, scratch_shapes, (hf, wf, cf)


# ---------------- parameters ----------------

def make_params(key):
    # PyTorch-layout Conv2d parameters: w (Cout, Cin, k, k), b (Cout,).
    params = []
    for cin, cout, k in zip(IN_CHS, CHANNELS, KSIZES):
        key, k1, k2 = jax.random.split(key, 3)
        fan_in = cin * k * k
        w = jax.random.normal(k1, (cout, cin, k, k), jnp.float32) * (0.1 / fan_in ** 0.5)
        b = jax.random.normal(k2, (cout,), jnp.float32) * 0.01
        params.append((w, b))
    return params


def prepare_params(raw_params):
    # Merge both MFM halves into a single (k*k*cin, cout) matmul weight, fold the
    # eval-mode affine=False BatchNorm scale 1/sqrt(1+eps) (running stats 0/1) into
    # weights/bias (positive per-channel scale commutes with MFM max and max-pool),
    # cast weights to bf16 (f32 accumulation happens inside the kernel).
    # TODO(synk): trained checkpoints must fold real BN running stats here instead.
    prepped = []
    for (w, b), k, cin, bn in zip(raw_params, KSIZES, IN_CHS, BN_AFTER):
        cout = w.shape[0]
        s = (1.0 + _BN_EPS) ** -0.5 if bn else 1.0
        wm = jnp.transpose(w, (2, 3, 1, 0)).reshape(k * k * cin, cout) * s
        if k == 5:                                   # stem: pad contraction 25 -> 32
            wm = jnp.pad(wm, ((0, _STEM_K - k * k * cin), (0, 0)))
        bm = (b * s).reshape(1, cout)
        prepped.append((wm.astype(jnp.bfloat16), bm.astype(jnp.float32)))
    return prepped


# ---------------- forward ----------------

def _expand_stem_taps(x):
    # (B, H, W) -> (B, H, W, 32): the 25 taps of the zero-padded 5x5 window as
    # lane-dense channels (+7 zero lanes), so the stem becomes a flat matmul.
    B, H, W = x.shape
    xp = jnp.pad(x, ((0, 0), (2, 2), (2, 2)))
    taps = [xp[:, dh:dh + H, dw:dw + W] for dh in range(5) for dw in range(5)]
    t = jnp.stack(taps, axis=-1)
    t = jnp.pad(t, ((0, 0), (0, 0), (0, 0), (0, _STEM_K - 25)))
    return t.astype(jnp.bfloat16)


def lcnn_forward(x, params):
    # x: (B, dim, time); PyTorch unsqueezes to NCHW, we carry NHWC (lane-dense C).
    assert x.ndim == 3, f'Input size error in LCNN. Need 3, but get {x.ndim}'
    B, H, W = x.shape
    xt = _expand_stem_taps(x)

    kernel, scratch_shapes, (hf, wf, cf) = _build_lcnn_kernel(H, W)
    ws = [p[0] for p in params]
    bs = [p[1] for p in params]

    flops = 0
    h, w = H, W
    for (wm, _), pool in zip(params, POOL_AFTER):
        kk, cout = wm.shape
        flops += 2 * B * h * w * kk * cout
        if pool:
            h, w = h // 2, w // 2
    bytes_accessed = int(xt.size * 2
                         + sum(wm.size * 2 + bm.size * 4 for wm, bm in params)
                         + B * hf * wf * cf * 4)

    in_specs = [pl.BlockSpec((None, H, W, _STEM_K), lambda b: (b, 0, 0, 0))]
    in_specs += [pl.BlockSpec(wm.shape, lambda b: (0, 0)) for wm in ws]
    in_specs += [pl.BlockSpec(bm.shape, lambda b: (0, 0)) for bm in bs]

    out = pl.pallas_call(
        kernel,
        out_shape=jax.ShapeDtypeStruct((B, hf, wf, cf), jnp.float32),
        grid=(B,),
        in_specs=in_specs,
        out_specs=pl.BlockSpec((None, hf, wf, cf), lambda b: (b, 0, 0, 0)),
        scratch_shapes=scratch_shapes,
        compiler_params=pltpu.CompilerParams(
            dimension_semantics=("parallel",),
            vmem_limit_bytes=_VMEM_LIMIT),
        cost_estimate=pl.CostEstimate(flops=flops, transcendentals=0,
                                      bytes_accessed=bytes_accessed),
    )(xt, *ws, *bs)

    # Dropout(0.7): identity at inference.
    # TODO(synk): training-mode Dropout / batch-statistics BatchNorm not reproduced.
    # PyTorch: NCHW -> permute(0,2,1,3) -> (B, H', C, W') -> reshape (B, H', C*W').
    out = jnp.transpose(out, (0, 1, 3, 2))
    return out.reshape(B, hf, cf * wf)


if __name__ == "__main__":
    key = jax.random.PRNGKey(0)
    kx, kp = jax.random.split(key)
    # small spectrogram-like input: (batch=2, freq=32, time=32); 32 = 16 * 2 so the
    # four 2x2 max-pools divide evenly.
    x = jax.random.normal(kx, (2, 32, 32), jnp.float32)
    params = prepare_params(make_params(kp))

    fwd = jax.jit(lcnn_forward)
    out = jax.block_until_ready(fwd(x, params))
    # expected: H' = 32/16 = 2 frames, feature = (channels[8]//2) * (32/16) = 64
    assert out.shape == (2, 2, 64), out.shape
    assert bool(jnp.all(jnp.isfinite(out)))
    print("KERNEL_OK")
</pallas_src>

<mosaic_0001>
module attributes {stable_mosaic.version = 11 : i64} {
  func.func @kernel(%arg0: i32, %arg1: memref<1x32x32x32xbf16, #tpu.memory_space<vmem>>, %arg2: memref<32x64xbf16, #tpu.memory_space<vmem>>, %arg3: memref<32x64xbf16, #tpu.memory_space<vmem>>, %arg4: memref<288x96xbf16, #tpu.memory_space<vmem>>, %arg5: memref<48x96xbf16, #tpu.memory_space<vmem>>, %arg6: memref<432x128xbf16, #tpu.memory_space<vmem>>, %arg7: memref<64x128xbf16, #tpu.memory_space<vmem>>, %arg8: memref<576x64xbf16, #tpu.memory_space<vmem>>, %arg9: memref<32x64xbf16, #tpu.memory_space<vmem>>, %arg10: memref<288x64xbf16, #tpu.memory_space<vmem>>, %arg11: memref<1x64xf32, #tpu.memory_space<vmem>>, %arg12: memref<1x64xf32, #tpu.memory_space<vmem>>, %arg13: memref<1x96xf32, #tpu.memory_space<vmem>>, %arg14: memref<1x96xf32, #tpu.memory_space<vmem>>, %arg15: memref<1x128xf32, #tpu.memory_space<vmem>>, %arg16: memref<1x128xf32, #tpu.memory_space<vmem>>, %arg17: memref<1x64xf32, #tpu.memory_space<vmem>>, %arg18: memref<1x64xf32, #tpu.memory_space<vmem>>, %arg19: memref<1x64xf32, #tpu.memory_space<vmem>>, %arg20: memref<1x2x2x32xf32, #tpu.memory_space<vmem>>, %arg21: memref<512x32xf32, #tpu.memory_space<vmem>>, %arg22: memref<18x18x32xf32, #tpu.memory_space<vmem>>, %arg23: memref<256x288xbf16, #tpu.memory_space<vmem>>, %arg24: memref<128x48xf32, #tpu.memory_space<vmem>>, %arg25: memref<10x10x48xf32, #tpu.memory_space<vmem>>, %arg26: memref<64x432xbf16, #tpu.memory_space<vmem>>, %arg27: memref<32x64xf32, #tpu.memory_space<vmem>>, %arg28: memref<6x6x64xf32, #tpu.memory_space<vmem>>, %arg29: memref<16x576xbf16, #tpu.memory_space<vmem>>, %arg30: memref<6x6x32xf32, #tpu.memory_space<vmem>>, %arg31: memref<16x288xbf16, #tpu.memory_space<vmem>>, %arg32: memref<8x32xf32, #tpu.memory_space<vmem>>) attributes {dimension_semantics = [#tpu.dimension_semantics<parallel>], iteration_bounds = array<i64: 2>, scalar_prefetch = 0 : i64, scratch_operands = 12 : i64, tpu.core_type = #tpu.core_type<tc>, window_params = [{transform_indices = @transform_0, window_bounds = array<i64: 1, 32, 32, 32>}, {pipeline_mode = #tpu.pipeline_mode<synchronous>, transform_indices = @transform_1, window_bounds = array<i64: 32, 64>}, {pipeline_mode = #tpu.pipeline_mode<synchronous>, transform_indices = @transform_2, window_bounds = array<i64: 32, 64>}, {pipeline_mode = #tpu.pipeline_mode<synchronous>, transform_indices = @transform_3, window_bounds = array<i64: 288, 96>}, {pipeline_mode = #tpu.pipeline_mode<synchronous>, transform_indices = @transform_4, window_bounds = array<i64: 48, 96>}, {pipeline_mode = #tpu.pipeline_mode<synchronous>, transform_indices = @transform_5, window_bounds = array<i64: 432, 128>}, {pipeline_mode = #tpu.pipeline_mode<synchronous>, transform_indices = @transform_6, window_bounds = array<i64: 64, 128>}, {pipeline_mode = #tpu.pipeline_mode<synchronous>, transform_indices = @transform_7, window_bounds = array<i64: 576, 64>}, {pipeline_mode = #tpu.pipeline_mode<synchronous>, transform_indices = @transform_8, window_bounds = array<i64: 32, 64>}, {pipeline_mode = #tpu.pipeline_mode<synchronous>, transform_indices = @transform_9, window_bounds = array<i64: 288, 64>}, {pipeline_mode = #tpu.pipeline_mode<synchronous>, transform_indices = @transform_10, window_bounds = array<i64: 1, 64>}, {pipeline_mode = #tpu.pipeline_mode<synchronous>, transform_indices = @transform_11, window_bounds = array<i64: 1, 64>}, {pipeline_mode = #tpu.pipeline_mode<synchronous>, transform_indices = @transform_12, window_bounds = array<i64: 1, 96>}, {pipeline_mode = #tpu.pipeline_mode<synchronous>, transform_indices = @transform_13, window_bounds = array<i64: 1, 96>}, {pipeline_mode = #tpu.pipeline_mode<synchronous>, transform_indices = @transform_14, window_bounds = array<i64: 1, 128>}, {pipeline_mode = #tpu.pipeline_mode<synchronous>, transform_indices = @transform_15, window_bounds = array<i64: 1, 128>}, {pipeline_mode = #tpu.pipeline_mode<synchronous>, transform_indices = @transform_16, window_bounds = array<i64: 1, 64>}, {pipeline_mode = #tpu.pipeline_mode<synchronous>, transform_indices = @transform_17, window_bounds = array<i64: 1, 64>}, {pipeline_mode = #tpu.pipeline_mode<synchronous>, transform_indices = @transform_18, window_bounds = array<i64: 1, 64>}, {transform_indices = @transform_19, window_bounds = array<i64: 1, 2, 2, 32>}]} {
    %c0 = arith.constant 0 : index
    %c0_0 = arith.constant 0 : index
    %c0_1 = arith.constant 0 : index
    %c0_2 = arith.constant 0 : index
    %0 = vector.load %arg1[%c0, %c0_0, %c0_1, %c0_2] : memref<1x32x32x32xbf16, #tpu.memory_space<vmem>>, vector<1x32x32x32xbf16>
    %1 = vector.shape_cast %0 : vector<1x32x32x32xbf16> to vector<32x32x32xbf16>
    %2 = vector.shape_cast %1 : vector<32x32x32xbf16> to vector<1024x32xbf16>
    %c0_3 = arith.constant 0 : index
    %c0_4 = arith.constant 0 : index
    %3 = vector.load %arg2[%c0_3, %c0_4] : memref<32x64xbf16, #tpu.memory_space<vmem>>, vector<32x64xbf16>
    %cst = arith.constant dense<0.000000e+00> : vector<1024x64xf32>
    %4 = tpu.matmul %2, %3, %cst {dimension_numbers = #tpu.dot_dimension_numbers<[1], [0], [0], [1], [0, 0, 1, 1], [], []>} : vector<1024x32xbf16>, vector<32x64xbf16>, vector<1024x64xf32> -> vector<1024x64xf32>
    %c0_5 = arith.constant 0 : index
    %c0_6 = arith.constant 0 : index
    %5 = vector.load %arg11[%c0_5, %c0_6] : memref<1x64xf32, #tpu.memory_space<vmem>>, vector<1x64xf32>
    %6 = vector.broadcast %5 : vector<1x64xf32> to vector<1024x64xf32>
    %7 = arith.addf %4, %6 : vector<1024x64xf32>
    %8 = vector.extract_strided_slice %7 {offsets = [0, 0], sizes = [1024, 32], strides = [1, 1]} : vector<1024x64xf32> to vector<1024x32xf32>
    %9 = vector.extract_strided_slice %7 {offsets = [0, 32], sizes = [1024, 32], strides = [1, 1]} : vector<1024x64xf32> to vector<1024x32xf32>
    %10 = arith.maximumf %8, %9 : vector<1024x32xf32>
    %11 = vector.shape_cast %10 : vector<1024x32xf32> to vector<16x2x32x32xf32>
    %12 = vector.extract_strided_slice %11 {offsets = [0, 0, 0, 0], sizes = [16, 1, 32, 32], strides = [1, 1, 1, 1]} : vector<16x2x32x32xf32> to vector<16x1x32x32xf32>
    %13 = vector.shape_cast %12 : vector<16x1x32x32xf32> to vector<16x32x32xf32>
    %14 = vector.extract_strided_slice %11 {offsets = [0, 1, 0, 0], sizes = [16, 1, 32, 32], strides = [1, 1, 1, 1]} : vector<16x2x32x32xf32> to vector<16x1x32x32xf32>
    %15 = vector.shape_cast %14 : vector<16x1x32x32xf32> to vector<16x32x32xf32>
    %16 = arith.maximumf %13, %15 : vector<16x32x32xf32>
    %17 = vector.shape_cast %16 : vector<16x32x32xf32> to vector<512x32xf32>
    %c0_7 = arith.constant 0 : index
    %c0_8 = arith.constant 0 : index
    %18 = vector.load %arg21[%c0_7, %c0_8] : memref<512x32xf32, #tpu.memory_space<vmem>>, vector<512x32xf32>
    tpu.vector_store %arg21[%c0_7, %c0_8], %17 {strides = array<i32>} : memref<512x32xf32, #tpu.memory_space<vmem>>, vector<512x32xf32>,
    %c0_9 = arith.constant 0 : index
    %c0_10 = arith.constant 0 : index
    %19 = tpu.strided_load %arg21[%c0_9, %c0_10] {strides = array<i32: 2, 1>} : memref<512x32xf32, #tpu.memory_space<vmem>>, vector<256x32xf32>
    %c1 = arith.constant 1 : index
    %c0_11 = arith.constant 0 : index
    %20 = tpu.strided_load %arg21[%c1, %c0_11] {strides = array<i32: 2, 1>} : memref<512x32xf32, #tpu.memory_space<vmem>>, vector<256x32xf32>
    %21 = arith.maximumf %19, %20 : vector<256x32xf32>
    %22 = arith.truncf %21 : vector<256x32xf32> to vector<256x32xbf16>
    %c0_12 = arith.constant 0 : index
    %c0_13 = arith.constant 0 : index
    %23 = vector.load %arg3[%c0_12, %c0_13] : memref<32x64xbf16, #tpu.memory_space<vmem>>, vector<32x64xbf16>
    %cst_14 = arith.constant dense<0.000000e+00> : vector<256x64xf32>
    %24 = tpu.matmul %22, %23, %cst_14 {dimension_numbers = #tpu.dot_dimension_numbers<[1], [0], [0], [1], [0, 0, 1, 1], [], []>} : vector<256x32xbf16>, vector<32x64xbf16>, vector<256x64xf32> -> vector<256x64xf32>
    %c0_15 = arith.constant 0 : index
    %c0_16 = arith.constant 0 : index
    %25 = vector.load %arg12[%c0_15, %c0_16] : memref<1x64xf32, #tpu.memory_space<vmem>>, vector<1x64xf32>
    %26 = vector.broadcast %25 : vector<1x64xf32> to vector<256x64xf32>
    %27 = arith.addf %24, %26 : vector<256x64xf32>
    %28 = vector.extract_strided_slice %27 {offsets = [0, 0], sizes = [256, 32], strides = [1, 1]} : vector<256x64xf32> to vector<256x32xf32>
    %29 = vector.extract_strided_slice %27 {offsets = [0, 32], sizes = [256, 32], strides = [1, 1]} : vector<256x64xf32> to vector<256x32xf32>
    %30 = arith.maximumf %28, %29 : vector<256x32xf32>
    %31 = arith.truncf %30 : vector<256x32xf32> to vector<256x32xbf16>
    %cst_17 = arith.constant 0.000000e+00 : f32
    %32 = vector.broadcast %cst_17 : f32 to vector<18x18x32xf32>
    %c0_18 = arith.constant 0 : index
    %c0_19 = arith.constant 0 : index
    %c0_20 = arith.constant 0 : index
    %33 = vector.load %arg22[%c0_18, %c0_19, %c0_20] : memref<18x18x32xf32, #tpu.memory_space<vmem>>, vector<18x18x32xf32>
    tpu.vector_store %arg22[%c0_18, %c0_19, %c0_20], %32 {strides = array<i32>} : memref<18x18x32xf32, #tpu.memory_space<vmem>>, vector<18x18x32xf32>,
    %34 = vector.shape_cast %31 : vector<256x32xbf16> to vector<16x16x32xbf16>
    %35 = arith.extf %34 : vector<16x16x32xbf16> to vector<16x16x32xf32>
    %c1_21 = arith.constant 1 : index
    %c1_22 = arith.constant 1 : index
    %c0_23 = arith.constant 0 : index
    %36 = vector.load %arg22[%c1_21, %c1_22, %c0_23] : memref<18x18x32xf32, #tpu.memory_space<vmem>>, vector<16x16x32xf32>
    tpu.vector_store %arg22[%c1_21, %c1_22, %c0_23], %35 {strides = array<i32>} : memref<18x18x32xf32, #tpu.memory_space<vmem>>, vector<16x16x32xf32>,
    %c0_24 = arith.constant 0 : index
    %c0_25 = arith.constant 0 : index
    %c0_26 = arith.constant 0 : index
    %37 = vector.load %arg22[%c0_24, %c0_25, %c0_26] : memref<18x18x32xf32, #tpu.memory_space<vmem>>, vector<16x16x32xf32>
    %38 = vector.shape_cast %37 : vector<16x16x32xf32> to vector<256x32xf32>
    %39 = arith.truncf %38 : vector<256x32xf32> to vector<256x32xbf16>
    %c0_27 = arith.constant 0 : index
    %c0_28 = arith.constant 0 : index
    %40 = vector.load %arg23[%c0_27, %c0_28] : memref<256x288xbf16, #tpu.memory_space<vmem>>, vector<256x32xbf16>
    tpu.vector_store %arg23[%c0_27, %c0_28], %39 {strides = array<i32>} : memref<256x288xbf16, #tpu.memory_space<vmem>>, vector<256x32xbf16>,
    %c0_29 = arith.constant 0 : index
    %c1_30 = arith.constant 1 : index
    %c0_31 = arith.constant 0 : index
    %41 = vector.load %arg22[%c0_29, %c1_30, %c0_31] : memref<18x18x32xf32, #tpu.memory_space<vmem>>, vector<16x16x32xf32>
    %42 = vector.shape_cast %41 : vector<16x16x32xf32> to vector<256x32xf32>
    %43 = arith.truncf %42 : vector<256x32xf32> to vector<256x32xbf16>
    %c0_32 = arith.constant 0 : index
    %c32 = arith.constant 32 : index
    %44 = vector.load %arg23[%c0_32, %c32] : memref<256x288xbf16, #tpu.memory_space<vmem>>, vector<256x32xbf16>
    tpu.vector_store %arg23[%c0_32, %c32], %43 {strides = array<i32>} : memref<256x288xbf16, #tpu.memory_space<vmem>>, vector<256x32xbf16>,
    %c0_33 = arith.constant 0 : index
    %c2 = arith.constant 2 : index
    %c0_34 = arith.constant 0 : index
    %45 = vector.load %arg22[%c0_33, %c2, %c0_34] : memref<18x18x32xf32, #tpu.memory_space<vmem>>, vector<16x16x32xf32>
    %46 = vector.shape_cast %45 : vector<16x16x32xf32> to vector<256x32xf32>
    %47 = arith.truncf %46 : vector<256x32xf32> to vector<256x32xbf16>
    %c0_35 = arith.constant 0 : index
    %c64 = arith.constant 64 : index
    %48 = vector.load %arg23[%c0_35, %c64] : memref<256x288xbf16, #tpu.memory_space<vmem>>, vector<256x32xbf16>
    tpu.vector_store %arg23[%c0_35, %c64], %47 {strides = array<i32>} : memref<256x288xbf16, #tpu.memory_space<vmem>>, vector<256x32xbf16>,
    %c1_36 = arith.constant 1 : index
    %c0_37 = arith.constant 0 : index
    %c0_38 = arith.constant 0 : index
    %49 = vector.load %arg22[%c1_36, %c0_37, %c0_38] : memref<18x18x32xf32, #tpu.memory_space<vmem>>, vector<16x16x32xf32>
    %50 = vector.shape_cast %49 : vector<16x16x32xf32> to vector<256x32xf32>
    %51 = arith.truncf %50 : vector<256x32xf32> to vector<256x32xbf16>
    %c0_39 = arith.constant 0 : index
    %c96 = arith.constant 96 : index
    %52 = vector.load %arg23[%c0_39, %c96] : memref<256x288xbf16, #tpu.memory_space<vmem>>, vector<256x32xbf16>
    tpu.vector_store %arg23[%c0_39, %c96], %51 {strides = array<i32>} : memref<256x288xbf16, #tpu.memory_space<vmem>>, vector<256x32xbf16>,
    %c1_40 = arith.constant 1 : index
    %c1_41 = arith.constant 1 : index
    %c0_42 = arith.constant 0 : index
    %53 = vector.load %arg22[%c1_40, %c1_41, %c0_42] : memref<18x18x32xf32, #tpu.memory_space<vmem>>, vector<16x16x32xf32>
    %54 = vector.shape_cast %53 : vector<16x16x32xf32> to vector<256x32xf32>
    %55 = arith.truncf %54 : vector<256x32xf32> to vector<256x32xbf16>
    %c0_43 = arith.constant 0 : index
    %c128 = arith.constant 128 : index
    %56 = vector.load %arg23[%c0_43, %c128] : memref<256x288xbf16, #tpu.memory_space<vmem>>, vector<256x32xbf16>
    tpu.vector_store %arg23[%c0_43, %c128], %55 {strides = array<i32>} : memref<256x288xbf16, #tpu.memory_space<vmem>>, vector<256x32xbf16>,
    %c1_44 = arith.constant 1 : index
    %c2_45 = arith.constant 2 : index
    %c0_46 = arith.constant 0 : index
    %57 = vector.load %arg22[%c1_44, %c2_45, %c0_46] : memref<18x18x32xf32, #tpu.memory_space<vmem>>, vector<16x16x32xf32>
    %58 = vector.shape_cast %57 : vector<16x16x32xf32> to vector<256x32xf32>
    %59 = arith.truncf %58 : vector<256x32xf32> to vector<256x32xbf16>
    %c0_47 = arith.constant 0 : index
    %c160 = arith.constant 160 : index
    %60 = vector.load %arg23[%c0_47, %c160] : memref<256x288xbf16, #tpu.memory_space<vmem>>, vector<256x32xbf16>
    tpu.vector_store %arg23[%c0_47, %c160], %59 {strides = array<i32>} : memref<256x288xbf16, #tpu.memory_space<vmem>>, vector<256x32xbf16>,
    %c2_48 = arith.constant 2 : index
    %c0_49 = arith.constant 0 : index
    %c0_50 = arith.constant 0 : index
    %61 = vector.load %arg22[%c2_48, %c0_49, %c0_50] : memref<18x18x32xf32, #tpu.memory_space<vmem>>, vector<16x16x32xf32>
    %62 = vector.shape_cast %61 : vector<16x16x32xf32> to vector<256x32xf32>
    %63 = arith.truncf %62 : vector<256x32xf32> to vector<256x32xbf16>
    %c0_51 = arith.constant 0 : index
    %c192 = arith.constant 192 : index
    %64 = vector.load %arg23[%c0_51, %c192] : memref<256x288xbf16, #tpu.memory_space<vmem>>, vector<256x32xbf16>
    tpu.vector_store %arg23[%c0_51, %c192], %63 {strides = array<i32>} : memref<256x288xbf16, #tpu.memory_space<vmem>>, vector<256x32xbf16>,
    %c2_52 = arith.constant 2 : index
    %c1_53 = arith.constant 1 : index
    %c0_54 = arith.constant 0 : index
    %65 = vector.load %arg22[%c2_52, %c1_53, %c0_54] : memref<18x18x32xf32, #tpu.memory_space<vmem>>, vector<16x16x32xf32>
    %66 = vector.shape_cast %65 : vector<16x16x32xf32> to vector<256x32xf32>
    %67 = arith.truncf %66 : vector<256x32xf32> to vector<256x32xbf16>
    %c0_55 = arith.constant 0 : index
    %c224 = arith.constant 224 : index
    %68 = vector.load %arg23[%c0_55, %c224] : memref<256x288xbf16, #tpu.memory_space<vmem>>, vector<256x32xbf16>
    tpu.vector_store %arg23[%c0_55, %c224], %67 {strides = array<i32>} : memref<256x288xbf16, #tpu.memory_space<vmem>>, vector<256x32xbf16>,
    %c2_56 = arith.constant 2 : index
    %c2_57 = arith.constant 2 : index
    %c0_58 = arith.constant 0 : index
    %69 = vector.load %arg22[%c2_56, %c2_57, %c0_58] : memref<18x18x32xf32, #tpu.memory_space<vmem>>, vector<16x16x32xf32>
    %70 = vector.shape_cast %69 : vector<16x16x32xf32> to vector<256x32xf32>
    %71 = arith.truncf %70 : vector<256x32xf32> to vector<256x32xbf16>
    %c0_59 = arith.constant 0 : index
    %c256 = arith.constant 256 : index
    %72 = vector.load %arg23[%c0_59, %c256] : memref<256x288xbf16, #tpu.memory_space<vmem>>, vector<256x32xbf16>
    tpu.vector_store %arg23[%c0_59, %c256], %71 {strides = array<i32>} : memref<256x288xbf16, #tpu.memory_space<vmem>>, vector<256x32xbf16>,
    %c0_60 = arith.constant 0 : index
    %c0_61 = arith.constant 0 : index
    %73 = vector.load %arg23[%c0_60, %c0_61] : memref<256x288xbf16, #tpu.memory_space<vmem>>, vector<256x288xbf16>
    %c0_62 = arith.constant 0 : index
    %c0_63 = arith.constant 0 : index
    %74 = vector.load %arg4[%c0_62, %c0_63] : memref<288x96xbf16, #tpu.memory_space<vmem>>, vector<288x96xbf16>
    %cst_64 = arith.constant dense<0.000000e+00> : vector<256x96xf32>
    %75 = tpu.matmul %73, %74, %cst_64 {dimension_numbers = #tpu.dot_dimension_numbers<[1], [0], [0], [1], [0, 0, 1, 1], [], []>} : vector<256x288xbf16>, vector<288x96xbf16>, vector<256x96xf32> -> vector<256x96xf32>
    %c0_65 = arith.constant 0 : index
    %c0_66 = arith.constant 0 : index
    %76 = vector.load %arg13[%c0_65, %c0_66] : memref<1x96xf32, #tpu.memory_space<vmem>>, vector<1x96xf32>
    %77 = vector.broadcast %76 : vector<1x96xf32> to vector<256x96xf32>
    %78 = arith.addf %75, %77 : vector<256x96xf32>
    %79 = vector.extract_strided_slice %78 {offsets = [0, 0], sizes = [256, 48], strides = [1, 1]} : vector<256x96xf32> to vector<256x48xf32>
    %80 = vector.extract_strided_slice %78 {offsets = [0, 48], sizes = [256, 48], strides = [1, 1]} : vector<256x96xf32> to vector<256x48xf32>
    %81 = arith.maximumf %79, %80 : vector<256x48xf32>
    %82 = vector.shape_cast %81 : vector<256x48xf32> to vector<8x2x16x48xf32>
    %83 = vector.extract_strided_slice %82 {offsets = [0, 0, 0, 0], sizes = [8, 1, 16, 48], strides = [1, 1, 1, 1]} : vector<8x2x16x48xf32> to vector<8x1x16x48xf32>
    %84 = vector.shape_cast %83 : vector<8x1x16x48xf32> to vector<8x16x48xf32>
    %85 = vector.extract_strided_slice %82 {offsets = [0, 1, 0, 0], sizes = [8, 1, 16, 48], strides = [1, 1, 1, 1]} : vector<8x2x16x48xf32> to vector<8x1x16x48xf32>
    %86 = vector.shape_cast %85 : vector<8x1x16x48xf32> to vector<8x16x48xf32>
    %87 = arith.maximumf %84, %86 : vector<8x16x48xf32>
    %88 = vector.shape_cast %87 : vector<8x16x48xf32> to vector<128x48xf32>
    %c0_67 = arith.constant 0 : index
    %c0_68 = arith.constant 0 : index
    %89 = vector.load %arg24[%c0_67, %c0_68] : memref<128x48xf32, #tpu.memory_space<vmem>>, vector<128x48xf32>
    tpu.vector_store %arg24[%c0_67, %c0_68], %88 {strides = array<i32>} : memref<128x48xf32, #tpu.memory_space<vmem>>, vector<128x48xf32>,
    %c0_69 = arith.constant 0 : index
    %c0_70 = arith.constant 0 : index
    %90 = tpu.strided_load %arg24[%c0_69, %c0_70] {strides = array<i32: 2, 1>} : memref<128x48xf32, #tpu.memory_space<vmem>>, vector<64x48xf32>
    %c1_71 = arith.constant 1 : index
    %c0_72 = arith.constant 0 : index
    %91 = tpu.strided_load %arg24[%c1_71, %c0_72] {strides = array<i32: 2, 1>} : memref<128x48xf32, #tpu.memory_space<vmem>>, vector<64x48xf32>
    %92 = arith.maximumf %90, %91 : vector<64x48xf32>
    %93 = arith.truncf %92 : vector<64x48xf32> to vector<64x48xbf16>
    %c0_73 = arith.constant 0 : index
    %c0_74 = arith.constant 0 : index
    %94 = vector.load %arg5[%c0_73, %c0_74] : memref<48x96xbf16, #tpu.memory_space<vmem>>, vector<48x96xbf16>
    %cst_75 = arith.constant dense<0.000000e+00> : vector<64x96xf32>
    %95 = tpu.matmul %93, %94, %cst_75 {dimension_numbers = #tpu.dot_dimension_numbers<[1], [0], [0], [1], [0, 0, 1, 1], [], []>} : vector<64x48xbf16>, vector<48x96xbf16>, vector<64x96xf32> -> vector<64x96xf32>
    %c0_76 = arith.constant 0 : index
    %c0_77 = arith.constant 0 : index
    %96 = vector.load %arg14[%c0_76, %c0_77] : memref<1x96xf32, #tpu.memory_space<vmem>>, vector<1x96xf32>
    %97 = vector.broadcast %96 : vector<1x96xf32> to vector<64x96xf32>
    %98 = arith.addf %95, %97 : vector<64x96xf32>
    %99 = vector.extract_strided_slice %98 {offsets = [0, 0], sizes = [64, 48], strides = [1, 1]} : vector<64x96xf32> to vector<64x48xf32>
    %100 = vector.extract_strided_slice %98 {offsets = [0, 48], sizes = [64, 48], strides = [1, 1]} : vector<64x96xf32> to vector<64x48xf32>
    %101 = arith.maximumf %99, %100 : vector<64x48xf32>
    %102 = arith.truncf %101 : vector<64x48xf32> to vector<64x48xbf16>
    %cst_78 = arith.constant 0.000000e+00 : f32
    %103 = vector.broadcast %cst_78 : f32 to vector<10x10x48xf32>
    %c0_79 = arith.constant 0 : index
    %c0_80 = arith.constant 0 : index
    %c0_81 = arith.constant 0 : index
    %104 = vector.load %arg25[%c0_79, %c0_80, %c0_81] : memref<10x10x48xf32, #tpu.memory_space<vmem>>, vector<10x10x48xf32>
    tpu.vector_store %arg25[%c0_79, %c0_80, %c0_81], %103 {strides = array<i32>} : memref<10x10x48xf32, #tpu.memory_space<vmem>>, vector<10x10x48xf32>,
    %105 = vector.shape_cast %102 : vector<64x48xbf16> to vector<8x8x48xbf16>
    %106 = arith.extf %105 : vector<8x8x48xbf16> to vector<8x8x48xf32>
    %c1_82 = arith.constant 1 : index
    %c1_83 = arith.constant 1 : index
    %c0_84 = arith.constant 0 : index
    %107 = vector.load %arg25[%c1_82, %c1_83, %c0_84] : memref<10x10x48xf32, #tpu.memory_space<vmem>>, vector<8x8x48xf32>
    tpu.vector_store %arg25[%c1_82, %c1_83, %c0_84], %106 {strides = array<i32>} : memref<10x10x48xf32, #tpu.memory_space<vmem>>, vector<8x8x48xf32>,
    %c0_85 = arith.constant 0 : index
    %c0_86 = arith.constant 0 : index
    %c0_87 = arith.constant 0 : index
    %108 = vector.load %arg25[%c0_85, %c0_86, %c0_87] : memref<10x10x48xf32, #tpu.memory_space<vmem>>, vector<8x8x48xf32>
    %109 = vector.shape_cast %108 : vector<8x8x48xf32> to vector<64x48xf32>
    %110 = arith.truncf %109 : vector<64x48xf32> to vector<64x48xbf16>
    %c0_88 = arith.constant 0 : index
    %c0_89 = arith.constant 0 : index
    %111 = vector.load %arg26[%c0_88, %c0_89] : memref<64x432xbf16, #tpu.memory_space<vmem>>, vector<64x48xbf16>
    tpu.vector_store %arg26[%c0_88, %c0_89], %110 {strides = array<i32>} : memref<64x432xbf16, #tpu.memory_space<vmem>>, vector<64x48xbf16>,
    %c0_90 = arith.constant 0 : index
    %c1_91 = arith.constant 1 : index
    %c0_92 = arith.constant 0 : index
    %112 = vector.load %arg25[%c0_90, %c1_91, %c0_92] : memref<10x10x48xf32, #tpu.memory_space<vmem>>, vector<8x8x48xf32>
    %113 = vector.shape_cast %112 : vector<8x8x48xf32> to vector<64x48xf32>
    %114 = arith.truncf %113 : vector<64x48xf32> to vector<64x48xbf16>
    %c0_93 = arith.constant 0 : index
    %c48 = arith.constant 48 : index
    %115 = vector.load %arg26[%c0_93, %c48] : memref<64x432xbf16, #tpu.memory_space<vmem>>, vector<64x48xbf16>
    tpu.vector_store %arg26[%c0_93, %c48], %114 {strides = array<i32>} : memref<64x432xbf16, #tpu.memory_space<vmem>>, vector<64x48xbf16>,
    %c0_94 = arith.constant 0 : index
    %c2_95 = arith.constant 2 : index
    %c0_96 = arith.constant 0 : index
    %116 = vector.load %arg25[%c0_94, %c2_95, %c0_96] : memref<10x10x48xf32, #tpu.memory_space<vmem>>, vector<8x8x48xf32>
    %117 = vector.shape_cast %116 : vector<8x8x48xf32> to vector<64x48xf32>
    %118 = arith.truncf %117 : vector<64x48xf32> to vector<64x48xbf16>
    %c0_97 = arith.constant 0 : index
    %c96_98 = arith.constant 96 : index
    %119 = vector.load %arg26[%c0_97, %c96_98] : memref<64x432xbf16, #tpu.memory_space<vmem>>, vector<64x48xbf16>
    tpu.vector_store %arg26[%c0_97, %c96_98], %118 {strides = array<i32>} : memref<64x432xbf16, #tpu.memory_space<vmem>>, vector<64x48xbf16>,
    %c1_99 = arith.constant 1 : index
    %c0_100 = arith.constant 0 : index
    %c0_101 = arith.constant 0 : index
    %120 = vector.load %arg25[%c1_99, %c0_100, %c0_101] : memref<10x10x48xf32, #tpu.memory_space<vmem>>, vector<8x8x48xf32>
    %121 = vector.shape_cast %120 : vector<8x8x48xf32> to vector<64x48xf32>
    %122 = arith.truncf %121 : vector<64x48xf32> to vector<64x48xbf16>
    %c0_102 = arith.constant 0 : index
    %c144 = arith.constant 144 : index
    %123 = vector.load %arg26[%c0_102, %c144] : memref<64x432xbf16, #tpu.memory_space<vmem>>, vector<64x48xbf16>
    tpu.vector_store %arg26[%c0_102, %c144], %122 {strides = array<i32>} : memref<64x432xbf16, #tpu.memory_space<vmem>>, vector<64x48xbf16>,
    %c1_103 = arith.constant 1 : index
    %c1_104 = arith.constant 1 : index
    %c0_105 = arith.constant 0 : index
    %124 = vector.load %arg25[%c1_103, %c1_104, %c0_105] : memref<10x10x48xf32, #tpu.memory_space<vmem>>, vector<8x8x48xf32>
    %125 = vector.shape_cast %124 : vector<8x8x48xf32> to vector<64x48xf32>
    %126 = arith.truncf %125 : vector<64x48xf32> to vector<64x48xbf16>
    %c0_106 = arith.constant 0 : index
    %c192_107 = arith.constant 192 : index
    %127 = vector.load %arg26[%c0_106, %c192_107] : memref<64x432xbf16, #tpu.memory_space<vmem>>, vector<64x48xbf16>
    tpu.vector_store %arg26[%c0_106, %c192_107], %126 {strides = array<i32>} : memref<64x432xbf16, #tpu.memory_space<vmem>>, vector<64x48xbf16>,
    %c1_108 = arith.constant 1 : index
    %c2_109 = arith.constant 2 : index
    %c0_110 = arith.constant 0 : index
    %128 = vector.load %arg25[%c1_108, %c2_109, %c0_110] : memref<10x10x48xf32, #tpu.memory_space<vmem>>, vector<8x8x48xf32>
    %129 = vector.shape_cast %128 : vector<8x8x48xf32> to vector<64x48xf32>
    %130 = arith.truncf %129 : vector<64x48xf32> to vector<64x48xbf16>
    %c0_111 = arith.constant 0 : index
    %c240 = arith.constant 240 : index
    %131 = vector.load %arg26[%c0_111, %c240] : memref<64x432xbf16, #tpu.memory_space<vmem>>, vector<64x48xbf16>
    tpu.vector_store %arg26[%c0_111, %c240], %130 {strides = array<i32>} : memref<64x432xbf16, #tpu.memory_space<vmem>>, vector<64x48xbf16>,
    %c2_112 = arith.constant 2 : index
    %c0_113 = arith.constant 0 : index
    %c0_114 = arith.constant 0 : index
    %132 = vector.load %arg25[%c2_112, %c0_113, %c0_114] : memref<10x10x48xf32, #tpu.memory_space<vmem>>, vector<8x8x48xf32>
    %133 = vector.shape_cast %132 : vector<8x8x48xf32> to vector<64x48xf32>
    %134 = arith.truncf %133 : vector<64x48xf32> to vector<64x48xbf16>
    %c0_115 = arith.constant 0 : index
    %c288 = arith.constant 288 : index
    %135 = vector.load %arg26[%c0_115, %c288] : memref<64x432xbf16, #tpu.memory_space<vmem>>, vector<64x48xbf16>
    tpu.vector_store %arg26[%c0_115, %c288], %134 {strides = array<i32>} : memref<64x432xbf16, #tpu.memory_space<vmem>>, vector<64x48xbf16>,
    %c2_116 = arith.constant 2 : index
    %c1_117 = arith.constant 1 : index
    %c0_118 = arith.constant 0 : index
    %136 = vector.load %arg25[%c2_116, %c1_117, %c0_118] : memref<10x10x48xf32, #tpu.memory_space<vmem>>, vector<8x8x48xf32>
    %137 = vector.shape_cast %136 : vector<8x8x48xf32> to vector<64x48xf32>
    %138 = arith.truncf %137 : vector<64x48xf32> to vector<64x48xbf16>
    %c0_119 = arith.constant 0 : index
    %c336 = arith.constant 336 : index
    %139 = vector.load %arg26[%c0_119, %c336] : memref<64x432xbf16, #tpu.memory_space<vmem>>, vector<64x48xbf16>
    tpu.vector_store %arg26[%c0_119, %c336], %138 {strides = array<i32>} : memref<64x432xbf16, #tpu.memory_space<vmem>>, vector<64x48xbf16>,
    %c2_120 = arith.constant 2 : index
    %c2_121 = arith.constant 2 : index
    %c0_122 = arith.constant 0 : index
    %140 = vector.load %arg25[%c2_120, %c2_121, %c0_122] : memref<10x10x48xf32, #tpu.memory_space<vmem>>, vector<8x8x48xf32>
    %141 = vector.shape_cast %140 : vector<8x8x48xf32> to vector<64x48xf32>
    %142 = arith.truncf %141 : vector<64x48xf32> to vector<64x48xbf16>
    %c0_123 = arith.constant 0 : index
    %c384 = arith.constant 384 : index
    %143 = vector.load %arg26[%c0_123, %c384] : memref<64x432xbf16, #tpu.memory_space<vmem>>, vector<64x48xbf16>
    tpu.vector_store %arg26[%c0_123, %c384], %142 {strides = array<i32>} : memref<64x432xbf16, #tpu.memory_space<vmem>>, vector<64x48xbf16>,
    %c0_124 = arith.constant 0 : index
    %c0_125 = arith.constant 0 : index
    %144 = vector.load %arg26[%c0_124, %c0_125] : memref<64x432xbf16, #tpu.memory_space<vmem>>, vector<64x432xbf16>
    %c0_126 = arith.constant 0 : index
    %c0_127 = arith.constant 0 : index
    %145 = vector.load %arg6[%c0_126, %c0_127] : memref<432x128xbf16, #tpu.memory_space<vmem>>, vector<432x128xbf16>
    %cst_128 = arith.constant dense<0.000000e+00> : vector<64x128xf32>
    %146 = tpu.matmul %144, %145, %cst_128 {dimension_numbers = #tpu.dot_dimension_numbers<[1], [0], [0], [1], [0, 0, 1, 1], [], []>} : vector<64x432xbf16>, vector<432x128xbf16>, vector<64x128xf32> -> vector<64x128xf32>
    %c0_129 = arith.constant 0 : index
    %c0_130 = arith.constant 0 : index
    %147 = vector.load %arg15[%c0_129, %c0_130] : memref<1x128xf32, #tpu.memory_space<vmem>>, vector<1x128xf32>
    %148 = vector.broadcast %147 : vector<1x128xf32> to vector<64x128xf32>
    %149 = arith.addf %146, %148 : vector<64x128xf32>
    %150 = vector.extract_strided_slice %149 {offsets = [0, 0], sizes = [64, 64], strides = [1, 1]} : vector<64x128xf32> to vector<64x64xf32>
    %151 = vector.extract_strided_slice %149 {offsets = [0, 64], sizes = [64, 64], strides = [1, 1]} : vector<64x128xf32> to vector<64x64xf32>
    %152 = arith.maximumf %150, %151 : vector<64x64xf32>
    %153 = vector.shape_cast %152 : vector<64x64xf32> to vector<4x2x8x64xf32>
    %154 = vector.extract_strided_slice %153 {offsets = [0, 0, 0, 0], sizes = [4, 1, 8, 64], strides = [1, 1, 1, 1]} : vector<4x2x8x64xf32> to vector<4x1x8x64xf32>
    %155 = vector.shape_cast %154 : vector<4x1x8x64xf32> to vector<4x8x64xf32>
    %156 = vector.extract_strided_slice %153 {offsets = [0, 1, 0, 0], sizes = [4, 1, 8, 64], strides = [1, 1, 1, 1]} : vector<4x2x8x64xf32> to vector<4x1x8x64xf32>
    %157 = vector.shape_cast %156 : vector<4x1x8x64xf32> to vector<4x8x64xf32>
    %158 = arith.maximumf %155, %157 : vector<4x8x64xf32>
    %159 = vector.shape_cast %158 : vector<4x8x64xf32> to vector<32x64xf32>
    %c0_131 = arith.constant 0 : index
    %c0_132 = arith.constant 0 : index
    %160 = vector.load %arg27[%c0_131, %c0_132] : memref<32x64xf32, #tpu.memory_space<vmem>>, vector<32x64xf32>
    tpu.vector_store %arg27[%c0_131, %c0_132], %159 {strides = array<i32>} : memref<32x64xf32, #tpu.memory_space<vmem>>, vector<32x64xf32>,
    %c0_133 = arith.constant 0 : index
    %c0_134 = arith.constant 0 : index
    %161 = tpu.strided_load %arg27[%c0_133, %c0_134] {strides = array<i32: 2, 1>} : memref<32x64xf32, #tpu.memory_space<vmem>>, vector<16x64xf32>
    %c1_135 = arith.constant 1 : index
    %c0_136 = arith.constant 0 : index
    %162 = tpu.strided_load %arg27[%c1_135, %c0_136] {strides = array<i32: 2, 1>} : memref<32x64xf32, #tpu.memory_space<vmem>>, vector<16x64xf32>
    %163 = arith.maximumf %161, %162 : vector<16x64xf32>
    %164 = arith.truncf %163 : vector<16x64xf32> to vector<16x64xbf16>
    %c0_137 = arith.constant 0 : index
    %c0_138 = arith.constant 0 : index
    %165 = vector.load %arg7[%c0_137, %c0_138] : memref<64x128xbf16, #tpu.memory_space<vmem>>, vector<64x128xbf16>
    %cst_139 = arith.constant dense<0.000000e+00> : vector<16x128xf32>
    %166 = tpu.matmul %164, %165, %cst_139 {dimension_numbers = #tpu.dot_dimension_numbers<[1], [0], [0], [1], [0, 0, 1, 1], [], []>} : vector<16x64xbf16>, vector<64x128xbf16>, vector<16x128xf32> -> vector<16x128xf32>
    %c0_140 = arith.constant 0 : index
    %c0_141 = arith.constant 0 : index
    %167 = vector.load %arg16[%c0_140, %c0_141] : memref<1x128xf32, #tpu.memory_space<vmem>>, vector<1x128xf32>
    %168 = vector.broadcast %167 : vector<1x128xf32> to vector<16x128xf32>
    %169 = arith.addf %166, %168 : vector<16x128xf32>
    %170 = vector.extract_strided_slice %169 {offsets = [0, 0], sizes = [16, 64], strides = [1, 1]} : vector<16x128xf32> to vector<16x64xf32>
    %171 = vector.extract_strided_slice %169 {offsets = [0, 64], sizes = [16, 64], strides = [1, 1]} : vector<16x128xf32> to vector<16x64xf32>
    %172 = arith.maximumf %170, %171 : vector<16x64xf32>
    %173 = arith.truncf %172 : vector<16x64xf32> to vector<16x64xbf16>
    %cst_142 = arith.constant 0.000000e+00 : f32
    %174 = vector.broadcast %cst_142 : f32 to vector<6x6x64xf32>
    %c0_143 = arith.constant 0 : index
    %c0_144 = arith.constant 0 : index
    %c0_145 = arith.constant 0 : index
    %175 = vector.load %arg28[%c0_143, %c0_144, %c0_145] : memref<6x6x64xf32, #tpu.memory_space<vmem>>, vector<6x6x64xf32>
    tpu.vector_store %arg28[%c0_143, %c0_144, %c0_145], %174 {strides = array<i32>} : memref<6x6x64xf32, #tpu.memory_space<vmem>>, vector<6x6x64xf32>,
    %176 = vector.shape_cast %173 : vector<16x64xbf16> to vector<4x4x64xbf16>
    %177 = arith.extf %176 : vector<4x4x64xbf16> to vector<4x4x64xf32>
    %c1_146 = arith.constant 1 : index
    %c1_147 = arith.constant 1 : index
    %c0_148 = arith.constant 0 : index
    %178 = vector.load %arg28[%c1_146, %c1_147, %c0_148] : memref<6x6x64xf32, #tpu.memory_space<vmem>>, vector<4x4x64xf32>
    tpu.vector_store %arg28[%c1_146, %c1_147, %c0_148], %177 {strides = array<i32>} : memref<6x6x64xf32, #tpu.memory_space<vmem>>, vector<4x4x64xf32>,
    %c0_149 = arith.constant 0 : index
    %c0_150 = arith.constant 0 : index
    %c0_151 = arith.constant 0 : index
    %179 = vector.load %arg28[%c0_149, %c0_150, %c0_151] : memref<6x6x64xf32, #tpu.memory_space<vmem>>, vector<4x4x64xf32>
    %180 = vector.shape_cast %179 : vector<4x4x64xf32> to vector<16x64xf32>
    %181 = arith.truncf %180 : vector<16x64xf32> to vector<16x64xbf16>
    %c0_152 = arith.constant 0 : index
    %c0_153 = arith.constant 0 : index
    %182 = vector.load %arg29[%c0_152, %c0_153] : memref<16x576xbf16, #tpu.memory_space<vmem>>, vector<16x64xbf16>
    tpu.vector_store %arg29[%c0_152, %c0_153], %181 {strides = array<i32>} : memref<16x576xbf16, #tpu.memory_space<vmem>>, vector<16x64xbf16>,
    %c0_154 = arith.constant 0 : index
    %c1_155 = arith.constant 1 : index
    %c0_156 = arith.constant 0 : index
    %183 = vector.load %arg28[%c0_154, %c1_155, %c0_156] : memref<6x6x64xf32, #tpu.memory_space<vmem>>, vector<4x4x64xf32>
    %184 = vector.shape_cast %183 : vector<4x4x64xf32> to vector<16x64xf32>
    %185 = arith.truncf %184 : vector<16x64xf32> to vector<16x64xbf16>
    %c0_157 = arith.constant 0 : index
    %c64_158 = arith.constant 64 : index
    %186 = vector.load %arg29[%c0_157, %c64_158] : memref<16x576xbf16, #tpu.memory_space<vmem>>, vector<16x64xbf16>
    tpu.vector_store %arg29[%c0_157, %c64_158], %185 {strides = array<i32>} : memref<16x576xbf16, #tpu.memory_space<vmem>>, vector<16x64xbf16>,
    %c0_159 = arith.constant 0 : index
    %c2_160 = arith.constant 2 : index
    %c0_161 = arith.constant 0 : index
    %187 = vector.load %arg28[%c0_159, %c2_160, %c0_161] : memref<6x6x64xf32, #tpu.memory_space<vmem>>, vector<4x4x64xf32>
    %188 = vector.shape_cast %187 : vector<4x4x64xf32> to vector<16x64xf32>
    %189 = arith.truncf %188 : vector<16x64xf32> to vector<16x64xbf16>
    %c0_162 = arith.constant 0 : index
    %c128_163 = arith.constant 128 : index
    %190 = vector.load %arg29[%c0_162, %c128_163] : memref<16x576xbf16, #tpu.memory_space<vmem>>, vector<16x64xbf16>
    tpu.vector_store %arg29[%c0_162, %c128_163], %189 {strides = array<i32>} : memref<16x576xbf16, #tpu.memory_space<vmem>>, vector<16x64xbf16>,
    %c1_164 = arith.constant 1 : index
    %c0_165 = arith.constant 0 : index
    %c0_166 = arith.constant 0 : index
    %191 = vector.load %arg28[%c1_164, %c0_165, %c0_166] : memref<6x6x64xf32, #tpu.memory_space<vmem>>, vector<4x4x64xf32>
    %192 = vector.shape_cast %191 : vector<4x4x64xf32> to vector<16x64xf32>
    %193 = arith.truncf %192 : vector<16x64xf32> to vector<16x64xbf16>
    %c0_167 = arith.constant 0 : index
    %c192_168 = arith.constant 192 : index
    %194 = vector.load %arg29[%c0_167, %c192_168] : memref<16x576xbf16, #tpu.memory_space<vmem>>, vector<16x64xbf16>
    tpu.vector_store %arg29[%c0_167, %c192_168], %193 {strides = array<i32>} : memref<16x576xbf16, #tpu.memory_space<vmem>>, vector<16x64xbf16>,
    %c1_169 = arith.constant 1 : index
    %c1_170 = arith.constant 1 : index
    %c0_171 = arith.constant 0 : index
    %195 = vector.load %arg28[%c1_169, %c1_170, %c0_171] : memref<6x6x64xf32, #tpu.memory_space<vmem>>, vector<4x4x64xf32>
    %196 = vector.shape_cast %195 : vector<4x4x64xf32> to vector<16x64xf32>
    %197 = arith.truncf %196 : vector<16x64xf32> to vector<16x64xbf16>
    %c0_172 = arith.constant 0 : index
    %c256_173 = arith.constant 256 : index
    %198 = vector.load %arg29[%c0_172, %c256_173] : memref<16x576xbf16, #tpu.memory_space<vmem>>, vector<16x64xbf16>
    tpu.vector_store %arg29[%c0_172, %c256_173], %197 {strides = array<i32>} : memref<16x576xbf16, #tpu.memory_space<vmem>>, vector<16x64xbf16>,
    %c1_174 = arith.constant 1 : index
    %c2_175 = arith.constant 2 : index
    %c0_176 = arith.constant 0 : index
    %199 = vector.load %arg28[%c1_174, %c2_175, %c0_176] : memref<6x6x64xf32, #tpu.memory_space<vmem>>, vector<4x4x64xf32>
    %200 = vector.shape_cast %199 : vector<4x4x64xf32> to vector<16x64xf32>
    %201 = arith.truncf %200 : vector<16x64xf32> to vector<16x64xbf16>
    %c0_177 = arith.constant 0 : index
    %c320 = arith.constant 320 : index
    %202 = vector.load %arg29[%c0_177, %c320] : memref<16x576xbf16, #tpu.memory_space<vmem>>, vector<16x64xbf16>
    tpu.vector_store %arg29[%c0_177, %c320], %201 {strides = array<i32>} : memref<16x576xbf16, #tpu.memory_space<vmem>>, vector<16x64xbf16>,
    %c2_178 = arith.constant 2 : index
    %c0_179 = arith.constant 0 : index
    %c0_180 = arith.constant 0 : index
    %203 = vector.load %arg28[%c2_178, %c0_179, %c0_180] : memref<6x6x64xf32, #tpu.memory_space<vmem>>, vector<4x4x64xf32>
    %204 = vector.shape_cast %203 : vector<4x4x64xf32> to vector<16x64xf32>
    %205 = arith.truncf %204 : vector<16x64xf32> to vector<16x64xbf16>
    %c0_181 = arith.constant 0 : index
    %c384_182 = arith.constant 384 : index
    %206 = vector.load %arg29[%c0_181, %c384_182] : memref<16x576xbf16, #tpu.memory_space<vmem>>, vector<16x64xbf16>
    tpu.vector_store %arg29[%c0_181, %c384_182], %205 {strides = array<i32>} : memref<16x576xbf16, #tpu.memory_space<vmem>>, vector<16x64xbf16>,
    %c2_183 = arith.constant 2 : index
    %c1_184 = arith.constant 1 : index
    %c0_185 = arith.constant 0 : index
    %207 = vector.load %arg28[%c2_183, %c1_184, %c0_185] : memref<6x6x64xf32, #tpu.memory_space<vmem>>, vector<4x4x64xf32>
    %208 = vector.shape_cast %207 : vector<4x4x64xf32> to vector<16x64xf32>
    %209 = arith.truncf %208 : vector<16x64xf32> to vector<16x64xbf16>
    %c0_186 = arith.constant 0 : index
    %c448 = arith.constant 448 : index
    %210 = vector.load %arg29[%c0_186, %c448] : memref<16x576xbf16, #tpu.memory_space<vmem>>, vector<16x64xbf16>
    tpu.vector_store %arg29[%c0_186, %c448], %209 {strides = array<i32>} : memref<16x576xbf16, #tpu.memory_space<vmem>>, vector<16x64xbf16>,
    %c2_187 = arith.constant 2 : index
    %c2_188 = arith.constant 2 : index
    %c0_189 = arith.constant 0 : index
    %211 = vector.load %arg28[%c2_187, %c2_188, %c0_189] : memref<6x6x64xf32, #tpu.memory_space<vmem>>, vector<4x4x64xf32>
    %212 = vector.shape_cast %211 : vector<4x4x64xf32> to vector<16x64xf32>
    %213 = arith.truncf %212 : vector<16x64xf32> to vector<16x64xbf16>
    %c0_190 = arith.constant 0 : index
    %c512 = arith.constant 512 : index
    %214 = vector.load %arg29[%c0_190, %c512] : memref<16x576xbf16, #tpu.memory_space<vmem>>, vector<16x64xbf16>
    tpu.vector_store %arg29[%c0_190, %c512], %213 {strides = array<i32>} : memref<16x576xbf16, #tpu.memory_space<vmem>>, vector<16x64xbf16>,
    %c0_191 = arith.constant 0 : index
    %c0_192 = arith.constant 0 : index
    %215 = vector.load %arg29[%c0_191, %c0_192] : memref<16x576xbf16, #tpu.memory_space<vmem>>, vector<16x576xbf16>
    %c0_193 = arith.constant 0 : index
    %c0_194 = arith.constant 0 : index
    %216 = vector.load %arg8[%c0_193, %c0_194] : memref<576x64xbf16, #tpu.memory_space<vmem>>, vector<576x64xbf16>
    %cst_195 = arith.constant dense<0.000000e+00> : vector<16x64xf32>
    %217 = tpu.matmul %215, %216, %cst_195 {dimension_numbers = #tpu.dot_dimension_numbers<[1], [0], [0], [1], [0, 0, 1, 1], [], []>} : vector<16x576xbf16>, vector<576x64xbf16>, vector<16x64xf32> -> vector<16x64xf32>
    %c0_196 = arith.constant 0 : index
    %c0_197 = arith.constant 0 : index
    %218 = vector.load %arg17[%c0_196, %c0_197] : memref<1x64xf32, #tpu.memory_space<vmem>>, vector<1x64xf32>
    %219 = vector.broadcast %218 : vector<1x64xf32> to vector<16x64xf32>
    %220 = arith.addf %217, %219 : vector<16x64xf32>
    %221 = vector.extract_strided_slice %220 {offsets = [0, 0], sizes = [16, 32], strides = [1, 1]} : vector<16x64xf32> to vector<16x32xf32>
    %222 = vector.extract_strided_slice %220 {offsets = [0, 32], sizes = [16, 32], strides = [1, 1]} : vector<16x64xf32> to vector<16x32xf32>
    %223 = arith.maximumf %221, %222 : vector<16x32xf32>
    %224 = arith.truncf %223 : vector<16x32xf32> to vector<16x32xbf16>
    %c0_198 = arith.constant 0 : index
    %c0_199 = arith.constant 0 : index
    %225 = vector.load %arg9[%c0_198, %c0_199] : memref<32x64xbf16, #tpu.memory_space<vmem>>, vector<32x64xbf16>
    %cst_200 = arith.constant dense<0.000000e+00> : vector<16x64xf32>
    %226 = tpu.matmul %224, %225, %cst_200 {dimension_numbers = #tpu.dot_dimension_numbers<[1], [0], [0], [1], [0, 0, 1, 1], [], []>} : vector<16x32xbf16>, vector<32x64xbf16>, vector<16x64xf32> -> vector<16x64xf32>
    %c0_201 = arith.constant 0 : index
    %c0_202 = arith.constant 0 : index
    %227 = vector.load %arg18[%c0_201, %c0_202] : memref<1x64xf32, #tpu.memory_space<vmem>>, vector<1x64xf32>
    %228 = vector.broadcast %227 : vector<1x64xf32> to vector<16x64xf32>
    %229 = arith.addf %226, %228 : vector<16x64xf32>
    %230 = vector.extract_strided_slice %229 {offsets = [0, 0], sizes = [16, 32], strides = [1, 1]} : vector<16x64xf32> to vector<16x32xf32>
    %231 = vector.extract_strided_slice %229 {offsets = [0, 32], sizes = [16, 32], strides = [1, 1]} : vector<16x64xf32> to vector<16x32xf32>
    %232 = arith.maximumf %230, %231 : vector<16x32xf32>
    %233 = arith.truncf %232 : vector<16x32xf32> to vector<16x32xbf16>
    %cst_203 = arith.constant 0.000000e+00 : f32
    %234 = vector.broadcast %cst_203 : f32 to vector<6x6x32xf32>
    %c0_204 = arith.constant 0 : index
    %c0_205 = arith.constant 0 : index
    %c0_206 = arith.constant 0 : index
    %235 = vector.load %arg30[%c0_204, %c0_205, %c0_206] : memref<6x6x32xf32, #tpu.memory_space<vmem>>, vector<6x6x32xf32>
    tpu.vector_store %arg30[%c0_204, %c0_205, %c0_206], %234 {strides = array<i32>} : memref<6x6x32xf32, #tpu.memory_space<vmem>>, vector<6x6x32xf32>,
    %236 = vector.shape_cast %233 : vector<16x32xbf16> to vector<4x4x32xbf16>
    %237 = arith.extf %236 : vector<4x4x32xbf16> to vector<4x4x32xf32>
    %c1_207 = arith.constant 1 : index
    %c1_208 = arith.constant 1 : index
    %c0_209 = arith.constant 0 : index
    %238 = vector.load %arg30[%c1_207, %c1_208, %c0_209] : memref<6x6x32xf32, #tpu.memory_space<vmem>>, vector<4x4x32xf32>
    tpu.vector_store %arg30[%c1_207, %c1_208, %c0_209], %237 {strides = array<i32>} : memref<6x6x32xf32, #tpu.memory_space<vmem>>, vector<4x4x32xf32>,
    %c0_210 = arith.constant 0 : index
    %c0_211 = arith.constant 0 : index
    %c0_212 = arith.constant 0 : index
    %239 = vector.load %arg30[%c0_210, %c0_211, %c0_212] : memref<6x6x32xf32, #tpu.memory_space<vmem>>, vector<4x4x32xf32>
    %240 = vector.shape_cast %239 : vector<4x4x32xf32> to vector<16x32xf32>
    %241 = arith.truncf %240 : vector<16x32xf32> to vector<16x32xbf16>
    %c0_213 = arith.constant 0 : index
    %c0_214 = arith.constant 0 : index
    %242 = vector.load %arg31[%c0_213, %c0_214] : memref<16x288xbf16, #tpu.memory_space<vmem>>, vector<16x32xbf16>
    tpu.vector_store %arg31[%c0_213, %c0_214], %241 {strides = array<i32>} : memref<16x288xbf16, #tpu.memory_space<vmem>>, vector<16x32xbf16>,
    %c0_215 = arith.constant 0 : index
    %c1_216 = arith.constant 1 : index
    %c0_217 = arith.constant 0 : index
    %243 = vector.load %arg30[%c0_215, %c1_216, %c0_217] : memref<6x6x32xf32, #tpu.memory_space<vmem>>, vector<4x4x32xf32>
    %244 = vector.shape_cast %243 : vector<4x4x32xf32> to vector<16x32xf32>
    %245 = arith.truncf %244 : vector<16x32xf32> to vector<16x32xbf16>
    %c0_218 = arith.constant 0 : index
    %c32_219 = arith.constant 32 : index
    %246 = vector.load %arg31[%c0_218, %c32_219] : memref<16x288xbf16, #tpu.memory_space<vmem>>, vector<16x32xbf16>
    tpu.vector_store %arg31[%c0_218, %c32_219], %245 {strides = array<i32>} : memref<16x288xbf16, #tpu.memory_space<vmem>>, vector<16x32xbf16>,
    %c0_220 = arith.constant 0 : index
    %c2_221 = arith.constant 2 : index
    %c0_222 = arith.constant 0 : index
    %247 = vector.load %arg30[%c0_220, %c2_221, %c0_222] : memref<6x6x32xf32, #tpu.memory_space<vmem>>, vector<4x4x32xf32>
    %248 = vector.shape_cast %247 : vector<4x4x32xf32> to vector<16x32xf32>
    %249 = arith.truncf %248 : vector<16x32xf32> to vector<16x32xbf16>
    %c0_223 = arith.constant 0 : index
    %c64_224 = arith.constant 64 : index
    %250 = vector.load %arg31[%c0_223, %c64_224] : memref<16x288xbf16, #tpu.memory_space<vmem>>, vector<16x32xbf16>
    tpu.vector_store %arg31[%c0_223, %c64_224], %249 {strides = array<i32>} : memref<16x288xbf16, #tpu.memory_space<vmem>>, vector<16x32xbf16>,
    %c1_225 = arith.constant 1 : index
    %c0_226 = arith.constant 0 : index
    %c0_227 = arith.constant 0 : index
    %251 = vector.load %arg30[%c1_225, %c0_226, %c0_227] : memref<6x6x32xf32, #tpu.memory_space<vmem>>, vector<4x4x32xf32>
    %252 = vector.shape_cast %251 : vector<4x4x32xf32> to vector<16x32xf32>
    %253 = arith.truncf %252 : vector<16x32xf32> to vector<16x32xbf16>
    %c0_228 = arith.constant 0 : index
    %c96_229 = arith.constant 96 : index
    %254 = vector.load %arg31[%c0_228, %c96_229] : memref<16x288xbf16, #tpu.memory_space<vmem>>, vector<16x32xbf16>
    tpu.vector_store %arg31[%c0_228, %c96_229], %253 {strides = array<i32>} : memref<16x288xbf16, #tpu.memory_space<vmem>>, vector<16x32xbf16>,
    %c1_230 = arith.constant 1 : index
    %c1_231 = arith.constant 1 : index
    %c0_232 = arith.constant 0 : index
    %255 = vector.load %arg30[%c1_230, %c1_231, %c0_232] : memref<6x6x32xf32, #tpu.memory_space<vmem>>, vector<4x4x32xf32>
    %256 = vector.shape_cast %255 : vector<4x4x32xf32> to vector<16x32xf32>
    %257 = arith.truncf %256 : vector<16x32xf32> to vector<16x32xbf16>
    %c0_233 = arith.constant 0 : index
    %c128_234 = arith.constant 128 : index
    %258 = vector.load %arg31[%c0_233, %c128_234] : memref<16x288xbf16, #tpu.memory_space<vmem>>, vector<16x32xbf16>
    tpu.vector_store %arg31[%c0_233, %c128_234], %257 {strides = array<i32>} : memref<16x288xbf16, #tpu.memory_space<vmem>>, vector<16x32xbf16>,
    %c1_235 = arith.constant 1 : index
    %c2_236 = arith.constant 2 : index
    %c0_237 = arith.constant 0 : index
    %259 = vector.load %arg30[%c1_235, %c2_236, %c0_237] : memref<6x6x32xf32, #tpu.memory_space<vmem>>, vector<4x4x32xf32>
    %260 = vector.shape_cast %259 : vector<4x4x32xf32> to vector<16x32xf32>
    %261 = arith.truncf %260 : vector<16x32xf32> to vector<16x32xbf16>
    %c0_238 = arith.constant 0 : index
    %c160_239 = arith.constant 160 : index
    %262 = vector.load %arg31[%c0_238, %c160_239] : memref<16x288xbf16, #tpu.memory_space<vmem>>, vector<16x32xbf16>
    tpu.vector_store %arg31[%c0_238, %c160_239], %261 {strides = array<i32>} : memref<16x288xbf16, #tpu.memory_space<vmem>>, vector<16x32xbf16>,
    %c2_240 = arith.constant 2 : index
    %c0_241 = arith.constant 0 : index
    %c0_242 = arith.constant 0 : index
    %263 = vector.load %arg30[%c2_240, %c0_241, %c0_242] : memref<6x6x32xf32, #tpu.memory_space<vmem>>, vector<4x4x32xf32>
    %264 = vector.shape_cast %263 : vector<4x4x32xf32> to vector<16x32xf32>
    %265 = arith.truncf %264 : vector<16x32xf32> to vector<16x32xbf16>
    %c0_243 = arith.constant 0 : index
    %c192_244 = arith.constant 192 : index
    %266 = vector.load %arg31[%c0_243, %c192_244] : memref<16x288xbf16, #tpu.memory_space<vmem>>, vector<16x32xbf16>
    tpu.vector_store %arg31[%c0_243, %c192_244], %265 {strides = array<i32>} : memref<16x288xbf16, #tpu.memory_space<vmem>>, vector<16x32xbf16>,
    %c2_245 = arith.constant 2 : index
    %c1_246 = arith.constant 1 : index
    %c0_247 = arith.constant 0 : index
    %267 = vector.load %arg30[%c2_245, %c1_246, %c0_247] : memref<6x6x32xf32, #tpu.memory_space<vmem>>, vector<4x4x32xf32>
    %268 = vector.shape_cast %267 : vector<4x4x32xf32> to vector<16x32xf32>
    %269 = arith.truncf %268 : vector<16x32xf32> to vector<16x32xbf16>
    %c0_248 = arith.constant 0 : index
    %c224_249 = arith.constant 224 : index
    %270 = vector.load %arg31[%c0_248, %c224_249] : memref<16x288xbf16, #tpu.memory_space<vmem>>, vector<16x32xbf16>
    tpu.vector_store %arg31[%c0_248, %c224_249], %269 {strides = array<i32>} : memref<16x288xbf16, #tpu.memory_space<vmem>>, vector<16x32xbf16>,
    %c2_250 = arith.constant 2 : index
    %c2_251 = arith.constant 2 : index
    %c0_252 = arith.constant 0 : index
    %271 = vector.load %arg30[%c2_250, %c2_251, %c0_252] : memref<6x6x32xf32, #tpu.memory_space<vmem>>, vector<4x4x32xf32>
    %272 = vector.shape_cast %271 : vector<4x4x32xf32> to vector<16x32xf32>
    %273 = arith.truncf %272 : vector<16x32xf32> to vector<16x32xbf16>
    %c0_253 = arith.constant 0 : index
    %c256_254 = arith.constant 256 : index
    %274 = vector.load %arg31[%c0_253, %c256_254] : memref<16x288xbf16, #tpu.memory_space<vmem>>, vector<16x32xbf16>
    tpu.vector_store %arg31[%c0_253, %c256_254], %273 {strides = array<i32>} : memref<16x288xbf16, #tpu.memory_space<vmem>>, vector<16x32xbf16>,
    %c0_255 = arith.constant 0 : index
    %c0_256 = arith.constant 0 : index
    %275 = vector.load %arg31[%c0_255, %c0_256] : memref<16x288xbf16, #tpu.memory_space<vmem>>, vector<16x288xbf16>
    %c0_257 = arith.constant 0 : index
    %c0_258 = arith.constant 0 : index
    %276 = vector.load %arg10[%c0_257, %c0_258] : memref<288x64xbf16, #tpu.memory_space<vmem>>, vector<288x64xbf16>
    %cst_259 = arith.constant dense<0.000000e+00> : vector<16x64xf32>
    %277 = tpu.matmul %275, %276, %cst_259 {dimension_numbers = #tpu.dot_dimension_numbers<[1], [0], [0], [1], [0, 0, 1, 1], [], []>} : vector<16x288xbf16>, vector<288x64xbf16>, vector<16x64xf32> -> vector<16x64xf32>
    %c0_260 = arith.constant 0 : index
    %c0_261 = arith.constant 0 : index
    %278 = vector.load %arg19[%c0_260, %c0_261] : memref<1x64xf32, #tpu.memory_space<vmem>>, vector<1x64xf32>
    %279 = vector.broadcast %278 : vector<1x64xf32> to vector<16x64xf32>
    %280 = arith.addf %277, %279 : vector<16x64xf32>
    %281 = vector.extract_strided_slice %280 {offsets = [0, 0], sizes = [16, 32], strides = [1, 1]} : vector<16x64xf32> to vector<16x32xf32>
    %282 = vector.extract_strided_slice %280 {offsets = [0, 32], sizes = [16, 32], strides = [1, 1]} : vector<16x64xf32> to vector<16x32xf32>
    %283 = arith.maximumf %281, %282 : vector<16x32xf32>
    %284 = vector.shape_cast %283 : vector<16x32xf32> to vector<2x2x4x32xf32>
    %285 = vector.extract_strided_slice %284 {offsets = [0, 0, 0, 0], sizes = [2, 1, 4, 32], strides = [1, 1, 1, 1]} : vector<2x2x4x32xf32> to vector<2x1x4x32xf32>
    %286 = vector.shape_cast %285 : vector<2x1x4x32xf32> to vector<2x4x32xf32>
    %287 = vector.extract_strided_slice %284 {offsets = [0, 1, 0, 0], sizes = [2, 1, 4, 32], strides = [1, 1, 1, 1]} : vector<2x2x4x32xf32> to vector<2x1x4x32xf32>
    %288 = vector.shape_cast %287 : vector<2x1x4x32xf32> to vector<2x4x32xf32>
    %289 = arith.maximumf %286, %288 : vector<2x4x32xf32>
    %290 = vector.shape_cast %289 : vector<2x4x32xf32> to vector<8x32xf32>
    %c0_262 = arith.constant 0 : index
    %c0_263 = arith.constant 0 : index
    %291 = vector.load %arg32[%c0_262, %c0_263] : memref<8x32xf32, #tpu.memory_space<vmem>>, vector<8x32xf32>
    tpu.vector_store %arg32[%c0_262, %c0_263], %290 {strides = array<i32>} : memref<8x32xf32, #tpu.memory_space<vmem>>, vector<8x32xf32>,
    %c0_264 = arith.constant 0 : index
    %c0_265 = arith.constant 0 : index
    %292 = tpu.strided_load %arg32[%c0_264, %c0_265] {strides = array<i32: 2, 1>} : memref<8x32xf32, #tpu.memory_space<vmem>>, vector<4x32xf32>
    %c1_266 = arith.constant 1 : index
    %c0_267 = arith.constant 0 : index
    %293 = tpu.strided_load %arg32[%c1_266, %c0_267] {strides = array<i32: 2, 1>} : memref<8x32xf32, #tpu.memory_space<vmem>>, vector<4x32xf32>
    %294 = arith.maximumf %292, %293 : vector<4x32xf32>
    %295 = vector.shape_cast %294 : vector<4x32xf32> to vector<2x2x32xf32>
    %c0_268 = arith.constant 0 : index
    %c0_269 = arith.constant 0 : index
    %c0_270 = arith.constant 0 : index
    %c0_271 = arith.constant 0 : index
    %296 = vector.load %arg20[%c0_268, %c0_269, %c0_270, %c0_271] : memref<1x2x2x32xf32, #tpu.memory_space<vmem>>, vector<1x2x2x32xf32>
    %297 = vector.shape_cast %296 : vector<1x2x2x32xf32> to vector<2x2x32xf32>
    %298 = vector.shape_cast %295 : vector<2x2x32xf32> to vector<1x2x2x32xf32>
    tpu.vector_store %arg20[%c0_268, %c0_269, %c0_270, %c0_271], %298 {strides = array<i32>} : memref<1x2x2x32xf32, #tpu.memory_space<vmem>>, vector<1x2x2x32xf32>,
    return
  }
  func.func @transform_0(%arg0: i32) -> (i32, i32, i32, i32) {
    %c0_i32 = arith.constant 0 : i32
    %c0_i32_0 = arith.constant 0 : i32
    %c0_i32_1 = arith.constant 0 : i32
    %c0_i32_2 = arith.constant 0 : i32
    return %arg0, %c0_i32, %c0_i32_0, %c0_i32_1 : i32, i32, i32, i32
  }
  func.func @transform_1(%arg0: i32) -> (i32, i32) {
    %c0_i32 = arith.constant 0 : i32
    %c0_i32_0 = arith.constant 0 : i32
    %c0_i32_1 = arith.constant 0 : i32
    return %c0_i32, %c0_i32_0 : i32, i32
  }
  func.func @transform_2(%arg0: i32) -> (i32, i32) {
    %c0_i32 = arith.constant 0 : i32
    %c0_i32_0 = arith.constant 0 : i32
    %c0_i32_1 = arith.constant 0 : i32
    return %c0_i32, %c0_i32_0 : i32, i32
  }
  func.func @transform_3(%arg0: i32) -> (i32, i32) {
    %c0_i32 = arith.constant 0 : i32
    %c0_i32_0 = arith.constant 0 : i32
    %c0_i32_1 = arith.constant 0 : i32
    return %c0_i32, %c0_i32_0 : i32, i32
  }
  func.func @transform_4(%arg0: i32) -> (i32, i32) {
    %c0_i32 = arith.constant 0 : i32
    %c0_i32_0 = arith.constant 0 : i32
    %c0_i32_1 = arith.constant 0 : i32
    return %c0_i32, %c0_i32_0 : i32, i32
  }
  func.func @transform_5(%arg0: i32) -> (i32, i32) {
    %c0_i32 = arith.constant 0 : i32
    %c0_i32_0 = arith.constant 0 : i32
    %c0_i32_1 = arith.constant 0 : i32
    return %c0_i32, %c0_i32_0 : i32, i32
  }
  func.func @transform_6(%arg0: i32) -> (i32, i32) {
    %c0_i32 = arith.constant 0 : i32
    %c0_i32_0 = arith.constant 0 : i32
    %c0_i32_1 = arith.constant 0 : i32
    return %c0_i32, %c0_i32_0 : i32, i32
  }
  func.func @transform_7(%arg0: i32) -> (i32, i32) {
    %c0_i32 = arith.constant 0 : i32
    %c0_i32_0 = arith.constant 0 : i32
    %c0_i32_1 = arith.constant 0 : i32
    return %c0_i32, %c0_i32_0 : i32, i32
  }
  func.func @transform_8(%arg0: i32) -> (i32, i32) {
    %c0_i32 = arith.constant 0 : i32
    %c0_i32_0 = arith.constant 0 : i32
    %c0_i32_1 = arith.constant 0 : i32
    return %c0_i32, %c0_i32_0 : i32, i32
  }
  func.func @transform_9(%arg0: i32) -> (i32, i32) {
    %c0_i32 = arith.constant 0 : i32
    %c0_i32_0 = arith.constant 0 : i32
    %c0_i32_1 = arith.constant 0 : i32
    return %c0_i32, %c0_i32_0 : i32, i32
  }
  func.func @transform_10(%arg0: i32) -> (i32, i32) {
    %c0_i32 = arith.constant 0 : i32
    %c0_i32_0 = arith.constant 0 : i32
    %c0_i32_1 = arith.constant 0 : i32
    return %c0_i32, %c0_i32_0 : i32, i32
  }
  func.func @transform_11(%arg0: i32) -> (i32, i32) {
    %c0_i32 = arith.constant 0 : i32
    %c0_i32_0 = arith.constant 0 : i32
    %c0_i32_1 = arith.constant 0 : i32
    return %c0_i32, %c0_i32_0 : i32, i32
  }
  func.func @transform_12(%arg0: i32) -> (i32, i32) {
    %c0_i32 = arith.constant 0 : i32
    %c0_i32_0 = arith.constant 0 : i32
    %c0_i32_1 = arith.constant 0 : i32
    return %c0_i32, %c0_i32_0 : i32, i32
  }
  func.func @transform_13(%arg0: i32) -> (i32, i32) {
    %c0_i32 = arith.constant 0 : i32
    %c0_i32_0 = arith.constant 0 : i32
    %c0_i32_1 = arith.constant 0 : i32
    return %c0_i32, %c0_i32_0 : i32, i32
  }
  func.func @transform_14(%arg0: i32) -> (i32, i32) {
    %c0_i32 = arith.constant 0 : i32
    %c0_i32_0 = arith.constant 0 : i32
    %c0_i32_1 = arith.constant 0 : i32
    return %c0_i32, %c0_i32_0 : i32, i32
  }
  func.func @transform_15(%arg0: i32) -> (i32, i32) {
    %c0_i32 = arith.constant 0 : i32
    %c0_i32_0 = arith.constant 0 : i32
    %c0_i32_1 = arith.constant 0 : i32
    return %c0_i32, %c0_i32_0 : i32, i32
  }
  func.func @transform_16(%arg0: i32) -> (i32, i32) {
    %c0_i32 = arith.constant 0 : i32
    %c0_i32_0 = arith.constant 0 : i32
    %c0_i32_1 = arith.constant 0 : i32
    return %c0_i32, %c0_i32_0 : i32, i32
  }
  func.func @transform_17(%arg0: i32) -> (i32, i32) {
    %c0_i32 = arith.constant 0 : i32
    %c0_i32_0 = arith.constant 0 : i32
    %c0_i32_1 = arith.constant 0 : i32
    return %c0_i32, %c0_i32_0 : i32, i32
  }
  func.func @transform_18(%arg0: i32) -> (i32, i32) {
    %c0_i32 = arith.constant 0 : i32
    %c0_i32_0 = arith.constant 0 : i32
    %c0_i32_1 = arith.constant 0 : i32
    return %c0_i32, %c0_i32_0 : i32, i32
  }
  func.func @transform_19(%arg0: i32) -> (i32, i32, i32, i32) {
    %c0_i32 = arith.constant 0 : i32
    %c0_i32_0 = arith.constant 0 : i32
    %c0_i32_1 = arith.constant 0 : i32
    %c0_i32_2 = arith.constant 0 : i32
    return %arg0, %c0_i32, %c0_i32_0, %c0_i32_1 : i32, i32, i32, i32
  }
}

</mosaic_0001>

<llo_original>
// kernel: lcnn_forward.1
$region0: #{lcnn_forward.1}
  #allocation0 [shape = 'u32[]', space=smem, size = 0x4, offset = 0x4, fixed_abs, tag = 'smem constant byte address 0x4 - core index']
  #allocation1 [shape = 'u32[144,128]{1,0:T(1,128)}', space=vmem, size = 0x12000, scoped, tag = 'internal scratch']
  #allocation2 [shape = 'f32[512,32]{1,0:T(8,128)}', space=vmem, size = 0x40000, scoped, tag = 'scratch operand']
  #allocation3 [shape = 'f32[18,18,32]{2,1,0:T(8,128)}', space=vmem, size = 0x36000, scoped, tag = 'scratch operand']
  #allocation4 [shape = 'bf16[256,288]{1,0:T(8,128)(2,1)}', space=vmem, size = 0x30000, scoped, tag = 'scratch operand']
  #allocation5 [shape = 'f32[128,48]{1,0:T(8,128)}', space=vmem, size = 0x10000, scoped, tag = 'scratch operand']
  #allocation6 [shape = 'f32[10,10,48]{2,1,0:T(8,128)}', space=vmem, size = 0x14000, scoped, tag = 'scratch operand']
  #allocation7 [shape = 'bf16[64,432]{1,0:T(8,128)(2,1)}', space=vmem, size = 0x10000, scoped, tag = 'scratch operand']
  #allocation8 [shape = 'f32[32,64]{1,0:T(8,128)}', space=vmem, size = 0x4000, scoped, tag = 'scratch operand']
  #allocation9 [shape = 'f32[6,6,64]{2,1,0:T(8,128)}', space=vmem, size = 0x6000, scoped, tag = 'scratch operand']
  #allocation10 [shape = 'bf16[16,576]{1,0:T(8,128)(2,1)}', space=vmem, size = 0x5000, scoped, tag = 'scratch operand']
  #allocation11 [shape = 'f32[6,6,32]{2,1,0:T(8,128)}', space=vmem, size = 0x6000, scoped, tag = 'scratch operand']
  #allocation12 [shape = 'bf16[16,288]{1,0:T(8,128)(2,1)}', space=vmem, size = 0x3000, scoped, tag = 'scratch operand']
  #allocation13 [shape = 'f32[8,32]{1,0:T(8,128)}', space=vmem, size = 0x1000, scoped, tag = 'scratch operand']
  %s0 = inlined_call_operand.vmem [shape: bf16[2,32,32,32], index: 0, kind: input, shape index: {}]
  %s1 = inlined_call_operand.vmem [shape: bf16[32,64], index: 1, kind: input, shape index: {}]
  %s2 = inlined_call_operand.vmem [shape: bf16[32,64], index: 2, kind: input, shape index: {}]
  %s3 = inlined_call_operand.vmem [shape: bf16[288,96], index: 3, kind: input, shape index: {}]
  %s4 = inlined_call_operand.vmem [shape: bf16[48,96], index: 4, kind: input, shape index: {}]
  %s5 = inlined_call_operand.vmem [shape: bf16[432,128], index: 5, kind: input, shape index: {}]
  %s6 = inlined_call_operand.vmem [shape: bf16[64,128], index: 6, kind: input, shape index: {}]
  %s7 = inlined_call_operand.vmem [shape: bf16[576,64], index: 7, kind: input, shape index: {}]
  %s8 = inlined_call_operand.vmem [shape: bf16[32,64], index: 8, kind: input, shape index: {}]
  %s9 = inlined_call_operand.vmem [shape: bf16[288,64], index: 9, kind: input, shape index: {}]
  %s10 = inlined_call_operand.vmem [shape: f32[1,64], index: 10, kind: input, shape index: {}]
  %s11 = inlined_call_operand.vmem [shape: f32[1,64], index: 11, kind: input, shape index: {}]
  %s12 = inlined_call_operand.vmem [shape: f32[1,96], index: 12, kind: input, shape index: {}]
  %s13 = inlined_call_operand.vmem [shape: f32[1,96], index: 13, kind: input, shape index: {}]
  %s14 = inlined_call_operand.vmem [shape: f32[1,128], index: 14, kind: input, shape index: {}]
  %s15 = inlined_call_operand.vmem [shape: f32[1,128], index: 15, kind: input, shape index: {}]
  %s16 = inlined_call_operand.vmem [shape: f32[1,64], index: 16, kind: input, shape index: {}]
  %s17 = inlined_call_operand.vmem [shape: f32[1,64], index: 17, kind: input, shape index: {}]
  %s18 = inlined_call_operand.vmem [shape: f32[1,64], index: 18, kind: input, shape index: {}]
  %s19 = inlined_call_operand.vmem [shape: f32[2,2,2,32], index: 19, kind: output, shape index: {}]
  %s20 = sld [smem:[#allocation0]]
  $region109: #{lcnn_forward.1} parent=0
    _
  %s22 = ssub.s32 1, %s20
  %s23 = scalar_select 0, %s22, %s20
  loop: start=0, step=1, limit=4
  $region2: #{lcnn_forward.1} parent=0 // loop_pre_header
    _
  $region3: #{lcnn_forward.1} parent=0 // loop_header
    %s25 = sphi 0, %s29
    %p26 = scmp.ge.s32.totalorder %s25, 4
    %s35 = sphi 0, %s37
    %s38 = sphi 0, %s35
    %s39 = sphi 0, %s38
    %s55 = sphi 0, %s39
    %s59 = sphi 0, %s59
    %s61 = sphi 0, %s59
    %s62 = sphi 0, %s61
    %s76 = sphi 0, %s62
    %s80 = sphi 0, %s80
    %s82 = sphi 0, %s80
    %s83 = sphi 0, %s82
    %s97 = sphi 0, %s83
    %s101 = sphi 0, %s101
    %s103 = sphi 0, %s101
    %s104 = sphi 0, %s103
    %s118 = sphi 0, %s104
    %s122 = sphi 0, %s122
    %s124 = sphi 0, %s122
    %s125 = sphi 0, %s124
    %s139 = sphi 0, %s125
    %s143 = sphi 0, %s143
    %s145 = sphi 0, %s143
    %s146 = sphi 0, %s145
    %s160 = sphi 0, %s146
    %s164 = sphi 0, %s164
    %s166 = sphi 0, %s164
    %s167 = sphi 0, %s166
    %s181 = sphi 0, %s167
    %s185 = sphi 0, %s185
    %s187 = sphi 0, %s185
    %s188 = sphi 0, %s187
    %s202 = sphi 0, %s188
    %s206 = sphi 0, %s206
    %s208 = sphi 0, %s206
    %s209 = sphi 0, %s208
    %s223 = sphi 0, %s209
    %s227 = sphi 0, %s227
    %s229 = sphi 0, %s227
    %s230 = sphi 0, %s229
    %s244 = sphi 0, %s230
    %s248 = sphi 0, %s248
    %s250 = sphi 0, %s248
    %s251 = sphi 0, %s250
    %s265 = sphi 0, %s251
    %s269 = sphi 0, %s269
    %s271 = sphi 0, %s269
    %s272 = sphi 0, %s271
    %s286 = sphi 0, %s272
    %s290 = sphi 0, %s290
    %s292 = sphi 0, %s290
    %s293 = sphi 0, %s292
    %s307 = sphi 0, %s293
    %s311 = sphi 0, %s311
    %s313 = sphi 0, %s311
    %s314 = sphi 0, %s313
    %s328 = sphi 0, %s314
    %s332 = sphi 0, %s332
    %s334 = sphi 0, %s332
    %s335 = sphi 0, %s334
    %s349 = sphi 0, %s335
    %s353 = sphi 0, %s353
    %s355 = sphi 0, %s353
    %s356 = sphi 0, %s355
    %s370 = sphi 0, %s356
    %s374 = sphi 0, %s374
    %s376 = sphi 0, %s374
    %s377 = sphi 0, %s376
    %s391 = sphi 0, %s377
    %s395 = sphi 0, %s395
    %s397 = sphi 0, %s395
    %s398 = sphi 0, %s397
    %s412 = sphi 0, %s398
    %s416 = sphi 0, %s416
    %s418 = sphi 0, %s416
    %s419 = sphi 0, %s418
    %s433 = sphi 0, %s419
    %s439 = sphi 0, %s441
    %s442 = sphi 0, %s439
    %s443 = sphi 0, %s442
    %s459 = sphi 0, %s443
  $region4: #{lcnn_forward.1} parent=0 // loop_header_branch
    %28 = sbr.rel (%p26) target = $region8
  $region5: #{lcnn_forward.1} parent=0 // loop_body
    %s30 = ssub.s32 %s25, 1
    %s31 = ssub.s32 %s25, 2
    %s32 = sadd.s32 %s25, 1
    %s33 = ssub.s32 %s25, %s32
    %p34 = scmp.eq.s32.totalorder %s33, 0
    %s36 = sadd.s32 %s35, 1
    %s37 = scalar_select %p34, %s35, %s36
    %p40 = pneg %p34
    %p41 = scmp.eq.s32.totalorder %s25, 1
    %p42 = por %p40, %p41
    %p43 = scmp.ne.s32.totalorder %s35, %s38
    %p44 = scmp.eq.s32.totalorder %s25, 0
    %p45 = por %p43, %p44
    %p46 = scmp.ne.s32.totalorder %s35, %s38
    %p47 = scmp.eq.s32.totalorder %s30, 1
    %p48 = por %p46, %p47
    %p49 = scmp.ne.s32.totalorder %s38, %s39
    %p50 = scmp.eq.s32.totalorder %s30, 0
    %p51 = por %p49, %p50
    %p52 = scmp.ne.s32.totalorder %s38, %s39
    %p53 = scmp.eq.s32.totalorder %s31, 1
    %p54 = por %p52, %p53
    %p56 = scmp.ne.s32.totalorder %s39, %s55
    %p57 = scmp.eq.s32.totalorder %s31, 0
    %p58 = por %p56, %p57
    %s60 = sadd.s32 %s59, 1
    %p63 = scmp.eq.s32.totalorder %s25, 1
    %p64 = scmp.ne.s32.totalorder %s59, %s61
    %p65 = scmp.eq.s32.totalorder %s25, 0
    %p66 = por %p64, %p65
    %p67 = scmp.ne.s32.totalorder %s59, %s61
    %p68 = scmp.eq.s32.totalorder %s30, 1
    %p69 = por %p67, %p68
    %p70 = scmp.ne.s32.totalorder %s61, %s62
    %p71 = scmp.eq.s32.totalorder %s30, 0
    %p72 = por %p70, %p71
    %p73 = scmp.ne.s32.totalorder %s61, %s62
    %p74 = scmp.eq.s32.totalorder %s31, 1
    %p75 = por %p73, %p74
    %p77 = scmp.ne.s32.totalorder %s62, %s76
    %p78 = scmp.eq.s32.totalorder %s31, 0
    %p79 = por %p77, %p78
    %s81 = sadd.s32 %s80, 1
    %p84 = scmp.eq.s32.totalorder %s25, 1
    %p85 = scmp.ne.s32.totalorder %s80, %s82
    %p86 = scmp.eq.s32.totalorder %s25, 0
    %p87 = por %p85, %p86
    %p88 = scmp.ne.s32.totalorder %s80, %s82
    %p89 = scmp.eq.s32.totalorder %s30, 1
    %p90 = por %p88, %p89
    %p91 = scmp.ne.s32.totalorder %s82, %s83
    %p92 = scmp.eq.s32.totalorder %s30, 0
    %p93 = por %p91, %p92
    %p94 = scmp.ne.s32.totalorder %s82, %s83
    %p95 = scmp.eq.s32.totalorder %s31, 1
    %p96 = por %p94, %p95
    %p98 = scmp.ne.s32.totalorder %s83, %s97
    %p99 = scmp.eq.s32.totalorder %s31, 0
    %p100 = por %p98, %p99
    %s102 = sadd.s32 %s101, 1
    %p105 = scmp.eq.s32.totalorder %s25, 1
    %p106 = scmp.ne.s32.totalorder %s101, %s103
    %p107 = scmp.eq.s32.totalorder %s25, 0
    %p108 = por %p106, %p107
    %p109 = scmp.ne.s32.totalorder %s101, %s103
    %p110 = scmp.eq.s32.totalorder %s30, 1
    %p111 = por %p109, %p110
    %p112 = scmp.ne.s32.totalorder %s103, %s104
    %p113 = scmp.eq.s32.totalorder %s30, 0
    %p114 = por %p112, %p113
    %p115 = scmp.ne.s32.totalorder %s103, %s104
    %p116 = scmp.eq.s32.totalorder %s31, 1
    %p117 = por %p115, %p116
    %p119 = scmp.ne.s32.totalorder %s104, %s118
    %p120 = scmp.eq.s32.totalorder %s31, 0
    %p121 = por %p119, %p120
    %s123 = sadd.s32 %s122, 1
    %p126 = scmp.eq.s32.totalorder %s25, 1
    %p127 = scmp.ne.s32.totalorder %s122, %s124
    %p128 = scmp.eq.s32.totalorder %s25, 0
    %p129 = por %p127, %p128
    %p130 = scmp.ne.s32.totalorder %s122, %s124
    %p131 = scmp.eq.s32.totalorder %s30, 1
    %p132 = por %p130, %p131
    %p133 = scmp.ne.s32.totalorder %s124, %s125
    %p134 = scmp.eq.s32.totalorder %s30, 0
    %p135 = por %p133, %p134
    %p136 = scmp.ne.s32.totalorder %s124, %s125
    %p137 = scmp.eq.s32.totalorder %s31, 1
    %p138 = por %p136, %p137
    %p140 = scmp.ne.s32.totalorder %s125, %s139
    %p141 = scmp.eq.s32.totalorder %s31, 0
    %p142 = por %p140, %p141
    %s144 = sadd.s32 %s143, 1
    %p147 = scmp.eq.s32.totalorder %s25, 1
    %p148 = scmp.ne.s32.totalorder %s143, %s145
    %p149 = scmp.eq.s32.totalorder %s25, 0
    %p150 = por %p148, %p149
    %p151 = scmp.ne.s32.totalorder %s143, %s145
    %p152 = scmp.eq.s32.totalorder %s30, 1
    %p153 = por %p151, %p152
    %p154 = scmp.ne.s32.totalorder %s145, %s146
    %p155 = scmp.eq.s32.totalorder %s30, 0
    %p156 = por %p154, %p155
    %p157 = scmp.ne.s32.totalorder %s145, %s146
    %p158 = scmp.eq.s32.totalorder %s31, 1
    %p159 = por %p157, %p158
    %p161 = scmp.ne.s32.totalorder %s146, %s160
    %p162 = scmp.eq.s32.totalorder %s31, 0
    %p163 = por %p161, %p162
    %s165 = sadd.s32 %s164, 1
    %p168 = scmp.eq.s32.totalorder %s25, 1
    %p169 = scmp.ne.s32.totalorder %s164, %s166
    %p170 = scmp.eq.s32.totalorder %s25, 0
    %p171 = por %p169, %p170
    %p172 = scmp.ne.s32.totalorder %s164, %s166
    %p173 = scmp.eq.s32.totalorder %s30, 1
    %p174 = por %p172, %p173
    %p175 = scmp.ne.s32.totalorder %s166, %s167
    %p176 = scmp.eq.s32.totalorder %s30, 0
    %p177 = por %p175, %p176
    %p178 = scmp.ne.s32.totalorder %s166, %s167
    %p179 = scmp.eq.s32.totalorder %s31, 1
    %p180 = por %p178, %p179
    %p182 = scmp.ne.s32.totalorder %s167, %s181
    %p183 = scmp.eq.s32.totalorder %s31, 0
    %p184 = por %p182, %p183
    %s186 = sadd.s32 %s185, 1
    %p189 = scmp.eq.s32.totalorder %s25, 1
    %p190 = scmp.ne.s32.totalorder %s185, %s187
    %p191 = scmp.eq.s32.totalorder %s25, 0
    %p192 = por %p190, %p191
    %p193 = scmp.ne.s32.totalorder %s185, %s187
    %p194 = scmp.eq.s32.totalorder %s30, 1
    %p195 = por %p193, %p194
    %p196 = scmp.ne.s32.totalorder %s187, %s188
    %p197 = scmp.eq.s32.totalorder %s30, 0
    %p198 = por %p196, %p197
    %p199 = scmp.ne.s32.totalorder %s187, %s188
    %p200 = scmp.eq.s32.totalorder %s31, 1
    %p201 = por %p199, %p200
    %p203 = scmp.ne.s32.totalorder %s188, %s202
    %p204 = scmp.eq.s32.totalorder %s31, 0
    %p205 = por %p203, %p204
    %s207 = sadd.s32 %s206, 1
    %p210 = scmp.eq.s32.totalorder %s25, 1
    %p211 = scmp.ne.s32.totalorder %s206, %s208
    %p212 = scmp.eq.s32.totalorder %s25, 0
    %p213 = por %p211, %p212
    %p214 = scmp.ne.s32.totalorder %s206, %s208
    %p215 = scmp.eq.s32.totalorder %s30, 1
    %p216 = por %p214, %p215
    %p217 = scmp.ne.s32.totalorder %s208, %s209
    %p218 = scmp.eq.s32.totalorder %s30, 0
    %p219 = por %p217, %p218
    %p220 = scmp.ne.s32.totalorder %s208, %s209
    %p221 = scmp.eq.s32.totalorder %s31, 1
    %p222 = por %p220, %p221
    %p224 = scmp.ne.s32.totalorder %s209, %s223
    %p225 = scmp.eq.s32.totalorder %s31, 0
    %p226 = por %p224, %p225
    %s228 = sadd.s32 %s227, 1
    %p231 = scmp.eq.s32.totalorder %s25, 1
    %p232 = scmp.ne.s32.totalorder %s227, %s229
    %p233 = scmp.eq.s32.totalorder %s25, 0
    %p234 = por %p232, %p233
    %p235 = scmp.ne.s32.totalorder %s227, %s229
    %p236 = scmp.eq.s32.totalorder %s30, 1
    %p237 = por %p235, %p236
    %p238 = scmp.ne.s32.totalorder %s229, %s230
    %p239 = scmp.eq.s32.totalorder %s30, 0
    %p240 = por %p238, %p239
    %p241 = scmp.ne.s32.totalorder %s229, %s230
    %p242 = scmp.eq.s32.totalorder %s31, 1
    %p243 = por %p241, %p242
    %p245 = scmp.ne.s32.totalorder %s230, %s244
    %p246 = scmp.eq.s32.totalorder %s31, 0
    %p247 = por %p245, %p246
    %s249 = sadd.s32 %s248, 1
    %p252 = scmp.eq.s32.totalorder %s25, 1
    %p253 = scmp.ne.s32.totalorder %s248, %s250
    %p254 = scmp.eq.s32.totalorder %s25, 0
    %p255 = por %p253, %p254
    %p256 = scmp.ne.s32.totalorder %s248, %s250
    %p257 = scmp.eq.s32.totalorder %s30, 1
    %p258 = por %p256, %p257
    %p259 = scmp.ne.s32.totalorder %s250, %s251
    %p260 = scmp.eq.s32.totalorder %s30, 0
    %p261 = por %p259, %p260
    %p262 = scmp.ne.s32.totalorder %s250, %s251
    %p263 = scmp.eq.s32.totalorder %s31, 1
    %p264 = por %p262, %p263
    %p266 = scmp.ne.s32.totalorder %s251, %s265
    %p267 = scmp.eq.s32.totalorder %s31, 0
    %p268 = por %p266, %p267
    %s270 = sadd.s32 %s269, 1
    %p273 = scmp.eq.s32.totalorder %s25, 1
    %p274 = scmp.ne.s32.totalorder %s269, %s271
    %p275 = scmp.eq.s32.totalorder %s25, 0
    %p276 = por %p274, %p275
    %p277 = scmp.ne.s32.totalorder %s269, %s271
    %p278 = scmp.eq.s32.totalorder %s30, 1
    %p279 = por %p277, %p278
    %p280 = scmp.ne.s32.totalorder %s271, %s272
    %p281 = scmp.eq.s32.totalorder %s30, 0
    %p282 = por %p280, %p281
    %p283 = scmp.ne.s32.totalorder %s271, %s272
    %p284 = scmp.eq.s32.totalorder %s31, 1
    %p285 = por %p283, %p284
    %p287 = scmp.ne.s32.totalorder %s272, %s286
    %p288 = scmp.eq.s32.totalorder %s31, 0
    %p289 = por %p287, %p288
    %s291 = sadd.s32 %s290, 1
    %p294 = scmp.eq.s32.totalorder %s25, 1
    %p295 = scmp.ne.s32.totalorder %s290, %s292
    %p296 = scmp.eq.s32.totalorder %s25, 0
    %p297 = por %p295, %p296
    %p298 = scmp.ne.s32.totalorder %s290, %s292
    %p299 = scmp.eq.s32.totalorder %s30, 1
    %p300 = por %p298, %p299
    %p301 = scmp.ne.s32.totalorder %s292, %s293
    %p302 = scmp.eq.s32.totalorder %s30, 0
    %p303 = por %p301, %p302
    %p304 = scmp.ne.s32.totalorder %s292, %s293
    %p305 = scmp.eq.s32.totalorder %s31, 1
    %p306 = por %p304, %p305
    %p308 = scmp.ne.s32.totalorder %s293, %s307
    %p309 = scmp.eq.s32.totalorder %s31, 0
    %p310 = por %p308, %p309
    %s312 = sadd.s32 %s311, 1
    %p315 = scmp.eq.s32.totalorder %s25, 1
    %p316 = scmp.ne.s32.totalorder %s311, %s313
    %p317 = scmp.eq.s32.totalorder %s25, 0
    %p318 = por %p316, %p317
    %p319 = scmp.ne.s32.totalorder %s311, %s313
    %p320 = scmp.eq.s32.totalorder %s30, 1
    %p321 = por %p319, %p320
    %p322 = scmp.ne.s32.totalorder %s313, %s314
    %p323 = scmp.eq.s32.totalorder %s30, 0
    %p324 = por %p322, %p323
    %p325 = scmp.ne.s32.totalorder %s313, %s314
    %p326 = scmp.eq.s32.totalorder %s31, 1
    %p327 = por %p325, %p326
    %p329 = scmp.ne.s32.totalorder %s314, %s328
    %p330 = scmp.eq.s32.totalorder %s31, 0
    %p331 = por %p329, %p330
    %s333 = sadd.s32 %s332, 1
    %p336 = scmp.eq.s32.totalorder %s25, 1
    %p337 = scmp.ne.s32.totalorder %s332, %s334
    %p338 = scmp.eq.s32.totalorder %s25, 0
    %p339 = por %p337, %p338
    %p340 = scmp.ne.s32.totalorder %s332, %s334
    %p341 = scmp.eq.s32.totalorder %s30, 1
    %p342 = por %p340, %p341
    %p343 = scmp.ne.s32.totalorder %s334, %s335
    %p344 = scmp.eq.s32.totalorder %s30, 0
    %p345 = por %p343, %p344
    %p346 = scmp.ne.s32.totalorder %s334, %s335
    %p347 = scmp.eq.s32.totalorder %s31, 1
    %p348 = por %p346, %p347
    %p350 = scmp.ne.s32.totalorder %s335, %s349
    %p351 = scmp.eq.s32.totalorder %s31, 0
    %p352 = por %p350, %p351
    %s354 = sadd.s32 %s353, 1
    %p357 = scmp.eq.s32.totalorder %s25, 1
    %p358 = scmp.ne.s32.totalorder %s353, %s355
    %p359 = scmp.eq.s32.totalorder %s25, 0
    %p360 = por %p358, %p359
    %p361 = scmp.ne.s32.totalorder %s353, %s355
    %p362 = scmp.eq.s32.totalorder %s30, 1
    %p363 = por %p361, %p362
    %p364 = scmp.ne.s32.totalorder %s355, %s356
    %p365 = scmp.eq.s32.totalorder %s30, 0
    %p366 = por %p364, %p365
    %p367 = scmp.ne.s32.totalorder %s355, %s356
    %p368 = scmp.eq.s32.totalorder %s31, 1
    %p369 = por %p367, %p368
    %p371 = scmp.ne.s32.totalorder %s356, %s370
    %p372 = scmp.eq.s32.totalorder %s31, 0
    %p373 = por %p371, %p372
    %s375 = sadd.s32 %s374, 1
    %p378 = scmp.eq.s32.totalorder %s25, 1
    %p379 = scmp.ne.s32.totalorder %s374, %s376
    %p380 = scmp.eq.s32.totalorder %s25, 0
    %p381 = por %p379, %p380
    %p382 = scmp.ne.s32.totalorder %s374, %s376
    %p383 = scmp.eq.s32.totalorder %s30, 1
    %p384 = por %p382, %p383
    %p385 = scmp.ne.s32.totalorder %s376, %s377
    %p386 = scmp.eq.s32.totalorder %s30, 0
    %p387 = por %p385, %p386
    %p388 = scmp.ne.s32.totalorder %s376, %s377
    %p389 = scmp.eq.s32.totalorder %s31, 1
    %p390 = por %p388, %p389
    %p392 = scmp.ne.s32.totalorder %s377, %s391
    %p393 = scmp.eq.s32.totalorder %s31, 0
    %p394 = por %p392, %p393
    %s396 = sadd.s32 %s395, 1
    %p399 = scmp.eq.s32.totalorder %s25, 1
    %p400 = scmp.ne.s32.totalorder %s395, %s397
    %p401 = scmp.eq.s32.totalorder %s25, 0
    %p402 = por %p400, %p401
    %p403 = scmp.ne.s32.totalorder %s395, %s397
    %p404 = scmp.eq.s32.totalorder %s30, 1
    %p405 = por %p403, %p404
    %p406 = scmp.ne.s32.totalorder %s397, %s398
    %p407 = scmp.eq.s32.totalorder %s30, 0
    %p408 = por %p406, %p407
    %p409 = scmp.ne.s32.totalorder %s397, %s398
    %p410 = scmp.eq.s32.totalorder %s31, 1
    %p411 = por %p409, %p410
    %p413 = scmp.ne.s32.totalorder %s398, %s412
    %p414 = scmp.eq.s32.totalorder %s31, 0
    %p415 = por %p413, %p414
    %s417 = sadd.s32 %s416, 1
    %p420 = scmp.eq.s32.totalorder %s25, 1
    %p421 = scmp.ne.s32.totalorder %s416, %s418
    %p422 = scmp.eq.s32.totalorder %s25, 0
    %p423 = por %p421, %p422
    %p424 = scmp.ne.s32.totalorder %s416, %s418
    %p425 = scmp.eq.s32.totalorder %s30, 1
    %p426 = por %p424, %p425
    %p427 = scmp.ne.s32.totalorder %s418, %s419
    %p428 = scmp.eq.s32.totalorder %s30, 0
    %p429 = por %p427, %p428
    %p430 = scmp.ne.s32.totalorder %s418, %s419
    %p431 = scmp.eq.s32.totalorder %s31, 1
    %p432 = por %p430, %p431
    %p434 = scmp.ne.s32.totalorder %s419, %s433
    %p435 = scmp.eq.s32.totalorder %s31, 0
    %p436 = por %p434, %p435
    %s437 = ssub.s32 %s25, %s32
    %p438 = scmp.eq.s32.totalorder %s437, 0
    %s440 = sadd.s32 %s439, 1
    %s441 = scalar_select %p438, %s439, %s440
    %p444 = pneg %p438
    %p445 = scmp.eq.s32.totalorder %s25, 1
    %p446 = por %p444, %p445
    %p447 = scmp.ne.s32.totalorder %s439, %s442
    %p448 = scmp.eq.s32.totalorder %s25, 0
    %p449 = por %p447, %p448
    %p450 = scmp.ne.s32.totalorder %s439, %s442
    %p451 = scmp.eq.s32.totalorder %s30, 1
    %p452 = por %p450, %p451
    %p453 = scmp.ne.s32.totalorder %s442, %s443
    %p454 = scmp.eq.s32.totalorder %s30, 0
    %p455 = por %p453, %p454
    %p456 = scmp.ne.s32.totalorder %s442, %s443
    %p457 = scmp.eq.s32.totalorder %s31, 1
    %p458 = por %p456, %p457
    %p460 = scmp.ne.s32.totalorder %s443, %s459
    %p461 = scmp.eq.s32.totalorder %s31, 0
    %p462 = por %p460, %p461
    %p463 = scmp.le.s32.totalorder 1, %s25
    %p464 = scmp.lt.s32.totalorder %s25, 3
    %p465 = pnand %p463, %p464
    %p466 = pneg %p465
    // Predicated region
    $region9: #{lcnn_forward.1} parent=5 // pred_check
      _
    $region10: #{lcnn_forward.1} parent=5 // pred_check_branch
      %468 = sbr.rel (%p465) target = $region12
    $region11: #{lcnn_forward.1} parent=5 // pred_region
      %s469 = ssub.s32 %s25, 1
      // Predicated region
      $region13: #{lcnn_forward.1} parent=11 // pred_check
        %p470 = pneg %p72
      $region14: #{lcnn_forward.1} parent=11 // pred_check_branch
        %472 = sbr.rel (%p470) target = $region16
      $region15: #{lcnn_forward.1} parent=11 // pred_region
        _
      $region16: #{lcnn_forward.1} parent=11 // pred_fallthru
        _
      // Predicated region
      $region17: #{lcnn_forward.1} parent=11 // pred_check
        %p473 = pneg %p93
      $region18: #{lcnn_forward.1} parent=11 // pred_check_branch
        %475 = sbr.rel (%p473) target = $region20
      $region19: #{lcnn_forward.1} parent=11 // pred_region
        _
      $region20: #{lcnn_forward.1} parent=11 // pred_fallthru
        _
      // Predicated region
      $region21: #{lcnn_forward.1} parent=11 // pred_check
        %p476 = pneg %p114
      $region22: #{lcnn_forward.1} parent=11 // pred_check_branch
        %478 = sbr.rel (%p476) target = $region24
      $region23: #{lcnn_forward.1} parent=11 // pred_region
        _
      $region24: #{lcnn_forward.1} parent=11 // pred_fallthru
        _
      // Predicated region
      $region25: #{lcnn_forward.1} parent=11 // pred_check
        %p479 = pneg %p135
      $region26: #{lcnn_forward.1} parent=11 // pred_check_branch
        %481 = sbr.rel (%p479) target = $region28
      $region27: #{lcnn_forward.1} parent=11 // pred_region
        _
      $region28: #{lcnn_forward.1} parent=11 // pred_fallthru
        _
      // Predicated region
      $region29: #{lcnn_forward.1} parent=11 // pred_check
        %p482 = pneg %p156
      $region30: #{lcnn_forward.1} parent=11 // pred_check_branch
        %484 = sbr.rel (%p482) target = $region32
      $region31: #{lcnn_forward.1} parent=11 // pred_region
        _
      $region32: #{lcnn_forward.1} parent=11 // pred_fallthru
        _
      // Predicated region
      $region33: #{lcnn_forward.1} parent=11 // pred_check
        %p485 = pneg %p177
      $region34: #{lcnn_forward.1} parent=11 // pred_check_branch
        %487 = sbr.rel (%p485) target = $region36
      $region35: #{lcnn_forward.1} parent=11 // pred_region
        _
      $region36: #{lcnn_forward.1} parent=11 // pred_fallthru
        _
      // Predicated region
      $region37: #{lcnn_forward.1} parent=11 // pred_check
        %p488 = pneg %p198
      $region38: #{lcnn_forward.1} parent=11 // pred_check_branch
        %490 = sbr.rel (%p488) target = $region40
      $region39: #{lcnn_forward.1} parent=11 // pred_region
        _
      $region40: #{lcnn_forward.1} parent=11 // pred_fallthru
        _
      // Predicated region
      $region41: #{lcnn_forward.1} parent=11 // pred_check
        %p491 = pneg %p219
      $region42: #{lcnn_forward.1} parent=11 // pred_check_branch
        %493 = sbr.rel (%p491) target = $region44
      $region43: #{lcnn_forward.1} parent=11 // pred_region
        _
      $region44: #{lcnn_forward.1} parent=11 // pred_fallthru
        _
      // Predicated region
      $region45: #{lcnn_forward.1} parent=11 // pred_check
        %p494 = pneg %p240
      $region46: #{lcnn_forward.1} parent=11 // pred_check_branch
        %496 = sbr.rel (%p494) target = $region48
      $region47: #{lcnn_forward.1} parent=11 // pred_region
        _
      $region48: #{lcnn_forward.1} parent=11 // pred_fallthru
        _
      // Predicated region
      $region49: #{lcnn_forward.1} parent=11 // pred_check
        %p497 = pneg %p261
      $region50: #{lcnn_forward.1} parent=11 // pred_check_branch
        %499 = sbr.rel (%p497) target = $region52
      $region51: #{lcnn_forward.1} parent=11 // pred_region
        _
      $region52: #{lcnn_forward.1} parent=11 // pred_fallthru
        _
      // Predicated region
      $region53: #{lcnn_forward.1} parent=11 // pred_check
        %p500 = pneg %p282
      $region54: #{lcnn_forward.1} parent=11 // pred_check_branch
        %502 = sbr.rel (%p500) target = $region56
      $region55: #{lcnn_forward.1} parent=11 // pred_region
        _
      $region56: #{lcnn_forward.1} parent=11 // pred_fallthru
        _
      // Predicated region
      $region57: #{lcnn_forward.1} parent=11 // pred_check
        %p503 = pneg %p303
      $region58: #{lcnn_forward.1} parent=11 // pred_check_branch
        %505 = sbr.rel (%p503) target = $region60
      $region59: #{lcnn_forward.1} parent=11 // pred_region
        _
      $region60: #{lcnn_forward.1} parent=11 // pred_fallthru
        _
      // Predicated region
      $region61: #{lcnn_forward.1} parent=11 // pred_check
        %p506 = pneg %p324
      $region62: #{lcnn_forward.1} parent=11 // pred_check_branch
        %508 = sbr.rel (%p506) target = $region64
      $region63: #{lcnn_forward.1} parent=11 // pred_region
        _
      $region64: #{lcnn_forward.1} parent=11 // pred_fallthru
        _
      // Predicated region
      $region65: #{lcnn_forward.1} parent=11 // pred_check
        %p509 = pneg %p345
      $region66: #{lcnn_forward.1} parent=11 // pred_check_branch
        %511 = sbr.rel (%p509) target = $region68
      $region67: #{lcnn_forward.1} parent=11 // pred_region
        _
      $region68: #{lcnn_forward.1} parent=11 // pred_fallthru
        _
      // Predicated region
      $region69: #{lcnn_forward.1} parent=11 // pred_check
        %p512 = pneg %p366
      $region70: #{lcnn_forward.1} parent=11 // pred_check_branch
        %514 = sbr.rel (%p512) target = $region72
      $region71: #{lcnn_forward.1} parent=11 // pred_region
        _
      $region72: #{lcnn_forward.1} parent=11 // pred_fallthru
        _
      // Predicated region
      $region73: #{lcnn_forward.1} parent=11 // pred_check
        %p515 = pneg %p387
      $region74: #{lcnn_forward.1} parent=11 // pred_check_branch
        %517 = sbr.rel (%p515) target = $region76
      $region75: #{lcnn_forward.1} parent=11 // pred_region
        _
      $region76: #{lcnn_forward.1} parent=11 // pred_fallthru
        _
      // Predicated region
      $region77: #{lcnn_forward.1} parent=11 // pred_check
        %p518 = pneg %p408
      $region78: #{lcnn_forward.1} parent=11 // pred_check_branch
        %520 = sbr.rel (%p518) target = $region80
      $region79: #{lcnn_forward.1} parent=11 // pred_region
        _
      $region80: #{lcnn_forward.1} parent=11 // pred_fallthru
        _
      // Predicated region
      $region81: #{lcnn_forward.1} parent=11 // pred_check
        %p521 = pneg %p429
      $region82: #{lcnn_forward.1} parent=11 // pred_check_branch
        %523 = sbr.rel (%p521) target = $region84
      $region83: #{lcnn_forward.1} parent=11 // pred_region
        _
      $region84: #{lcnn_forward.1} parent=11 // pred_fallthru
        _
    $region12: #{lcnn_forward.1} parent=5 // pred_fallthru
      _
    %p524 = scmp.lt.s32.totalorder %s25, 2
    // Predicated region
    $region85: #{lcnn_forward.1} parent=5 // pred_check
      %p525 = pneg %p524
    $region86: #{lcnn_forward.1} parent=5 // pred_check_branch
      %527 = sbr.rel (%p525) target = $region88
    $region87: #{lcnn_forward.1} parent=5 // pred_region
      // Predicated region
      $region89: #{lcnn_forward.1} parent=87 // pred_check
        %p528 = pneg %p45
      $region90: #{lcnn_forward.1} parent=87 // pred_check_branch
        %530 = sbr.rel (%p528) target = $region92
      $region91: #{lcnn_forward.1} parent=87 // pred_region
        %p531 = scmp.lt.s32.totalorder %s25, 1
        %s532 = scalar_select %p531, %s25, 1
        %s533 = smul.addr %s532, 128
        %s534 = smul.addr %s533, 4
        %s535 = scalar_lea.vmem %s0, %s534
      $region92: #{lcnn_forward.1} parent=87 // pred_fallthru
        _
    $region88: #{lcnn_forward.1} parent=5 // pred_fallthru
      _
    %p536 = scmp.le.s32.totalorder 1, %s25
    %p537 = scmp.lt.s32.totalorder %s25, 3
    %p538 = pnand %p536, %p537
    %p539 = pneg %p538
    // Predicated region
    $region93: #{lcnn_forward.1} parent=5 // pred_check
      _
    $region94: #{lcnn_forward.1} parent=5 // pred_check_branch
      %541 = sbr.rel (%p538) target = $region96
    $region95: #{lcnn_forward.1} parent=5 // pred_region
      %s542 = ssub.s32 %s25, 1
      %p543 = scmp.lt.s32.totalorder %s30, 1
      %s544 = scalar_select %p543, %s30, 1
      %s545 = smul.addr %s544, 128
      %s546 = smul.addr %s545, 4
      %s547 = scalar_lea.vmem %s0, %s546
      %p548 = pneg %p51
      %p549 = pneg %p48
      %p550 = pneg %p72
      %p551 = pneg %p69
      %p552 = pneg %p93
      %p553 = pneg %p90
      %p554 = pneg %p114
      %p555 = pneg %p111
      %p556 = pneg %p135
      %p557 = pneg %p132
      %p558 = pneg %p156
      %p559 = pneg %p153
      %p560 = pneg %p177
      %p561 = pneg %p174
      %p562 = pneg %p198
      %p563 = pneg %p195
      %p564 = pneg %p219
      %p565 = pneg %p216
      %p566 = pneg %p240
      %p567 = pneg %p237
      %p568 = pneg %p261
      %p569 = pneg %p258
      %p570 = pneg %p282
      %p571 = pneg %p279
      %p572 = pneg %p303
      %p573 = pneg %p300
      %p574 = pneg %p324
      %p575 = pneg %p321
      %p576 = pneg %p345
      %p577 = pneg %p342
      %p578 = pneg %p366
      %p579 = pneg %p363
      %p580 = pneg %p387
      %p581 = pneg %p384
      %p582 = pneg %p408
      %p583 = pneg %p405
      %p584 = pneg %p429
      %p585 = pneg %p426
      %p586 = pneg %p455
      %p587 = pneg %p452
      %p588 = scmp.lt.s32.totalorder %s30, 1
      %s589 = scalar_select %p588, %s30, 1
      %s590 = smul.addr %s589, 2
      %s591 = smul.addr %s590, 2
      %s592 = scalar_lea.vmem %s19, %s591
      %p593 = scmp.lt.s32.totalorder %s30, 1
      %s594 = scalar_select %p593, %s30, 1
      %s595 = smul.addr %s594, 128
      %s596 = smul.addr %s595, 4
      %s597 = scalar_lea.vmem %s0, %s596
      %p598 = scmp.lt.s32.totalorder %s30, 1
      %s599 = scalar_select %p598, %s30, 1
      %s600 = smul.addr %s599, 2
      %s601 = smul.addr %s600, 2
      %s602 = scalar_lea.vmem %s19, %s601
      %v604 = vld [vmem:[%s597] sm:$0xf]
      %v605 = vld [vmem:[%s597 + $0x4] sm:$0xf]
      %v606 = vld [vmem:[%s597 + $0x8] sm:$0xf]
      %v607 = vld [vmem:[%s597 + $0xc] sm:$0xf]
      %v608 = vld [vmem:[%s597 + $0x10] sm:$0xf]
      %v609 = vld [vmem:[%s597 + $0x14] sm:$0xf]
      %v610 = vld [vmem:[%s597 + $0x18] sm:$0xf]
      %v611 = vld [vmem:[%s597 + $0x1c] sm:$0xf]
      %v612 = vld [vmem:[%s597 + $0x20] sm:$0xf]
      %v613 = vld [vmem:[%s597 + $0x24] sm:$0xf]
      %v614 = vld [vmem:[%s597 + $0x28] sm:$0xf]
      %v615 = vld [vmem:[%s597 + $0x2c] sm:$0xf]
      %v616 = vld [vmem:[%s597 + $0x30] sm:$0xf]
      %v617 = vld [vmem:[%s597 + $0x34] sm:$0xf]
      %v618 = vld [vmem:[%s597 + $0x38] sm:$0xf]
      %v619 = vld [vmem:[%s597 + $0x3c] sm:$0xf]
      %v620 = vld [vmem:[%s597 + $0x40] sm:$0xf]
      %v621 = vld [vmem:[%s597 + $0x44] sm:$0xf]
      %v622 = vld [vmem:[%s597 + $0x48] sm:$0xf]
      %v623 = vld [vmem:[%s597 + $0x4c] sm:$0xf]
      %v624 = vld [vmem:[%s597 + $0x50] sm:$0xf]
      %v625 = vld [vmem:[%s597 + $0x54] sm:$0xf]
      %v626 = vld [vmem:[%s597 + $0x58] sm:$0xf]
      %v627 = vld [vmem:[%s597 + $0x5c] sm:$0xf]
      %v628 = vld [vmem:[%s597 + $0x60] sm:$0xf]
      %v629 = vld [vmem:[%s597 + $0x64] sm:$0xf]
      %v630 = vld [vmem:[%s597 + $0x68] sm:$0xf]
      %v631 = vld [vmem:[%s597 + $0x6c] sm:$0xf]
      %v632 = vld [vmem:[%s597 + $0x70] sm:$0xf]
      %v633 = vld [vmem:[%s597 + $0x74] sm:$0xf]
      %v634 = vld [vmem:[%s597 + $0x78] sm:$0xf]
      %v635 = vld [vmem:[%s597 + $0x7c] sm:$0xf]
      %v636 = vld [vmem:[%s597 + $0x80] sm:$0xf]
      %v637 = vld [vmem:[%s597 + $0x84] sm:$0xf]
      %v638 = vld [vmem:[%s597 + $0x88] sm:$0xf]
      %v639 = vld [vmem:[%s597 + $0x8c] sm:$0xf]
      %v640 = vld [vmem:[%s597 + $0x90] sm:$0xf]
      %v641 = vld [vmem:[%s597 + $0x94] sm:$0xf]
      %v642 = vld [vmem:[%s597 + $0x98] sm:$0xf]
      %v643 = vld [vmem:[%s597 + $0x9c] sm:$0xf]
      %v644 = vld [vmem:[%s597 + $0xa0] sm:$0xf]
      %v645 = vld [vmem:[%s597 + $0xa4] sm:$0xf]
      %v646 = vld [vmem:[%s597 + $0xa8] sm:$0xf]
      %v647 = vld [vmem:[%s597 + $0xac] sm:$0xf]
      %v648 = vld [vmem:[%s597 + $0xb0] sm:$0xf]
      %v649 = vld [vmem:[%s597 + $0xb4] sm:$0xf]
      %v650 = vld [vmem:[%s597 + $0xb8] sm:$0xf]
      %v651 = vld [vmem:[%s597 + $0xbc] sm:$0xf]
      %v652 = vld [vmem:[%s597 + $0xc0] sm:$0xf]
      %v653 = vld [vmem:[%s597 + $0xc4] sm:$0xf]
      %v654 = vld [vmem:[%s597 + $0xc8] sm:$0xf]
      %v655 = vld [vmem:[%s597 + $0xcc] sm:$0xf]
      %v656 = vld [vmem:[%s597 + $0xd0] sm:$0xf]
      %v657 = vld [vmem:[%s597 + $0xd4] sm:$0xf]
      %v658 = vld [vmem:[%s597 + $0xd8] sm:$0xf]
      %v659 = vld [vmem:[%s597 + $0xdc] sm:$0xf]
      %v660 = vld [vmem:[%s597 + $0xe0] sm:$0xf]
      %v661 = vld [vmem:[%s597 + $0xe4] sm:$0xf]
      %v662 = vld [vmem:[%s597 + $0xe8] sm:$0xf]
      %v663 = vld [vmem:[%s597 + $0xec] sm:$0xf]
      %v664 = vld [vmem:[%s597 + $0xf0] sm:$0xf]
      %v665 = vld [vmem:[%s597 + $0xf4] sm:$0xf]
      %v666 = vld [vmem:[%s597 + $0xf8] sm:$0xf]
      %v667 = vld [vmem:[%s597 + $0xfc] sm:$0xf]
      %v668 = vld [vmem:[%s597 + $0x100] sm:$0xf]
      %v669 = vld [vmem:[%s597 + $0x104] sm:$0xf]
      %v670 = vld [vmem:[%s597 + $0x108] sm:$0xf]
      %v671 = vld [vmem:[%s597 + $0x10c] sm:$0xf]
      %v672 = vld [vmem:[%s597 + $0x110] sm:$0xf]
      %v673 = vld [vmem:[%s597 + $0x114] sm:$0xf]
      %v674 = vld [vmem:[%s597 + $0x118] sm:$0xf]
      %v675 = vld [vmem:[%s597 + $0x11c] sm:$0xf]
      %v676 = vld [vmem:[%s597 + $0x120] sm:$0xf]
      %v677 = vld [vmem:[%s597 + $0x124] sm:$0xf]
      %v678 = vld [vmem:[%s597 + $0x128] sm:$0xf]
      %v679 = vld [vmem:[%s597 + $0x12c] sm:$0xf]
      %v680 = vld [vmem:[%s597 + $0x130] sm:$0xf]
      %v681 = vld [vmem:[%s597 + $0x134] sm:$0xf]
      %v682 = vld [vmem:[%s597 + $0x138] sm:$0xf]
      %v683 = vld [vmem:[%s597 + $0x13c] sm:$0xf]
      %v684 = vld [vmem:[%s597 + $0x140] sm:$0xf]
      %v685 = vld [vmem:[%s597 + $0x144] sm:$0xf]
      %v686 = vld [vmem:[%s597 + $0x148] sm:$0xf]
      %v687 = vld [vmem:[%s597 + $0x14c] sm:$0xf]
      %v688 = vld [vmem:[%s597 + $0x150] sm:$0xf]
      %v689 = vld [vmem:[%s597 + $0x154] sm:$0xf]
      %v690 = vld [vmem:[%s597 + $0x158] sm:$0xf]
      %v691 = vld [vmem:[%s597 + $0x15c] sm:$0xf]
      %v692 = vld [vmem:[%s597 + $0x160] sm:$0xf]
      %v693 = vld [vmem:[%s597 + $0x164] sm:$0xf]
      %v694 = vld [vmem:[%s597 + $0x168] sm:$0xf]
      %v695 = vld [vmem:[%s597 + $0x16c] sm:$0xf]
      %v696 = vld [vmem:[%s597 + $0x170] sm:$0xf]
      %v697 = vld [vmem:[%s597 + $0x174] sm:$0xf]
      %v698 = vld [vmem:[%s597 + $0x178] sm:$0xf]
      %v699 = vld [vmem:[%s597 + $0x17c] sm:$0xf]
      %v700 = vld [vmem:[%s597 + $0x180] sm:$0xf]
      %v701 = vld [vmem:[%s597 + $0x184] sm:$0xf]
      %v702 = vld [vmem:[%s597 + $0x188] sm:$0xf]
      %v703 = vld [vmem:[%s597 + $0x18c] sm:$0xf]
      %v704 = vld [vmem:[%s597 + $0x190] sm:$0xf]
      %v705 = vld [vmem:[%s597 + $0x194] sm:$0xf]
      %v706 = vld [vmem:[%s597 + $0x198] sm:$0xf]
      %v707 = vld [vmem:[%s597 + $0x19c] sm:$0xf]
      %v708 = vld [vmem:[%s597 + $0x1a0] sm:$0xf]
      %v709 = vld [vmem:[%s597 + $0x1a4] sm:$0xf]
      %v710 = vld [vmem:[%s597 + $0x1a8] sm:$0xf]
      %v711 = vld [vmem:[%s597 + $0x1ac] sm:$0xf]
      %v712 = vld [vmem:[%s597 + $0x1b0] sm:$0xf]
      %v713 = vld [vmem:[%s597 + $0x1b4] sm:$0xf]
      %v714 = vld [vmem:[%s597 + $0x1b8] sm:$0xf]
      %v715 = vld [vmem:[%s597 + $0x1bc] sm:$0xf]
      %v716 = vld [vmem:[%s597 + $0x1c0] sm:$0xf]
      %v717 = vld [vmem:[%s597 + $0x1c4] sm:$0xf]
      %v718 = vld [vmem:[%s597 + $0x1c8] sm:$0xf]
      %v719 = vld [vmem:[%s597 + $0x1cc] sm:$0xf]
      %v720 = vld [vmem:[%s597 + $0x1d0] sm:$0xf]
      %v721 = vld [vmem:[%s597 + $0x1d4] sm:$0xf]
      %v722 = vld [vmem:[%s597 + $0x1d8] sm:$0xf]
      %v723 = vld [vmem:[%s597 + $0x1dc] sm:$0xf]
      %v724 = vld [vmem:[%s597 + $0x1e0] sm:$0xf]
      %v725 = vld [vmem:[%s597 + $0x1e4] sm:$0xf]
      %v726 = vld [vmem:[%s597 + $0x1e8] sm:$0xf]
      %v727 = vld [vmem:[%s597 + $0x1ec] sm:$0xf]
      %v728 = vld [vmem:[%s597 + $0x1f0] sm:$0xf]
      %v729 = vld [vmem:[%s597 + $0x1f4] sm:$0xf]
      %v730 = vld [vmem:[%s597 + $0x1f8] sm:$0xf]
      %v731 = vld [vmem:[%s597 + $0x1fc] sm:$0xf]
      %v732 = vld [vmem:[%s1] sm:$0xf]
      %v733 = vld [vmem:[%s1 + $0x4] sm:$0xf]
      %v734 = vld [vmem:[%s1 + $0x8] sm:$0xf]
      %v735 = vld [vmem:[%s1 + $0xc] sm:$0xf]
      %v736 = vld [vmem:[%s10] sm:$0x1]
      %v738 = vlaneseq
      %v739 = vshrl.u32 %v738, 7
      %v740 = vsub.s32 0, %v739
      %v741 = vrot.slane %v736, %v740
      %v871 = vunpack.c.l.b16 %v604
      %v872 = vunpack.c.l.b16 %v605
      %v873 = vunpack.c.l.b16 %v606
      %v874 = vunpack.c.l.b16 %v607
      %v875 = vunpack.c.l.b16 %v608
      %v876 = vunpack.c.l.b16 %v609
      %v877 = vunpack.c.l.b16 %v610
      %v878 = vunpack.c.l.b16 %v611
      %v879 = vunpack.c.l.b16 %v612
      %v880 = vunpack.c.l.b16 %v613
      %v881 = vunpack.c.l.b16 %v614
      %v882 = vunpack.c.l.b16 %v615
      %v883 = vunpack.c.l.b16 %v616
      %v884 = vunpack.c.l.b16 %v617
      %v885 = vunpack.c.l.b16 %v618
      %v886 = vunpack.c.l.b16 %v619
      %v887 = vunpack.c.l.b16 %v620
      %v888 = vunpack.c.l.b16 %v621
      %v889 = vunpack.c.l.b16 %v622
      %v890 = vunpack.c.l.b16 %v623
      %v891 = vunpack.c.l.b16 %v624
      %v892 = vunpack.c.l.b16 %v625
      %v893 = vunpack.c.l.b16 %v626
      %v894 = vunpack.c.l.b16 %v627
      %v895 = vunpack.c.l.b16 %v628
      %v896 = vunpack.c.l.b16 %v629
      %v897 = vunpack.c.l.b16 %v630
      %v898 = vunpack.c.l.b16 %v631
      %v899 = vunpack.c.l.b16 %v632
      %v900 = vunpack.c.l.b16 %v633
      %v901 = vunpack.c.l.b16 %v634
      %v902 = vunpack.c.l.b16 %v635
      %v903 = vunpack.c.l.b16 %v636
      %v904 = vunpack.c.l.b16 %v637
      %v905 = vunpack.c.l.b16 %v638
      %v906 = vunpack.c.l.b16 %v639
      %v907 = vunpack.c.l.b16 %v640
      %v908 = vunpack.c.l.b16 %v641
      %v909 = vunpack.c.l.b16 %v642
      %v910 = vunpack.c.l.b16 %v643
      %v911 = vunpack.c.l.b16 %v644
      %v912 = vunpack.c.l.b16 %v645
      %v913 = vunpack.c.l.b16 %v646
      %v914 = vunpack.c.l.b16 %v647
      %v915 = vunpack.c.l.b16 %v648
      %v916 = vunpack.c.l.b16 %v649
      %v917 = vunpack.c.l.b16 %v650
      %v918 = vunpack.c.l.b16 %v651
      %v919 = vunpack.c.l.b16 %v652
      %v920 = vunpack.c.l.b16 %v653
      %v921 = vunpack.c.l.b16 %v654
      %v922 = vunpack.c.l.b16 %v655
      %v923 = vunpack.c.l.b16 %v656
      %v924 = vunpack.c.l.b16 %v657
      %v925 = vunpack.c.l.b16 %v658
      %v926 = vunpack.c.l.b16 %v659
      %v927 = vunpack.c.l.b16 %v660
      %v928 = vunpack.c.l.b16 %v661
      %v929 = vunpack.c.l.b16 %v662
      %v930 = vunpack.c.l.b16 %v663
      %v931 = vunpack.c.l.b16 %v664
      %v932 = vunpack.c.l.b16 %v665
      %v933 = vunpack.c.l.b16 %v666
      %v934 = vunpack.c.l.b16 %v667
      %v935 = vunpack.c.l.b16 %v668
      %v936 = vunpack.c.l.b16 %v669
      %v937 = vunpack.c.l.b16 %v670
      %v938 = vunpack.c.l.b16 %v671
      %v939 = vunpack.c.l.b16 %v672
      %v940 = vunpack.c.l.b16 %v673
      %v941 = vunpack.c.l.b16 %v674
      %v942 = vunpack.c.l.b16 %v675
      %v943 = vunpack.c.l.b16 %v676
      %v944 = vunpack.c.l.b16 %v677
      %v945 = vunpack.c.l.b16 %v678
      %v946 = vunpack.c.l.b16 %v679
      %v947 = vunpack.c.l.b16 %v680
      %v948 = vunpack.c.l.b16 %v681
      %v949 = vunpack.c.l.b16 %v682
      %v950 = vunpack.c.l.b16 %v683
      %v951 = vunpack.c.l.b16 %v684
      %v952 = vunpack.c.l.b16 %v685
      %v953 = vunpack.c.l.b16 %v686
      %v954 = vunpack.c.l.b16 %v687
      %v955 = vunpack.c.l.b16 %v688
      %v956 = vunpack.c.l.b16 %v689
      %v957 = vunpack.c.l.b16 %v690
      %v958 = vunpack.c.l.b16 %v691
      %v959 = vunpack.c.l.b16 %v692
      %v960 = vunpack.c.l.b16 %v693
      %v961 = vunpack.c.l.b16 %v694
      %v962 = vunpack.c.l.b16 %v695
      %v963 = vunpack.c.l.b16 %v696
      %v964 = vunpack.c.l.b16 %v697
      %v965 = vunpack.c.l.b16 %v698
      %v966 = vunpack.c.l.b16 %v699
      %v967 = vunpack.c.l.b16 %v700
      %v968 = vunpack.c.l.b16 %v701
      %v969 = vunpack.c.l.b16 %v702
      %v970 = vunpack.c.l.b16 %v703
      %v971 = vunpack.c.l.b16 %v704
      %v972 = vunpack.c.l.b16 %v705
      %v973 = vunpack.c.l.b16 %v706
      %v974 = vunpack.c.l.b16 %v707
      %v975 = vunpack.c.l.b16 %v708
      %v976 = vunpack.c.l.b16 %v709
      %v977 = vunpack.c.l.b16 %v710
      %v978 = vunpack.c.l.b16 %v711
      %v979 = vunpack.c.l.b16 %v712
      %v980 = vunpack.c.l.b16 %v713
      %v981 = vunpack.c.l.b16 %v714
      %v982 = vunpack.c.l.b16 %v715
      %v983 = vunpack.c.l.b16 %v716
      %v984 = vunpack.c.l.b16 %v717
      %v985 = vunpack.c.l.b16 %v718
      %v986 = vunpack.c.l.b16 %v719
      %v987 = vunpack.c.l.b16 %v720
      %v988 = vunpack.c.l.b16 %v721
      %v989 = vunpack.c.l.b16 %v722
      %v990 = vunpack.c.l.b16 %v723
      %v991 = vunpack.c.l.b16 %v724
      %v992 = vunpack.c.l.b16 %v725
      %v993 = vunpack.c.l.b16 %v726
      %v994 = vunpack.c.l.b16 %v727
      %v995 = vunpack.c.l.b16 %v728
      %v996 = vunpack.c.l.b16 %v729
      %v997 = vunpack.c.l.b16 %v730
      %v998 = vunpack.c.l.b16 %v731
      %v999 = vpack.c.b16 %v872, %v871
      %v1000 = vpack.c.b16 %v874, %v873
      %v1001 = vpack.c.b16 %v876, %v875
      %v1002 = vpack.c.b16 %v878, %v877
      %v1003 = vpack.c.b16 %v880, %v879
      %v1004 = vpack.c.b16 %v882, %v881
      %v1005 = vpack.c.b16 %v884, %v883
      %v1006 = vpack.c.b16 %v886, %v885
      %v1007 = vpack.c.b16 %v888, %v887
      %v1008 = vpack.c.b16 %v890, %v889
      %v1009 = vpack.c.b16 %v892, %v891
      %v1010 = vpack.c.b16 %v894, %v893
      %v1011 = vpack.c.b16 %v896, %v895
      %v1012 = vpack.c.b16 %v898, %v897
      %v1013 = vpack.c.b16 %v900, %v899
      %v1014 = vpack.c.b16 %v902, %v901
      %v1015 = vpack.c.b16 %v904, %v903
      %v1016 = vpack.c.b16 %v906, %v905
      %v1017 = vpack.c.b16 %v908, %v907
      %v1018 = vpack.c.b16 %v910, %v909
      %v1019 = vpack.c.b16 %v912, %v911
      %v1020 = vpack.c.b16 %v914, %v913
      %v1021 = vpack.c.b16 %v916, %v915
      %v1022 = vpack.c.b16 %v918, %v917
      %v1023 = vpack.c.b16 %v920, %v919
      %v1024 = vpack.c.b16 %v922, %v921
      %v1025 = vpack.c.b16 %v924, %v923
      %v1026 = vpack.c.b16 %v926, %v925
      %v1027 = vpack.c.b16 %v928, %v927
      %v1028 = vpack.c.b16 %v930, %v929
      %v1029 = vpack.c.b16 %v932, %v931
      %v1030 = vpack.c.b16 %v934, %v933
      %v1031 = vpack.c.b16 %v936, %v935
      %v1032 = vpack.c.b16 %v938, %v937
      %v1033 = vpack.c.b16 %v940, %v939
      %v1034 = vpack.c.b16 %v942, %v941
      %v1035 = vpack.c.b16 %v944, %v943
      %v1036 = vpack.c.b16 %v946, %v945
      %v1037 = vpack.c.b16 %v948, %v947
      %v1038 = vpack.c.b16 %v950, %v949
      %v1039 = vpack.c.b16 %v952, %v951
      %v1040 = vpack.c.b16 %v954, %v953
      %v1041 = vpack.c.b16 %v956, %v955
      %v1042 = vpack.c.b16 %v958, %v957
      %v1043 = vpack.c.b16 %v960, %v959
      %v1044 = vpack.c.b16 %v962, %v961
      %v1045 = vpack.c.b16 %v964, %v963
      %v1046 = vpack.c.b16 %v966, %v965
      %v1047 = vpack.c.b16 %v968, %v967
      %v1048 = vpack.c.b16 %v970, %v969
      %v1049 = vpack.c.b16 %v972, %v971
      %v1050 = vpack.c.b16 %v974, %v973
      %v1051 = vpack.c.b16 %v976, %v975
      %v1052 = vpack.c.b16 %v978, %v977
      %v1053 = vpack.c.b16 %v980, %v979
      %v1054 = vpack.c.b16 %v982, %v981
      %v1055 = vpack.c.b16 %v984, %v983
      %v1056 = vpack.c.b16 %v986, %v985
      %v1057 = vpack.c.b16 %v988, %v987
      %v1058 = vpack.c.b16 %v990, %v989
      %v1059 = vpack.c.b16 %v992, %v991
      %v1060 = vpack.c.b16 %v994, %v993
      %v1061 = vpack.c.b16 %v996, %v995
      %v1062 = vpack.c.b16 %v998, %v997
      %v1067 = vunpack.c.l.b16 %v732
      %v1068 = vunpack.c.l.b16 %v733
      %v1069 = vunpack.c.l.b16 %v734
      %v1070 = vunpack.c.l.b16 %v735
      %v1071 = vpack.c.b16 %v1068, %v1067
      %v1072 = vpack.c.b16 %v1070, %v1069
      %vm1075 = vcmask 261120
      %v1077 = vsel %vm1075, %v999, 0
      %v1080 = vsel %vm1075, %v1000, 0
      %v1083 = vsel %vm1075, %v1001, 0
      %v1086 = vsel %vm1075, %v1002, 0
      %v1089 = vsel %vm1075, %v1003, 0
      %v1092 = vsel %vm1075, %v1004, 0
      %v1095 = vsel %vm1075, %v1005, 0
      %v1098 = vsel %vm1075, %v1006, 0
      %v1101 = vsel %vm1075, %v1007, 0
      %v1104 = vsel %vm1075, %v1008, 0
      %v1107 = vsel %vm1075, %v1009, 0
      %v1110 = vsel %vm1075, %v1010, 0
      %v1113 = vsel %vm1075, %v1011, 0
      %v1116 = vsel %vm1075, %v1012, 0
      %v1119 = vsel %vm1075, %v1013, 0
      %v1122 = vsel %vm1075, %v1014, 0
      %v1125 = vsel %vm1075, %v1015, 0
      %v1128 = vsel %vm1075, %v1016, 0
      %v1131 = vsel %vm1075, %v1017, 0
      %v1134 = vsel %vm1075, %v1018, 0
      %v1137 = vsel %vm1075, %v1019, 0
      %v1140 = vsel %vm1075, %v1020, 0
      %v1143 = vsel %vm1075, %v1021, 0
      %v1146 = vsel %vm1075, %v1022, 0
      %v1149 = vsel %vm1075, %v1023, 0
      %v1152 = vsel %vm1075, %v1024, 0
      %v1155 = vsel %vm1075, %v1025, 0
      %v1158 = vsel %vm1075, %v1026, 0
      %v1161 = vsel %vm1075, %v1027, 0
      %v1164 = vsel %vm1075, %v1028, 0
      %v1167 = vsel %vm1075, %v1029, 0
      %v1170 = vsel %vm1075, %v1030, 0
      %v1173 = vsel %vm1075, %v1031, 0
      %v1176 = vsel %vm1075, %v1032, 0
      %v1179 = vsel %vm1075, %v1033, 0
      %v1182 = vsel %vm1075, %v1034, 0
      %v1185 = vsel %vm1075, %v1035, 0
      %v1188 = vsel %vm1075, %v1036, 0
      %v1191 = vsel %vm1075, %v1037, 0
      %v1194 = vsel %vm1075, %v1038, 0
      %v1197 = vsel %vm1075, %v1039, 0
      %v1200 = vsel %vm1075, %v1040, 0
      %v1203 = vsel %vm1075, %v1041, 0
      %v1206 = vsel %vm1075, %v1042, 0
      %v1209 = vsel %vm1075, %v1043, 0
      %v1212 = vsel %vm1075, %v1044, 0
      %v1215 = vsel %vm1075, %v1045, 0
      %v1218 = vsel %vm1075, %v1046, 0
      %v1221 = vsel %vm1075, %v1047, 0
      %v1224 = vsel %vm1075, %v1048, 0
      %v1227 = vsel %vm1075, %v1049, 0
      %v1230 = vsel %vm1075, %v1050, 0
      %v1233 = vsel %vm1075, %v1051, 0
      %v1236 = vsel %vm1075, %v1052, 0
      %v1239 = vsel %vm1075, %v1053, 0
      %v1242 = vsel %vm1075, %v1054, 0
      %v1245 = vsel %vm1075, %v1055, 0
      %v1248 = vsel %vm1075, %v1056, 0
      %v1251 = vsel %vm1075, %v1057, 0
      %v1254 = vsel %vm1075, %v1058, 0
      %v1257 = vsel %vm1075, %v1059, 0
      %v1260 = vsel %vm1075, %v1060, 0
      %v1263 = vsel %vm1075, %v1061, 0
      %v1266 = vsel %vm1075, %v1062, 0
      %1268 = vmatprep.subr.bf16.mxu0 0
      %1269 = vmatpush1.bf16.msra.mxu0 0
      %1270 = vmatprep.subr.bf16.mxu0 0
      %1271 = vmatpush1.bf16.msra.mxu0 0
      %1272 = vmatprep.subr.bf16.mxu0 0
      %1273 = vmatpush1.bf16.msra.mxu0 0
      %1274 = vmatprep.subr.bf16.mxu0 0
      %1275 = vmatpush1.bf16.msra.mxu0 0
      %1276 = vmatprep.subr.bf16.mxu0 0
      %1277 = vmatpush1.bf16.msra.mxu0 0
      %1278 = vmatprep.subr.bf16.mxu0 0
      %1279 = vmatpush1.bf16.msra.mxu0 0
      %1280 = vmatprep.subr.bf16.mxu0 0
      %1281 = vmatpush1.bf16.msra.mxu0 %v1072
      %1282 = vmatprep.subr.bf16.mxu0 0
      %1283 = vmatpush1.bf16.msra.mxu0 %v1071
      %1284 = vmatprep.subr.bf16.mxu0 0
      %1285 = vmatpush2.bf16.msra.mxu0 0
      %1286 = vmatprep.subr.bf16.mxu0 0
      %1287 = vmatpush2.bf16.msra.mxu0 0
      %1288 = vmatprep.subr.bf16.mxu0 0
      %1289 = vmatpush2.bf16.msra.mxu0 0
      %1290 = vmatprep.subr.bf16.mxu0 0
      %1291 = vmatpush2.bf16.msra.mxu0 0
      %1292 = vmatprep.subr.bf16.mxu0 0
      %1293 = vmatpush2.bf16.msra.mxu0 0
      %1294 = vmatprep.subr.bf16.mxu0 0
      %1295 = vmatpush2.bf16.msra.mxu0 0
      %1296 = vmatprep.subr.bf16.mxu0 0
      %1297 = vmatpush2.bf16.msra.mxu0 0
      %1298 = vmatprep.subr.bf16.mxu0 0
      %1299 = vmatpush2.bf16.msra.mxu0 0
      %1300 = vmatprep.mubr.bf16.mxu0 0
      %1301 = vmatmul.mubr.bf16.gmra.mxu0 %v1077
      %v1302 = vpop.f32.mrf.mxu0
      %v1303 = vadd.f32 %v741, %v1302
      %v1304 = vpop.f32.mrf.mxu0
      %v1305 = vpop.f32.mrf.mxu0
      %v1306 = vadd.f32 %v741, %v1305
      %v1307 = vpop.f32.mrf.mxu0
      %1308 = vmatprep.mubr.bf16.mxu0 0
      %1309 = vmatmul.mubr.bf16.gmra.mxu0 %v1080
      %v1310 = vpop.f32.mrf.mxu0
      %v1311 = vadd.f32 %v741, %v1310
      %v1312 = vpop.f32.mrf.mxu0
      %v1313 = vpop.f32.mrf.mxu0
      %v1314 = vadd.f32 %v741, %v1313
      %v1315 = vpop.f32.mrf.mxu0
      %1316 = vmatprep.mubr.bf16.mxu0 0
      %1317 = vmatmul.mubr.bf16.gmra.mxu0 %v1083
      %v1318 = vpop.f32.mrf.mxu0
      %v1319 = vadd.f32 %v741, %v1318
      %v1320 = vpop.f32.mrf.mxu0
      %v1321 = vpop.f32.mrf.mxu0
      %v1322 = vadd.f32 %v741, %v1321
      %v1323 = vpop.f32.mrf.mxu0
      %1324 = vmatprep.mubr.bf16.mxu0 0
      %1325 = vmatmul.mubr.bf16.gmra.mxu0 %v1086
      %v1326 = vpop.f32.mrf.mxu0
      %v1327 = vadd.f32 %v741, %v1326
      %v1328 = vpop.f32.mrf.mxu0
      %v1329 = vpop.f32.mrf.mxu0
      %v1330 = vadd.f32 %v741, %v1329
      %v1331 = vpop.f32.mrf.mxu0
      %1332 = vmatprep.mubr.bf16.mxu0 0
      %1333 = vmatmul.mubr.bf16.gmra.mxu0 %v1089
      %v1334 = vpop.f32.mrf.mxu0
      %v1335 = vadd.f32 %v741, %v1334
      %v1336 = vpop.f32.mrf.mxu0
      %v1337 = vpop.f32.mrf.mxu0
      %v1338 = vadd.f32 %v741, %v1337
      %v1339 = vpop.f32.mrf.mxu0
      %1340 = vmatprep.mubr.bf16.mxu0 0
      %1341 = vmatmul.mubr.bf16.gmra.mxu0 %v1092
      %v1342 = vpop.f32.mrf.mxu0
      %v1343 = vadd.f32 %v741, %v1342
      %v1344 = vpop.f32.mrf.mxu0
      %v1345 = vpop.f32.mrf.mxu0
      %v1346 = vadd.f32 %v741, %v1345
      %v1347 = vpop.f32.mrf.mxu0
      %1348 = vmatprep.mubr.bf16.mxu0 0
      %1349 = vmatmul.mubr.bf16.gmra.mxu0 %v1095
      %v1350 = vpop.f32.mrf.mxu0
      %v1351 = vadd.f32 %v741, %v1350
      %v1352 = vpop.f32.mrf.mxu0
      %v1353 = vpop.f32.mrf.mxu0
      %v1354 = vadd.f32 %v741, %v1353
      %v1355 = vpop.f32.mrf.mxu0
      %1356 = vmatprep.mubr.bf16.mxu0 0
      %1357 = vmatmul.mubr.bf16.gmra.mxu0 %v1098
      %v1358 = vpop.f32.mrf.mxu0
      %v1359 = vadd.f32 %v741, %v1358
      %v1360 = vpop.f32.mrf.mxu0
      %v1361 = vpop.f32.mrf.mxu0
      %v1362 = vadd.f32 %v741, %v1361
      %v1363 = vpop.f32.mrf.mxu0
      %1364 = vmatprep.mubr.bf16.mxu0 0
      %1365 = vmatmul.mubr.bf16.gmra.mxu0 %v1101
      %v1366 = vpop.f32.mrf.mxu0
      %v1367 = vadd.f32 %v741, %v1366
      %v1368 = vpop.f32.mrf.mxu0
      %v1369 = vpop.f32.mrf.mxu0
      %v1370 = vadd.f32 %v741, %v1369
      %v1371 = vpop.f32.mrf.mxu0
      %1372 = vmatprep.mubr.bf16.mxu0 0
      %1373 = vmatmul.mubr.bf16.gmra.mxu0 %v1104
      %v1374 = vpop.f32.mrf.mxu0
      %v1375 = vadd.f32 %v741, %v1374
      %v1376 = vpop.f32.mrf.mxu0
      %v1377 = vpop.f32.mrf.mxu0
      %v1378 = vadd.f32 %v741, %v1377
      %v1379 = vpop.f32.mrf.mxu0
      %1380 = vmatprep.mubr.bf16.mxu0 0
      %1381 = vmatmul.mubr.bf16.gmra.mxu0 %v1107
      %v1382 = vpop.f32.mrf.mxu0
      %v1383 = vadd.f32 %v741, %v1382
      %v1384 = vpop.f32.mrf.mxu0
      %v1385 = vpop.f32.mrf.mxu0
      %v1386 = vadd.f32 %v741, %v1385
      %v1387 = vpop.f32.mrf.mxu0
      %1388 = vmatprep.mubr.bf16.mxu0 0
      %1389 = vmatmul.mubr.bf16.gmra.mxu0 %v1110
      %v1390 = vpop.f32.mrf.mxu0
      %v1391 = vadd.f32 %v741, %v1390
      %v1392 = vpop.f32.mrf.mxu0
      %v1393 = vpop.f32.mrf.mxu0
      %v1394 = vadd.f32 %v741, %v1393
      %v1395 = vpop.f32.mrf.mxu0
      %1396 = vmatprep.mubr.bf16.mxu0 0
      %1397 = vmatmul.mubr.bf16.gmra.mxu0 %v1113
      %v1398 = vpop.f32.mrf.mxu0
      %v1399 = vadd.f32 %v741, %v1398
      %v1400 = vpop.f32.mrf.mxu0
      %v1401 = vpop.f32.mrf.mxu0
      %v1402 = vadd.f32 %v741, %v1401
      %v1403 = vpop.f32.mrf.mxu0
      %1404 = vmatprep.mubr.bf16.mxu0 0
      %1405 = vmatmul.mubr.bf16.gmra.mxu0 %v1116
      %v1406 = vpop.f32.mrf.mxu0
      %v1407 = vadd.f32 %v741, %v1406
      %v1408 = vpop.f32.mrf.mxu0
      %v1409 = vpop.f32.mrf.mxu0
      %v1410 = vadd.f32 %v741, %v1409
      %v1411 = vpop.f32.mrf.mxu0
      %1412 = vmatprep.mubr.bf16.mxu0 0
      %1413 = vmatmul.mubr.bf16.gmra.mxu0 %v1119
      %v1414 = vpop.f32.mrf.mxu0
      %v1415 = vadd.f32 %v741, %v1414
      %v1416 = vpop.f32.mrf.mxu0
      %v1417 = vpop.f32.mrf.mxu0
      %v1418 = vadd.f32 %v741, %v1417
      %v1419 = vpop.f32.mrf.mxu0
      %1420 = vmatprep.mubr.bf16.mxu0 0
      %1421 = vmatmul.mubr.bf16.gmra.mxu0 %v1122
      %v1422 = vpop.f32.mrf.mxu0
      %v1423 = vadd.f32 %v741, %v1422
      %v1424 = vpop.f32.mrf.mxu0
      %v1425 = vpop.f32.mrf.mxu0
      %v1426 = vadd.f32 %v741, %v1425
      %v1427 = vpop.f32.mrf.mxu0
      %1428 = vmatprep.mubr.bf16.mxu0 0
      %1429 = vmatmul.mubr.bf16.gmra.mxu0 %v1125
      %v1430 = vpop.f32.mrf.mxu0
      %v1431 = vadd.f32 %v741, %v1430
      %v1432 = vpop.f32.mrf.mxu0
      %v1433 = vpop.f32.mrf.mxu0
      %v1434 = vadd.f32 %v741, %v1433
      %v1435 = vpop.f32.mrf.mxu0
      %1436 = vmatprep.mubr.bf16.mxu0 0
      %1437 = vmatmul.mubr.bf16.gmra.mxu0 %v1128
      %v1438 = vpop.f32.mrf.mxu0
      %v1439 = vadd.f32 %v741, %v1438
      %v1440 = vpop.f32.mrf.mxu0
      %v1441 = vpop.f32.mrf.mxu0
      %v1442 = vadd.f32 %v741, %v1441
      %v1443 = vpop.f32.mrf.mxu0
      %1444 = vmatprep.mubr.bf16.mxu0 0
      %1445 = vmatmul.mubr.bf16.gmra.mxu0 %v1131
      %v1446 = vpop.f32.mrf.mxu0
      %v1447 = vadd.f32 %v741, %v1446
      %v1448 = vpop.f32.mrf.mxu0
      %v1449 = vpop.f32.mrf.mxu0
      %v1450 = vadd.f32 %v741, %v1449
      %v1451 = vpop.f32.mrf.mxu0
      %1452 = vmatprep.mubr.bf16.mxu0 0
      %1453 = vmatmul.mubr.bf16.gmra.mxu0 %v1134
      %v1454 = vpop.f32.mrf.mxu0
      %v1455 = vadd.f32 %v741, %v1454
      %v1456 = vpop.f32.mrf.mxu0
      %v1457 = vpop.f32.mrf.mxu0
      %v1458 = vadd.f32 %v741, %v1457
      %v1459 = vpop.f32.mrf.mxu0
      %1460 = vmatprep.mubr.bf16.mxu0 0
      %1461 = vmatmul.mubr.bf16.gmra.mxu0 %v1137
      %v1462 = vpop.f32.mrf.mxu0
      %v1463 = vadd.f32 %v741, %v1462
      %v1464 = vpop.f32.mrf.mxu0
      %v1465 = vpop.f32.mrf.mxu0
      %v1466 = vadd.f32 %v741, %v1465
      %v1467 = vpop.f32.mrf.mxu0
      %1468 = vmatprep.mubr.bf16.mxu0 0
      %1469 = vmatmul.mubr.bf16.gmra.mxu0 %v1140
      %v1470 = vpop.f32.mrf.mxu0
      %v1471 = vadd.f32 %v741, %v1470
      %v1472 = vpop.f32.mrf.mxu0
      %v1473 = vpop.f32.mrf.mxu0
      %v1474 = vadd.f32 %v741, %v1473
      %v1475 = vpop.f32.mrf.mxu0
      %1476 = vmatprep.mubr.bf16.mxu0 0
      %1477 = vmatmul.mubr.bf16.gmra.mxu0 %v1143
      %v1478 = vpop.f32.mrf.mxu0
      %v1479 = vadd.f32 %v741, %v1478
      %v1480 = vpop.f32.mrf.mxu0
      %v1481 = vpop.f32.mrf.mxu0
      %v1482 = vadd.f32 %v741, %v1481
      %v1483 = vpop.f32.mrf.mxu0
      %1484 = vmatprep.mubr.bf16.mxu0 0
      %1485 = vmatmul.mubr.bf16.gmra.mxu0 %v1146
      %v1486 = vpop.f32.mrf.mxu0
      %v1487 = vadd.f32 %v741, %v1486
      %v1488 = vpop.f32.mrf.mxu0
      %v1489 = vpop.f32.mrf.mxu0
      %v1490 = vadd.f32 %v741, %v1489
      %v1491 = vpop.f32.mrf.mxu0
      %1492 = vmatprep.mubr.bf16.mxu0 0
      %1493 = vmatmul.mubr.bf16.gmra.mxu0 %v1149
      %v1494 = vpop.f32.mrf.mxu0
      %v1495 = vadd.f32 %v741, %v1494
      %v1496 = vpop.f32.mrf.mxu0
      %v1497 = vpop.f32.mrf.mxu0
      %v1498 = vadd.f32 %v741, %v1497
      %v1499 = vpop.f32.mrf.mxu0
      %1500 = vmatprep.mubr.bf16.mxu0 0
      %1501 = vmatmul.mubr.bf16.gmra.mxu0 %v1152
      %v1502 = vpop.f32.mrf.mxu0
      %v1503 = vadd.f32 %v741, %v1502
      %v1504 = vpop.f32.mrf.mxu0
      %v1505 = vpop.f32.mrf.mxu0
      %v1506 = vadd.f32 %v741, %v1505
      %v1507 = vpop.f32.mrf.mxu0
      %1508 = vmatprep.mubr.bf16.mxu0 0
      %1509 = vmatmul.mubr.bf16.gmra.mxu0 %v1155
      %v1510 = vpop.f32.mrf.mxu0
      %v1511 = vadd.f32 %v741, %v1510
      %v1512 = vpop.f32.mrf.mxu0
      %v1513 = vpop.f32.mrf.mxu0
      %v1514 = vadd.f32 %v741, %v1513
      %v1515 = vpop.f32.mrf.mxu0
      %1516 = vmatprep.mubr.bf16.mxu0 0
      %1517 = vmatmul.mubr.bf16.gmra.mxu0 %v1158
      %v1518 = vpop.f32.mrf.mxu0
      %v1519 = vadd.f32 %v741, %v1518
      %v1520 = vpop.f32.mrf.mxu0
      %v1521 = vpop.f32.mrf.mxu0
      %v1522 = vadd.f32 %v741, %v1521
      %v1523 = vpop.f32.mrf.mxu0
      %1524 = vmatprep.mubr.bf16.mxu0 0
      %1525 = vmatmul.mubr.bf16.gmra.mxu0 %v1161
      %v1526 = vpop.f32.mrf.mxu0
      %v1527 = vadd.f32 %v741, %v1526
      %v1528 = vpop.f32.mrf.mxu0
      %v1529 = vpop.f32.mrf.mxu0
      %v1530 = vadd.f32 %v741, %v1529
      %v1531 = vpop.f32.mrf.mxu0
      %1532 = vmatprep.mubr.bf16.mxu0 0
      %1533 = vmatmul.mubr.bf16.gmra.mxu0 %v1164
      %v1534 = vpop.f32.mrf.mxu0
      %v1535 = vadd.f32 %v741, %v1534
      %v1536 = vpop.f32.mrf.mxu0
      %v1537 = vpop.f32.mrf.mxu0
      %v1538 = vadd.f32 %v741, %v1537
      %v1539 = vpop.f32.mrf.mxu0
      %1540 = vmatprep.mubr.bf16.mxu0 0
      %1541 = vmatmul.mubr.bf16.gmra.mxu0 %v1167
      %v1542 = vpop.f32.mrf.mxu0
      %v1543 = vadd.f32 %v741, %v1542
      %v1544 = vpop.f32.mrf.mxu0
      %v1545 = vpop.f32.mrf.mxu0
      %v1546 = vadd.f32 %v741, %v1545
      %v1547 = vpop.f32.mrf.mxu0
      %1548 = vmatprep.mubr.bf16.mxu0 0
      %1549 = vmatmul.mubr.bf16.gmra.mxu0 %v1170
      %v1550 = vpop.f32.mrf.mxu0
      %v1551 = vadd.f32 %v741, %v1550
      %v1552 = vpop.f32.mrf.mxu0
      %v1553 = vpop.f32.mrf.mxu0
      %v1554 = vadd.f32 %v741, %v1553
      %v1555 = vpop.f32.mrf.mxu0
      %1556 = vmatprep.mubr.bf16.mxu0 0
      %1557 = vmatmul.mubr.bf16.gmra.mxu0 %v1173
      %v1558 = vpop.f32.mrf.mxu0
      %v1559 = vadd.f32 %v741, %v1558
      %v1560 = vpop.f32.mrf.mxu0
      %v1561 = vpop.f32.mrf.mxu0
      %v1562 = vadd.f32 %v741, %v1561
      %v1563 = vpop.f32.mrf.mxu0
      %1564 = vmatprep.mubr.bf16.mxu0 0
      %1565 = vmatmul.mubr.bf16.gmra.mxu0 %v1176
      %v1566 = vpop.f32.mrf.mxu0
      %v1567 = vadd.f32 %v741, %v1566
      %v1568 = vpop.f32.mrf.mxu0
      %v1569 = vpop.f32.mrf.mxu0
      %v1570 = vadd.f32 %v741, %v1569
      %v1571 = vpop.f32.mrf.mxu0
      %1572 = vmatprep.mubr.bf16.mxu0 0
      %1573 = vmatmul.mubr.bf16.gmra.mxu0 %v1179
      %v1574 = vpop.f32.mrf.mxu0
      %v1575 = vadd.f32 %v741, %v1574
      %v1576 = vpop.f32.mrf.mxu0
      %v1577 = vpop.f32.mrf.mxu0
      %v1578 = vadd.f32 %v741, %v1577
      %v1579 = vpop.f32.mrf.mxu0
      %1580 = vmatprep.mubr.bf16.mxu0 0
      %1581 = vmatmul.mubr.bf16.gmra.mxu0 %v1182
      %v1582 = vpop.f32.mrf.mxu0
      %v1583 = vadd.f32 %v741, %v1582
      %v1584 = vpop.f32.mrf.mxu0
      %v1585 = vpop.f32.mrf.mxu0
      %v1586 = vadd.f32 %v741, %v1585
      %v1587 = vpop.f32.mrf.mxu0
      %1588 = vmatprep.mubr.bf16.mxu0 0
      %1589 = vmatmul.mubr.bf16.gmra.mxu0 %v1185
      %v1590 = vpop.f32.mrf.mxu0
      %v1591 = vadd.f32 %v741, %v1590
      %v1592 = vpop.f32.mrf.mxu0
      %v1593 = vpop.f32.mrf.mxu0
      %v1594 = vadd.f32 %v741, %v1593
      %v1595 = vpop.f32.mrf.mxu0
      %1596 = vmatprep.mubr.bf16.mxu0 0
      %1597 = vmatmul.mubr.bf16.gmra.mxu0 %v1188
      %v1598 = vpop.f32.mrf.mxu0
      %v1599 = vadd.f32 %v741, %v1598
      %v1600 = vpop.f32.mrf.mxu0
      %v1601 = vpop.f32.mrf.mxu0
      %v1602 = vadd.f32 %v741, %v1601
      %v1603 = vpop.f32.mrf.mxu0
      %1604 = vmatprep.mubr.bf16.mxu0 0
      %1605 = vmatmul.mubr.bf16.gmra.mxu0 %v1191
      %v1606 = vpop.f32.mrf.mxu0
      %v1607 = vadd.f32 %v741, %v1606
      %v1608 = vpop.f32.mrf.mxu0
      %v1609 = vpop.f32.mrf.mxu0
      %v1610 = vadd.f32 %v741, %v1609
      %v1611 = vpop.f32.mrf.mxu0
      %1612 = vmatprep.mubr.bf16.mxu0 0
      %1613 = vmatmul.mubr.bf16.gmra.mxu0 %v1194
      %v1614 = vpop.f32.mrf.mxu0
      %v1615 = vadd.f32 %v741, %v1614
      %v1616 = vpop.f32.mrf.mxu0
      %v1617 = vpop.f32.mrf.mxu0
      %v1618 = vadd.f32 %v741, %v1617
      %v1619 = vpop.f32.mrf.mxu0
      %1620 = vmatprep.mubr.bf16.mxu0 0
      %1621 = vmatmul.mubr.bf16.gmra.mxu0 %v1197
      %v1622 = vpop.f32.mrf.mxu0
      %v1623 = vadd.f32 %v741, %v1622
      %v1624 = vpop.f32.mrf.mxu0
      %v1625 = vpop.f32.mrf.mxu0
      %v1626 = vadd.f32 %v741, %v1625
      %v1627 = vpop.f32.mrf.mxu0
      %1628 = vmatprep.mubr.bf16.mxu0 0
      %1629 = vmatmul.mubr.bf16.gmra.mxu0 %v1200
      %v1630 = vpop.f32.mrf.mxu0
      %v1631 = vadd.f32 %v741, %v1630
      %v1632 = vpop.f32.mrf.mxu0
      %v1633 = vpop.f32.mrf.mxu0
      %v1634 = vadd.f32 %v741, %v1633
      %v1635 = vpop.f32.mrf.mxu0
      %1636 = vmatprep.mubr.bf16.mxu0 0
      %1637 = vmatmul.mubr.bf16.gmra.mxu0 %v1203
      %v1638 = vpop.f32.mrf.mxu0
      %v1639 = vadd.f32 %v741, %v1638
      %v1640 = vpop.f32.mrf.mxu0
      %v1641 = vpop.f32.mrf.mxu0
      %v1642 = vadd.f32 %v741, %v1641
      %v1643 = vpop.f32.mrf.mxu0
      %1644 = vmatprep.mubr.bf16.mxu0 0
      %1645 = vmatmul.mubr.bf16.gmra.mxu0 %v1206
      %v1646 = vpop.f32.mrf.mxu0
      %v1647 = vadd.f32 %v741, %v1646
      %v1648 = vpop.f32.mrf.mxu0
      %v1649 = vpop.f32.mrf.mxu0
      %v1650 = vadd.f32 %v741, %v1649
      %v1651 = vpop.f32.mrf.mxu0
      %1652 = vmatprep.mubr.bf16.mxu0 0
      %1653 = vmatmul.mubr.bf16.gmra.mxu0 %v1209
      %v1654 = vpop.f32.mrf.mxu0
      %v1655 = vadd.f32 %v741, %v1654
      %v1656 = vpop.f32.mrf.mxu0
      %v1657 = vpop.f32.mrf.mxu0
      %v1658 = vadd.f32 %v741, %v1657
      %v1659 = vpop.f32.mrf.mxu0
      %1660 = vmatprep.mubr.bf16.mxu0 0
      %1661 = vmatmul.mubr.bf16.gmra.mxu0 %v1212
      %v1662 = vpop.f32.mrf.mxu0
      %v1663 = vadd.f32 %v741, %v1662
      %v1664 = vpop.f32.mrf.mxu0
      %v1665 = vpop.f32.mrf.mxu0
      %v1666 = vadd.f32 %v741, %v1665
      %v1667 = vpop.f32.mrf.mxu0
      %1668 = vmatprep.mubr.bf16.mxu0 0
      %1669 = vmatmul.mubr.bf16.gmra.mxu0 %v1215
      %v1670 = vpop.f32.mrf.mxu0
      %v1671 = vadd.f32 %v741, %v1670
      %v1672 = vpop.f32.mrf.mxu0
      %v1673 = vpop.f32.mrf.mxu0
      %v1674 = vadd.f32 %v741, %v1673
      %v1675 = vpop.f32.mrf.mxu0
      %1676 = vmatprep.mubr.bf16.mxu0 0
      %1677 = vmatmul.mubr.bf16.gmra.mxu0 %v1218
      %v1678 = vpop.f32.mrf.mxu0
      %v1679 = vadd.f32 %v741, %v1678
      %v1680 = vpop.f32.mrf.mxu0
      %v1681 = vpop.f32.mrf.mxu0
      %v1682 = vadd.f32 %v741, %v1681
      %v1683 = vpop.f32.mrf.mxu0
      %1684 = vmatprep.mubr.bf16.mxu0 0
      %1685 = vmatmul.mubr.bf16.gmra.mxu0 %v1221
      %v1686 = vpop.f32.mrf.mxu0
      %v1687 = vadd.f32 %v741, %v1686
      %v1688 = vpop.f32.mrf.mxu0
      %v1689 = vpop.f32.mrf.mxu0
      %v1690 = vadd.f32 %v741, %v1689
      %v1691 = vpop.f32.mrf.mxu0
      %1692 = vmatprep.mubr.bf16.mxu0 0
      %1693 = vmatmul.mubr.bf16.gmra.mxu0 %v1224
      %v1694 = vpop.f32.mrf.mxu0
      %v1695 = vadd.f32 %v741, %v1694
      %v1696 = vpop.f32.mrf.mxu0
      %v1697 = vpop.f32.mrf.mxu0
      %v1698 = vadd.f32 %v741, %v1697
      %v1699 = vpop.f32.mrf.mxu0
      %1700 = vmatprep.mubr.bf16.mxu0 0
      %1701 = vmatmul.mubr.bf16.gmra.mxu0 %v1227
      %v1702 = vpop.f32.mrf.mxu0
      %v1703 = vadd.f32 %v741, %v1702
      %v1704 = vpop.f32.mrf.mxu0
      %v1705 = vpop.f32.mrf.mxu0
      %v1706 = vadd.f32 %v741, %v1705
      %v1707 = vpop.f32.mrf.mxu0
      %1708 = vmatprep.mubr.bf16.mxu0 0
      %1709 = vmatmul.mubr.bf16.gmra.mxu0 %v1230
      %v1710 = vpop.f32.mrf.mxu0
      %v1711 = vadd.f32 %v741, %v1710
      %v1712 = vpop.f32.mrf.mxu0
      %v1713 = vpop.f32.mrf.mxu0
      %v1714 = vadd.f32 %v741, %v1713
      %v1715 = vpop.f32.mrf.mxu0
      %1716 = vmatprep.mubr.bf16.mxu0 0
      %1717 = vmatmul.mubr.bf16.gmra.mxu0 %v1233
      %v1718 = vpop.f32.mrf.mxu0
      %v1719 = vadd.f32 %v741, %v1718
      %v1720 = vpop.f32.mrf.mxu0
      %v1721 = vpop.f32.mrf.mxu0
      %v1722 = vadd.f32 %v741, %v1721
      %v1723 = vpop.f32.mrf.mxu0
      %1724 = vmatprep.mubr.bf16.mxu0 0
      %1725 = vmatmul.mubr.bf16.gmra.mxu0 %v1236
      %v1726 = vpop.f32.mrf.mxu0
      %v1727 = vadd.f32 %v741, %v1726
      %v1728 = vpop.f32.mrf.mxu0
      %v1729 = vpop.f32.mrf.mxu0
      %v1730 = vadd.f32 %v741, %v1729
      %v1731 = vpop.f32.mrf.mxu0
      %1732 = vmatprep.mubr.bf16.mxu0 0
      %1733 = vmatmul.mubr.bf16.gmra.mxu0 %v1239
      %v1734 = vpop.f32.mrf.mxu0
      %v1735 = vadd.f32 %v741, %v1734
      %v1736 = vpop.f32.mrf.mxu0
      %v1737 = vpop.f32.mrf.mxu0
      %v1738 = vadd.f32 %v741, %v1737
      %v1739 = vpop.f32.mrf.mxu0
      %1740 = vmatprep.mubr.bf16.mxu0 0
      %1741 = vmatmul.mubr.bf16.gmra.mxu0 %v1242
      %v1742 = vpop.f32.mrf.mxu0
      %v1743 = vadd.f32 %v741, %v1742
      %v1744 = vpop.f32.mrf.mxu0
      %v1745 = vpop.f32.mrf.mxu0
      %v1746 = vadd.f32 %v741, %v1745
      %v1747 = vpop.f32.mrf.mxu0
      %1748 = vmatprep.mubr.bf16.mxu0 0
      %1749 = vmatmul.mubr.bf16.gmra.mxu0 %v1245
      %v1750 = vpop.f32.mrf.mxu0
      %v1751 = vadd.f32 %v741, %v1750
      %v1752 = vpop.f32.mrf.mxu0
      %v1753 = vpop.f32.mrf.mxu0
      %v1754 = vadd.f32 %v741, %v1753
      %v1755 = vpop.f32.mrf.mxu0
      %1756 = vmatprep.mubr.bf16.mxu0 0
      %1757 = vmatmul.mubr.bf16.gmra.mxu0 %v1248
      %v1758 = vpop.f32.mrf.mxu0
      %v1759 = vadd.f32 %v741, %v1758
      %v1760 = vpop.f32.mrf.mxu0
      %v1761 = vpop.f32.mrf.mxu0
      %v1762 = vadd.f32 %v741, %v1761
      %v1763 = vpop.f32.mrf.mxu0
      %1764 = vmatprep.mubr.bf16.mxu0 0
      %1765 = vmatmul.mubr.bf16.gmra.mxu0 %v1251
      %v1766 = vpop.f32.mrf.mxu0
      %v1767 = vadd.f32 %v741, %v1766
      %v1768 = vpop.f32.mrf.mxu0
      %v1769 = vpop.f32.mrf.mxu0
      %v1770 = vadd.f32 %v741, %v1769
      %v1771 = vpop.f32.mrf.mxu0
      %1772 = vmatprep.mubr.bf16.mxu0 0
      %1773 = vmatmul.mubr.bf16.gmra.mxu0 %v1254
      %v1774 = vpop.f32.mrf.mxu0
      %v1775 = vadd.f32 %v741, %v1774
      %v1776 = vpop.f32.mrf.mxu0
      %v1777 = vpop.f32.mrf.mxu0
      %v1778 = vadd.f32 %v741, %v1777
      %v1779 = vpop.f32.mrf.mxu0
      %1780 = vmatprep.mubr.bf16.mxu0 0
      %1781 = vmatmul.mubr.bf16.gmra.mxu0 %v1257
      %v1782 = vpop.f32.mrf.mxu0
      %v1783 = vadd.f32 %v741, %v1782
      %v1784 = vpop.f32.mrf.mxu0
      %v1785 = vpop.f32.mrf.mxu0
      %v1786 = vadd.f32 %v741, %v1785
      %v1787 = vpop.f32.mrf.mxu0
      %1788 = vmatprep.mubr.bf16.mxu0 0
      %1789 = vmatmul.mubr.bf16.gmra.mxu0 %v1260
      %v1790 = vpop.f32.mrf.mxu0
      %v1791 = vadd.f32 %v741, %v1790
      %v1792 = vpop.f32.mrf.mxu0
      %v1793 = vpop.f32.mrf.mxu0
      %v1794 = vadd.f32 %v741, %v1793
      %v1795 = vpop.f32.mrf.mxu0
      %1796 = vmatprep.mubr.bf16.mxu0 0
      %1797 = vmatmul.mubr.bf16.gmra.mxu0 %v1263
      %v1798 = vpop.f32.mrf.mxu0
      %v1799 = vadd.f32 %v741, %v1798
      %v1800 = vpop.f32.mrf.mxu0
      %v1801 = vpop.f32.mrf.mxu0
      %v1802 = vadd.f32 %v741, %v1801
      %v1803 = vpop.f32.mrf.mxu0
      %1804 = vmatprep.mubr.bf16.mxu0 0
      %1805 = vmatmul.mubr.bf16.gmra.mxu0 %v1266
      %v1806 = vpop.f32.mrf.mxu0
      %v1807 = vadd.f32 %v741, %v1806
      %v1808 = vpop.f32.mrf.mxu0
      %v1809 = vpop.f32.mrf.mxu0
      %v1810 = vadd.f32 %v741, %v1809
      %v1811 = vpop.f32.mrf.mxu0
      %1812 = vdwg.mxu0
      %1941 = vrot.lane.b32.xlu0 %v1303, 96
      %v1942 = vpop.permute.xlu0 %1941
      %1943 = vrot.lane.b32.xlu0 %v1306, 96
      %v1944 = vpop.permute.xlu0 %1943
      %1945 = vrot.lane.b32.xlu0 %v1311, 96
      %v1946 = vpop.permute.xlu0 %1945
      %1947 = vrot.lane.b32.xlu0 %v1314, 96
      %v1948 = vpop.permute.xlu0 %1947
      %1949 = vrot.lane.b32.xlu0 %v1319, 96
      %v1950 = vpop.permute.xlu0 %1949
      %1951 = vrot.lane.b32.xlu0 %v1322, 96
      %v1952 = vpop.permute.xlu0 %1951
      %1953 = vrot.lane.b32.xlu0 %v1327, 96
      %v1954 = vpop.permute.xlu0 %1953
      %1955 = vrot.lane.b32.xlu0 %v1330, 96
      %v1956 = vpop.permute.xlu0 %1955
      %1957 = vrot.lane.b32.xlu0 %v1335, 96
      %v1958 = vpop.permute.xlu0 %1957
      %1959 = vrot.lane.b32.xlu0 %v1338, 96
      %v1960 = vpop.permute.xlu0 %1959
      %1961 = vrot.lane.b32.xlu0 %v1343, 96
      %v1962 = vpop.permute.xlu0 %1961
      %1963 = vrot.lane.b32.xlu0 %v1346, 96
      %v1964 = vpop.permute.xlu0 %1963
      %1965 = vrot.lane.b32.xlu0 %v1351, 96
      %v1966 = vpop.permute.xlu0 %1965
      %1967 = vrot.lane.b32.xlu0 %v1354, 96
      %v1968 = vpop.permute.xlu0 %1967
      %1969 = vrot.lane.b32.xlu0 %v1359, 96
      %v1970 = vpop.permute.xlu0 %1969
      %1971 = vrot.lane.b32.xlu0 %v1362, 96
      %v1972 = vpop.permute.xlu0 %1971
      %1973 = vrot.lane.b32.xlu0 %v1367, 96
      %v1974 = vpop.permute.xlu0 %1973
      %1975 = vrot.lane.b32.xlu0 %v1370, 96
      %v1976 = vpop.permute.xlu0 %1975
      %1977 = vrot.lane.b32.xlu0 %v1375, 96
      %v1978 = vpop.permute.xlu0 %1977
      %1979 = vrot.lane.b32.xlu0 %v1378, 96
      %v1980 = vpop.permute.xlu0 %1979
      %1981 = vrot.lane.b32.xlu0 %v1383, 96
      %v1982 = vpop.permute.xlu0 %1981
      %1983 = vrot.lane.b32.xlu0 %v1386, 96
      %v1984 = vpop.permute.xlu0 %1983
      %1985 = vrot.lane.b32.xlu0 %v1391, 96
      %v1986 = vpop.permute.xlu0 %1985
      %1987 = vrot.lane.b32.xlu0 %v1394, 96
      %v1988 = vpop.permute.xlu0 %1987
      %1989 = vrot.lane.b32.xlu0 %v1399, 96
      %v1990 = vpop.permute.xlu0 %1989
      %1991 = vrot.lane.b32.xlu0 %v1402, 96
      %v1992 = vpop.permute.xlu0 %1991
      %1993 = vrot.lane.b32.xlu0 %v1407, 96
      %v1994 = vpop.permute.xlu0 %1993
      %1995 = vrot.lane.b32.xlu0 %v1410, 96
      %v1996 = vpop.permute.xlu0 %1995
      %1997 = vrot.lane.b32.xlu0 %v1415, 96
      %v1998 = vpop.permute.xlu0 %1997
      %1999 = vrot.lane.b32.xlu0 %v1418, 96
      %v2000 = vpop.permute.xlu0 %1999
      %2001 = vrot.lane.b32.xlu0 %v1423, 96
      %v2002 = vpop.permute.xlu0 %2001
      %2003 = vrot.lane.b32.xlu0 %v1426, 96
      %v2004 = vpop.permute.xlu0 %2003
      %2005 = vrot.lane.b32.xlu0 %v1431, 96
      %v2006 = vpop.permute.xlu0 %2005
      %2007 = vrot.lane.b32.xlu0 %v1434, 96
      %v2008 = vpop.permute.xlu0 %2007
      %2009 = vrot.lane.b32.xlu0 %v1439, 96
      %v2010 = vpop.permute.xlu0 %2009
      %2011 = vrot.lane.b32.xlu0 %v1442, 96
      %v2012 = vpop.permute.xlu0 %2011
      %2013 = vrot.lane.b32.xlu0 %v1447, 96
      %v2014 = vpop.permute.xlu0 %2013
      %2015 = vrot.lane.b32.xlu0 %v1450, 96
      %v2016 = vpop.permute.xlu0 %2015
      %2017 = vrot.lane.b32.xlu0 %v1455, 96
      %v2018 = vpop.permute.xlu0 %2017
      %2019 = vrot.lane.b32.xlu0 %v1458, 96
      %v2020 = vpop.permute.xlu0 %2019
      %2021 = vrot.lane.b32.xlu0 %v1463, 96
      %v2022 = vpop.permute.xlu0 %2021
      %2023 = vrot.lane.b32.xlu0 %v1466, 96
      %v2024 = vpop.permute.xlu0 %2023
      %2025 = vrot.lane.b32.xlu0 %v1471, 96
      %v2026 = vpop.permute.xlu0 %2025
      %2027 = vrot.lane.b32.xlu0 %v1474, 96
      %v2028 = vpop.permute.xlu0 %2027
      %2029 = vrot.lane.b32.xlu0 %v1479, 96
      %v2030 = vpop.permute.xlu0 %2029
      %2031 = vrot.lane.b32.xlu0 %v1482, 96
      %v2032 = vpop.permute.xlu0 %2031
      %2033 = vrot.lane.b32.xlu0 %v1487, 96
      %v2034 = vpop.permute.xlu0 %2033
      %2035 = vrot.lane.b32.xlu0 %v1490, 96
      %v2036 = vpop.permute.xlu0 %2035
      %2037 = vrot.lane.b32.xlu0 %v1495, 96
      %v2038 = vpop.permute.xlu0 %2037
      %2039 = vrot.lane.b32.xlu0 %v1498, 96
      %v2040 = vpop.permute.xlu0 %2039
      %2041 = vrot.lane.b32.xlu0 %v1503, 96
      %v2042 = vpop.permute.xlu0 %2041
      %2043 = vrot.lane.b32.xlu0 %v1506, 96
      %v2044 = vpop.permute.xlu0 %2043
      %2045 = vrot.lane.b32.xlu0 %v1511, 96
      %v2046 = vpop.permute.xlu0 %2045
      %2047 = vrot.lane.b32.xlu0 %v1514, 96
      %v2048 = vpop.permute.xlu0 %2047
      %2049 = vrot.lane.b32.xlu0 %v1519, 96
      %v2050 = vpop.permute.xlu0 %2049
      %2051 = vrot.lane.b32.xlu0 %v1522, 96
      %v2052 = vpop.permute.xlu0 %2051
      %2053 = vrot.lane.b32.xlu0 %v1527, 96
      %v2054 = vpop.permute.xlu0 %2053
      %2055 = vrot.lane.b32.xlu0 %v1530, 96
      %v2056 = vpop.permute.xlu0 %2055
      %2057 = vrot.lane.b32.xlu0 %v1535, 96
      %v2058 = vpop.permute.xlu0 %2057
      %2059 = vrot.lane.b32.xlu0 %v1538, 96
      %v2060 = vpop.permute.xlu0 %2059
      %2061 = vrot.lane.b32.xlu0 %v1543, 96
      %v2062 = vpop.permute.xlu0 %2061
      %2063 = vrot.lane.b32.xlu0 %v1546, 96
      %v2064 = vpop.permute.xlu0 %2063
      %2065 = vrot.lane.b32.xlu0 %v1551, 96
      %v2066 = vpop.permute.xlu0 %2065
      %2067 = vrot.lane.b32.xlu0 %v1554, 96
      %v2068 = vpop.permute.xlu0 %2067
      %2069 = vrot.lane.b32.xlu0 %v1559, 96
      %v2070 = vpop.permute.xlu0 %2069
      %2071 = vrot.lane.b32.xlu0 %v1562, 96
      %v2072 = vpop.permute.xlu0 %2071
      %2073 = vrot.lane.b32.xlu0 %v1567, 96
      %v2074 = vpop.permute.xlu0 %2073
      %2075 = vrot.lane.b32.xlu0 %v1570, 96
      %v2076 = vpop.permute.xlu0 %2075
      %2077 = vrot.lane.b32.xlu0 %v1575, 96
      %v2078 = vpop.permute.xlu0 %2077
      %2079 = vrot.lane.b32.xlu0 %v1578, 96
      %v2080 = vpop.permute.xlu0 %2079
      %2081 = vrot.lane.b32.xlu0 %v1583, 96
      %v2082 = vpop.permute.xlu0 %2081
      %2083 = vrot.lane.b32.xlu0 %v1586, 96
      %v2084 = vpop.permute.xlu0 %2083
      %2085 = vrot.lane.b32.xlu0 %v1591, 96
      %v2086 = vpop.permute.xlu0 %2085
      %2087 = vrot.lane.b32.xlu0 %v1594, 96
      %v2088 = vpop.permute.xlu0 %2087
      %2089 = vrot.lane.b32.xlu0 %v1599, 96
      %v2090 = vpop.permute.xlu0 %2089
      %2091 = vrot.lane.b32.xlu0 %v1602, 96
      %v2092 = vpop.permute.xlu0 %2091
      %2093 = vrot.lane.b32.xlu0 %v1607, 96
      %v2094 = vpop.permute.xlu0 %2093
      %2095 = vrot.lane.b32.xlu0 %v1610, 96
      %v2096 = vpop.permute.xlu0 %2095
      %2097 = vrot.lane.b32.xlu0 %v1615, 96
      %v2098 = vpop.permute.xlu0 %2097
      %2099 = vrot.lane.b32.xlu0 %v1618, 96
      %v2100 = vpop.permute.xlu0 %2099
      %2101 = vrot.lane.b32.xlu0 %v1623, 96
      %v2102 = vpop.permute.xlu0 %2101
      %2103 = vrot.lane.b32.xlu0 %v1626, 96
      %v2104 = vpop.permute.xlu0 %2103
      %2105 = vrot.lane.b32.xlu0 %v1631, 96
      %v2106 = vpop.permute.xlu0 %2105
      %2107 = vrot.lane.b32.xlu0 %v1634, 96
      %v2108 = vpop.permute.xlu0 %2107
      %2109 = vrot.lane.b32.xlu0 %v1639, 96
      %v2110 = vpop.permute.xlu0 %2109
      %2111 = vrot.lane.b32.xlu0 %v1642, 96
      %v2112 = vpop.permute.xlu0 %2111
      %2113 = vrot.lane.b32.xlu0 %v1647, 96
      %v2114 = vpop.permute.xlu0 %2113
      %2115 = vrot.lane.b32.xlu0 %v1650, 96
      %v2116 = vpop.permute.xlu0 %2115
      %2117 = vrot.lane.b32.xlu0 %v1655, 96
      %v2118 = vpop.permute.xlu0 %2117
      %2119 = vrot.lane.b32.xlu0 %v1658, 96
      %v2120 = vpop.permute.xlu0 %2119
      %2121 = vrot.lane.b32.xlu0 %v1663, 96
      %v2122 = vpop.permute.xlu0 %2121
      %2123 = vrot.lane.b32.xlu0 %v1666, 96
      %v2124 = vpop.permute.xlu0 %2123
      %2125 = vrot.lane.b32.xlu0 %v1671, 96
      %v2126 = vpop.permute.xlu0 %2125
      %2127 = vrot.lane.b32.xlu0 %v1674, 96
      %v2128 = vpop.permute.xlu0 %2127
      %2129 = vrot.lane.b32.xlu0 %v1679, 96
      %v2130 = vpop.permute.xlu0 %2129
      %2131 = vrot.lane.b32.xlu0 %v1682, 96
      %v2132 = vpop.permute.xlu0 %2131
      %2133 = vrot.lane.b32.xlu0 %v1687, 96
      %v2134 = vpop.permute.xlu0 %2133
      %2135 = vrot.lane.b32.xlu0 %v1690, 96
      %v2136 = vpop.permute.xlu0 %2135
      %2137 = vrot.lane.b32.xlu0 %v1695, 96
      %v2138 = vpop.permute.xlu0 %2137
      %2139 = vrot.lane.b32.xlu0 %v1698, 96
      %v2140 = vpop.permute.xlu0 %2139
      %2141 = vrot.lane.b32.xlu0 %v1703, 96
      %v2142 = vpop.permute.xlu0 %2141
      %2143 = vrot.lane.b32.xlu0 %v1706, 96
      %v2144 = vpop.permute.xlu0 %2143
      %2145 = vrot.lane.b32.xlu0 %v1711, 96
      %v2146 = vpop.permute.xlu0 %2145
      %2147 = vrot.lane.b32.xlu0 %v1714, 96
      %v2148 = vpop.permute.xlu0 %2147
      %2149 = vrot.lane.b32.xlu0 %v1719, 96
      %v2150 = vpop.permute.xlu0 %2149
      %2151 = vrot.lane.b32.xlu0 %v1722, 96
      %v2152 = vpop.permute.xlu0 %2151
      %2153 = vrot.lane.b32.xlu0 %v1727, 96
      %v2154 = vpop.permute.xlu0 %2153
      %2155 = vrot.lane.b32.xlu0 %v1730, 96
      %v2156 = vpop.permute.xlu0 %2155
      %2157 = vrot.lane.b32.xlu0 %v1735, 96
      %v2158 = vpop.permute.xlu0 %2157
      %2159 = vrot.lane.b32.xlu0 %v1738, 96
      %v2160 = vpop.permute.xlu0 %2159
      %2161 = vrot.lane.b32.xlu0 %v1743, 96
      %v2162 = vpop.permute.xlu0 %2161
      %2163 = vrot.lane.b32.xlu0 %v1746, 96
      %v2164 = vpop.permute.xlu0 %2163
      %2165 = vrot.lane.b32.xlu0 %v1751, 96
      %v2166 = vpop.permute.xlu0 %2165
      %2167 = vrot.lane.b32.xlu0 %v1754, 96
      %v2168 = vpop.permute.xlu0 %2167
      %2169 = vrot.lane.b32.xlu0 %v1759, 96
      %v2170 = vpop.permute.xlu0 %2169
      %2171 = vrot.lane.b32.xlu0 %v1762, 96
      %v2172 = vpop.permute.xlu0 %2171
      %2173 = vrot.lane.b32.xlu0 %v1767, 96
      %v2174 = vpop.permute.xlu0 %2173
      %2175 = vrot.lane.b32.xlu0 %v1770, 96
      %v2176 = vpop.permute.xlu0 %2175
      %2177 = vrot.lane.b32.xlu0 %v1775, 96
      %v2178 = vpop.permute.xlu0 %2177
      %2179 = vrot.lane.b32.xlu0 %v1778, 96
      %v2180 = vpop.permute.xlu0 %2179
      %2181 = vrot.lane.b32.xlu0 %v1783, 96
      %v2182 = vpop.permute.xlu0 %2181
      %2183 = vrot.lane.b32.xlu0 %v1786, 96
      %v2184 = vpop.permute.xlu0 %2183
      %2185 = vrot.lane.b32.xlu0 %v1791, 96
      %v2186 = vpop.permute.xlu0 %2185
      %2187 = vrot.lane.b32.xlu0 %v1794, 96
      %v2188 = vpop.permute.xlu0 %2187
      %2189 = vrot.lane.b32.xlu0 %v1799, 96
      %v2190 = vpop.permute.xlu0 %2189
      %2191 = vrot.lane.b32.xlu0 %v1802, 96
      %v2192 = vpop.permute.xlu0 %2191
      %2193 = vrot.lane.b32.xlu0 %v1807, 96
      %v2194 = vpop.permute.xlu0 %2193
      %2195 = vrot.lane.b32.xlu0 %v1810, 96
      %v2196 = vpop.permute.xlu0 %2195
      %v2325 = vmax.f32 %v1303, %v1942
      %v2326 = vmax.f32 %v1306, %v1944
      %v2327 = vmax.f32 %v1311, %v1946
      %v2328 = vmax.f32 %v1314, %v1948
      %v2329 = vmax.f32 %v1319, %v1950
      %v2330 = vmax.f32 %v1322, %v1952
      %v2331 = vmax.f32 %v1327, %v1954
      %v2332 = vmax.f32 %v1330, %v1956
      %v2333 = vmax.f32 %v1335, %v1958
      %v2334 = vmax.f32 %v1338, %v1960
      %v2335 = vmax.f32 %v1343, %v1962
      %v2336 = vmax.f32 %v1346, %v1964
      %v2337 = vmax.f32 %v1351, %v1966
      %v2338 = vmax.f32 %v1354, %v1968
      %v2339 = vmax.f32 %v1359, %v1970
      %v2340 = vmax.f32 %v1362, %v1972
      %v2341 = vmax.f32 %v1367, %v1974
      %v2342 = vmax.f32 %v1370, %v1976
      %v2343 = vmax.f32 %v1375, %v1978
      %v2344 = vmax.f32 %v1378, %v1980
      %v2345 = vmax.f32 %v1383, %v1982
      %v2346 = vmax.f32 %v1386, %v1984
      %v2347 = vmax.f32 %v1391, %v1986
      %v2348 = vmax.f32 %v1394, %v1988
      %v2349 = vmax.f32 %v1399, %v1990
      %v2350 = vmax.f32 %v1402, %v1992
      %v2351 = vmax.f32 %v1407, %v1994
      %v2352 = vmax.f32 %v1410, %v1996
      %v2353 = vmax.f32 %v1415, %v1998
      %v2354 = vmax.f32 %v1418, %v2000
      %v2355 = vmax.f32 %v1423, %v2002
      %v2356 = vmax.f32 %v1426, %v2004
      %v2357 = vmax.f32 %v1431, %v2006
      %v2358 = vmax.f32 %v1434, %v2008
      %v2359 = vmax.f32 %v1439, %v2010
      %v2360 = vmax.f32 %v1442, %v2012
      %v2361 = vmax.f32 %v1447, %v2014
      %v2362 = vmax.f32 %v1450, %v2016
      %v2363 = vmax.f32 %v1455, %v2018
      %v2364 = vmax.f32 %v1458, %v2020
      %v2365 = vmax.f32 %v1463, %v2022
      %v2366 = vmax.f32 %v1466, %v2024
      %v2367 = vmax.f32 %v1471, %v2026
      %v2368 = vmax.f32 %v1474, %v2028
      %v2369 = vmax.f32 %v1479, %v2030
      %v2370 = vmax.f32 %v1482, %v2032
      %v2371 = vmax.f32 %v1487, %v2034
      %v2372 = vmax.f32 %v1490, %v2036
      %v2373 = vmax.f32 %v1495, %v2038
      %v2374 = vmax.f32 %v1498, %v2040
      %v2375 = vmax.f32 %v1503, %v2042
      %v2376 = vmax.f32 %v1506, %v2044
      %v2377 = vmax.f32 %v1511, %v2046
      %v2378 = vmax.f32 %v1514, %v2048
      %v2379 = vmax.f32 %v1519, %v2050
      %v2380 = vmax.f32 %v1522, %v2052
      %v2381 = vmax.f32 %v1527, %v2054
      %v2382 = vmax.f32 %v1530, %v2056
      %v2383 = vmax.f32 %v1535, %v2058
      %v2384 = vmax.f32 %v1538, %v2060
      %v2385 = vmax.f32 %v1543, %v2062
      %v2386 = vmax.f32 %v1546, %v2064
      %v2387 = vmax.f32 %v1551, %v2066
      %v2388 = vmax.f32 %v1554, %v2068
      %v2389 = vmax.f32 %v1559, %v2070
      %v2390 = vmax.f32 %v1562, %v2072
      %v2391 = vmax.f32 %v1567, %v2074
      %v2392 = vmax.f32 %v1570, %v2076
      %v2393 = vmax.f32 %v1575, %v2078
      %v2394 = vmax.f32 %v1578, %v2080
      %v2395 = vmax.f32 %v1583, %v2082
      %v2396 = vmax.f32 %v1586, %v2084
      %v2397 = vmax.f32 %v1591, %v2086
      %v2398 = vmax.f32 %v1594, %v2088
      %v2399 = vmax.f32 %v1599, %v2090
      %v2400 = vmax.f32 %v1602, %v2092
      %v2401 = vmax.f32 %v1607, %v2094
      %v2402 = vmax.f32 %v1610, %v2096
      %v2403 = vmax.f32 %v1615, %v2098
      %v2404 = vmax.f32 %v1618, %v2100
      %v2405 = vmax.f32 %v1623, %v2102
      %v2406 = vmax.f32 %v1626, %v2104
      %v2407 = vmax.f32 %v1631, %v2106
      %v2408 = vmax.f32 %v1634, %v2108
      %v2409 = vmax.f32 %v1639, %v2110
      %v2410 = vmax.f32 %v1642, %v2112
      %v2411 = vmax.f32 %v1647, %v2114
      %v2412 = vmax.f32 %v1650, %v2116
      %v2413 = vmax.f32 %v1655, %v2118
      %v2414 = vmax.f32 %v1658, %v2120
      %v2415 = vmax.f32 %v1663, %v2122
      %v2416 = vmax.f32 %v1666, %v2124
      %v2417 = vmax.f32 %v1671, %v2126
      %v2418 = vmax.f32 %v1674, %v2128
      %v2419 = vmax.f32 %v1679, %v2130
      %v2420 = vmax.f32 %v1682, %v2132
      %v2421 = vmax.f32 %v1687, %v2134
      %v2422 = vmax.f32 %v1690, %v2136
      %v2423 = vmax.f32 %v1695, %v2138
      %v2424 = vmax.f32 %v1698, %v2140
      %v2425 = vmax.f32 %v1703, %v2142
      %v2426 = vmax.f32 %v1706, %v2144
      %v2427 = vmax.f32 %v1711, %v2146
      %v2428 = vmax.f32 %v1714, %v2148
      %v2429 = vmax.f32 %v1719, %v2150
      %v2430 = vmax.f32 %v1722, %v2152
      %v2431 = vmax.f32 %v1727, %v2154
      %v2432 = vmax.f32 %v1730, %v2156
      %v2433 = vmax.f32 %v1735, %v2158
      %v2434 = vmax.f32 %v1738, %v2160
      %v2435 = vmax.f32 %v1743, %v2162
      %v2436 = vmax.f32 %v1746, %v2164
      %v2437 = vmax.f32 %v1751, %v2166
      %v2438 = vmax.f32 %v1754, %v2168
      %v2439 = vmax.f32 %v1759, %v2170
      %v2440 = vmax.f32 %v1762, %v2172
      %v2441 = vmax.f32 %v1767, %v2174
      %v2442 = vmax.f32 %v1770, %v2176
      %v2443 = vmax.f32 %v1775, %v2178
      %v2444 = vmax.f32 %v1778, %v2180
      %v2445 = vmax.f32 %v1783, %v2182
      %v2446 = vmax.f32 %v1786, %v2184
      %v2447 = vmax.f32 %v1791, %v2186
      %v2448 = vmax.f32 %v1794, %v2188
      %v2449 = vmax.f32 %v1799, %v2190
      %v2450 = vmax.f32 %v1802, %v2192
      %v2451 = vmax.f32 %v1807, %v2194
      %v2452 = vmax.f32 %v1810, %v2196
      %v2453 = vmax.f32 %v2325, %v2329
      %v2454 = vmax.f32 %v2326, %v2330
      %v2455 = vmax.f32 %v2327, %v2331
      %v2456 = vmax.f32 %v2328, %v2332
      %v2457 = vmax.f32 %v2333, %v2337
      %v2458 = vmax.f32 %v2334, %v2338
      %v2459 = vmax.f32 %v2335, %v2339
      %v2460 = vmax.f32 %v2336, %v2340
      %v2461 = vmax.f32 %v2341, %v2345
      %v2462 = vmax.f32 %v2342, %v2346
      %v2463 = vmax.f32 %v2343, %v2347
      %v2464 = vmax.f32 %v2344, %v2348
      %v2465 = vmax.f32 %v2349, %v2353
      %v2466 = vmax.f32 %v2350, %v2354
      %v2467 = vmax.f32 %v2351, %v2355
      %v2468 = vmax.f32 %v2352, %v2356
      %v2469 = vmax.f32 %v2357, %v2361
      %v2470 = vmax.f32 %v2358, %v2362
      %v2471 = vmax.f32 %v2359, %v2363
      %v2472 = vmax.f32 %v2360, %v2364
      %v2473 = vmax.f32 %v2365, %v2369
      %v2474 = vmax.f32 %v2366, %v2370
      %v2475 = vmax.f32 %v2367, %v2371
      %v2476 = vmax.f32 %v2368, %v2372
      %v2477 = vmax.f32 %v2373, %v2377
      %v2478 = vmax.f32 %v2374, %v2378
      %v2479 = vmax.f32 %v2375, %v2379
      %v2480 = vmax.f32 %v2376, %v2380
      %v2481 = vmax.f32 %v2381, %v2385
      %v2482 = vmax.f32 %v2382, %v2386
      %v2483 = vmax.f32 %v2383, %v2387
      %v2484 = vmax.f32 %v2384, %v2388
      %v2485 = vmax.f32 %v2389, %v2393
      %v2486 = vmax.f32 %v2390, %v2394
      %v2487 = vmax.f32 %v2391, %v2395
      %v2488 = vmax.f32 %v2392, %v2396
      %v2489 = vmax.f32 %v2397, %v2401
      %v2490 = vmax.f32 %v2398, %v2402
      %v2491 = vmax.f32 %v2399, %v2403
      %v2492 = vmax.f32 %v2400, %v2404
      %v2493 = vmax.f32 %v2405, %v2409
      %v2494 = vmax.f32 %v2406, %v2410
      %v2495 = vmax.f32 %v2407, %v2411
      %v2496 = vmax.f32 %v2408, %v2412
      %v2497 = vmax.f32 %v2413, %v2417
      %v2498 = vmax.f32 %v2414, %v2418
      %v2499 = vmax.f32 %v2415, %v2419
      %v2500 = vmax.f32 %v2416, %v2420
      %v2501 = vmax.f32 %v2421, %v2425
      %v2502 = vmax.f32 %v2422, %v2426
      %v2503 = vmax.f32 %v2423, %v2427
      %v2504 = vmax.f32 %v2424, %v2428
      %v2505 = vmax.f32 %v2429, %v2433
      %v2506 = vmax.f32 %v2430, %v2434
      %v2507 = vmax.f32 %v2431, %v2435
      %v2508 = vmax.f32 %v2432, %v2436
      %v2509 = vmax.f32 %v2437, %v2441
      %v2510 = vmax.f32 %v2438, %v2442
      %v2511 = vmax.f32 %v2439, %v2443
      %v2512 = vmax.f32 %v2440, %v2444
      %v2513 = vmax.f32 %v2445, %v2449
      %v2514 = vmax.f32 %v2446, %v2450
      %v2515 = vmax.f32 %v2447, %v2451
      %v2516 = vmax.f32 %v2448, %v2452
      %2517 = vst.msk [vmem:[#allocation2] sm:$0xff] %vm1075, %v2453
      %2518 = vst.msk [vmem:[#allocation2 + $0x8] sm:$0xff] %vm1075, %v2454
      %2519 = vst.msk [vmem:[#allocation2 + $0x10] sm:$0xff] %vm1075, %v2455
      %2520 = vst.msk [vmem:[#allocation2 + $0x18] sm:$0xff] %vm1075, %v2456
      %2521 = vst.msk [vmem:[#allocation2 + $0x20] sm:$0xff] %vm1075, %v2457
      %2522 = vst.msk [vmem:[#allocation2 + $0x28] sm:$0xff] %vm1075, %v2458
      %2523 = vst.msk [vmem:[#allocation2 + $0x30] sm:$0xff] %vm1075, %v2459
      %2524 = vst.msk [vmem:[#allocation2 + $0x38] sm:$0xff] %vm1075, %v2460
      %2525 = vst.msk [vmem:[#allocation2 + $0x40] sm:$0xff] %vm1075, %v2461
      %2526 = vst.msk [vmem:[#allocation2 + $0x48] sm:$0xff] %vm1075, %v2462
      %2527 = vst.msk [vmem:[#allocation2 + $0x50] sm:$0xff] %vm1075, %v2463
      %2528 = vst.msk [vmem:[#allocation2 + $0x58] sm:$0xff] %vm1075, %v2464
      %2529 = vst.msk [vmem:[#allocation2 + $0x60] sm:$0xff] %vm1075, %v2465
      %2530 = vst.msk [vmem:[#allocation2 + $0x68] sm:$0xff] %vm1075, %v2466
      %2531 = vst.msk [vmem:[#allocation2 + $0x70] sm:$0xff] %vm1075, %v2467
      %2532 = vst.msk [vmem:[#allocation2 + $0x78] sm:$0xff] %vm1075, %v2468
      %2533 = vst.msk [vmem:[#allocation2 + $0x80] sm:$0xff] %vm1075, %v2469
      %2534 = vst.msk [vmem:[#allocation2 + $0x88] sm:$0xff] %vm1075, %v2470
      %2535 = vst.msk [vmem:[#allocation2 + $0x90] sm:$0xff] %vm1075, %v2471
      %2536 = vst.msk [vmem:[#allocation2 + $0x98] sm:$0xff] %vm1075, %v2472
      %2537 = vst.msk [vmem:[#allocation2 + $0xa0] sm:$0xff] %vm1075, %v2473
      %2538 = vst.msk [vmem:[#allocation2 + $0xa8] sm:$0xff] %vm1075, %v2474
      %2539 = vst.msk [vmem:[#allocation2 + $0xb0] sm:$0xff] %vm1075, %v2475
      %2540 = vst.msk [vmem:[#allocation2 + $0xb8] sm:$0xff] %vm1075, %v2476
      %2541 = vst.msk [vmem:[#allocation2 + $0xc0] sm:$0xff] %vm1075, %v2477
      %2542 = vst.msk [vmem:[#allocation2 + $0xc8] sm:$0xff] %vm1075, %v2478
      %2543 = vst.msk [vmem:[#allocation2 + $0xd0] sm:$0xff] %vm1075, %v2479
      %2544 = vst.msk [vmem:[#allocation2 + $0xd8] sm:$0xff] %vm1075, %v2480
      %2545 = vst.msk [vmem:[#allocation2 + $0xe0] sm:$0xff] %vm1075, %v2481
      %2546 = vst.msk [vmem:[#allocation2 + $0xe8] sm:$0xff] %vm1075, %v2482
      %2547 = vst.msk [vmem:[#allocation2 + $0xf0] sm:$0xff] %vm1075, %v2483
      %2548 = vst.msk [vmem:[#allocation2 + $0xf8] sm:$0xff] %vm1075, %v2484
      %2549 = vst.msk [vmem:[#allocation2 + $0x100] sm:$0xff] %vm1075, %v2485
      %2550 = vst.msk [vmem:[#allocation2 + $0x108] sm:$0xff] %vm1075, %v2486
      %2551 = vst.msk [vmem:[#allocation2 + $0x110] sm:$0xff] %vm1075, %v2487
      %2552 = vst.msk [vmem:[#allocation2 + $0x118] sm:$0xff] %vm1075, %v2488
      %2553 = vst.msk [vmem:[#allocation2 + $0x120] sm:$0xff] %vm1075, %v2489
      %2554 = vst.msk [vmem:[#allocation2 + $0x128] sm:$0xff] %vm1075, %v2490
      %2555 = vst.msk [vmem:[#allocation2 + $0x130] sm:$0xff] %vm1075, %v2491
      %2556 = vst.msk [vmem:[#allocation2 + $0x138] sm:$0xff] %vm1075, %v2492
      %2557 = vst.msk [vmem:[#allocation2 + $0x140] sm:$0xff] %vm1075, %v2493
      %2558 = vst.msk [vmem:[#allocation2 + $0x148] sm:$0xff] %vm1075, %v2494
      %2559 = vst.msk [vmem:[#allocation2 + $0x150] sm:$0xff] %vm1075, %v2495
      %2560 = vst.msk [vmem:[#allocation2 + $0x158] sm:$0xff] %vm1075, %v2496
      %2561 = vst.msk [vmem:[#allocation2 + $0x160] sm:$0xff] %vm1075, %v2497
      %2562 = vst.msk [vmem:[#allocation2 + $0x168] sm:$0xff] %vm1075, %v2498
      %2563 = vst.msk [vmem:[#allocation2 + $0x170] sm:$0xff] %vm1075, %v2499
      %2564 = vst.msk [vmem:[#allocation2 + $0x178] sm:$0xff] %vm1075, %v2500
      %2565 = vst.msk [vmem:[#allocation2 + $0x180] sm:$0xff] %vm1075, %v2501
      %2566 = vst.msk [vmem:[#allocation2 + $0x188] sm:$0xff] %vm1075, %v2502
      %2567 = vst.msk [vmem:[#allocation2 + $0x190] sm:$0xff] %vm1075, %v2503
      %2568 = vst.msk [vmem:[#allocation2 + $0x198] sm:$0xff] %vm1075, %v2504
      %2569 = vst.msk [vmem:[#allocation2 + $0x1a0] sm:$0xff] %vm1075, %v2505
      %2570 = vst.msk [vmem:[#allocation2 + $0x1a8] sm:$0xff] %vm1075, %v2506
      %2571 = vst.msk [vmem:[#allocation2 + $0x1b0] sm:$0xff] %vm1075, %v2507
      %2572 = vst.msk [vmem:[#allocation2 + $0x1b8] sm:$0xff] %vm1075, %v2508
      %2573 = vst.msk [vmem:[#allocation2 + $0x1c0] sm:$0xff] %vm1075, %v2509
      %2574 = vst.msk [vmem:[#allocation2 + $0x1c8] sm:$0xff] %vm1075, %v2510
      %2575 = vst.msk [vmem:[#allocation2 + $0x1d0] sm:$0xff] %vm1075, %v2511
      %2576 = vst.msk [vmem:[#allocation2 + $0x1d8] sm:$0xff] %vm1075, %v2512
      %2577 = vst.msk [vmem:[#allocation2 + $0x1e0] sm:$0xff] %vm1075, %v2513
      %2578 = vst.msk [vmem:[#allocation2 + $0x1e8] sm:$0xff] %vm1075, %v2514
      %2579 = vst.msk [vmem:[#allocation2 + $0x1f0] sm:$0xff] %vm1075, %v2515
      %2580 = vst.msk [vmem:[#allocation2 + $0x1f8] sm:$0xff] %vm1075, %v2516
      %v2581 = vld [vmem:[#allocation2] ss:$2 sm:$0xff]
      %s2582 = scalar_lea.vmem [#allocation2], 16
      %v2583 = vld [vmem:[%s2582] ss:$2 sm:$0xff]
      %s2584 = scalar_lea.vmem [#allocation2], 32
      %v2585 = vld [vmem:[%s2584] ss:$2 sm:$0xff]
      %s2586 = scalar_lea.vmem [#allocation2], 48
      %v2587 = vld [vmem:[%s2586] ss:$2 sm:$0xff]
      %s2588 = scalar_lea.vmem [#allocation2], 64
      %v2589 = vld [vmem:[%s2588] ss:$2 sm:$0xff]
      %s2590 = scalar_lea.vmem [#allocation2], 80
      %v2591 = vld [vmem:[%s2590] ss:$2 sm:$0xff]
      %s2592 = scalar_lea.vmem [#allocation2], 96
      %v2593 = vld [vmem:[%s2592] ss:$2 sm:$0xff]
      %s2594 = scalar_lea.vmem [#allocation2], 112
      %v2595 = vld [vmem:[%s2594] ss:$2 sm:$0xff]
      %s2596 = scalar_lea.vmem [#allocation2], 128
      %v2597 = vld [vmem:[%s2596] ss:$2 sm:$0xff]
      %s2598 = scalar_lea.vmem [#allocation2], 144
      %v2599 = vld [vmem:[%s2598] ss:$2 sm:$0xff]
      %s2600 = scalar_lea.vmem [#allocation2], 160
      %v2601 = vld [vmem:[%s2600] ss:$2 sm:$0xff]
      %s2602 = scalar_lea.vmem [#allocation2], 176
      %v2603 = vld [vmem:[%s2602] ss:$2 sm:$0xff]
      %s2604 = scalar_lea.vmem [#allocation2], 192
      %v2605 = vld [vmem:[%s2604] ss:$2 sm:$0xff]
      %s2606 = scalar_lea.vmem [#allocation2], 208
      %v2607 = vld [vmem:[%s2606] ss:$2 sm:$0xff]
      %s2608 = scalar_lea.vmem [#allocation2], 224
      %v2609 = vld [vmem:[%s2608] ss:$2 sm:$0xff]
      %s2610 = scalar_lea.vmem [#allocation2], 240
      %v2611 = vld [vmem:[%s2610] ss:$2 sm:$0xff]
      %s2612 = scalar_lea.vmem [#allocation2], 256
      %v2613 = vld [vmem:[%s2612] ss:$2 sm:$0xff]
      %s2614 = scalar_lea.vmem [#allocation2], 272
      %v2615 = vld [vmem:[%s2614] ss:$2 sm:$0xff]
      %s2616 = scalar_lea.vmem [#allocation2], 288
      %v2617 = vld [vmem:[%s2616] ss:$2 sm:$0xff]
      %s2618 = scalar_lea.vmem [#allocation2], 304
      %v2619 = vld [vmem:[%s2618] ss:$2 sm:$0xff]
      %s2620 = scalar_lea.vmem [#allocation2], 320
      %v2621 = vld [vmem:[%s2620] ss:$2 sm:$0xff]
      %s2622 = scalar_lea.vmem [#allocation2], 336
      %v2623 = vld [vmem:[%s2622] ss:$2 sm:$0xff]
      %s2624 = scalar_lea.vmem [#allocation2], 352
      %v2625 = vld [vmem:[%s2624] ss:$2 sm:$0xff]
      %s2626 = scalar_lea.vmem [#allocation2], 368
      %v2627 = vld [vmem:[%s2626] ss:$2 sm:$0xff]
      %s2628 = scalar_lea.vmem [#allocation2], 384
      %v2629 = vld [vmem:[%s2628] ss:$2 sm:$0xff]
      %s2630 = scalar_lea.vmem [#allocation2], 400
      %v2631 = vld [vmem:[%s2630] ss:$2 sm:$0xff]
      %s2632 = scalar_lea.vmem [#allocation2], 416
      %v2633 = vld [vmem:[%s2632] ss:$2 sm:$0xff]
      %s2634 = scalar_lea.vmem [#allocation2], 432
      %v2635 = vld [vmem:[%s2634] ss:$2 sm:$0xff]
      %s2636 = scalar_lea.vmem [#allocation2], 448
      %v2637 = vld [vmem:[%s2636] ss:$2 sm:$0xff]
      %s2638 = scalar_lea.vmem [#allocation2], 464
      %v2639 = vld [vmem:[%s2638] ss:$2 sm:$0xff]
      %s2640 = scalar_lea.vmem [#allocation2], 480
      %v2641 = vld [vmem:[%s2640] ss:$2 sm:$0xff]
      %s2642 = scalar_lea.vmem [#allocation2], 496
      %v2643 = vld [vmem:[%s2642] ss:$2 sm:$0xff]
      %s2644 = scalar_lea.vmem [#allocation2], 1
      %v2645 = vld [vmem:[%s2644] ss:$2 sm:$0xff]
      %s2646 = scalar_lea.vmem [#allocation2], 17
      %v2647 = vld [vmem:[%s2646] ss:$2 sm:$0xff]
      %s2648 = scalar_lea.vmem [#allocation2], 33
      %v2649 = vld [vmem:[%s2648] ss:$2 sm:$0xff]
      %s2650 = scalar_lea.vmem [#allocation2], 49
      %v2651 = vld [vmem:[%s2650] ss:$2 sm:$0xff]
      %s2652 = scalar_lea.vmem [#allocation2], 65
      %v2653 = vld [vmem:[%s2652] ss:$2 sm:$0xff]
      %s2654 = scalar_lea.vmem [#allocation2], 81
      %v2655 = vld [vmem:[%s2654] ss:$2 sm:$0xff]
      %s2656 = scalar_lea.vmem [#allocation2], 97
      %v2657 = vld [vmem:[%s2656] ss:$2 sm:$0xff]
      %s2658 = scalar_lea.vmem [#allocation2], 113
      %v2659 = vld [vmem:[%s2658] ss:$2 sm:$0xff]
      %s2660 = scalar_lea.vmem [#allocation2], 129
      %v2661 = vld [vmem:[%s2660] ss:$2 sm:$0xff]
      %s2662 = scalar_lea.vmem [#allocation2], 145
      %v2663 = vld [vmem:[%s2662] ss:$2 sm:$0xff]
      %s2664 = scalar_lea.vmem [#allocation2], 161
      %v2665 = vld [vmem:[%s2664] ss:$2 sm:$0xff]
      %s2666 = scalar_lea.vmem [#allocation2], 177
      %v2667 = vld [vmem:[%s2666] ss:$2 sm:$0xff]
      %s2668 = scalar_lea.vmem [#allocation2], 193
      %v2669 = vld [vmem:[%s2668] ss:$2 sm:$0xff]
      %s2670 = scalar_lea.vmem [#allocation2], 209
      %v2671 = vld [vmem:[%s2670] ss:$2 sm:$0xff]
      %s2672 = scalar_lea.vmem [#allocation2], 225
      %v2673 = vld [vmem:[%s2672] ss:$2 sm:$0xff]
      %s2674 = scalar_lea.vmem [#allocation2], 241
      %v2675 = vld [vmem:[%s2674] ss:$2 sm:$0xff]
      %s2676 = scalar_lea.vmem [#allocation2], 257
      %v2677 = vld [vmem:[%s2676] ss:$2 sm:$0xff]
      %s2678 = scalar_lea.vmem [#allocation2], 273
      %v2679 = vld [vmem:[%s2678] ss:$2 sm:$0xff]
      %s2680 = scalar_lea.vmem [#allocation2], 289
      %v2681 = vld [vmem:[%s2680] ss:$2 sm:$0xff]
      %s2682 = scalar_lea.vmem [#allocation2], 305
      %v2683 = vld [vmem:[%s2682] ss:$2 sm:$0xff]
      %s2684 = scalar_lea.vmem [#allocation2], 321
      %v2685 = vld [vmem:[%s2684] ss:$2 sm:$0xff]
      %s2686 = scalar_lea.vmem [#allocation2], 337
      %v2687 = vld [vmem:[%s2686] ss:$2 sm:$0xff]
      %s2688 = scalar_lea.vmem [#allocation2], 353
      %v2689 = vld [vmem:[%s2688] ss:$2 sm:$0xff]
      %s2690 = scalar_lea.vmem [#allocation2], 369
      %v2691 = vld [vmem:[%s2690] ss:$2 sm:$0xff]
      %s2692 = scalar_lea.vmem [#allocation2], 385
      %v2693 = vld [vmem:[%s2692] ss:$2 sm:$0xff]
      %s2694 = scalar_lea.vmem [#allocation2], 401
      %v2695 = vld [vmem:[%s2694] ss:$2 sm:$0xff]
      %s2696 = scalar_lea.vmem [#allocation2], 417
      %v2697 = vld [vmem:[%s2696] ss:$2 sm:$0xff]
      %s2698 = scalar_lea.vmem [#allocation2], 433
      %v2699 = vld [vmem:[%s2698] ss:$2 sm:$0xff]
      %s2700 = scalar_lea.vmem [#allocation2], 449
      %v2701 = vld [vmem:[%s2700] ss:$2 sm:$0xff]
      %s2702 = scalar_lea.vmem [#allocation2], 465
      %v2703 = vld [vmem:[%s2702] ss:$2 sm:$0xff]
      %s2704 = scalar_lea.vmem [#allocation2], 481
      %v2705 = vld [vmem:[%s2704] ss:$2 sm:$0xff]
      %s2706 = scalar_lea.vmem [#allocation2], 497
      %v2707 = vld [vmem:[%s2706] ss:$2 sm:$0xff]
      %v2708 = vmax.f32 %v2581, %v2645
      %v2709 = vmax.f32 %v2583, %v2647
      %v2710 = vmax.f32 %v2585, %v2649
      %v2711 = vmax.f32 %v2587, %v2651
      %v2712 = vmax.f32 %v2589, %v2653
      %v2713 = vmax.f32 %v2591, %v2655
      %v2714 = vmax.f32 %v2593, %v2657
      %v2715 = vmax.f32 %v2595, %v2659
      %v2716 = vmax.f32 %v2597, %v2661
      %v2717 = vmax.f32 %v2599, %v2663
      %v2718 = vmax.f32 %v2601, %v2665
      %v2719 = vmax.f32 %v2603, %v2667
      %v2720 = vmax.f32 %v2605, %v2669
      %v2721 = vmax.f32 %v2607, %v2671
      %v2722 = vmax.f32 %v2609, %v2673
      %v2723 = vmax.f32 %v2611, %v2675
      %v2724 = vmax.f32 %v2613, %v2677
      %v2725 = vmax.f32 %v2615, %v2679
      %v2726 = vmax.f32 %v2617, %v2681
      %v2727 = vmax.f32 %v2619, %v2683
      %v2728 = vmax.f32 %v2621, %v2685
      %v2729 = vmax.f32 %v2623, %v2687
      %v2730 = vmax.f32 %v2625, %v2689
      %v2731 = vmax.f32 %v2627, %v2691
      %v2732 = vmax.f32 %v2629, %v2693
      %v2733 = vmax.f32 %v2631, %v2695
      %v2734 = vmax.f32 %v2633, %v2697
      %v2735 = vmax.f32 %v2635, %v2699
      %v2736 = vmax.f32 %v2637, %v2701
      %v2737 = vmax.f32 %v2639, %v2703
      %v2738 = vmax.f32 %v2641, %v2705
      %v2739 = vmax.f32 %v2643, %v2707
      %v2740 = vpack.c.bf16 %v2709, %v2708
      %v2741 = vpack.c.bf16 %v2711, %v2710
      %v2742 = vpack.c.bf16 %v2713, %v2712
      %v2743 = vpack.c.bf16 %v2715, %v2714
      %v2744 = vpack.c.bf16 %v2717, %v2716
      %v2745 = vpack.c.bf16 %v2719, %v2718
      %v2746 = vpack.c.bf16 %v2721, %v2720
      %v2747 = vpack.c.bf16 %v2723, %v2722
      %v2748 = vpack.c.bf16 %v2725, %v2724
      %v2749 = vpack.c.bf16 %v2727, %v2726
      %v2750 = vpack.c.bf16 %v2729, %v2728
      %v2751 = vpack.c.bf16 %v2731, %v2730
      %v2752 = vpack.c.bf16 %v2733, %v2732
      %v2753 = vpack.c.bf16 %v2735, %v2734
      %v2754 = vpack.c.bf16 %v2737, %v2736
      %v2755 = vpack.c.bf16 %v2739, %v2738
      %v2756 = vld [vmem:[%s2] sm:$0xf]
      %v2757 = vld [vmem:[%s2 + $0x4] sm:$0xf]
      %v2758 = vld [vmem:[%s2 + $0x8] sm:$0xf]
      %v2759 = vld [vmem:[%s2 + $0xc] sm:$0xf]
      %v2760 = vld [vmem:[%s11] sm:$0x1]
      %v2762 = vlaneseq
      %v2763 = vshrl.u32 %v2762, 7
      %v2764 = vsub.s32 0, %v2763
      %v2765 = vrot.slane %v2760, %v2764
      %v2771 = vunpack.c.l.b16 %v2756
      %v2772 = vunpack.c.l.b16 %v2757
      %v2773 = vunpack.c.l.b16 %v2758
      %v2774 = vunpack.c.l.b16 %v2759
      %v2775 = vpack.c.b16 %v2772, %v2771
      %v2776 = vpack.c.b16 %v2774, %v2773
      %v2780 = vsel %vm1075, %v2740, 0
      %v2783 = vsel %vm1075, %v2741, 0
      %v2786 = vsel %vm1075, %v2742, 0
      %v2789 = vsel %vm1075, %v2743, 0
      %v2792 = vsel %vm1075, %v2744, 0
      %v2795 = vsel %vm1075, %v2745, 0
      %v2798 = vsel %vm1075, %v2746, 0
      %v2801 = vsel %vm1075, %v2747, 0
      %v2804 = vsel %vm1075, %v2748, 0
      %v2807 = vsel %vm1075, %v2749, 0
      %v2810 = vsel %vm1075, %v2750, 0
      %v2813 = vsel %vm1075, %v2751, 0
      %v2816 = vsel %vm1075, %v2752, 0
      %v2819 = vsel %vm1075, %v2753, 0
      %v2822 = vsel %vm1075, %v2754, 0
      %v2825 = vsel %vm1075, %v2755, 0
      %2827 = vmatprep.subr.bf16.mxu0 0
      %2828 = vmatpush1.bf16.msra.mxu0 0
      %2829 = vmatprep.subr.bf16.mxu0 0
      %2830 = vmatpush1.bf16.msra.mxu0 0
      %2831 = vmatprep.subr.bf16.mxu0 0
      %2832 = vmatpush1.bf16.msra.mxu0 0
      %2833 = vmatprep.subr.bf16.mxu0 0
      %2834 = vmatpush1.bf16.msra.mxu0 0
      %2835 = vmatprep.subr.bf16.mxu0 0
      %2836 = vmatpush1.bf16.msra.mxu0 0
      %2837 = vmatprep.subr.bf16.mxu0 0
      %2838 = vmatpush1.bf16.msra.mxu0 0
      %2839 = vmatprep.subr.bf16.mxu0 0
      %2840 = vmatpush1.bf16.msra.mxu0 %v2776
      %2841 = vmatprep.subr.bf16.mxu0 0
      %2842 = vmatpush1.bf16.msra.mxu0 %v2775
      %2843 = vmatprep.subr.bf16.mxu0 0
      %2844 = vmatpush2.bf16.msra.mxu0 0
      %2845 = vmatprep.subr.bf16.mxu0 0
      %2846 = vmatpush2.bf16.msra.mxu0 0
      %2847 = vmatprep.subr.bf16.mxu0 0
      %2848 = vmatpush2.bf16.msra.mxu0 0
      %2849 = vmatprep.subr.bf16.mxu0 0
      %2850 = vmatpush2.bf16.msra.mxu0 0
      %2851 = vmatprep.subr.bf16.mxu0 0
      %2852 = vmatpush2.bf16.msra.mxu0 0
      %2853 = vmatprep.subr.bf16.mxu0 0
      %2854 = vmatpush2.bf16.msra.mxu0 0
      %2855 = vmatprep.subr.bf16.mxu0 0
      %2856 = vmatpush2.bf16.msra.mxu0 0
      %2857 = vmatprep.subr.bf16.mxu0 0
      %2858 = vmatpush2.bf16.msra.mxu0 0
      %2859 = vmatprep.mubr.bf16.mxu0 0
      %2860 = vmatmul.mubr.bf16.gmra.mxu0 %v2780
      %v2861 = vpop.f32.mrf.mxu0
      %v2862 = vadd.f32 %v2765, %v2861
      %v2863 = vpop.f32.mrf.mxu0
      %v2864 = vpop.f32.mrf.mxu0
      %v2865 = vadd.f32 %v2765, %v2864
      %v2866 = vpop.f32.mrf.mxu0
      %2867 = vmatprep.mubr.bf16.mxu0 0
      %2868 = vmatmul.mubr.bf16.gmra.mxu0 %v2783
      %v2869 = vpop.f32.mrf.mxu0
      %v2870 = vadd.f32 %v2765, %v2869
      %v2871 = vpop.f32.mrf.mxu0
      %v2872 = vpop.f32.mrf.mxu0
      %v2873 = vadd.f32 %v2765, %v2872
      %v2874 = vpop.f32.mrf.mxu0
      %2875 = vmatprep.mubr.bf16.mxu0 0
      %2876 = vmatmul.mubr.bf16.gmra.mxu0 %v2786
      %v2877 = vpop.f32.mrf.mxu0
      %v2878 = vadd.f32 %v2765, %v2877
      %v2879 = vpop.f32.mrf.mxu0
      %v2880 = vpop.f32.mrf.mxu0
      %v2881 = vadd.f32 %v2765, %v2880
      %v2882 = vpop.f32.mrf.mxu0
      %2883 = vmatprep.mubr.bf16.mxu0 0
      %2884 = vmatmul.mubr.bf16.gmra.mxu0 %v2789
      %v2885 = vpop.f32.mrf.mxu0
      %v2886 = vadd.f32 %v2765, %v2885
      %v2887 = vpop.f32.mrf.mxu0
      %v2888 = vpop.f32.mrf.mxu0
      %v2889 = vadd.f32 %v2765, %v2888
      %v2890 = vpop.f32.mrf.mxu0
      %2891 = vmatprep.mubr.bf16.mxu0 0
      %2892 = vmatmul.mubr.bf16.gmra.mxu0 %v2792
      %v2893 = vpop.f32.mrf.mxu0
      %v2894 = vadd.f32 %v2765, %v2893
      %v2895 = vpop.f32.mrf.mxu0
      %v2896 = vpop.f32.mrf.mxu0
      %v2897 = vadd.f32 %v2765, %v2896
      %v2898 = vpop.f32.mrf.mxu0
      %2899 = vmatprep.mubr.bf16.mxu0 0
      %2900 = vmatmul.mubr.bf16.gmra.mxu0 %v2795
      %v2901 = vpop.f32.mrf.mxu0
      %v2902 = vadd.f32 %v2765, %v2901
      %v2903 = vpop.f32.mrf.mxu0
      %v2904 = vpop.f32.mrf.mxu0
      %v2905 = vadd.f32 %v2765, %v2904
      %v2906 = vpop.f32.mrf.mxu0
      %2907 = vmatprep.mubr.bf16.mxu0 0
      %2908 = vmatmul.mubr.bf16.gmra.mxu0 %v2798
      %v2909 = vpop.f32.mrf.mxu0
      %v2910 = vadd.f32 %v2765, %v2909
      %v2911 = vpop.f32.mrf.mxu0
      %v2912 = vpop.f32.mrf.mxu0
      %v2913 = vadd.f32 %v2765, %v2912
      %v2914 = vpop.f32.mrf.mxu0
      %2915 = vmatprep.mubr.bf16.mxu0 0
      %2916 = vmatmul.mubr.bf16.gmra.mxu0 %v2801
      %v2917 = vpop.f32.mrf.mxu0
      %v2918 = vadd.f32 %v2765, %v2917
      %v2919 = vpop.f32.mrf.mxu0
      %v2920 = vpop.f32.mrf.mxu0
      %v2921 = vadd.f32 %v2765, %v2920
      %v2922 = vpop.f32.mrf.mxu0
      %2923 = vmatprep.mubr.bf16.mxu0 0
      %2924 = vmatmul.mubr.bf16.gmra.mxu0 %v2804
      %v2925 = vpop.f32.mrf.mxu0
      %v2926 = vadd.f32 %v2765, %v2925
      %v2927 = vpop.f32.mrf.mxu0
      %v2928 = vpop.f32.mrf.mxu0
      %v2929 = vadd.f32 %v2765, %v2928
      %v2930 = vpop.f32.mrf.mxu0
      %2931 = vmatprep.mubr.bf16.mxu0 0
      %2932 = vmatmul.mubr.bf16.gmra.mxu0 %v2807
      %v2933 = vpop.f32.mrf.mxu0
      %v2934 = vadd.f32 %v2765, %v2933
      %v2935 = vpop.f32.mrf.mxu0
      %v2936 = vpop.f32.mrf.mxu0
      %v2937 = vadd.f32 %v2765, %v2936
      %v2938 = vpop.f32.mrf.mxu0
      %2939 = vmatprep.mubr.bf16.mxu0 0
      %2940 = vmatmul.mubr.bf16.gmra.mxu0 %v2810
      %v2941 = vpop.f32.mrf.mxu0
      %v2942 = vadd.f32 %v2765, %v2941
      %v2943 = vpop.f32.mrf.mxu0
      %v2944 = vpop.f32.mrf.mxu0
      %v2945 = vadd.f32 %v2765, %v2944
      %v2946 = vpop.f32.mrf.mxu0
      %2947 = vmatprep.mubr.bf16.mxu0 0
      %2948 = vmatmul.mubr.bf16.gmra.mxu0 %v2813
      %v2949 = vpop.f32.mrf.mxu0
      %v2950 = vadd.f32 %v2765, %v2949
      %v2951 = vpop.f32.mrf.mxu0
      %v2952 = vpop.f32.mrf.mxu0
      %v2953 = vadd.f32 %v2765, %v2952
      %v2954 = vpop.f32.mrf.mxu0
      %2955 = vmatprep.mubr.bf16.mxu0 0
      %2956 = vmatmul.mubr.bf16.gmra.mxu0 %v2816
      %v2957 = vpop.f32.mrf.mxu0
      %v2958 = vadd.f32 %v2765, %v2957
      %v2959 = vpop.f32.mrf.mxu0
      %v2960 = vpop.f32.mrf.mxu0
      %v2961 = vadd.f32 %v2765, %v2960
      %v2962 = vpop.f32.mrf.mxu0
      %2963 = vmatprep.mubr.bf16.mxu0 0
      %2964 = vmatmul.mubr.bf16.gmra.mxu0 %v2819
      %v2965 = vpop.f32.mrf.mxu0
      %v2966 = vadd.f32 %v2765, %v2965
      %v2967 = vpop.f32.mrf.mxu0
      %v2968 = vpop.f32.mrf.mxu0
      %v2969 = vadd.f32 %v2765, %v2968
      %v2970 = vpop.f32.mrf.mxu0
      %2971 = vmatprep.mubr.bf16.mxu0 0
      %2972 = vmatmul.mubr.bf16.gmra.mxu0 %v2822
      %v2973 = vpop.f32.mrf.mxu0
      %v2974 = vadd.f32 %v2765, %v2973
      %v2975 = vpop.f32.mrf.mxu0
      %v2976 = vpop.f32.mrf.mxu0
      %v2977 = vadd.f32 %v2765, %v2976
      %v2978 = vpop.f32.mrf.mxu0
      %2979 = vmatprep.mubr.bf16.mxu0 0
      %2980 = vmatmul.mubr.bf16.gmra.mxu0 %v2825
      %v2981 = vpop.f32.mrf.mxu0
      %v2982 = vadd.f32 %v2765, %v2981
      %v2983 = vpop.f32.mrf.mxu0
      %v2984 = vpop.f32.mrf.mxu0
      %v2985 = vadd.f32 %v2765, %v2984
      %v2986 = vpop.f32.mrf.mxu0
      %2987 = vdwg.mxu0
      %3020 = vrot.lane.b32.xlu0 %v2862, 96
      %v3021 = vpop.permute.xlu0 %3020
      %3022 = vrot.lane.b32.xlu0 %v2865, 96
      %v3023 = vpop.permute.xlu0 %3022
      %3024 = vrot.lane.b32.xlu0 %v2870, 96
      %v3025 = vpop.permute.xlu0 %3024
      %3026 = vrot.lane.b32.xlu0 %v2873, 96
      %v3027 = vpop.permute.xlu0 %3026
      %3028 = vrot.lane.b32.xlu0 %v2878, 96
      %v3029 = vpop.permute.xlu0 %3028
      %3030 = vrot.lane.b32.xlu0 %v2881, 96
      %v3031 = vpop.permute.xlu0 %3030
      %3032 = vrot.lane.b32.xlu0 %v2886, 96
      %v3033 = vpop.permute.xlu0 %3032
      %3034 = vrot.lane.b32.xlu0 %v2889, 96
      %v3035 = vpop.permute.xlu0 %3034
      %3036 = vrot.lane.b32.xlu0 %v2894, 96
      %v3037 = vpop.permute.xlu0 %3036
      %3038 = vrot.lane.b32.xlu0 %v2897, 96
      %v3039 = vpop.permute.xlu0 %3038
      %3040 = vrot.lane.b32.xlu0 %v2902, 96
      %v3041 = vpop.permute.xlu0 %3040
      %3042 = vrot.lane.b32.xlu0 %v2905, 96
      %v3043 = vpop.permute.xlu0 %3042
      %3044 = vrot.lane.b32.xlu0 %v2910, 96
      %v3045 = vpop.permute.xlu0 %3044
      %3046 = vrot.lane.b32.xlu0 %v2913, 96
      %v3047 = vpop.permute.xlu0 %3046
      %3048 = vrot.lane.b32.xlu0 %v2918, 96
      %v3049 = vpop.permute.xlu0 %3048
      %3050 = vrot.lane.b32.xlu0 %v2921, 96
      %v3051 = vpop.permute.xlu0 %3050
      %3052 = vrot.lane.b32.xlu0 %v2926, 96
      %v3053 = vpop.permute.xlu0 %3052
      %3054 = vrot.lane.b32.xlu0 %v2929, 96
      %v3055 = vpop.permute.xlu0 %3054
      %3056 = vrot.lane.b32.xlu0 %v2934, 96
      %v3057 = vpop.permute.xlu0 %3056
      %3058 = vrot.lane.b32.xlu0 %v2937, 96
      %v3059 = vpop.permute.xlu0 %3058
      %3060 = vrot.lane.b32.xlu0 %v2942, 96
      %v3061 = vpop.permute.xlu0 %3060
      %3062 = vrot.lane.b32.xlu0 %v2945, 96
      %v3063 = vpop.permute.xlu0 %3062
      %3064 = vrot.lane.b32.xlu0 %v2950, 96
      %v3065 = vpop.permute.xlu0 %3064
      %3066 = vrot.lane.b32.xlu0 %v2953, 96
      %v3067 = vpop.permute.xlu0 %3066
      %3068 = vrot.lane.b32.xlu0 %v2958, 96
      %v3069 = vpop.permute.xlu0 %3068
      %3070 = vrot.lane.b32.xlu0 %v2961, 96
      %v3071 = vpop.permute.xlu0 %3070
      %3072 = vrot.lane.b32.xlu0 %v2966, 96
      %v3073 = vpop.permute.xlu0 %3072
      %3074 = vrot.lane.b32.xlu0 %v2969, 96
      %v3075 = vpop.permute.xlu0 %3074
      %3076 = vrot.lane.b32.xlu0 %v2974, 96
      %v3077 = vpop.permute.xlu0 %3076
      %3078 = vrot.lane.b32.xlu0 %v2977, 96
      %v3079 = vpop.permute.xlu0 %3078
      %3080 = vrot.lane.b32.xlu0 %v2982, 96
      %v3081 = vpop.permute.xlu0 %3080
      %3082 = vrot.lane.b32.xlu0 %v2985, 96
      %v3083 = vpop.permute.xlu0 %3082
      %v3116 = vmax.f32 %v2862, %v3021
      %v3117 = vmax.f32 %v2865, %v3023
      %v3118 = vmax.f32 %v2870, %v3025
      %v3119 = vmax.f32 %v2873, %v3027
      %v3120 = vmax.f32 %v2878, %v3029
      %v3121 = vmax.f32 %v2881, %v3031
      %v3122 = vmax.f32 %v2886, %v3033
      %v3123 = vmax.f32 %v2889, %v3035
      %v3124 = vmax.f32 %v2894, %v3037
      %v3125 = vmax.f32 %v2897, %v3039
      %v3126 = vmax.f32 %v2902, %v3041
      %v3127 = vmax.f32 %v2905, %v3043
      %v3128 = vmax.f32 %v2910, %v3045
      %v3129 = vmax.f32 %v2913, %v3047
      %v3130 = vmax.f32 %v2918, %v3049
      %v3131 = vmax.f32 %v2921, %v3051
      %v3132 = vmax.f32 %v2926, %v3053
      %v3133 = vmax.f32 %v2929, %v3055
      %v3134 = vmax.f32 %v2934, %v3057
      %v3135 = vmax.f32 %v2937, %v3059
      %v3136 = vmax.f32 %v2942, %v3061
      %v3137 = vmax.f32 %v2945, %v3063
      %v3138 = vmax.f32 %v2950, %v3065
      %v3139 = vmax.f32 %v2953, %v3067
      %v3140 = vmax.f32 %v2958, %v3069
      %v3141 = vmax.f32 %v2961, %v3071
      %v3142 = vmax.f32 %v2966, %v3073
      %v3143 = vmax.f32 %v2969, %v3075
      %v3144 = vmax.f32 %v2974, %v3077
      %v3145 = vmax.f32 %v2977, %v3079
      %v3146 = vmax.f32 %v2982, %v3081
      %v3147 = vmax.f32 %v2985, %v3083
      %v3148 = vpack.c.bf16 %v3117, %v3116
      %v3149 = vpack.c.bf16 %v3119, %v3118
      %v3150 = vpack.c.bf16 %v3121, %v3120
      %v3151 = vpack.c.bf16 %v3123, %v3122
      %v3152 = vpack.c.bf16 %v3125, %v3124
      %v3153 = vpack.c.bf16 %v3127, %v3126
      %v3154 = vpack.c.bf16 %v3129, %v3128
      %v3155 = vpack.c.bf16 %v3131, %v3130
      %v3156 = vpack.c.bf16 %v3133, %v3132
      %v3157 = vpack.c.bf16 %v3135, %v3134
      %v3158 = vpack.c.bf16 %v3137, %v3136
      %v3159 = vpack.c.bf16 %v3139, %v3138
      %v3160 = vpack.c.bf16 %v3141, %v3140
      %v3161 = vpack.c.bf16 %v3143, %v3142
      %v3162 = vpack.c.bf16 %v3145, %v3144
      %v3163 = vpack.c.bf16 %v3147, %v3146
      %3164 = vst.msk [vmem:[#allocation3] sm:$0xff] %vm1075, 0.0
      %3165 = vst.msk [vmem:[#allocation3 + $0x8] sm:$0xff] %vm1075, 0.0
      %vm3166 = vcmask 254976
      %3167 = vst.msk [vmem:[#allocation3 + $0x10] sm:$0x3] %vm3166, 0.0
      %3168 = vst.msk [vmem:[#allocation3 + $0x18] sm:$0xff] %vm1075, 0.0
      %3169 = vst.msk [vmem:[#allocation3 + $0x20] sm:$0xff] %vm1075, 0.0
      %3170 = vst.msk [vmem:[#allocation3 + $0x28] sm:$0x3] %vm3166, 0.0
      %3171 = vst.msk [vmem:[#allocation3 + $0x30] sm:$0xff] %vm1075, 0.0
      %3172 = vst.msk [vmem:[#allocation3 + $0x38] sm:$0xff] %vm1075, 0.0
      %3173 = vst.msk [vmem:[#allocation3 + $0x40] sm:$0x3] %vm3166, 0.0
      %3174 = vst.msk [vmem:[#allocation3 + $0x48] sm:$0xff] %vm1075, 0.0
      %3175 = vst.msk [vmem:[#allocation3 + $0x50] sm:$0xff] %vm1075, 0.0
      %3176 = vst.msk [vmem:[#allocation3 + $0x58] sm:$0x3] %vm3166, 0.0
      %3177 = vst.msk [vmem:[#allocation3 + $0x60] sm:$0xff] %vm1075, 0.0
      %3178 = vst.msk [vmem:[#allocation3 + $0x68] sm:$0xff] %vm1075, 0.0
      %3179 = vst.msk [vmem:[#allocation3 + $0x70] sm:$0x3] %vm3166, 0.0
      %3180 = vst.msk [vmem:[#allocation3 + $0x78] sm:$0xff] %vm1075, 0.0
      %3181 = vst.msk [vmem:[#allocation3 + $0x80] sm:$0xff] %vm1075, 0.0
      %3182 = vst.msk [vmem:[#allocation3 + $0x88] sm:$0x3] %vm3166, 0.0
      %3183 = vst.msk [vmem:[#allocation3 + $0x90] sm:$0xff] %vm1075, 0.0
      %3184 = vst.msk [vmem:[#allocation3 + $0x98] sm:$0xff] %vm1075, 0.0
      %3185 = vst.msk [vmem:[#allocation3 + $0xa0] sm:$0x3] %vm3166, 0.0
      %3186 = vst.msk [vmem:[#allocation3 + $0xa8] sm:$0xff] %vm1075, 0.0
      %3187 = vst.msk [vmem:[#allocation3 + $0xb0] sm:$0xff] %vm1075, 0.0
      %3188 = vst.msk [vmem:[#allocation3 + $0xb8] sm:$0x3] %vm3166, 0.0
      %3189 = vst.msk [vmem:[#allocation3 + $0xc0] sm:$0xff] %vm1075, 0.0
      %3190 = vst.msk [vmem:[#allocation3 + $0xc8] sm:$0xff] %vm1075, 0.0
      %3191 = vst.msk [vmem:[#allocation3 + $0xd0] sm:$0x3] %vm3166, 0.0
      %3192 = vst.msk [vmem:[#allocation3 + $0xd8] sm:$0xff] %vm1075, 0.0
      %3193 = vst.msk [vmem:[#allocation3 + $0xe0] sm:$0xff] %vm1075, 0.0
      %3194 = vst.msk [vmem:[#allocation3 + $0xe8] sm:$0x3] %vm3166, 0.0
      %3195 = vst.msk [vmem:[#allocation3 + $0xf0] sm:$0xff] %vm1075, 0.0
      %3196 = vst.msk [vmem:[#allocation3 + $0xf8] sm:$0xff] %vm1075, 0.0
      %3197 = vst.msk [vmem:[#allocation3 + $0x100] sm:$0x3] %vm3166, 0.0
      %3198 = vst.msk [vmem:[#allocation3 + $0x108] sm:$0xff] %vm1075, 0.0
      %3199 = vst.msk [vmem:[#allocation3 + $0x110] sm:$0xff] %vm1075, 0.0
      %3200 = vst.msk [vmem:[#allocation3 + $0x118] sm:$0x3] %vm3166, 0.0
      %3201 = vst.msk [vmem:[#allocation3 + $0x120] sm:$0xff] %vm1075, 0.0
      %3202 = vst.msk [vmem:[#allocation3 + $0x128] sm:$0xff] %vm1075, 0.0
      %3203 = vst.msk [vmem:[#allocation3 + $0x130] sm:$0x3] %vm3166, 0.0
      %3204 = vst.msk [vmem:[#allocation3 + $0x138] sm:$0xff] %vm1075, 0.0
      %3205 = vst.msk [vmem:[#allocation3 + $0x140] sm:$0xff] %vm1075, 0.0
      %3206 = vst.msk [vmem:[#allocation3 + $0x148] sm:$0x3] %vm3166, 0.0
      %3207 = vst.msk [vmem:[#allocation3 + $0x150] sm:$0xff] %vm1075, 0.0
      %3208 = vst.msk [vmem:[#allocation3 + $0x158] sm:$0xff] %vm1075, 0.0
      %3209 = vst.msk [vmem:[#allocation3 + $0x160] sm:$0x3] %vm3166, 0.0
      %3210 = vst.msk [vmem:[#allocation3 + $0x168] sm:$0xff] %vm1075, 0.0
      %3211 = vst.msk [vmem:[#allocation3 + $0x170] sm:$0xff] %vm1075, 0.0
      %3212 = vst.msk [vmem:[#allocation3 + $0x178] sm:$0x3] %vm3166, 0.0
      %3213 = vst.msk [vmem:[#allocation3 + $0x180] sm:$0xff] %vm1075, 0.0
      %3214 = vst.msk [vmem:[#allocation3 + $0x188] sm:$0xff] %vm1075, 0.0
      %3215 = vst.msk [vmem:[#allocation3 + $0x190] sm:$0x3] %vm3166, 0.0
      %3216 = vst.msk [vmem:[#allocation3 + $0x198] sm:$0xff] %vm1075, 0.0
      %3217 = vst.msk [vmem:[#allocation3 + $0x1a0] sm:$0xff] %vm1075, 0.0
      %3218 = vst.msk [vmem:[#allocation3 + $0x1a8] sm:$0x3] %vm3166, 0.0
      %v3219 = vunpack.c.l.bf16 %v3148
      %v3220 = vunpack.c.h.bf16 %v3148
      %v3221 = vunpack.c.l.bf16 %v3149
      %v3222 = vunpack.c.h.bf16 %v3149
      %v3223 = vunpack.c.l.bf16 %v3150
      %v3224 = vunpack.c.h.bf16 %v3150
      %v3225 = vunpack.c.l.bf16 %v3151
      %v3226 = vunpack.c.h.bf16 %v3151
      %v3227 = vunpack.c.l.bf16 %v3152
      %v3228 = vunpack.c.h.bf16 %v3152
      %v3229 = vunpack.c.l.bf16 %v3153
      %v3230 = vunpack.c.h.bf16 %v3153
      %v3231 = vunpack.c.l.bf16 %v3154
      %v3232 = vunpack.c.h.bf16 %v3154
      %v3233 = vunpack.c.l.bf16 %v3155
      %v3234 = vunpack.c.h.bf16 %v3155
      %v3235 = vunpack.c.l.bf16 %v3156
      %v3236 = vunpack.c.h.bf16 %v3156
      %v3237 = vunpack.c.l.bf16 %v3157
      %v3238 = vunpack.c.h.bf16 %v3157
      %v3239 = vunpack.c.l.bf16 %v3158
      %v3240 = vunpack.c.h.bf16 %v3158
      %v3241 = vunpack.c.l.bf16 %v3159
      %v3242 = vunpack.c.h.bf16 %v3159
      %v3243 = vunpack.c.l.bf16 %v3160
      %v3244 = vunpack.c.h.bf16 %v3160
      %v3245 = vunpack.c.l.bf16 %v3161
      %v3246 = vunpack.c.h.bf16 %v3161
      %v3247 = vunpack.c.l.bf16 %v3162
      %v3248 = vunpack.c.h.bf16 %v3162
      %v3249 = vunpack.c.l.bf16 %v3163
      %v3250 = vunpack.c.h.bf16 %v3163
      %s3251 = scalar_lea.vmem [#allocation3], 24
      %3252 = vst.msk [vmem:[%s3251 + $0x1] sm:$0xff] %vm1075, %v3219
      %3253 = vst.msk [vmem:[%s3251 + $0x9] sm:$0xff] %vm1075, %v3220
      %3254 = vst.msk [vmem:[%s3251 + $0x19] sm:$0xff] %vm1075, %v3221
      %3255 = vst.msk [vmem:[%s3251 + $0x21] sm:$0xff] %vm1075, %v3222
      %3256 = vst.msk [vmem:[%s3251 + $0x31] sm:$0xff] %vm1075, %v3223
      %3257 = vst.msk [vmem:[%s3251 + $0x39] sm:$0xff] %vm1075, %v3224
      %3258 = vst.msk [vmem:[%s3251 + $0x49] sm:$0xff] %vm1075, %v3225
      %3259 = vst.msk [vmem:[%s3251 + $0x51] sm:$0xff] %vm1075, %v3226
      %3260 = vst.msk [vmem:[%s3251 + $0x61] sm:$0xff] %vm1075, %v3227
      %3261 = vst.msk [vmem:[%s3251 + $0x69] sm:$0xff] %vm1075, %v3228
      %3262 = vst.msk [vmem:[%s3251 + $0x79] sm:$0xff] %vm1075, %v3229
      %3263 = vst.msk [vmem:[%s3251 + $0x81] sm:$0xff] %vm1075, %v3230
      %3264 = vst.msk [vmem:[%s3251 + $0x91] sm:$0xff] %vm1075, %v3231
      %3265 = vst.msk [vmem:[%s3251 + $0x99] sm:$0xff] %vm1075, %v3232
      %3266 = vst.msk [vmem:[%s3251 + $0xa9] sm:$0xff] %vm1075, %v3233
      %3267 = vst.msk [vmem:[%s3251 + $0xb1] sm:$0xff] %vm1075, %v3234
      %3268 = vst.msk [vmem:[%s3251 + $0xc1] sm:$0xff] %vm1075, %v3235
      %3269 = vst.msk [vmem:[%s3251 + $0xc9] sm:$0xff] %vm1075, %v3236
      %3270 = vst.msk [vmem:[%s3251 + $0xd9] sm:$0xff] %vm1075, %v3237
      %3271 = vst.msk [vmem:[%s3251 + $0xe1] sm:$0xff] %vm1075, %v3238
      %3272 = vst.msk [vmem:[%s3251 + $0xf1] sm:$0xff] %vm1075, %v3239
      %3273 = vst.msk [vmem:[%s3251 + $0xf9] sm:$0xff] %vm1075, %v3240
      %3274 = vst.msk [vmem:[%s3251 + $0x109] sm:$0xff] %vm1075, %v3241
      %3275 = vst.msk [vmem:[%s3251 + $0x111] sm:$0xff] %vm1075, %v3242
      %3276 = vst.msk [vmem:[%s3251 + $0x121] sm:$0xff] %vm1075, %v3243
      %3277 = vst.msk [vmem:[%s3251 + $0x129] sm:$0xff] %vm1075, %v3244
      %3278 = vst.msk [vmem:[%s3251 + $0x139] sm:$0xff] %vm1075, %v3245
      %3279 = vst.msk [vmem:[%s3251 + $0x141] sm:$0xff] %vm1075, %v3246
      %3280 = vst.msk [vmem:[%s3251 + $0x151] sm:$0xff] %vm1075, %v3247
      %3281 = vst.msk [vmem:[%s3251 + $0x159] sm:$0xff] %vm1075, %v3248
      %3282 = vst.msk [vmem:[%s3251 + $0x169] sm:$0xff] %vm1075, %v3249
      %3283 = vst.msk [vmem:[%s3251 + $0x171] sm:$0xff] %vm1075, %v3250
      %v3284 = vld [vmem:[#allocation3] sm:$0xff]
      %v3285 = vld [vmem:[#allocation3 + $0x8] sm:$0xff]
      %v3286 = vld [vmem:[#allocation3 + $0x18] sm:$0xff]
      %v3287 = vld [vmem:[#allocation3 + $0x20] sm:$0xff]
      %v3288 = vld [vmem:[#allocation3 + $0x30] sm:$0xff]
      %v3289 = vld [vmem:[#allocation3 + $0x38] sm:$0xff]
      %v3290 = vld [vmem:[#allocation3 + $0x48] sm:$0xff]
      %v3291 = vld [vmem:[#allocation3 + $0x50] sm:$0xff]
      %v3292 = vld [vmem:[#allocation3 + $0x60] sm:$0xff]
      %v3293 = vld [vmem:[#allocation3 + $0x68] sm:$0xff]
      %v3294 = vld [vmem:[#allocation3 + $0x78] sm:$0xff]
      %v3295 = vld [vmem:[#allocation3 + $0x80] sm:$0xff]
      %v3296 = vld [vmem:[#allocation3 + $0x90] sm:$0xff]
      %v3297 = vld [vmem:[#allocation3 + $0x98] sm:$0xff]
      %v3298 = vld [vmem:[#allocation3 + $0xa8] sm:$0xff]
      %v3299 = vld [vmem:[#allocation3 + $0xb0] sm:$0xff]
      %v3300 = vld [vmem:[#allocation3 + $0xc0] sm:$0xff]
      %v3301 = vld [vmem:[#allocation3 + $0xc8] sm:$0xff]
      %v3302 = vld [vmem:[#allocation3 + $0xd8] sm:$0xff]
      %v3303 = vld [vmem:[#allocation3 + $0xe0] sm:$0xff]
      %v3304 = vld [vmem:[#allocation3 + $0xf0] sm:$0xff]
      %v3305 = vld [vmem:[#allocation3 + $0xf8] sm:$0xff]
      %v3306 = vld [vmem:[#allocation3 + $0x108] sm:$0xff]
      %v3307 = vld [vmem:[#allocation3 + $0x110] sm:$0xff]
      %v3308 = vld [vmem:[#allocation3 + $0x120] sm:$0xff]
      %v3309 = vld [vmem:[#allocation3 + $0x128] sm:$0xff]
      %v3310 = vld [vmem:[#allocation3 + $0x138] sm:$0xff]
      %v3311 = vld [vmem:[#allocation3 + $0x140] sm:$0xff]
      %v3312 = vld [vmem:[#allocation3 + $0x150] sm:$0xff]
      %v3313 = vld [vmem:[#allocation3 + $0x158] sm:$0xff]
      %v3314 = vld [vmem:[#allocation3 + $0x168] sm:$0xff]
      %v3315 = vld [vmem:[#allocation3 + $0x170] sm:$0xff]
      %v3316 = vpack.c.bf16 %v3285, %v3284
      %v3317 = vpack.c.bf16 %v3287, %v3286
      %v3318 = vpack.c.bf16 %v3289, %v3288
      %v3319 = vpack.c.bf16 %v3291, %v3290
      %v3320 = vpack.c.bf16 %v3293, %v3292
      %v3321 = vpack.c.bf16 %v3295, %v3294
      %v3322 = vpack.c.bf16 %v3297, %v3296
      %v3323 = vpack.c.bf16 %v3299, %v3298
      %v3324 = vpack.c.bf16 %v3301, %v3300
      %v3325 = vpack.c.bf16 %v3303, %v3302
      %v3326 = vpack.c.bf16 %v3305, %v3304
      %v3327 = vpack.c.bf16 %v3307, %v3306
      %v3328 = vpack.c.bf16 %v3309, %v3308
      %v3329 = vpack.c.bf16 %v3311, %v3310
      %v3330 = vpack.c.bf16 %v3313, %v3312
      %v3331 = vpack.c.bf16 %v3315, %v3314
      %v3348 = vunpack.c.l.b16 %v3316
      %v3349 = vunpack.c.h.b16 %v3316
      %v3350 = vunpack.c.l.b16 %v3317
      %v3351 = vunpack.c.h.b16 %v3317
      %v3352 = vunpack.c.l.b16 %v3318
      %v3353 = vunpack.c.h.b16 %v3318
      %v3354 = vunpack.c.l.b16 %v3319
      %v3355 = vunpack.c.h.b16 %v3319
      %v3356 = vunpack.c.l.b16 %v3320
      %v3357 = vunpack.c.h.b16 %v3320
      %v3358 = vunpack.c.l.b16 %v3321
      %v3359 = vunpack.c.h.b16 %v3321
      %v3360 = vunpack.c.l.b16 %v3322
      %v3361 = vunpack.c.h.b16 %v3322
      %v3362 = vunpack.c.l.b16 %v3323
      %v3363 = vunpack.c.h.b16 %v3323
      %v3364 = vunpack.c.l.b16 %v3324
      %v3365 = vunpack.c.h.b16 %v3324
      %v3366 = vunpack.c.l.b16 %v3325
      %v3367 = vunpack.c.h.b16 %v3325
      %v3368 = vunpack.c.l.b16 %v3326
      %v3369 = vunpack.c.h.b16 %v3326
      %v3370 = vunpack.c.l.b16 %v3327
      %v3371 = vunpack.c.h.b16 %v3327
      %v3372 = vunpack.c.l.b16 %v3328
      %v3373 = vunpack.c.h.b16 %v3328
      %v3374 = vunpack.c.l.b16 %v3329
      %v3375 = vunpack.c.h.b16 %v3329
      %v3376 = vunpack.c.l.b16 %v3330
      %v3377 = vunpack.c.h.b16 %v3330
      %v3378 = vunpack.c.l.b16 %v3331
      %v3379 = vunpack.c.h.b16 %v3331
      %v3380 = vpack.c.b16 %v3348, %v3348
      %v3381 = vpack.c.b16 %v3349, %v3349
      %v3382 = vpack.c.b16 %v3350, %v3350
      %v3383 = vpack.c.b16 %v3351, %v3351
      %v3384 = vpack.c.b16 %v3352, %v3352
      %v3385 = vpack.c.b16 %v3353, %v3353
      %v3386 = vpack.c.b16 %v3354, %v3354
      %v3387 = vpack.c.b16 %v3355, %v3355
      %v3388 = vpack.c.b16 %v3356, %v3356
      %v3389 = vpack.c.b16 %v3357, %v3357
      %v3390 = vpack.c.b16 %v3358, %v3358
      %v3391 = vpack.c.b16 %v3359, %v3359
      %v3392 = vpack.c.b16 %v3360, %v3360
      %v3393 = vpack.c.b16 %v3361, %v3361
      %v3394 = vpack.c.b16 %v3362, %v3362
      %v3395 = vpack.c.b16 %v3363, %v3363
      %v3396 = vpack.c.b16 %v3364, %v3364
      %v3397 = vpack.c.b16 %v3365, %v3365
      %v3398 = vpack.c.b16 %v3366, %v3366
      %v3399 = vpack.c.b16 %v3367, %v3367
      %v3400 = vpack.c.b16 %v3368, %v3368
      %v3401 = vpack.c.b16 %v3369, %v3369
      %v3402 = vpack.c.b16 %v3370, %v3370
      %v3403 = vpack.c.b16 %v3371, %v3371
      %v3404 = vpack.c.b16 %v3372, %v3372
      %v3405 = vpack.c.b16 %v3373, %v3373
      %v3406 = vpack.c.b16 %v3374, %v3374
      %v3407 = vpack.c.b16 %v3375, %v3375
      %v3408 = vpack.c.b16 %v3376, %v3376
      %v3409 = vpack.c.b16 %v3377, %v3377
      %v3410 = vpack.c.b16 %v3378, %v3378
      %v3411 = vpack.c.b16 %v3379, %v3379
      %vm3444 = vcmask 257024
      %3445 = vst.msk [vmem:[#allocation4] sm:$0xf] %vm3444, %v3380
      %3446 = vst.msk [vmem:[#allocation4 + $0xc] sm:$0xf] %vm3444, %v3381
      %3447 = vst.msk [vmem:[#allocation4 + $0x18] sm:$0xf] %vm3444, %v3382
      %3448 = vst.msk [vmem:[#allocation4 + $0x24] sm:$0xf] %vm3444, %v3383
      %3449 = vst.msk [vmem:[#allocation4 + $0x30] sm:$0xf] %vm3444, %v3384
      %3450 = vst.msk [vmem:[#allocation4 + $0x3c] sm:$0xf] %vm3444, %v3385
      %3451 = vst.msk [vmem:[#allocation4 + $0x48] sm:$0xf] %vm3444, %v3386
      %3452 = vst.msk [vmem:[#allocation4 + $0x54] sm:$0xf] %vm3444, %v3387
      %3453 = vst.msk [vmem:[#allocation4 + $0x60] sm:$0xf] %vm3444, %v3388
      %3454 = vst.msk [vmem:[#allocation4 + $0x6c] sm:$0xf] %vm3444, %v3389
      %3455 = vst.msk [vmem:[#allocation4 + $0x78] sm:$0xf] %vm3444, %v3390
      %3456 = vst.msk [vmem:[#allocation4 + $0x84] sm:$0xf] %vm3444, %v3391
      %3457 = vst.msk [vmem:[#allocation4 + $0x90] sm:$0xf] %vm3444, %v3392
      %3458 = vst.msk [vmem:[#allocation4 + $0x9c] sm:$0xf] %vm3444, %v3393
      %3459 = vst.msk [vmem:[#allocation4 + $0xa8] sm:$0xf] %vm3444, %v3394
      %3460 = vst.msk [vmem:[#allocation4 + $0xb4] sm:$0xf] %vm3444, %v3395
      %3461 = vst.msk [vmem:[#allocation4 + $0xc0] sm:$0xf] %vm3444, %v3396
      %3462 = vst.msk [vmem:[#allocation4 + $0xcc] sm:$0xf] %vm3444, %v3397
      %3463 = vst.msk [vmem:[#allocation4 + $0xd8] sm:$0xf] %vm3444, %v3398
      %3464 = vst.msk [vmem:[#allocation4 + $0xe4] sm:$0xf] %vm3444, %v3399
      %3465 = vst.msk [vmem:[#allocation4 + $0xf0] sm:$0xf] %vm3444, %v3400
      %3466 = vst.msk [vmem:[#allocation4 + $0xfc] sm:$0xf] %vm3444, %v3401
      %3467 = vst.msk [vmem:[#allocation4 + $0x108] sm:$0xf] %vm3444, %v3402
      %3468 = vst.msk [vmem:[#allocation4 + $0x114] sm:$0xf] %vm3444, %v3403
      %3469 = vst.msk [vmem:[#allocation4 + $0x120] sm:$0xf] %vm3444, %v3404
      %3470 = vst.msk [vmem:[#allocation4 + $0x12c] sm:$0xf] %vm3444, %v3405
      %3471 = vst.msk [vmem:[#allocation4 + $0x138] sm:$0xf] %vm3444, %v3406
      %3472 = vst.msk [vmem:[#allocation4 + $0x144] sm:$0xf] %vm3444, %v3407
      %3473 = vst.msk [vmem:[#allocation4 + $0x150] sm:$0xf] %vm3444, %v3408
      %3474 = vst.msk [vmem:[#allocation4 + $0x15c] sm:$0xf] %vm3444, %v3409
      %3475 = vst.msk [vmem:[#allocation4 + $0x168] sm:$0xf] %vm3444, %v3410
      %3476 = vst.msk [vmem:[#allocation4 + $0x174] sm:$0xf] %vm3444, %v3411
      %v3477 = vld [vmem:[#allocation3 + $0x1] sm:$0xff]
      %v3478 = vld [vmem:[#allocation3 + $0x9] sm:$0xff]
      %v3479 = vld [vmem:[#allocation3 + $0x19] sm:$0xff]
      %v3480 = vld [vmem:[#allocation3 + $0x21] sm:$0xff]
      %v3481 = vld [vmem:[#allocation3 + $0x31] sm:$0xff]
      %v3482 = vld [vmem:[#allocation3 + $0x39] sm:$0xff]
      %v3483 = vld [vmem:[#allocation3 + $0x49] sm:$0xff]
      %v3484 = vld [vmem:[#allocation3 + $0x51] sm:$0xff]
      %v3485 = vld [vmem:[#allocation3 + $0x61] sm:$0xff]
      %v3486 = vld [vmem:[#allocation3 + $0x69] sm:$0xff]
      %v3487 = vld [vmem:[#allocation3 + $0x79] sm:$0xff]
      %v3488 = vld [vmem:[#allocation3 + $0x81] sm:$0xff]
      %v3489 = vld [vmem:[#allocation3 + $0x91] sm:$0xff]
      %v3490 = vld [vmem:[#allocation3 + $0x99] sm:$0xff]
      %v3491 = vld [vmem:[#allocation3 + $0xa9] sm:$0xff]
      %v3492 = vld [vmem:[#allocation3 + $0xb1] sm:$0xff]
      %v3493 = vld [vmem:[#allocation3 + $0xc1] sm:$0xff]
      %v3494 = vld [vmem:[#allocation3 + $0xc9] sm:$0xff]
      %v3495 = vld [vmem:[#allocation3 + $0xd9] sm:$0xff]
      %v3496 = vld [vmem:[#allocation3 + $0xe1] sm:$0xff]
      %v3497 = vld [vmem:[#allocation3 + $0xf1] sm:$0xff]
      %v3498 = vld [vmem:[#allocation3 + $0xf9] sm:$0xff]
      %v3499 = vld [vmem:[#allocation3 + $0x109] sm:$0xff]
      %v3500 = vld [vmem:[#allocation3 + $0x111] sm:$0xff]
      %v3501 = vld [vmem:[#allocation3 + $0x121] sm:$0xff]
      %v3502 = vld [vmem:[#allocation3 + $0x129] sm:$0xff]
      %v3503 = vld [vmem:[#allocation3 + $0x139] sm:$0xff]
      %v3504 = vld [vmem:[#allocation3 + $0x141] sm:$0xff]
      %v3505 = vld [vmem:[#allocation3 + $0x151] sm:$0xff]
      %v3506 = vld [vmem:[#allocation3 + $0x159] sm:$0xff]
      %v3507 = vld [vmem:[#allocation3 + $0x169] sm:$0xff]
      %v3508 = vld [vmem:[#allocation3 + $0x171] sm:$0xff]
      %v3509 = vpack.c.bf16 %v3478, %v3477
      %v3510 = vpack.c.bf16 %v3480, %v3479
      %v3511 = vpack.c.bf16 %v3482, %v3481
      %v3512 = vpack.c.bf16 %v3484, %v3483
      %v3513 = vpack.c.bf16 %v3486, %v3485
      %v3514 = vpack.c.bf16 %v3488, %v3487
      %v3515 = vpack.c.bf16 %v3490, %v3489
      %v3516 = vpack.c.bf16 %v3492, %v3491
      %v3517 = vpack.c.bf16 %v3494, %v3493
      %v3518 = vpack.c.bf16 %v3496, %v3495
      %v3519 = vpack.c.bf16 %v3498, %v3497
      %v3520 = vpack.c.bf16 %v3500, %v3499
      %v3521 = vpack.c.bf16 %v3502, %v3501
      %v3522 = vpack.c.bf16 %v3504, %v3503
      %v3523 = vpack.c.bf16 %v3506, %v3505
      %v3524 = vpack.c.bf16 %v3508, %v3507
      %v3541 = vunpack.c.l.b16 %v3509
      %v3542 = vunpack.c.h.b16 %v3509
      %v3543 = vunpack.c.l.b16 %v3510
      %v3544 = vunpack.c.h.b16 %v3510
      %v3545 = vunpack.c.l.b16 %v3511
      %v3546 = vunpack.c.h.b16 %v3511
      %v3547 = vunpack.c.l.b16 %v3512
      %v3548 = vunpack.c.h.b16 %v3512
      %v3549 = vunpack.c.l.b16 %v3513
      %v3550 = vunpack.c.h.b16 %v3513
      %v3551 = vunpack.c.l.b16 %v3514
      %v3552 = vunpack.c.h.b16 %v3514
      %v3553 = vunpack.c.l.b16 %v3515
      %v3554 = vunpack.c.h.b16 %v3515
      %v3555 = vunpack.c.l.b16 %v3516
      %v3556 = vunpack.c.h.b16 %v3516
      %v3557 = vunpack.c.l.b16 %v3517
      %v3558 = vunpack.c.h.b16 %v3517
      %v3559 = vunpack.c.l.b16 %v3518
      %v3560 = vunpack.c.h.b16 %v3518
      %v3561 = vunpack.c.l.b16 %v3519
      %v3562 = vunpack.c.h.b16 %v3519
      %v3563 = vunpack.c.l.b16 %v3520
      %v3564 = vunpack.c.h.b16 %v3520
      %v3565 = vunpack.c.l.b16 %v3521
      %v3566 = vunpack.c.h.b16 %v3521
      %v3567 = vunpack.c.l.b16 %v3522
      %v3568 = vunpack.c.h.b16 %v3522
      %v3569 = vunpack.c.l.b16 %v3523
      %v3570 = vunpack.c.h.b16 %v3523
      %v3571 = vunpack.c.l.b16 %v3524
      %v3572 = vunpack.c.h.b16 %v3524
      %v3573 = vpack.c.b16 %v3541, %v3541
      %v3574 = vpack.c.b16 %v3542, %v3542
      %v3575 = vpack.c.b16 %v3543, %v3543
      %v3576 = vpack.c.b16 %v3544, %v3544
      %v3577 = vpack.c.b16 %v3545, %v3545
      %v3578 = vpack.c.b16 %v3546, %v3546
      %v3579 = vpack.c.b16 %v3547, %v3547
      %v3580 = vpack.c.b16 %v3548, %v3548
      %v3581 = vpack.c.b16 %v3549, %v3549
      %v3582 = vpack.c.b16 %v3550, %v3550
      %v3583 = vpack.c.b16 %v3551, %v3551
      %v3584 = vpack.c.b16 %v3552, %v3552
      %v3585 = vpack.c.b16 %v3553, %v3553
      %v3586 = vpack.c.b16 %v3554, %v3554
      %v3587 = vpack.c.b16 %v3555, %v3555
      %v3588 = vpack.c.b16 %v3556, %v3556
      %v3589 = vpack.c.b16 %v3557, %v3557
      %v3590 = vpack.c.b16 %v3558, %v3558
      %v3591 = vpack.c.b16 %v3559, %v3559
      %v3592 = vpack.c.b16 %v3560, %v3560
      %v3593 = vpack.c.b16 %v3561, %v3561
      %v3594 = vpack.c.b16 %v3562, %v3562
      %v3595 = vpack.c.b16 %v3563, %v3563
      %v3596 = vpack.c.b16 %v3564, %v3564
      %v3597 = vpack.c.b16 %v3565, %v3565
      %v3598 = vpack.c.b16 %v3566, %v3566
      %v3599 = vpack.c.b16 %v3567, %v3567
      %v3600 = vpack.c.b16 %v3568, %v3568
      %v3601 = vpack.c.b16 %v3569, %v3569
      %v3602 = vpack.c.b16 %v3570, %v3570
      %v3603 = vpack.c.b16 %v3571, %v3571
      %v3604 = vpack.c.b16 %v3572, %v3572
      %3605 = vrot.lane.b32.xlu0 %v3573, 32
      %v3606 = vpop.permute.xlu0 %3605
      %3607 = vrot.lane.b32.xlu0 %v3574, 32
      %v3608 = vpop.permute.xlu0 %3607
      %3609 = vrot.lane.b32.xlu0 %v3575, 32
      %v3610 = vpop.permute.xlu0 %3609
      %3611 = vrot.lane.b32.xlu0 %v3576, 32
      %v3612 = vpop.permute.xlu0 %3611
      %3613 = vrot.lane.b32.xlu0 %v3577, 32
      %v3614 = vpop.permute.xlu0 %3613
      %3615 = vrot.lane.b32.xlu0 %v3578, 32
      %v3616 = vpop.permute.xlu0 %3615
      %3617 = vrot.lane.b32.xlu0 %v3579, 32
      %v3618 = vpop.permute.xlu0 %3617
      %3619 = vrot.lane.b32.xlu0 %v3580, 32
      %v3620 = vpop.permute.xlu0 %3619
      %3621 = vrot.lane.b32.xlu0 %v3581, 32
      %v3622 = vpop.permute.xlu0 %3621
      %3623 = vrot.lane.b32.xlu0 %v3582, 32
      %v3624 = vpop.permute.xlu0 %3623
      %3625 = vrot.lane.b32.xlu0 %v3583, 32
      %v3626 = vpop.permute.xlu0 %3625
      %3627 = vrot.lane.b32.xlu0 %v3584, 32
      %v3628 = vpop.permute.xlu0 %3627
      %3629 = vrot.lane.b32.xlu0 %v3585, 32
      %v3630 = vpop.permute.xlu0 %3629
      %3631 = vrot.lane.b32.xlu0 %v3586, 32
      %v3632 = vpop.permute.xlu0 %3631
      %3633 = vrot.lane.b32.xlu0 %v3587, 32
      %v3634 = vpop.permute.xlu0 %3633
      %3635 = vrot.lane.b32.xlu0 %v3588, 32
      %v3636 = vpop.permute.xlu0 %3635
      %3637 = vrot.lane.b32.xlu0 %v3589, 32
      %v3638 = vpop.permute.xlu0 %3637
      %3639 = vrot.lane.b32.xlu0 %v3590, 32
      %v3640 = vpop.permute.xlu0 %3639
      %3641 = vrot.lane.b32.xlu0 %v3591, 32
      %v3642 = vpop.permute.xlu0 %3641
      %3643 = vrot.lane.b32.xlu0 %v3592, 32
      %v3644 = vpop.permute.xlu0 %3643
      %3645 = vrot.lane.b32.xlu0 %v3593, 32
      %v3646 = vpop.permute.xlu0 %3645
      %3647 = vrot.lane.b32.xlu0 %v3594, 32
      %v3648 = vpop.permute.xlu0 %3647
      %3649 = vrot.lane.b32.xlu0 %v3595, 32
      %v3650 = vpop.permute.xlu0 %3649
      %3651 = vrot.lane.b32.xlu0 %v3596, 32
      %v3652 = vpop.permute.xlu0 %3651
      %3653 = vrot.lane.b32.xlu0 %v3597, 32
      %v3654 = vpop.permute.xlu0 %3653
      %3655 = vrot.lane.b32.xlu0 %v3598, 32
      %v3656 = vpop.permute.xlu0 %3655
      %3657 = vrot.lane.b32.xlu0 %v3599, 32
      %v3658 = vpop.permute.xlu0 %3657
      %3659 = vrot.lane.b32.xlu0 %v3600, 32
      %v3660 = vpop.permute.xlu0 %3659
      %3661 = vrot.lane.b32.xlu0 %v3601, 32
      %v3662 = vpop.permute.xlu0 %3661
      %3663 = vrot.lane.b32.xlu0 %v3602, 32
      %v3664 = vpop.permute.xlu0 %3663
      %3665 = vrot.lane.b32.xlu0 %v3603, 32
      %v3666 = vpop.permute.xlu0 %3665
      %3667 = vrot.lane.b32.xlu0 %v3604, 32
      %v3668 = vpop.permute.xlu0 %3667
      %vm3701 = vcmask 519424
      %3702 = vst.msk [vmem:[#allocation4] sm:$0xf] %vm3701, %v3606
      %3703 = vst.msk [vmem:[#allocation4 + $0xc] sm:$0xf] %vm3701, %v3608
      %3704 = vst.msk [vmem:[#allocation4 + $0x18] sm:$0xf] %vm3701, %v3610
      %3705 = vst.msk [vmem:[#allocation4 + $0x24] sm:$0xf] %vm3701, %v3612
      %3706 = vst.msk [vmem:[#allocation4 + $0x30] sm:$0xf] %vm3701, %v3614
      %3707 = vst.msk [vmem:[#allocation4 + $0x3c] sm:$0xf] %vm3701, %v3616
      %3708 = vst.msk [vmem:[#allocation4 + $0x48] sm:$0xf] %vm3701, %v3618
      %3709 = vst.msk [vmem:[#allocation4 + $0x54] sm:$0xf] %vm3701, %v3620
      %3710 = vst.msk [vmem:[#allocation4 + $0x60] sm:$0xf] %vm3701, %v3622
      %3711 = vst.msk [vmem:[#allocation4 + $0x6c] sm:$0xf] %vm3701, %v3624
      %3712 = vst.msk [vmem:[#allocation4 + $0x78] sm:$0xf] %vm3701, %v3626
      %3713 = vst.msk [vmem:[#allocation4 + $0x84] sm:$0xf] %vm3701, %v3628
      %3714 = vst.msk [vmem:[#allocation4 + $0x90] sm:$0xf] %vm3701, %v3630
      %3715 = vst.msk [vmem:[#allocation4 + $0x9c] sm:$0xf] %vm3701, %v3632
      %3716 = vst.msk [vmem:[#allocation4 + $0xa8] sm:$0xf] %vm3701, %v3634
      %3717 = vst.msk [vmem:[#allocation4 + $0xb4] sm:$0xf] %vm3701, %v3636
      %3718 = vst.msk [vmem:[#allocation4 + $0xc0] sm:$0xf] %vm3701, %v3638
      %3719 = vst.msk [vmem:[#allocation4 + $0xcc] sm:$0xf] %vm3701, %v3640
      %3720 = vst.msk [vmem:[#allocation4 + $0xd8] sm:$0xf] %vm3701, %v3642
      %3721 = vst.msk [vmem:[#allocation4 + $0xe4] sm:$0xf] %vm3701, %v3644
      %3722 = vst.msk [vmem:[#allocation4 + $0xf0] sm:$0xf] %vm3701, %v3646
      %3723 = vst.msk [vmem:[#allocation4 + $0xfc] sm:$0xf] %vm3701, %v3648
      %3724 = vst.msk [vmem:[#allocation4 + $0x108] sm:$0xf] %vm3701, %v3650
      %3725 = vst.msk [vmem:[#allocation4 + $0x114] sm:$0xf] %vm3701, %v3652
      %3726 = vst.msk [vmem:[#allocation4 + $0x120] sm:$0xf] %vm3701, %v3654
      %3727 = vst.msk [vmem:[#allocation4 + $0x12c] sm:$0xf] %vm3701, %v3656
      %3728 = vst.msk [vmem:[#allocation4 + $0x138] sm:$0xf] %vm3701, %v3658
      %3729 = vst.msk [vmem:[#allocation4 + $0x144] sm:$0xf] %vm3701, %v3660
      %3730 = vst.msk [vmem:[#allocation4 + $0x150] sm:$0xf] %vm3701, %v3662
      %3731 = vst.msk [vmem:[#allocation4 + $0x15c] sm:$0xf] %vm3701, %v3664
      %3732 = vst.msk [vmem:[#allocation4 + $0x168] sm:$0xf] %vm3701, %v3666
      %3733 = vst.msk [vmem:[#allocation4 + $0x174] sm:$0xf] %vm3701, %v3668
      %v3734 = vld [vmem:[#allocation3 + $0x2] sm:$0xff]
      %v3735 = vld [vmem:[#allocation3 + $0xa] sm:$0xff]
      %v3736 = vld [vmem:[#allocation3 + $0x1a] sm:$0xff]
      %v3737 = vld [vmem:[#allocation3 + $0x22] sm:$0xff]
      %v3738 = vld [vmem:[#allocation3 + $0x32] sm:$0xff]
      %v3739 = vld [vmem:[#allocation3 + $0x3a] sm:$0xff]
      %v3740 = vld [vmem:[#allocation3 + $0x4a] sm:$0xff]
      %v3741 = vld [vmem:[#allocation3 + $0x52] sm:$0xff]
      %v3742 = vld [vmem:[#allocation3 + $0x62] sm:$0xff]
      %v3743 = vld [vmem:[#allocation3 + $0x6a] sm:$0xff]
      %v3744 = vld [vmem:[#allocation3 + $0x7a] sm:$0xff]
      %v3745 = vld [vmem:[#allocation3 + $0x82] sm:$0xff]
      %v3746 = vld [vmem:[#allocation3 + $0x92] sm:$0xff]
      %v3747 = vld [vmem:[#allocation3 + $0x9a] sm:$0xff]
      %v3748 = vld [vmem:[#allocation3 + $0xaa] sm:$0xff]
      %v3749 = vld [vmem:[#allocation3 + $0xb2] sm:$0xff]
      %v3750 = vld [vmem:[#allocation3 + $0xc2] sm:$0xff]
      %v3751 = vld [vmem:[#allocation3 + $0xca] sm:$0xff]
      %v3752 = vld [vmem:[#allocation3 + $0xda] sm:$0xff]
      %v3753 = vld [vmem:[#allocation3 + $0xe2] sm:$0xff]
      %v3754 = vld [vmem:[#allocation3 + $0xf2] sm:$0xff]
      %v3755 = vld [vmem:[#allocation3 + $0xfa] sm:$0xff]
      %v3756 = vld [vmem:[#allocation3 + $0x10a] sm:$0xff]
      %v3757 = vld [vmem:[#allocation3 + $0x112] sm:$0xff]
      %v3758 = vld [vmem:[#allocation3 + $0x122] sm:$0xff]
      %v3759 = vld [vmem:[#allocation3 + $0x12a] sm:$0xff]
      %v3760 = vld [vmem:[#allocation3 + $0x13a] sm:$0xff]
      %v3761 = vld [vmem:[#allocation3 + $0x142] sm:$0xff]
      %v3762 = vld [vmem:[#allocation3 + $0x152] sm:$0xff]
      %v3763 = vld [vmem:[#allocation3 + $0x15a] sm:$0xff]
      %v3764 = vld [vmem:[#allocation3 + $0x16a] sm:$0xff]
      %v3765 = vld [vmem:[#allocation3 + $0x172] sm:$0xff]
      %v3766 = vpack.c.bf16 %v3735, %v3734
      %v3767 = vpack.c.bf16 %v3737, %v3736
      %v3768 = vpack.c.bf16 %v3739, %v3738
      %v3769 = vpack.c.bf16 %v3741, %v3740
      %v3770 = vpack.c.bf16 %v3743, %v3742
      %v3771 = vpack.c.bf16 %v3745, %v3744
      %v3772 = vpack.c.bf16 %v3747, %v3746
      %v3773 = vpack.c.bf16 %v3749, %v3748
      %v3774 = vpack.c.bf16 %v3751, %v3750
      %v3775 = vpack.c.bf16 %v3753, %v3752
      %v3776 = vpack.c.bf16 %v3755, %v3754
      %v3777 = vpack.c.bf16 %v3757, %v3756
      %v3778 = vpack.c.bf16 %v3759, %v3758
      %v3779 = vpack.c.bf16 %v3761, %v3760
      %v3780 = vpack.c.bf16 %v3763, %v3762
      %v3781 = vpack.c.bf16 %v3765, %v3764
      %v3798 = vunpack.c.l.b16 %v3766
      %v3799 = vunpack.c.h.b16 %v3766
      %v3800 = vunpack.c.l.b16 %v3767
      %v3801 = vunpack.c.h.b16 %v3767
      %v3802 = vunpack.c.l.b16 %v3768
      %v3803 = vunpack.c.h.b16 %v3768
      %v3804 = vunpack.c.l.b16 %v3769
      %v3805 = vunpack.c.h.b16 %v3769
      %v3806 = vunpack.c.l.b16 %v3770
      %v3807 = vunpack.c.h.b16 %v3770
      %v3808 = vunpack.c.l.b16 %v3771
      %v3809 = vunpack.c.h.b16 %v3771
      %v3810 = vunpack.c.l.b16 %v3772
      %v3811 = vunpack.c.h.b16 %v3772
      %v3812 = vunpack.c.l.b16 %v3773
      %v3813 = vunpack.c.h.b16 %v3773
      %v3814 = vunpack.c.l.b16 %v3774
      %v3815 = vunpack.c.h.b16 %v3774
      %v3816 = vunpack.c.l.b16 %v3775
      %v3817 = vunpack.c.h.b16 %v3775
      %v3818 = vunpack.c.l.b16 %v3776
      %v3819 = vunpack.c.h.b16 %v3776
      %v3820 = vunpack.c.l.b16 %v3777
      %v3821 = vunpack.c.h.b16 %v3777
      %v3822 = vunpack.c.l.b16 %v3778
      %v3823 = vunpack.c.h.b16 %v3778
      %v3824 = vunpack.c.l.b16 %v3779
      %v3825 = vunpack.c.h.b16 %v3779
      %v3826 = vunpack.c.l.b16 %v3780
      %v3827 = vunpack.c.h.b16 %v3780
      %v3828 = vunpack.c.l.b16 %v3781
      %v3829 = vunpack.c.h.b16 %v3781
      %v3830 = vpack.c.b16 %v3798, %v3798
      %v3831 = vpack.c.b16 %v3799, %v3799
      %v3832 = vpack.c.b16 %v3800, %v3800
      %v3833 = vpack.c.b16 %v3801, %v3801
      %v3834 = vpack.c.b16 %v3802, %v3802
      %v3835 = vpack.c.b16 %v3803, %v3803
      %v3836 = vpack.c.b16 %v3804, %v3804
      %v3837 = vpack.c.b16 %v3805, %v3805
      %v3838 = vpack.c.b16 %v3806, %v3806
      %v3839 = vpack.c.b16 %v3807, %v3807
      %v3840 = vpack.c.b16 %v3808, %v3808
      %v3841 = vpack.c.b16 %v3809, %v3809
      %v3842 = vpack.c.b16 %v3810, %v3810
      %v3843 = vpack.c.b16 %v3811, %v3811
      %v3844 = vpack.c.b16 %v3812, %v3812
      %v3845 = vpack.c.b16 %v3813, %v3813
      %v3846 = vpack.c.b16 %v3814, %v3814
      %v3847 = vpack.c.b16 %v3815, %v3815
      %v3848 = vpack.c.b16 %v3816, %v3816
      %v3849 = vpack.c.b16 %v3817, %v3817
      %v3850 = vpack.c.b16 %v3818, %v3818
      %v3851 = vpack.c.b16 %v3819, %v3819
      %v3852 = vpack.c.b16 %v3820, %v3820
      %v3853 = vpack.c.b16 %v3821, %v3821
      %v3854 = vpack.c.b16 %v3822, %v3822
      %v3855 = vpack.c.b16 %v3823, %v3823
      %v3856 = vpack.c.b16 %v3824, %v3824
      %v3857 = vpack.c.b16 %v3825, %v3825
      %v3858 = vpack.c.b16 %v3826, %v3826
      %v3859 = vpack.c.b16 %v3827, %v3827
      %v3860 = vpack.c.b16 %v3828, %v3828
      %v3861 = vpack.c.b16 %v3829, %v3829
      %3862 = vrot.lane.b32.xlu0 %v3830, 64
      %v3863 = vpop.permute.xlu0 %3862
      %3864 = vrot.lane.b32.xlu0 %v3831, 64
      %v3865 = vpop.permute.xlu0 %3864
      %3866 = vrot.lane.b32.xlu0 %v3832, 64
      %v3867 = vpop.permute.xlu0 %3866
      %3868 = vrot.lane.b32.xlu0 %v3833, 64
      %v3869 = vpop.permute.xlu0 %3868
      %3870 = vrot.lane.b32.xlu0 %v3834, 64
      %v3871 = vpop.permute.xlu0 %3870
      %3872 = vrot.lane.b32.xlu0 %v3835, 64
      %v3873 = vpop.permute.xlu0 %3872
      %3874 = vrot.lane.b32.xlu0 %v3836, 64
      %v3875 = vpop.permute.xlu0 %3874
      %3876 = vrot.lane.b32.xlu0 %v3837, 64
      %v3877 = vpop.permute.xlu0 %3876
      %3878 = vrot.lane.b32.xlu0 %v3838, 64
      %v3879 = vpop.permute.xlu0 %3878
      %3880 = vrot.lane.b32.xlu0 %v3839, 64
      %v3881 = vpop.permute.xlu0 %3880
      %3882 = vrot.lane.b32.xlu0 %v3840, 64
      %v3883 = vpop.permute.xlu0 %3882
      %3884 = vrot.lane.b32.xlu0 %v3841, 64
      %v3885 = vpop.permute.xlu0 %3884
      %3886 = vrot.lane.b32.xlu0 %v3842, 64
      %v3887 = vpop.permute.xlu0 %3886
      %3888 = vrot.lane.b32.xlu0 %v3843, 64
      %v3889 = vpop.permute.xlu0 %3888
      %3890 = vrot.lane.b32.xlu0 %v3844, 64
      %v3891 = vpop.permute.xlu0 %3890
      %3892 = vrot.lane.b32.xlu0 %v3845, 64
      %v3893 = vpop.permute.xlu0 %3892
      %3894 = vrot.lane.b32.xlu0 %v3846, 64
      %v3895 = vpop.permute.xlu0 %3894
      %3896 = vrot.lane.b32.xlu0 %v3847, 64
      %v3897 = vpop.permute.xlu0 %3896
      %3898 = vrot.lane.b32.xlu0 %v3848, 64
      %v3899 = vpop.permute.xlu0 %3898
      %3900 = vrot.lane.b32.xlu0 %v3849, 64
      %v3901 = vpop.permute.xlu0 %3900
      %3902 = vrot.lane.b32.xlu0 %v3850, 64
      %v3903 = vpop.permute.xlu0 %3902
      %3904 = vrot.lane.b32.xlu0 %v3851, 64
      %v3905 = vpop.permute.xlu0 %3904
      %3906 = vrot.lane.b32.xlu0 %v3852, 64
      %v3907 = vpop.permute.xlu0 %3906
      %3908 = vrot.lane.b32.xlu0 %v3853, 64
      %v3909 = vpop.permute.xlu0 %3908
      %3910 = vrot.lane.b32.xlu0 %v3854, 64
      %v3911 = vpop.permute.xlu0 %3910
      %3912 = vrot.lane.b32.xlu0 %v3855, 64
      %v3913 = vpop.permute.xlu0 %3912
      %3914 = vrot.lane.b32.xlu0 %v3856, 64
      %v3915 = vpop.permute.xlu0 %3914
      %3916 = vrot.lane.b32.xlu0 %v3857, 64
      %v3917 = vpop.permute.xlu0 %3916
      %3918 = vrot.lane.b32.xlu0 %v3858, 64
      %v3919 = vpop.permute.xlu0 %3918
      %3920 = vrot.lane.b32.xlu0 %v3859, 64
      %v3921 = vpop.permute.xlu0 %3920
      %3922 = vrot.lane.b32.xlu0 %v3860, 64
      %v3923 = vpop.permute.xlu0 %3922
      %3924 = vrot.lane.b32.xlu0 %v3861, 64
      %v3925 = vpop.permute.xlu0 %3924
      %vm3958 = vcmask 781824
      %3959 = vst.msk [vmem:[#allocation4] sm:$0xf] %vm3958, %v3863
      %3960 = vst.msk [vmem:[#allocation4 + $0xc] sm:$0xf] %vm3958, %v3865
      %3961 = vst.msk [vmem:[#allocation4 + $0x18] sm:$0xf] %vm3958, %v3867
      %3962 = vst.msk [vmem:[#allocation4 + $0x24] sm:$0xf] %vm3958, %v3869
      %3963 = vst.msk [vmem:[#allocation4 + $0x30] sm:$0xf] %vm3958, %v3871
      %3964 = vst.msk [vmem:[#allocation4 + $0x3c] sm:$0xf] %vm3958, %v3873
      %3965 = vst.msk [vmem:[#allocation4 + $0x48] sm:$0xf] %vm3958, %v3875
      %3966 = vst.msk [vmem:[#allocation4 + $0x54] sm:$0xf] %vm3958, %v3877
      %3967 = vst.msk [vmem:[#allocation4 + $0x60] sm:$0xf] %vm3958, %v3879
      %3968 = vst.msk [vmem:[#allocation4 + $0x6c] sm:$0xf] %vm3958, %v3881
      %3969 = vst.msk [vmem:[#allocation4 + $0x78] sm:$0xf] %vm3958, %v3883
      %3970 = vst.msk [vmem:[#allocation4 + $0x84] sm:$0xf] %vm3958, %v3885
      %3971 = vst.msk [vmem:[#allocation4 + $0x90] sm:$0xf] %vm3958, %v3887
      %3972 = vst.msk [vmem:[#allocation4 + $0x9c] sm:$0xf] %vm3958, %v3889
      %3973 = vst.msk [vmem:[#allocation4 + $0xa8] sm:$0xf] %vm3958, %v3891
      %3974 = vst.msk [vmem:[#allocation4 + $0xb4] sm:$0xf] %vm3958, %v3893
      %3975 = vst.msk [vmem:[#allocation4 + $0xc0] sm:$0xf] %vm3958, %v3895
      %3976 = vst.msk [vmem:[#allocation4 + $0xcc] sm:$0xf] %vm3958, %v3897
      %3977 = vst.msk [vmem:[#allocation4 + $0xd8] sm:$0xf] %vm3958, %v3899
      %3978 = vst.msk [vmem:[#allocation4 + $0xe4] sm:$0xf] %vm3958, %v3901
      %3979 = vst.msk [vmem:[#allocation4 + $0xf0] sm:$0xf] %vm3958, %v3903
      %3980 = vst.msk [vmem:[#allocation4 + $0xfc] sm:$0xf] %vm3958, %v3905
      %3981 = vst.msk [vmem:[#allocation4 + $0x108] sm:$0xf] %vm3958, %v3907
      %3982 = vst.msk [vmem:[#allocation4 + $0x114] sm:$0xf] %vm3958, %v3909
      %3983 = vst.msk [vmem:[#allocation4 + $0x120] sm:$0xf] %vm3958, %v3911
      %3984 = vst.msk [vmem:[#allocation4 + $0x12c] sm:$0xf] %vm3958, %v3913
      %3985 = vst.msk [vmem:[#allocation4 + $0x138] sm:$0xf] %vm3958, %v3915
      %3986 = vst.msk [vmem:[#allocation4 + $0x144] sm:$0xf] %vm3958, %v3917
      %3987 = vst.msk [vmem:[#allocation4 + $0x150] sm:$0xf] %vm3958, %v3919
      %3988 = vst.msk [vmem:[#allocation4 + $0x15c] sm:$0xf] %vm3958, %v3921
      %3989 = vst.msk [vmem:[#allocation4 + $0x168] sm:$0xf] %vm3958, %v3923
      %3990 = vst.msk [vmem:[#allocation4 + $0x174] sm:$0xf] %vm3958, %v3925
      %v3991 = vld [vmem:[%s3251] sm:$0xff]
      %v3992 = vld [vmem:[%s3251 + $0x8] sm:$0xff]
      %v3993 = vld [vmem:[%s3251 + $0x18] sm:$0xff]
      %v3994 = vld [vmem:[%s3251 + $0x20] sm:$0xff]
      %v3995 = vld [vmem:[%s3251 + $0x30] sm:$0xff]
      %v3996 = vld [vmem:[%s3251 + $0x38] sm:$0xff]
      %v3997 = vld [vmem:[%s3251 + $0x48] sm:$0xff]
      %v3998 = vld [vmem:[%s3251 + $0x50] sm:$0xff]
      %v3999 = vld [vmem:[%s3251 + $0x60] sm:$0xff]
      %v4000 = vld [vmem:[%s3251 + $0x68] sm:$0xff]
      %v4001 = vld [vmem:[%s3251 + $0x78] sm:$0xff]
      %v4002 = vld [vmem:[%s3251 + $0x80] sm:$0xff]
      %v4003 = vld [vmem:[%s3251 + $0x90] sm:$0xff]
      %v4004 = vld [vmem:[%s3251 + $0x98] sm:$0xff]
      %v4005 = vld [vmem:[%s3251 + $0xa8] sm:$0xff]
      %v4006 = vld [vmem:[%s3251 + $0xb0] sm:$0xff]
      %v4007 = vld [vmem:[%s3251 + $0xc0] sm:$0xff]
      %v4008 = vld [vmem:[%s3251 + $0xc8] sm:$0xff]
      %v4009 = vld [vmem:[%s3251 + $0xd8] sm:$0xff]
      %v4010 = vld [vmem:[%s3251 + $0xe0] sm:$0xff]
      %v4011 = vld [vmem:[%s3251 + $0xf0] sm:$0xff]
      %v4012 = vld [vmem:[%s3251 + $0xf8] sm:$0xff]
      %v4013 = vld [vmem:[%s3251 + $0x108] sm:$0xff]
      %v4014 = vld [vmem:[%s3251 + $0x110] sm:$0xff]
      %v4015 = vld [vmem:[%s3251 + $0x120] sm:$0xff]
      %v4016 = vld [vmem:[%s3251 + $0x128] sm:$0xff]
      %v4017 = vld [vmem:[%s3251 + $0x138] sm:$0xff]
      %v4018 = vld [vmem:[%s3251 + $0x140] sm:$0xff]
      %v4019 = vld [vmem:[%s3251 + $0x150] sm:$0xff]
      %v4020 = vld [vmem:[%s3251 + $0x158] sm:$0xff]
      %v4021 = vld [vmem:[%s3251 + $0x168] sm:$0xff]
      %v4022 = vld [vmem:[%s3251 + $0x170] sm:$0xff]
      %v4023 = vpack.c.bf16 %v3992, %v3991
      %v4024 = vpack.c.bf16 %v3994, %v3993
      %v4025 = vpack.c.bf16 %v3996, %v3995
      %v4026 = vpack.c.bf16 %v3998, %v3997
      %v4027 = vpack.c.bf16 %v4000, %v3999
      %v4028 = vpack.c.bf16 %v4002, %v4001
      %v4029 = vpack.c.bf16 %v4004, %v4003
      %v4030 = vpack.c.bf16 %v4006, %v4005
      %v4031 = vpack.c.bf16 %v4008, %v4007
      %v4032 = vpack.c.bf16 %v4010, %v4009
      %v4033 = vpack.c.bf16 %v4012, %v4011
      %v4034 = vpack.c.bf16 %v4014, %v4013
      %v4035 = vpack.c.bf16 %v4016, %v4015
      %v4036 = vpack.c.bf16 %v4018, %v4017
      %v4037 = vpack.c.bf16 %v4020, %v4019
      %v4038 = vpack.c.bf16 %v4022, %v4021
      %v4055 = vunpack.c.l.b16 %v4023
      %v4056 = vunpack.c.h.b16 %v4023
      %v4057 = vunpack.c.l.b16 %v4024
      %v4058 = vunpack.c.h.b16 %v4024
      %v4059 = vunpack.c.l.b16 %v4025
      %v4060 = vunpack.c.h.b16 %v4025
      %v4061 = vunpack.c.l.b16 %v4026
      %v4062 = vunpack.c.h.b16 %v4026
      %v4063 = vunpack.c.l.b16 %v4027
      %v4064 = vunpack.c.h.b16 %v4027
      %v4065 = vunpack.c.l.b16 %v4028
      %v4066 = vunpack.c.h.b16 %v4028
      %v4067 = vunpack.c.l.b16 %v4029
      %v4068 = vunpack.c.h.b16 %v4029
      %v4069 = vunpack.c.l.b16 %v4030
      %v4070 = vunpack.c.h.b16 %v4030
      %v4071 = vunpack.c.l.b16 %v4031
      %v4072 = vunpack.c.h.b16 %v4031
      %v4073 = vunpack.c.l.b16 %v4032
      %v4074 = vunpack.c.h.b16 %v4032
      %v4075 = vunpack.c.l.b16 %v4033
      %v4076 = vunpack.c.h.b16 %v4033
      %v4077 = vunpack.c.l.b16 %v4034
      %v4078 = vunpack.c.h.b16 %v4034
      %v4079 = vunpack.c.l.b16 %v4035
      %v4080 = vunpack.c.h.b16 %v4035
      %v4081 = vunpack.c.l.b16 %v4036
      %v4082 = vunpack.c.h.b16 %v4036
      %v4083 = vunpack.c.l.b16 %v4037
      %v4084 = vunpack.c.h.b16 %v4037
      %v4085 = vunpack.c.l.b16 %v4038
      %v4086 = vunpack.c.h.b16 %v4038
      %v4087 = vpack.c.b16 %v4055, %v4055
      %v4088 = vpack.c.b16 %v4056, %v4056
      %v4089 = vpack.c.b16 %v4057, %v4057
      %v4090 = vpack.c.b16 %v4058, %v4058
      %v4091 = vpack.c.b16 %v4059, %v4059
      %v4092 = vpack.c.b16 %v4060, %v4060
      %v4093 = vpack.c.b16 %v4061, %v4061
      %v4094 = vpack.c.b16 %v4062, %v4062
      %v4095 = vpack.c.b16 %v4063, %v4063
      %v4096 = vpack.c.b16 %v4064, %v4064
      %v4097 = vpack.c.b16 %v4065, %v4065
      %v4098 = vpack.c.b16 %v4066, %v4066
      %v4099 = vpack.c.b16 %v4067, %v4067
      %v4100 = vpack.c.b16 %v4068, %v4068
      %v4101 = vpack.c.b16 %v4069, %v4069
      %v4102 = vpack.c.b16 %v4070, %v4070
      %v4103 = vpack.c.b16 %v4071, %v4071
      %v4104 = vpack.c.b16 %v4072, %v4072
      %v4105 = vpack.c.b16 %v4073, %v4073
      %v4106 = vpack.c.b16 %v4074, %v4074
      %v4107 = vpack.c.b16 %v4075, %v4075
      %v4108 = vpack.c.b16 %v4076, %v4076
      %v4109 = vpack.c.b16 %v4077, %v4077
      %v4110 = vpack.c.b16 %v4078, %v4078
      %v4111 = vpack.c.b16 %v4079, %v4079
      %v4112 = vpack.c.b16 %v4080, %v4080
      %v4113 = vpack.c.b16 %v4081, %v4081
      %v4114 = vpack.c.b16 %v4082, %v4082
      %v4115 = vpack.c.b16 %v4083, %v4083
      %v4116 = vpack.c.b16 %v4084, %v4084
      %v4117 = vpack.c.b16 %v4085, %v4085
      %v4118 = vpack.c.b16 %v4086, %v4086
      %4119 = vrot.lane.b32.xlu0 %v4087, 96
      %v4120 = vpop.permute.xlu0 %4119
      %4121 = vrot.lane.b32.xlu0 %v4088, 96
      %v4122 = vpop.permute.xlu0 %4121
      %4123 = vrot.lane.b32.xlu0 %v4089, 96
      %v4124 = vpop.permute.xlu0 %4123
      %4125 = vrot.lane.b32.xlu0 %v4090, 96
      %v4126 = vpop.permute.xlu0 %4125
      %4127 = vrot.lane.b32.xlu0 %v4091, 96
      %v4128 = vpop.permute.xlu0 %4127
      %4129 = vrot.lane.b32.xlu0 %v4092, 96
      %v4130 = vpop.permute.xlu0 %4129
      %4131 = vrot.lane.b32.xlu0 %v4093, 96
      %v4132 = vpop.permute.xlu0 %4131
      %4133 = vrot.lane.b32.xlu0 %v4094, 96
      %v4134 = vpop.permute.xlu0 %4133
      %4135 = vrot.lane.b32.xlu0 %v4095, 96
      %v4136 = vpop.permute.xlu0 %4135
      %4137 = vrot.lane.b32.xlu0 %v4096, 96
      %v4138 = vpop.permute.xlu0 %4137
      %4139 = vrot.lane.b32.xlu0 %v4097, 96
      %v4140 = vpop.permute.xlu0 %4139
      %4141 = vrot.lane.b32.xlu0 %v4098, 96
      %v4142 = vpop.permute.xlu0 %4141
      %4143 = vrot.lane.b32.xlu0 %v4099, 96
      %v4144 = vpop.permute.xlu0 %4143
      %4145 = vrot.lane.b32.xlu0 %v4100, 96
      %v4146 = vpop.permute.xlu0 %4145
      %4147 = vrot.lane.b32.xlu0 %v4101, 96
      %v4148 = vpop.permute.xlu0 %4147
      %4149 = vrot.lane.b32.xlu0 %v4102, 96
      %v4150 = vpop.permute.xlu0 %4149
      %4151 = vrot.lane.b32.xlu0 %v4103, 96
      %v4152 = vpop.permute.xlu0 %4151
      %4153 = vrot.lane.b32.xlu0 %v4104, 96
      %v4154 = vpop.permute.xlu0 %4153
      %4155 = vrot.lane.b32.xlu0 %v4105, 96
      %v4156 = vpop.permute.xlu0 %4155
      %4157 = vrot.lane.b32.xlu0 %v4106, 96
      %v4158 = vpop.permute.xlu0 %4157
      %4159 = vrot.lane.b32.xlu0 %v4107, 96
      %v4160 = vpop.permute.xlu0 %4159
      %4161 = vrot.lane.b32.xlu0 %v4108, 96
      %v4162 = vpop.permute.xlu0 %4161
      %4163 = vrot.lane.b32.xlu0 %v4109, 96
      %v4164 = vpop.permute.xlu0 %4163
      %4165 = vrot.lane.b32.xlu0 %v4110, 96
      %v4166 = vpop.permute.xlu0 %4165
      %4167 = vrot.lane.b32.xlu0 %v4111, 96
      %v4168 = vpop.permute.xlu0 %4167
      %4169 = vrot.lane.b32.xlu0 %v4112, 96
      %v4170 = vpop.permute.xlu0 %4169
      %4171 = vrot.lane.b32.xlu0 %v4113, 96
      %v4172 = vpop.permute.xlu0 %4171
      %4173 = vrot.lane.b32.xlu0 %v4114, 96
      %v4174 = vpop.permute.xlu0 %4173
      %4175 = vrot.lane.b32.xlu0 %v4115, 96
      %v4176 = vpop.permute.xlu0 %4175
      %4177 = vrot.lane.b32.xlu0 %v4116, 96
      %v4178 = vpop.permute.xlu0 %4177
      %4179 = vrot.lane.b32.xlu0 %v4117, 96
      %v4180 = vpop.permute.xlu0 %4179
      %4181 = vrot.lane.b32.xlu0 %v4118, 96
      %v4182 = vpop.permute.xlu0 %4181
      %vm4215 = vcmask 1044224
      %4216 = vst.msk [vmem:[#allocation4] sm:$0xf] %vm4215, %v4120
      %4217 = vst.msk [vmem:[#allocation4 + $0xc] sm:$0xf] %vm4215, %v4122
      %4218 = vst.msk [vmem:[#allocation4 + $0x18] sm:$0xf] %vm4215, %v4124
      %4219 = vst.msk [vmem:[#allocation4 + $0x24] sm:$0xf] %vm4215, %v4126
      %4220 = vst.msk [vmem:[#allocation4 + $0x30] sm:$0xf] %vm4215, %v4128
      %4221 = vst.msk [vmem:[#allocation4 + $0x3c] sm:$0xf] %vm4215, %v4130
      %4222 = vst.msk [vmem:[#allocation4 + $0x48] sm:$0xf] %vm4215, %v4132
      %4223 = vst.msk [vmem:[#allocation4 + $0x54] sm:$0xf] %vm4215, %v4134
      %4224 = vst.msk [vmem:[#allocation4 + $0x60] sm:$0xf] %vm4215, %v4136
      %4225 = vst.msk [vmem:[#allocation4 + $0x6c] sm:$0xf] %vm4215, %v4138
      %4226 = vst.msk [vmem:[#allocation4 + $0x78] sm:$0xf] %vm4215, %v4140
      %4227 = vst.msk [vmem:[#allocation4 + $0x84] sm:$0xf] %vm4215, %v4142
      %4228 = vst.msk [vmem:[#allocation4 + $0x90] sm:$0xf] %vm4215, %v4144
      %4229 = vst.msk [vmem:[#allocation4 + $0x9c] sm:$0xf] %vm4215, %v4146
      %4230 = vst.msk [vmem:[#allocation4 + $0xa8] sm:$0xf] %vm4215, %v4148
      %4231 = vst.msk [vmem:[#allocation4 + $0xb4] sm:$0xf] %vm4215, %v4150
      %4232 = vst.msk [vmem:[#allocation4 + $0xc0] sm:$0xf] %vm4215, %v4152
      %4233 = vst.msk [vmem:[#allocation4 + $0xcc] sm:$0xf] %vm4215, %v4154
      %4234 = vst.msk [vmem:[#allocation4 + $0xd8] sm:$0xf] %vm4215, %v4156
      %4235 = vst.msk [vmem:[#allocation4 + $0xe4] sm:$0xf] %vm4215, %v4158
      %4236 = vst.msk [vmem:[#allocation4 + $0xf0] sm:$0xf] %vm4215, %v4160
      %4237 = vst.msk [vmem:[#allocation4 + $0xfc] sm:$0xf] %vm4215, %v4162
      %4238 = vst.msk [vmem:[#allocation4 + $0x108] sm:$0xf] %vm4215, %v4164
      %4239 = vst.msk [vmem:[#allocation4 + $0x114] sm:$0xf] %vm4215, %v4166
      %4240 = vst.msk [vmem:[#allocation4 + $0x120] sm:$0xf] %vm4215, %v4168
      %4241 = vst.msk [vmem:[#allocation4 + $0x12c] sm:$0xf] %vm4215, %v4170
      %4242 = vst.msk [vmem:[#allocation4 + $0x138] sm:$0xf] %vm4215, %v4172
      %4243 = vst.msk [vmem:[#allocation4 + $0x144] sm:$0xf] %vm4215, %v4174
      %4244 = vst.msk [vmem:[#allocation4 + $0x150] sm:$0xf] %vm4215, %v4176
      %4245 = vst.msk [vmem:[#allocation4 + $0x15c] sm:$0xf] %vm4215, %v4178
      %4246 = vst.msk [vmem:[#allocation4 + $0x168] sm:$0xf] %vm4215, %v4180
      %4247 = vst.msk [vmem:[#allocation4 + $0x174] sm:$0xf] %vm4215, %v4182
      %v4248 = vld [vmem:[%s3251 + $0x1] sm:$0xff]
      %v4249 = vld [vmem:[%s3251 + $0x9] sm:$0xff]
      %v4250 = vld [vmem:[%s3251 + $0x19] sm:$0xff]
      %v4251 = vld [vmem:[%s3251 + $0x21] sm:$0xff]
      %v4252 = vld [vmem:[%s3251 + $0x31] sm:$0xff]
      %v4253 = vld [vmem:[%s3251 + $0x39] sm:$0xff]
      %v4254 = vld [vmem:[%s3251 + $0x49] sm:$0xff]
      %v4255 = vld [vmem:[%s3251 + $0x51] sm:$0xff]
      %v4256 = vld [vmem:[%s3251 + $0x61] sm:$0xff]
      %v4257 = vld [vmem:[%s3251 + $0x69] sm:$0xff]
      %v4258 = vld [vmem:[%s3251 + $0x79] sm:$0xff]
      %v4259 = vld [vmem:[%s3251 + $0x81] sm:$0xff]
      %v4260 = vld [vmem:[%s3251 + $0x91] sm:$0xff]
      %v4261 = vld [vmem:[%s3251 + $0x99] sm:$0xff]
      %v4262 = vld [vmem:[%s3251 + $0xa9] sm:$0xff]
      %v4263 = vld [vmem:[%s3251 + $0xb1] sm:$0xff]
      %v4264 = vld [vmem:[%s3251 + $0xc1] sm:$0xff]
      %v4265 = vld [vmem:[%s3251 + $0xc9] sm:$0xff]
      %v4266 = vld [vmem:[%s3251 + $0xd9] sm:$0xff]
      %v4267 = vld [vmem:[%s3251 + $0xe1] sm:$0xff]
      %v4268 = vld [vmem:[%s3251 + $0xf1] sm:$0xff]
      %v4269 = vld [vmem:[%s3251 + $0xf9] sm:$0xff]
      %v4270 = vld [vmem:[%s3251 + $0x109] sm:$0xff]
      %v4271 = vld [vmem:[%s3251 + $0x111] sm:$0xff]
      %v4272 = vld [vmem:[%s3251 + $0x121] sm:$0xff]
      %v4273 = vld [vmem:[%s3251 + $0x129] sm:$0xff]
      %v4274 = vld [vmem:[%s3251 + $0x139] sm:$0xff]
      %v4275 = vld [vmem:[%s3251 + $0x141] sm:$0xff]
      %v4276 = vld [vmem:[%s3251 + $0x151] sm:$0xff]
      %v4277 = vld [vmem:[%s3251 + $0x159] sm:$0xff]
      %v4278 = vld [vmem:[%s3251 + $0x169] sm:$0xff]
      %v4279 = vld [vmem:[%s3251 + $0x171] sm:$0xff]
      %v4280 = vpack.c.bf16 %v4249, %v4248
      %v4281 = vpack.c.bf16 %v4251, %v4250
      %v4282 = vpack.c.bf16 %v4253, %v4252
      %v4283 = vpack.c.bf16 %v4255, %v4254
      %v4284 = vpack.c.bf16 %v4257, %v4256
      %v4285 = vpack.c.bf16 %v4259, %v4258
      %v4286 = vpack.c.bf16 %v4261, %v4260
      %v4287 = vpack.c.bf16 %v4263, %v4262
      %v4288 = vpack.c.bf16 %v4265, %v4264
      %v4289 = vpack.c.bf16 %v4267, %v4266
      %v4290 = vpack.c.bf16 %v4269, %v4268
      %v4291 = vpack.c.bf16 %v4271, %v4270
      %v4292 = vpack.c.bf16 %v4273, %v4272
      %v4293 = vpack.c.bf16 %v4275, %v4274
      %v4294 = vpack.c.bf16 %v4277, %v4276
      %v4295 = vpack.c.bf16 %v4279, %v4278
      %v4312 = vunpack.c.l.b16 %v4280
      %v4313 = vunpack.c.h.b16 %v4280
      %v4314 = vunpack.c.l.b16 %v4281
      %v4315 = vunpack.c.h.b16 %v4281
      %v4316 = vunpack.c.l.b16 %v4282
      %v4317 = vunpack.c.h.b16 %v4282
      %v4318 = vunpack.c.l.b16 %v4283
      %v4319 = vunpack.c.h.b16 %v4283
      %v4320 = vunpack.c.l.b16 %v4284
      %v4321 = vunpack.c.h.b16 %v4284
      %v4322 = vunpack.c.l.b16 %v4285
      %v4323 = vunpack.c.h.b16 %v4285
      %v4324 = vunpack.c.l.b16 %v4286
      %v4325 = vunpack.c.h.b16 %v4286
      %v4326 = vunpack.c.l.b16 %v4287
      %v4327 = vunpack.c.h.b16 %v4287
      %v4328 = vunpack.c.l.b16 %v4288
      %v4329 = vunpack.c.h.b16 %v4288
      %v4330 = vunpack.c.l.b16 %v4289
      %v4331 = vunpack.c.h.b16 %v4289
      %v4332 = vunpack.c.l.b16 %v4290
      %v4333 = vunpack.c.h.b16 %v4290
      %v4334 = vunpack.c.l.b16 %v4291
      %v4335 = vunpack.c.h.b16 %v4291
      %v4336 = vunpack.c.l.b16 %v4292
      %v4337 = vunpack.c.h.b16 %v4292
      %v4338 = vunpack.c.l.b16 %v4293
      %v4339 = vunpack.c.h.b16 %v4293
      %v4340 = vunpack.c.l.b16 %v4294
      %v4341 = vunpack.c.h.b16 %v4294
      %v4342 = vunpack.c.l.b16 %v4295
      %v4343 = vunpack.c.h.b16 %v4295
      %v4344 = vpack.c.b16 %v4312, %v4312
      %v4345 = vpack.c.b16 %v4313, %v4313
      %v4346 = vpack.c.b16 %v4314, %v4314
      %v4347 = vpack.c.b16 %v4315, %v4315
      %v4348 = vpack.c.b16 %v4316, %v4316
      %v4349 = vpack.c.b16 %v4317, %v4317
      %v4350 = vpack.c.b16 %v4318, %v4318
      %v4351 = vpack.c.b16 %v4319, %v4319
      %v4352 = vpack.c.b16 %v4320, %v4320
      %v4353 = vpack.c.b16 %v4321, %v4321
      %v4354 = vpack.c.b16 %v4322, %v4322
      %v4355 = vpack.c.b16 %v4323, %v4323
      %v4356 = vpack.c.b16 %v4324, %v4324
      %v4357 = vpack.c.b16 %v4325, %v4325
      %v4358 = vpack.c.b16 %v4326, %v4326
      %v4359 = vpack.c.b16 %v4327, %v4327
      %v4360 = vpack.c.b16 %v4328, %v4328
      %v4361 = vpack.c.b16 %v4329, %v4329
      %v4362 = vpack.c.b16 %v4330, %v4330
      %v4363 = vpack.c.b16 %v4331, %v4331
      %v4364 = vpack.c.b16 %v4332, %v4332
      %v4365 = vpack.c.b16 %v4333, %v4333
      %v4366 = vpack.c.b16 %v4334, %v4334
      %v4367 = vpack.c.b16 %v4335, %v4335
      %v4368 = vpack.c.b16 %v4336, %v4336
      %v4369 = vpack.c.b16 %v4337, %v4337
      %v4370 = vpack.c.b16 %v4338, %v4338
      %v4371 = vpack.c.b16 %v4339, %v4339
      %v4372 = vpack.c.b16 %v4340, %v4340
      %v4373 = vpack.c.b16 %v4341, %v4341
      %v4374 = vpack.c.b16 %v4342, %v4342
      %v4375 = vpack.c.b16 %v4343, %v4343
      %4408 = vst.msk [vmem:[#allocation4 + $0x4] sm:$0xf] %vm3444, %v4344
      %4409 = vst.msk [vmem:[#allocation4 + $0x10] sm:$0xf] %vm3444, %v4345
      %4410 = vst.msk [vmem:[#allocation4 + $0x1c] sm:$0xf] %vm3444, %v4346
      %4411 = vst.msk [vmem:[#allocation4 + $0x28] sm:$0xf] %vm3444, %v4347
      %4412 = vst.msk [vmem:[#allocation4 + $0x34] sm:$0xf] %vm3444, %v4348
      %4413 = vst.msk [vmem:[#allocation4 + $0x40] sm:$0xf] %vm3444, %v4349
      %4414 = vst.msk [vmem:[#allocation4 + $0x4c] sm:$0xf] %vm3444, %v4350
      %4415 = vst.msk [vmem:[#allocation4 + $0x58] sm:$0xf] %vm3444, %v4351
      %4416 = vst.msk [vmem:[#allocation4 + $0x64] sm:$0xf] %vm3444, %v4352
      %4417 = vst.msk [vmem:[#allocation4 + $0x70] sm:$0xf] %vm3444, %v4353
      %4418 = vst.msk [vmem:[#allocation4 + $0x7c] sm:$0xf] %vm3444, %v4354
      %4419 = vst.msk [vmem:[#allocation4 + $0x88] sm:$0xf] %vm3444, %v4355
      %4420 = vst.msk [vmem:[#allocation4 + $0x94] sm:$0xf] %vm3444, %v4356
      %4421 = vst.msk [vmem:[#allocation4 + $0xa0] sm:$0xf] %vm3444, %v4357
      %4422 = vst.msk [vmem:[#allocation4 + $0xac] sm:$0xf] %vm3444, %v4358
      %4423 = vst.msk [vmem:[#allocation4 + $0xb8] sm:$0xf] %vm3444, %v4359
      %4424 = vst.msk [vmem:[#allocation4 + $0xc4] sm:$0xf] %vm3444, %v4360
      %4425 = vst.msk [vmem:[#allocation4 + $0xd0] sm:$0xf] %vm3444, %v4361
      %4426 = vst.msk [vmem:[#allocation4 + $0xdc] sm:$0xf] %vm3444, %v4362
      %4427 = vst.msk [vmem:[#allocation4 + $0xe8] sm:$0xf] %vm3444, %v4363
      %4428 = vst.msk [vmem:[#allocation4 + $0xf4] sm:$0xf] %vm3444, %v4364
      %4429 = vst.msk [vmem:[#allocation4 + $0x100] sm:$0xf] %vm3444, %v4365
      %4430 = vst.msk [vmem:[#allocation4 + $0x10c] sm:$0xf] %vm3444, %v4366
      %4431 = vst.msk [vmem:[#allocation4 + $0x118] sm:$0xf] %vm3444, %v4367
      %4432 = vst.msk [vmem:[#allocation4 + $0x124] sm:$0xf] %vm3444, %v4368
      %4433 = vst.msk [vmem:[#allocation4 + $0x130] sm:$0xf] %vm3444, %v4369
      %4434 = vst.msk [vmem:[#allocation4 + $0x13c] sm:$0xf] %vm3444, %v4370
      %4435 = vst.msk [vmem:[#allocation4 + $0x148] sm:$0xf] %vm3444, %v4371
      %4436 = vst.msk [vmem:[#allocation4 + $0x154] sm:$0xf] %vm3444, %v4372
      %4437 = vst.msk [vmem:[#allocation4 + $0x160] sm:$0xf] %vm3444, %v4373
      %4438 = vst.msk [vmem:[#allocation4 + $0x16c] sm:$0xf] %vm3444, %v4374
      %4439 = vst.msk [vmem:[#allocation4 + $0x178] sm:$0xf] %vm3444, %v4375
      %v4440 = vld [vmem:[%s3251 + $0x2] sm:$0xff]
      %v4441 = vld [vmem:[%s3251 + $0xa] sm:$0xff]
      %v4442 = vld [vmem:[%s3251 + $0x1a] sm:$0xff]
      %v4443 = vld [vmem:[%s3251 + $0x22] sm:$0xff]
      %v4444 = vld [vmem:[%s3251 + $0x32] sm:$0xff]
      %v4445 = vld [vmem:[%s3251 + $0x3a] sm:$0xff]
      %v4446 = vld [vmem:[%s3251 + $0x4a] sm:$0xff]
      %v4447 = vld [vmem:[%s3251 + $0x52] sm:$0xff]
      %v4448 = vld [vmem:[%s3251 + $0x62] sm:$0xff]
      %v4449 = vld [vmem:[%s3251 + $0x6a] sm:$0xff]
      %v4450 = vld [vmem:[%s3251 + $0x7a] sm:$0xff]
      %v4451 = vld [vmem:[%s3251 + $0x82] sm:$0xff]
      %v4452 = vld [vmem:[%s3251 + $0x92] sm:$0xff]
      %v4453 = vld [vmem:[%s3251 + $0x9a] sm:$0xff]
      %v4454 = vld [vmem:[%s3251 + $0xaa] sm:$0xff]
      %v4455 = vld [vmem:[%s3251 + $0xb2] sm:$0xff]
      %v4456 = vld [vmem:[%s3251 + $0xc2] sm:$0xff]
      %v4457 = vld [vmem:[%s3251 + $0xca] sm:$0xff]
      %v4458 = vld [vmem:[%s3251 + $0xda] sm:$0xff]
      %v4459 = vld [vmem:[%s3251 + $0xe2] sm:$0xff]
      %v4460 = vld [vmem:[%s3251 + $0xf2] sm:$0xff]
      %v4461 = vld [vmem:[%s3251 + $0xfa] sm:$0xff]
      %v4462 = vld [vmem:[%s3251 + $0x10a] sm:$0xff]
      %v4463 = vld [vmem:[%s3251 + $0x112] sm:$0xff]
      %v4464 = vld [vmem:[%s3251 + $0x122] sm:$0xff]
      %v4465 = vld [vmem:[%s3251 + $0x12a] sm:$0xff]
      %v4466 = vld [vmem:[%s3251 + $0x13a] sm:$0xff]
      %v4467 = vld [vmem:[%s3251 + $0x142] sm:$0xff]
      %v4468 = vld [vmem:[%s3251 + $0x152] sm:$0xff]
      %v4469 = vld [vmem:[%s3251 + $0x15a] sm:$0xff]
      %v4470 = vld [vmem:[%s3251 + $0x16a] sm:$0xff]
      %v4471 = vld [vmem:[%s3251 + $0x172] sm:$0xff]
      %v4472 = vpack.c.bf16 %v4441, %v4440
      %v4473 = vpack.c.bf16 %v4443, %v4442
      %v4474 = vpack.c.bf16 %v4445, %v4444
      %v4475 = vpack.c.bf16 %v4447, %v4446
      %v4476 = vpack.c.bf16 %v4449, %v4448
      %v4477 = vpack.c.bf16 %v4451, %v4450
      %v4478 = vpack.c.bf16 %v4453, %v4452
      %v4479 = vpack.c.bf16 %v4455, %v4454
      %v4480 = vpack.c.bf16 %v4457, %v4456
      %v4481 = vpack.c.bf16 %v4459, %v4458
      %v4482 = vpack.c.bf16 %v4461, %v4460
      %v4483 = vpack.c.bf16 %v4463, %v4462
      %v4484 = vpack.c.bf16 %v4465, %v4464
      %v4485 = vpack.c.bf16 %v4467, %v4466
      %v4486 = vpack.c.bf16 %v4469, %v4468
      %v4487 = vpack.c.bf16 %v4471, %v4470
      %v4504 = vunpack.c.l.b16 %v4472
      %v4505 = vunpack.c.h.b16 %v4472
      %v4506 = vunpack.c.l.b16 %v4473
      %v4507 = vunpack.c.h.b16 %v4473
      %v4508 = vunpack.c.l.b16 %v4474
      %v4509 = vunpack.c.h.b16 %v4474
      %v4510 = vunpack.c.l.b16 %v4475
      %v4511 = vunpack.c.h.b16 %v4475
      %v4512 = vunpack.c.l.b16 %v4476
      %v4513 = vunpack.c.h.b16 %v4476
      %v4514 = vunpack.c.l.b16 %v4477
      %v4515 = vunpack.c.h.b16 %v4477
      %v4516 = vunpack.c.l.b16 %v4478
      %v4517 = vunpack.c.h.b16 %v4478
      %v4518 = vunpack.c.l.b16 %v4479
      %v4519 = vunpack.c.h.b16 %v4479
      %v4520 = vunpack.c.l.b16 %v4480
      %v4521 = vunpack.c.h.b16 %v4480
      %v4522 = vunpack.c.l.b16 %v4481
      %v4523 = vunpack.c.h.b16 %v4481
      %v4524 = vunpack.c.l.b16 %v4482
      %v4525 = vunpack.c.h.b16 %v4482
      %v4526 = vunpack.c.l.b16 %v4483
      %v4527 = vunpack.c.h.b16 %v4483
      %v4528 = vunpack.c.l.b16 %v4484
      %v4529 = vunpack.c.h.b16 %v4484
      %v4530 = vunpack.c.l.b16 %v4485
      %v4531 = vunpack.c.h.b16 %v4485
      %v4532 = vunpack.c.l.b16 %v4486
      %v4533 = vunpack.c.h.b16 %v4486
      %v4534 = vunpack.c.l.b16 %v4487
      %v4535 = vunpack.c.h.b16 %v4487
      %v4536 = vpack.c.b16 %v4504, %v4504
      %v4537 = vpack.c.b16 %v4505, %v4505
      %v4538 = vpack.c.b16 %v4506, %v4506
      %v4539 = vpack.c.b16 %v4507, %v4507
      %v4540 = vpack.c.b16 %v4508, %v4508
      %v4541 = vpack.c.b16 %v4509, %v4509
      %v4542 = vpack.c.b16 %v4510, %v4510
      %v4543 = vpack.c.b16 %v4511, %v4511
      %v4544 = vpack.c.b16 %v4512, %v4512
      %v4545 = vpack.c.b16 %v4513, %v4513
      %v4546 = vpack.c.b16 %v4514, %v4514
      %v4547 = vpack.c.b16 %v4515, %v4515
      %v4548 = vpack.c.b16 %v4516, %v4516
      %v4549 = vpack.c.b16 %v4517, %v4517
      %v4550 = vpack.c.b16 %v4518, %v4518
      %v4551 = vpack.c.b16 %v4519, %v4519
      %v4552 = vpack.c.b16 %v4520, %v4520
      %v4553 = vpack.c.b16 %v4521, %v4521
      %v4554 = vpack.c.b16 %v4522, %v4522
      %v4555 = vpack.c.b16 %v4523, %v4523
      %v4556 = vpack.c.b16 %v4524, %v4524
      %v4557 = vpack.c.b16 %v4525, %v4525
      %v4558 = vpack.c.b16 %v4526, %v4526
      %v4559 = vpack.c.b16 %v4527, %v4527
      %v4560 = vpack.c.b16 %v4528, %v4528
      %v4561 = vpack.c.b16 %v4529, %v4529
      %v4562 = vpack.c.b16 %v4530, %v4530
      %v4563 = vpack.c.b16 %v4531, %v4531
      %v4564 = vpack.c.b16 %v4532, %v4532
      %v4565 = vpack.c.b16 %v4533, %v4533
      %v4566 = vpack.c.b16 %v4534, %v4534
      %v4567 = vpack.c.b16 %v4535, %v4535
      %4568 = vrot.lane.b32.xlu0 %v4536, 32
      %v4569 = vpop.permute.xlu0 %4568
      %4570 = vrot.lane.b32.xlu0 %v4537, 32
      %v4571 = vpop.permute.xlu0 %4570
      %4572 = vrot.lane.b32.xlu0 %v4538, 32
      %v4573 = vpop.permute.xlu0 %4572
      %4574 = vrot.lane.b32.xlu0 %v4539, 32
      %v4575 = vpop.permute.xlu0 %4574
      %4576 = vrot.lane.b32.xlu0 %v4540, 32
      %v4577 = vpop.permute.xlu0 %4576
      %4578 = vrot.lane.b32.xlu0 %v4541, 32
      %v4579 = vpop.permute.xlu0 %4578
      %4580 = vrot.lane.b32.xlu0 %v4542, 32
      %v4581 = vpop.permute.xlu0 %4580
      %4582 = vrot.lane.b32.xlu0 %v4543, 32
      %v4583 = vpop.permute.xlu0 %4582
      %4584 = vrot.lane.b32.xlu0 %v4544, 32
      %v4585 = vpop.permute.xlu0 %4584
      %4586 = vrot.lane.b32.xlu0 %v4545, 32
      %v4587 = vpop.permute.xlu0 %4586
      %4588 = vrot.lane.b32.xlu0 %v4546, 32
      %v4589 = vpop.permute.xlu0 %4588
      %4590 = vrot.lane.b32.xlu0 %v4547, 32
      %v4591 = vpop.permute.xlu0 %4590
      %4592 = vrot.lane.b32.xlu0 %v4548, 32
      %v4593 = vpop.permute.xlu0 %4592
      %4594 = vrot.lane.b32.xlu0 %v4549, 32
      %v4595 = vpop.permute.xlu0 %4594
      %4596 = vrot.lane.b32.xlu0 %v4550, 32
      %v4597 = vpop.permute.xlu0 %4596
      %4598 = vrot.lane.b32.xlu0 %v4551, 32
      %v4599 = vpop.permute.xlu0 %4598
      %4600 = vrot.lane.b32.xlu0 %v4552, 32
      %v4601 = vpop.permute.xlu0 %4600
      %4602 = vrot.lane.b32.xlu0 %v4553, 32
      %v4603 = vpop.permute.xlu0 %4602
      %4604 = vrot.lane.b32.xlu0 %v4554, 32
      %v4605 = vpop.permute.xlu0 %4604
      %4606 = vrot.lane.b32.xlu0 %v4555, 32
      %v4607 = vpop.permute.xlu0 %4606
      %4608 = vrot.lane.b32.xlu0 %v4556, 32
      %v4609 = vpop.permute.xlu0 %4608
      %4610 = vrot.lane.b32.xlu0 %v4557, 32
      %v4611 = vpop.permute.xlu0 %4610
      %4612 = vrot.lane.b32.xlu0 %v4558, 32
      %v4613 = vpop.permute.xlu0 %4612
      %4614 = vrot.lane.b32.xlu0 %v4559, 32
      %v4615 = vpop.permute.xlu0 %4614
      %4616 = vrot.lane.b32.xlu0 %v4560, 32
      %v4617 = vpop.permute.xlu0 %4616
      %4618 = vrot.lane.b32.xlu0 %v4561, 32
      %v4619 = vpop.permute.xlu0 %4618
      %4620 = vrot.lane.b32.xlu0 %v4562, 32
      %v4621 = vpop.permute.xlu0 %4620
      %4622 = vrot.lane.b32.xlu0 %v4563, 32
      %v4623 = vpop.permute.xlu0 %4622
      %4624 = vrot.lane.b32.xlu0 %v4564, 32
      %v4625 = vpop.permute.xlu0 %4624
      %4626 = vrot.lane.b32.xlu0 %v4565, 32
      %v4627 = vpop.permute.xlu0 %4626
      %4628 = vrot.lane.b32.xlu0 %v4566, 32
      %v4629 = vpop.permute.xlu0 %4628
      %4630 = vrot.lane.b32.xlu0 %v4567, 32
      %v4631 = vpop.permute.xlu0 %4630
      %4664 = vst.msk [vmem:[#allocation4 + $0x4] sm:$0xf] %vm3701, %v4569
      %4665 = vst.msk [vmem:[#allocation4 + $0x10] sm:$0xf] %vm3701, %v4571
      %4666 = vst.msk [vmem:[#allocation4 + $0x1c] sm:$0xf] %vm3701, %v4573
      %4667 = vst.msk [vmem:[#allocation4 + $0x28] sm:$0xf] %vm3701, %v4575
      %4668 = vst.msk [vmem:[#allocation4 + $0x34] sm:$0xf] %vm3701, %v4577
      %4669 = vst.msk [vmem:[#allocation4 + $0x40] sm:$0xf] %vm3701, %v4579
      %4670 = vst.msk [vmem:[#allocation4 + $0x4c] sm:$0xf] %vm3701, %v4581
      %4671 = vst.msk [vmem:[#allocation4 + $0x58] sm:$0xf] %vm3701, %v4583
      %4672 = vst.msk [vmem:[#allocation4 + $0x64] sm:$0xf] %vm3701, %v4585
      %4673 = vst.msk [vmem:[#allocation4 + $0x70] sm:$0xf] %vm3701, %v4587
      %4674 = vst.msk [vmem:[#allocation4 + $0x7c] sm:$0xf] %vm3701, %v4589
      %4675 = vst.msk [vmem:[#allocation4 + $0x88] sm:$0xf] %vm3701, %v4591
      %4676 = vst.msk [vmem:[#allocation4 + $0x94] sm:$0xf] %vm3701, %v4593
      %4677 = vst.msk [vmem:[#allocation4 + $0xa0] sm:$0xf] %vm3701, %v4595
      %4678 = vst.msk [vmem:[#allocation4 + $0xac] sm:$0xf] %vm3701, %v4597
      %4679 = vst.msk [vmem:[#allocation4 + $0xb8] sm:$0xf] %vm3701, %v4599
      %4680 = vst.msk [vmem:[#allocation4 + $0xc4] sm:$0xf] %vm3701, %v4601
      %4681 = vst.msk [vmem:[#allocation4 + $0xd0] sm:$0xf] %vm3701, %v4603
      %4682 = vst.msk [vmem:[#allocation4 + $0xdc] sm:$0xf] %vm3701, %v4605
      %4683 = vst.msk [vmem:[#allocation4 + $0xe8] sm:$0xf] %vm3701, %v4607
      %4684 = vst.msk [vmem:[#allocation4 + $0xf4] sm:$0xf] %vm3701, %v4609
      %4685 = vst.msk [vmem:[#allocation4 + $0x100] sm:$0xf] %vm3701, %v4611
      %4686 = vst.msk [vmem:[#allocation4 + $0x10c] sm:$0xf] %vm3701, %v4613
      %4687 = vst.msk [vmem:[#allocation4 + $0x118] sm:$0xf] %vm3701, %v4615
      %4688 = vst.msk [vmem:[#allocation4 + $0x124] sm:$0xf] %vm3701, %v4617
      %4689 = vst.msk [vmem:[#allocation4 + $0x130] sm:$0xf] %vm3701, %v4619
      %4690 = vst.msk [vmem:[#allocation4 + $0x13c] sm:$0xf] %vm3701, %v4621
      %4691 = vst.msk [vmem:[#allocation4 + $0x148] sm:$0xf] %vm3701, %v4623
      %4692 = vst.msk [vmem:[#allocation4 + $0x154] sm:$0xf] %vm3701, %v4625
      %4693 = vst.msk [vmem:[#allocation4 + $0x160] sm:$0xf] %vm3701, %v4627
      %4694 = vst.msk [vmem:[#allocation4 + $0x16c] sm:$0xf] %vm3701, %v4629
      %4695 = vst.msk [vmem:[#allocation4 + $0x178] sm:$0xf] %vm3701, %v4631
      %s4696 = scalar_lea.vmem [#allocation3], 48
      %v4697 = vld [vmem:[%s4696] sm:$0xff]
      %v4698 = vld [vmem:[%s4696 + $0x8] sm:$0xff]
      %v4699 = vld [vmem:[%s4696 + $0x18] sm:$0xff]
      %v4700 = vld [vmem:[%s4696 + $0x20] sm:$0xff]
      %v4701 = vld [vmem:[%s4696 + $0x30] sm:$0xff]
      %v4702 = vld [vmem:[%s4696 + $0x38] sm:$0xff]
      %v4703 = vld [vmem:[%s4696 + $0x48] sm:$0xff]
      %v4704 = vld [vmem:[%s4696 + $0x50] sm:$0xff]
      %v4705 = vld [vmem:[%s4696 + $0x60] sm:$0xff]
      %v4706 = vld [vmem:[%s4696 + $0x68] sm:$0xff]
      %v4707 = vld [vmem:[%s4696 + $0x78] sm:$0xff]
      %v4708 = vld [vmem:[%s4696 + $0x80] sm:$0xff]
      %v4709 = vld [vmem:[%s4696 + $0x90] sm:$0xff]
      %v4710 = vld [vmem:[%s4696 + $0x98] sm:$0xff]
      %v4711 = vld [vmem:[%s4696 + $0xa8] sm:$0xff]
      %v4712 = vld [vmem:[%s4696 + $0xb0] sm:$0xff]
      %v4713 = vld [vmem:[%s4696 + $0xc0] sm:$0xff]
      %v4714 = vld [vmem:[%s4696 + $0xc8] sm:$0xff]
      %v4715 = vld [vmem:[%s4696 + $0xd8] sm:$0xff]
      %v4716 = vld [vmem:[%s4696 + $0xe0] sm:$0xff]
      %v4717 = vld [vmem:[%s4696 + $0xf0] sm:$0xff]
      %v4718 = vld [vmem:[%s4696 + $0xf8] sm:$0xff]
      %v4719 = vld [vmem:[%s4696 + $0x108] sm:$0xff]
      %v4720 = vld [vmem:[%s4696 + $0x110] sm:$0xff]
      %v4721 = vld [vmem:[%s4696 + $0x120] sm:$0xff]
      %v4722 = vld [vmem:[%s4696 + $0x128] sm:$0xff]
      %v4723 = vld [vmem:[%s4696 + $0x138] sm:$0xff]
      %v4724 = vld [vmem:[%s4696 + $0x140] sm:$0xff]
      %v4725 = vld [vmem:[%s4696 + $0x150] sm:$0xff]
      %v4726 = vld [vmem:[%s4696 + $0x158] sm:$0xff]
      %v4727 = vld [vmem:[%s4696 + $0x168] sm:$0xff]
      %v4728 = vld [vmem:[%s4696 + $0x170] sm:$0xff]
      %v4729 = vpack.c.bf16 %v4698, %v4697
      %v4730 = vpack.c.bf16 %v4700, %v4699
      %v4731 = vpack.c.bf16 %v4702, %v4701
      %v4732 = vpack.c.bf16 %v4704, %v4703
      %v4733 = vpack.c.bf16 %v4706, %v4705
      %v4734 = vpack.c.bf16 %v4708, %v4707
      %v4735 = vpack.c.bf16 %v4710, %v4709
      %v4736 = vpack.c.bf16 %v4712, %v4711
      %v4737 = vpack.c.bf16 %v4714, %v4713
      %v4738 = vpack.c.bf16 %v4716, %v4715
      %v4739 = vpack.c.bf16 %v4718, %v4717
      %v4740 = vpack.c.bf16 %v4720, %v4719
      %v4741 = vpack.c.bf16 %v4722, %v4721
      %v4742 = vpack.c.bf16 %v4724, %v4723
      %v4743 = vpack.c.bf16 %v4726, %v4725
      %v4744 = vpack.c.bf16 %v4728, %v4727
      %v4761 = vunpack.c.l.b16 %v4729
      %v4762 = vunpack.c.h.b16 %v4729
      %v4763 = vunpack.c.l.b16 %v4730
      %v4764 = vunpack.c.h.b16 %v4730
      %v4765 = vunpack.c.l.b16 %v4731
      %v4766 = vunpack.c.h.b16 %v4731
      %v4767 = vunpack.c.l.b16 %v4732
      %v4768 = vunpack.c.h.b16 %v4732
      %v4769 = vunpack.c.l.b16 %v4733
      %v4770 = vunpack.c.h.b16 %v4733
      %v4771 = vunpack.c.l.b16 %v4734
      %v4772 = vunpack.c.h.b16 %v4734
      %v4773 = vunpack.c.l.b16 %v4735
      %v4774 = vunpack.c.h.b16 %v4735
      %v4775 = vunpack.c.l.b16 %v4736
      %v4776 = vunpack.c.h.b16 %v4736
      %v4777 = vunpack.c.l.b16 %v4737
      %v4778 = vunpack.c.h.b16 %v4737
      %v4779 = vunpack.c.l.b16 %v4738
      %v4780 = vunpack.c.h.b16 %v4738
      %v4781 = vunpack.c.l.b16 %v4739
      %v4782 = vunpack.c.h.b16 %v4739
      %v4783 = vunpack.c.l.b16 %v4740
      %v4784 = vunpack.c.h.b16 %v4740
      %v4785 = vunpack.c.l.b16 %v4741
      %v4786 = vunpack.c.h.b16 %v4741
      %v4787 = vunpack.c.l.b16 %v4742
      %v4788 = vunpack.c.h.b16 %v4742
      %v4789 = vunpack.c.l.b16 %v4743
      %v4790 = vunpack.c.h.b16 %v4743
      %v4791 = vunpack.c.l.b16 %v4744
      %v4792 = vunpack.c.h.b16 %v4744
      %v4793 = vpack.c.b16 %v4761, %v4761
      %v4794 = vpack.c.b16 %v4762, %v4762
      %v4795 = vpack.c.b16 %v4763, %v4763
      %v4796 = vpack.c.b16 %v4764, %v4764
      %v4797 = vpack.c.b16 %v4765, %v4765
      %v4798 = vpack.c.b16 %v4766, %v4766
      %v4799 = vpack.c.b16 %v4767, %v4767
      %v4800 = vpack.c.b16 %v4768, %v4768
      %v4801 = vpack.c.b16 %v4769, %v4769
      %v4802 = vpack.c.b16 %v4770, %v4770
      %v4803 = vpack.c.b16 %v4771, %v4771
      %v4804 = vpack.c.b16 %v4772, %v4772
      %v4805 = vpack.c.b16 %v4773, %v4773
      %v4806 = vpack.c.b16 %v4774, %v4774
      %v4807 = vpack.c.b16 %v4775, %v4775
      %v4808 = vpack.c.b16 %v4776, %v4776
      %v4809 = vpack.c.b16 %v4777, %v4777
      %v4810 = vpack.c.b16 %v4778, %v4778
      %v4811 = vpack.c.b16 %v4779, %v4779
      %v4812 = vpack.c.b16 %v4780, %v4780
      %v4813 = vpack.c.b16 %v4781, %v4781
      %v4814 = vpack.c.b16 %v4782, %v4782
      %v4815 = vpack.c.b16 %v4783, %v4783
      %v4816 = vpack.c.b16 %v4784, %v4784
      %v4817 = vpack.c.b16 %v4785, %v4785
      %v4818 = vpack.c.b16 %v4786, %v4786
      %v4819 = vpack.c.b16 %v4787, %v4787
      %v4820 = vpack.c.b16 %v4788, %v4788
      %v4821 = vpack.c.b16 %v4789, %v4789
      %v4822 = vpack.c.b16 %v4790, %v4790
      %v4823 = vpack.c.b16 %v4791, %v4791
      %v4824 = vpack.c.b16 %v4792, %v4792
      %4825 = vrot.lane.b32.xlu0 %v4793, 64
      %v4826 = vpop.permute.xlu0 %4825
      %4827 = vrot.lane.b32.xlu0 %v4794, 64
      %v4828 = vpop.permute.xlu0 %4827
      %4829 = vrot.lane.b32.xlu0 %v4795, 64
      %v4830 = vpop.permute.xlu0 %4829
      %4831 = vrot.lane.b32.xlu0 %v4796, 64
      %v4832 = vpop.permute.xlu0 %4831
      %4833 = vrot.lane.b32.xlu0 %v4797, 64
      %v4834 = vpop.permute.xlu0 %4833
      %4835 = vrot.lane.b32.xlu0 %v4798, 64
      %v4836 = vpop.permute.xlu0 %4835
      %4837 = vrot.lane.b32.xlu0 %v4799, 64
      %v4838 = vpop.permute.xlu0 %4837
      %4839 = vrot.lane.b32.xlu0 %v4800, 64
      %v4840 = vpop.permute.xlu0 %4839
      %4841 = vrot.lane.b32.xlu0 %v4801, 64
      %v4842 = vpop.permute.xlu0 %4841
      %4843 = vrot.lane.b32.xlu0 %v4802, 64
      %v4844 = vpop.permute.xlu0 %4843
      %4845 = vrot.lane.b32.xlu0 %v4803, 64
      %v4846 = vpop.permute.xlu0 %4845
      %4847 = vrot.lane.b32.xlu0 %v4804, 64
      %v4848 = vpop.permute.xlu0 %4847
      %4849 = vrot.lane.b32.xlu0 %v4805, 64
      %v4850 = vpop.permute.xlu0 %4849
      %4851 = vrot.lane.b32.xlu0 %v4806, 64
      %v4852 = vpop.permute.xlu0 %4851
      %4853 = vrot.lane.b32.xlu0 %v4807, 64
      %v4854 = vpop.permute.xlu0 %4853
      %4855 = vrot.lane.b32.xlu0 %v4808, 64
      %v4856 = vpop.permute.xlu0 %4855
      %4857 = vrot.lane.b32.xlu0 %v4809, 64
      %v4858 = vpop.permute.xlu0 %4857
      %4859 = vrot.lane.b32.xlu0 %v4810, 64
      %v4860 = vpop.permute.xlu0 %4859
      %4861 = vrot.lane.b32.xlu0 %v4811, 64
      %v4862 = vpop.permute.xlu0 %4861
      %4863 = vrot.lane.b32.xlu0 %v4812, 64
      %v4864 = vpop.permute.xlu0 %4863
      %4865 = vrot.lane.b32.xlu0 %v4813, 64
      %v4866 = vpop.permute.xlu0 %4865
      %4867 = vrot.lane.b32.xlu0 %v4814, 64
      %v4868 = vpop.permute.xlu0 %4867
      %4869 = vrot.lane.b32.xlu0 %v4815, 64
      %v4870 = vpop.permute.xlu0 %4869
      %4871 = vrot.lane.b32.xlu0 %v4816, 64
      %v4872 = vpop.permute.xlu0 %4871
      %4873 = vrot.lane.b32.xlu0 %v4817, 64
      %v4874 = vpop.permute.xlu0 %4873
      %4875 = vrot.lane.b32.xlu0 %v4818, 64
      %v4876 = vpop.permute.xlu0 %4875
      %4877 = vrot.lane.b32.xlu0 %v4819, 64
      %v4878 = vpop.permute.xlu0 %4877
      %4879 = vrot.lane.b32.xlu0 %v4820, 64
      %v4880 = vpop.permute.xlu0 %4879
      %4881 = vrot.lane.b32.xlu0 %v4821, 64
      %v4882 = vpop.permute.xlu0 %4881
      %4883 = vrot.lane.b32.xlu0 %v4822, 64
      %v4884 = vpop.permute.xlu0 %4883
      %4885 = vrot.lane.b32.xlu0 %v4823, 64
      %v4886 = vpop.permute.xlu0 %4885
      %4887 = vrot.lane.b32.xlu0 %v4824, 64
      %v4888 = vpop.permute.xlu0 %4887
      %4921 = vst.msk [vmem:[#allocation4 + $0x4] sm:$0xf] %vm3958, %v4826
      %4922 = vst.msk [vmem:[#allocation4 + $0x10] sm:$0xf] %vm3958, %v4828
      %4923 = vst.msk [vmem:[#allocation4 + $0x1c] sm:$0xf] %vm3958, %v4830
      %4924 = vst.msk [vmem:[#allocation4 + $0x28] sm:$0xf] %vm3958, %v4832
      %4925 = vst.msk [vmem:[#allocation4 + $0x34] sm:$0xf] %vm3958, %v4834
      %4926 = vst.msk [vmem:[#allocation4 + $0x40] sm:$0xf] %vm3958, %v4836
      %4927 = vst.msk [vmem:[#allocation4 + $0x4c] sm:$0xf] %vm3958, %v4838
      %4928 = vst.msk [vmem:[#allocation4 + $0x58] sm:$0xf] %vm3958, %v4840
      %4929 = vst.msk [vmem:[#allocation4 + $0x64] sm:$0xf] %vm3958, %v4842
      %4930 = vst.msk [vmem:[#allocation4 + $0x70] sm:$0xf] %vm3958, %v4844
      %4931 = vst.msk [vmem:[#allocation4 + $0x7c] sm:$0xf] %vm3958, %v4846
      %4932 = vst.msk [vmem:[#allocation4 + $0x88] sm:$0xf] %vm3958, %v4848
      %4933 = vst.msk [vmem:[#allocation4 + $0x94] sm:$0xf] %vm3958, %v4850
      %4934 = vst.msk [vmem:[#allocation4 + $0xa0] sm:$0xf] %vm3958, %v4852
      %4935 = vst.msk [vmem:[#allocation4 + $0xac] sm:$0xf] %vm3958, %v4854
      %4936 = vst.msk [vmem:[#allocation4 + $0xb8] sm:$0xf] %vm3958, %v4856
      %4937 = vst.msk [vmem:[#allocation4 + $0xc4] sm:$0xf] %vm3958, %v4858
      %4938 = vst.msk [vmem:[#allocation4 + $0xd0] sm:$0xf] %vm3958, %v4860
      %4939 = vst.msk [vmem:[#allocation4 + $0xdc] sm:$0xf] %vm3958, %v4862
      %4940 = vst.msk [vmem:[#allocation4 + $0xe8] sm:$0xf] %vm3958, %v4864
      %4941 = vst.msk [vmem:[#allocation4 + $0xf4] sm:$0xf] %vm3958, %v4866
      %4942 = vst.msk [vmem:[#allocation4 + $0x100] sm:$0xf] %vm3958, %v4868
      %4943 = vst.msk [vmem:[#allocation4 + $0x10c] sm:$0xf] %vm3958, %v4870
      %4944 = vst.msk [vmem:[#allocation4 + $0x118] sm:$0xf] %vm3958, %v4872
      %4945 = vst.msk [vmem:[#allocation4 + $0x124] sm:$0xf] %vm3958, %v4874
      %4946 = vst.msk [vmem:[#allocation4 + $0x130] sm:$0xf] %vm3958, %v4876
      %4947 = vst.msk [vmem:[#allocation4 + $0x13c] sm:$0xf] %vm3958, %v4878
      %4948 = vst.msk [vmem:[#allocation4 + $0x148] sm:$0xf] %vm3958, %v4880
      %4949 = vst.msk [vmem:[#allocation4 + $0x154] sm:$0xf] %vm3958, %v4882
      %4950 = vst.msk [vmem:[#allocation4 + $0x160] sm:$0xf] %vm3958, %v4884
      %4951 = vst.msk [vmem:[#allocation4 + $0x16c] sm:$0xf] %vm3958, %v4886
      %4952 = vst.msk [vmem:[#allocation4 + $0x178] sm:$0xf] %vm3958, %v4888
      %v4953 = vld [vmem:[%s4696 + $0x1] sm:$0xff]
      %v4954 = vld [vmem:[%s4696 + $0x9] sm:$0xff]
      %v4955 = vld [vmem:[%s4696 + $0x19] sm:$0xff]
      %v4956 = vld [vmem:[%s4696 + $0x21] sm:$0xff]
      %v4957 = vld [vmem:[%s4696 + $0x31] sm:$0xff]
      %v4958 = vld [vmem:[%s4696 + $0x39] sm:$0xff]
      %v4959 = vld [vmem:[%s4696 + $0x49] sm:$0xff]
      %v4960 = vld [vmem:[%s4696 + $0x51] sm:$0xff]
      %v4961 = vld [vmem:[%s4696 + $0x61] sm:$0xff]
      %v4962 = vld [vmem:[%s4696 + $0x69] sm:$0xff]
      %v4963 = vld [vmem:[%s4696 + $0x79] sm:$0xff]
      %v4964 = vld [vmem:[%s4696 + $0x81] sm:$0xff]
      %v4965 = vld [vmem:[%s4696 + $0x91] sm:$0xff]
      %v4966 = vld [vmem:[%s4696 + $0x99] sm:$0xff]
      %v4967 = vld [vmem:[%s4696 + $0xa9] sm:$0xff]
      %v4968 = vld [vmem:[%s4696 + $0xb1] sm:$0xff]
      %v4969 = vld [vmem:[%s4696 + $0xc1] sm:$0xff]
      %v4970 = vld [vmem:[%s4696 + $0xc9] sm:$0xff]
      %v4971 = vld [vmem:[%s4696 + $0xd9] sm:$0xff]
      %v4972 = vld [vmem:[%s4696 + $0xe1] sm:$0xff]
      %v4973 = vld [vmem:[%s4696 + $0xf1] sm:$0xff]
      %v4974 = vld [vmem:[%s4696 + $0xf9] sm:$0xff]
      %v4975 = vld [vmem:[%s4696 + $0x109] sm:$0xff]
      %v4976 = vld [vmem:[%s4696 + $0x111] sm:$0xff]
      %v4977 = vld [vmem:[%s4696 + $0x121] sm:$0xff]
      %v4978 = vld [vmem:[%s4696 + $0x129] sm:$0xff]
      %v4979 = vld [vmem:[%s4696 + $0x139] sm:$0xff]
      %v4980 = vld [vmem:[%s4696 + $0x141] sm:$0xff]
      %v4981 = vld [vmem:[%s4696 + $0x151] sm:$0xff]
      %v4982 = vld [vmem:[%s4696 + $0x159] sm:$0xff]
      %v4983 = vld [vmem:[%s4696 + $0x169] sm:$0xff]
      %v4984 = vld [vmem:[%s4696 + $0x171] sm:$0xff]
      %v4985 = vpack.c.bf16 %v4954, %v4953
      %v4986 = vpack.c.bf16 %v4956, %v4955
      %v4987 = vpack.c.bf16 %v4958, %v4957
      %v4988 = vpack.c.bf16 %v4960, %v4959
      %v4989 = vpack.c.bf16 %v4962, %v4961
      %v4990 = vpack.c.bf16 %v4964, %v4963
      %v4991 = vpack.c.bf16 %v4966, %v4965
      %v4992 = vpack.c.bf16 %v4968, %v4967
      %v4993 = vpack.c.bf16 %v4970, %v4969
      %v4994 = vpack.c.bf16 %v4972, %v4971
      %v4995 = vpack.c.bf16 %v4974, %v4973
      %v4996 = vpack.c.bf16 %v4976, %v4975
      %v4997 = vpack.c.bf16 %v4978, %v4977
      %v4998 = vpack.c.bf16 %v4980, %v4979
      %v4999 = vpack.c.bf16 %v4982, %v4981
      %v5000 = vpack.c.bf16 %v4984, %v4983
      %v5017 = vunpack.c.l.b16 %v4985
      %v5018 = vunpack.c.h.b16 %v4985
      %v5019 = vunpack.c.l.b16 %v4986
      %v5020 = vunpack.c.h.b16 %v4986
      %v5021 = vunpack.c.l.b16 %v4987
      %v5022 = vunpack.c.h.b16 %v4987
      %v5023 = vunpack.c.l.b16 %v4988
      %v5024 = vunpack.c.h.b16 %v4988
      %v5025 = vunpack.c.l.b16 %v4989
      %v5026 = vunpack.c.h.b16 %v4989
      %v5027 = vunpack.c.l.b16 %v4990
      %v5028 = vunpack.c.h.b16 %v4990
      %v5029 = vunpack.c.l.b16 %v4991
      %v5030 = vunpack.c.h.b16 %v4991
      %v5031 = vunpack.c.l.b16 %v4992
      %v5032 = vunpack.c.h.b16 %v4992
      %v5033 = vunpack.c.l.b16 %v4993
      %v5034 = vunpack.c.h.b16 %v4993
      %v5035 = vunpack.c.l.b16 %v4994
      %v5036 = vunpack.c.h.b16 %v4994
      %v5037 = vunpack.c.l.b16 %v4995
      %v5038 = vunpack.c.h.b16 %v4995
      %v5039 = vunpack.c.l.b16 %v4996
      %v5040 = vunpack.c.h.b16 %v4996
      %v5041 = vunpack.c.l.b16 %v4997
      %v5042 = vunpack.c.h.b16 %v4997
      %v5043 = vunpack.c.l.b16 %v4998
      %v5044 = vunpack.c.h.b16 %v4998
      %v5045 = vunpack.c.l.b16 %v4999
      %v5046 = vunpack.c.h.b16 %v4999
      %v5047 = vunpack.c.l.b16 %v5000
      %v5048 = vunpack.c.h.b16 %v5000
      %v5049 = vpack.c.b16 %v5017, %v5017
      %v5050 = vpack.c.b16 %v5018, %v5018
      %v5051 = vpack.c.b16 %v5019, %v5019
      %v5052 = vpack.c.b16 %v5020, %v5020
      %v5053 = vpack.c.b16 %v5021, %v5021
      %v5054 = vpack.c.b16 %v5022, %v5022
      %v5055 = vpack.c.b16 %v5023, %v5023
      %v5056 = vpack.c.b16 %v5024, %v5024
      %v5057 = vpack.c.b16 %v5025, %v5025
      %v5058 = vpack.c.b16 %v5026, %v5026
      %v5059 = vpack.c.b16 %v5027, %v5027
      %v5060 = vpack.c.b16 %v5028, %v5028
      %v5061 = vpack.c.b16 %v5029, %v5029
      %v5062 = vpack.c.b16 %v5030, %v5030
      %v5063 = vpack.c.b16 %v5031, %v5031
      %v5064 = vpack.c.b16 %v5032, %v5032
      %v5065 = vpack.c.b16 %v5033, %v5033
      %v5066 = vpack.c.b16 %v5034, %v5034
      %v5067 = vpack.c.b16 %v5035, %v5035
      %v5068 = vpack.c.b16 %v5036, %v5036
      %v5069 = vpack.c.b16 %v5037, %v5037
      %v5070 = vpack.c.b16 %v5038, %v5038
      %v5071 = vpack.c.b16 %v5039, %v5039
      %v5072 = vpack.c.b16 %v5040, %v5040
      %v5073 = vpack.c.b16 %v5041, %v5041
      %v5074 = vpack.c.b16 %v5042, %v5042
      %v5075 = vpack.c.b16 %v5043, %v5043
      %v5076 = vpack.c.b16 %v5044, %v5044
      %v5077 = vpack.c.b16 %v5045, %v5045
      %v5078 = vpack.c.b16 %v5046, %v5046
      %v5079 = vpack.c.b16 %v5047, %v5047
      %v5080 = vpack.c.b16 %v5048, %v5048
      %5081 = vrot.lane.b32.xlu0 %v5049, 96
      %v5082 = vpop.permute.xlu0 %5081
      %5083 = vrot.lane.b32.xlu0 %v5050, 96
      %v5084 = vpop.permute.xlu0 %5083
      %5085 = vrot.lane.b32.xlu0 %v5051, 96
      %v5086 = vpop.permute.xlu0 %5085
      %5087 = vrot.lane.b32.xlu0 %v5052, 96
      %v5088 = vpop.permute.xlu0 %5087
      %5089 = vrot.lane.b32.xlu0 %v5053, 96
      %v5090 = vpop.permute.xlu0 %5089
      %5091 = vrot.lane.b32.xlu0 %v5054, 96
      %v5092 = vpop.permute.xlu0 %5091
      %5093 = vrot.lane.b32.xlu0 %v5055, 96
      %v5094 = vpop.permute.xlu0 %5093
      %5095 = vrot.lane.b32.xlu0 %v5056, 96
      %v5096 = vpop.permute.xlu0 %5095
      %5097 = vrot.lane.b32.xlu0 %v5057, 96
      %v5098 = vpop.permute.xlu0 %5097
      %5099 = vrot.lane.b32.xlu0 %v5058, 96
      %v5100 = vpop.permute.xlu0 %5099
      %5101 = vrot.lane.b32.xlu0 %v5059, 96
      %v5102 = vpop.permute.xlu0 %5101
      %5103 = vrot.lane.b32.xlu0 %v5060, 96
      %v5104 = vpop.permute.xlu0 %5103
      %5105 = vrot.lane.b32.xlu0 %v5061, 96
      %v5106 = vpop.permute.xlu0 %5105
      %5107 = vrot.lane.b32.xlu0 %v5062, 96
      %v5108 = vpop.permute.xlu0 %5107
      %5109 = vrot.lane.b32.xlu0 %v5063, 96
      %v5110 = vpop.permute.xlu0 %5109
      %5111 = vrot.lane.b32.xlu0 %v5064, 96
      %v5112 = vpop.permute.xlu0 %5111
      %5113 = vrot.lane.b32.xlu0 %v5065, 96
      %v5114 = vpop.permute.xlu0 %5113
      %5115 = vrot.lane.b32.xlu0 %v5066, 96
      %v5116 = vpop.permute.xlu0 %5115
      %5117 = vrot.lane.b32.xlu0 %v5067, 96
      %v5118 = vpop.permute.xlu0 %5117
      %5119 = vrot.lane.b32.xlu0 %v5068, 96
      %v5120 = vpop.permute.xlu0 %5119
      %5121 = vrot.lane.b32.xlu0 %v5069, 96
      %v5122 = vpop.permute.xlu0 %5121
      %5123 = vrot.lane.b32.xlu0 %v5070, 96
      %v5124 = vpop.permute.xlu0 %5123
      %5125 = vrot.lane.b32.xlu0 %v5071, 96
      %v5126 = vpop.permute.xlu0 %5125
      %5127 = vrot.lane.b32.xlu0 %v5072, 96
      %v5128 = vpop.permute.xlu0 %5127
      %5129 = vrot.lane.b32.xlu0 %v5073, 96
      %v5130 = vpop.permute.xlu0 %5129
      %5131 = vrot.lane.b32.xlu0 %v5074, 96
      %v5132 = vpop.permute.xlu0 %5131
      %5133 = vrot.lane.b32.xlu0 %v5075, 96
      %v5134 = vpop.permute.xlu0 %5133
      %5135 = vrot.lane.b32.xlu0 %v5076, 96
      %v5136 = vpop.permute.xlu0 %5135
      %5137 = vrot.lane.b32.xlu0 %v5077, 96
      %v5138 = vpop.permute.xlu0 %5137
      %5139 = vrot.lane.b32.xlu0 %v5078, 96
      %v5140 = vpop.permute.xlu0 %5139
      %5141 = vrot.lane.b32.xlu0 %v5079, 96
      %v5142 = vpop.permute.xlu0 %5141
      %5143 = vrot.lane.b32.xlu0 %v5080, 96
      %v5144 = vpop.permute.xlu0 %5143
      %5177 = vst.msk [vmem:[#allocation4 + $0x4] sm:$0xf] %vm4215, %v5082
      %5178 = vst.msk [vmem:[#allocation4 + $0x10] sm:$0xf] %vm4215, %v5084
      %5179 = vst.msk [vmem:[#allocation4 + $0x1c] sm:$0xf] %vm4215, %v5086
      %5180 = vst.msk [vmem:[#allocation4 + $0x28] sm:$0xf] %vm4215, %v5088
      %5181 = vst.msk [vmem:[#allocation4 + $0x34] sm:$0xf] %vm4215, %v5090
      %5182 = vst.msk [vmem:[#allocation4 + $0x40] sm:$0xf] %vm4215, %v5092
      %5183 = vst.msk [vmem:[#allocation4 + $0x4c] sm:$0xf] %vm4215, %v5094
      %5184 = vst.msk [vmem:[#allocation4 + $0x58] sm:$0xf] %vm4215, %v5096
      %5185 = vst.msk [vmem:[#allocation4 + $0x64] sm:$0xf] %vm4215, %v5098
      %5186 = vst.msk [vmem:[#allocation4 + $0x70] sm:$0xf] %vm4215, %v5100
      %5187 = vst.msk [vmem:[#allocation4 + $0x7c] sm:$0xf] %vm4215, %v5102
      %5188 = vst.msk [vmem:[#allocation4 + $0x88] sm:$0xf] %vm4215, %v5104
      %5189 = vst.msk [vmem:[#allocation4 + $0x94] sm:$0xf] %vm4215, %v5106
      %5190 = vst.msk [vmem:[#allocation4 + $0xa0] sm:$0xf] %vm4215, %v5108
      %5191 = vst.msk [vmem:[#allocation4 + $0xac] sm:$0xf] %vm4215, %v5110
      %5192 = vst.msk [vmem:[#allocation4 + $0xb8] sm:$0xf] %vm4215, %v5112
      %5193 = vst.msk [vmem:[#allocation4 + $0xc4] sm:$0xf] %vm4215, %v5114
      %5194 = vst.msk [vmem:[#allocation4 + $0xd0] sm:$0xf] %vm4215, %v5116
      %5195 = vst.msk [vmem:[#allocation4 + $0xdc] sm:$0xf] %vm4215, %v5118
      %5196 = vst.msk [vmem:[#allocation4 + $0xe8] sm:$0xf] %vm4215, %v5120
      %5197 = vst.msk [vmem:[#allocation4 + $0xf4] sm:$0xf] %vm4215, %v5122
      %5198 = vst.msk [vmem:[#allocation4 + $0x100] sm:$0xf] %vm4215, %v5124
      %5199 = vst.msk [vmem:[#allocation4 + $0x10c] sm:$0xf] %vm4215, %v5126
      %5200 = vst.msk [vmem:[#allocation4 + $0x118] sm:$0xf] %vm4215, %v5128
      %5201 = vst.msk [vmem:[#allocation4 + $0x124] sm:$0xf] %vm4215, %v5130
      %5202 = vst.msk [vmem:[#allocation4 + $0x130] sm:$0xf] %vm4215, %v5132
      %5203 = vst.msk [vmem:[#allocation4 + $0x13c] sm:$0xf] %vm4215, %v5134
      %5204 = vst.msk [vmem:[#allocation4 + $0x148] sm:$0xf] %vm4215, %v5136
      %5205 = vst.msk [vmem:[#allocation4 + $0x154] sm:$0xf] %vm4215, %v5138
      %5206 = vst.msk [vmem:[#allocation4 + $0x160] sm:$0xf] %vm4215, %v5140
      %5207 = vst.msk [vmem:[#allocation4 + $0x16c] sm:$0xf] %vm4215, %v5142
      %5208 = vst.msk [vmem:[#allocation4 + $0x178] sm:$0xf] %vm4215, %v5144
      %v5209 = vld [vmem:[%s4696 + $0x2] sm:$0xff]
      %v5210 = vld [vmem:[%s4696 + $0xa] sm:$0xff]
      %v5211 = vld [vmem:[%s4696 + $0x1a] sm:$0xff]
      %v5212 = vld [vmem:[%s4696 + $0x22] sm:$0xff]
      %v5213 = vld [vmem:[%s4696 + $0x32] sm:$0xff]
      %v5214 = vld [vmem:[%s4696 + $0x3a] sm:$0xff]
      %v5215 = vld [vmem:[%s4696 + $0x4a] sm:$0xff]
      %v5216 = vld [vmem:[%s4696 + $0x52] sm:$0xff]
      %v5217 = vld [vmem:[%s4696 + $0x62] sm:$0xff]
      %v5218 = vld [vmem:[%s4696 + $0x6a] sm:$0xff]
      %v5219 = vld [vmem:[%s4696 + $0x7a] sm:$0xff]
      %v5220 = vld [vmem:[%s4696 + $0x82] sm:$0xff]
      %v5221 = vld [vmem:[%s4696 + $0x92] sm:$0xff]
      %v5222 = vld [vmem:[%s4696 + $0x9a] sm:$0xff]
      %v5223 = vld [vmem:[%s4696 + $0xaa] sm:$0xff]
      %v5224 = vld [vmem:[%s4696 + $0xb2] sm:$0xff]
      %v5225 = vld [vmem:[%s4696 + $0xc2] sm:$0xff]
      %v5226 = vld [vmem:[%s4696 + $0xca] sm:$0xff]
      %v5227 = vld [vmem:[%s4696 + $0xda] sm:$0xff]
      %v5228 = vld [vmem:[%s4696 + $0xe2] sm:$0xff]
      %v5229 = vld [vmem:[%s4696 + $0xf2] sm:$0xff]
      %v5230 = vld [vmem:[%s4696 + $0xfa] sm:$0xff]
      %v5231 = vld [vmem:[%s4696 + $0x10a] sm:$0xff]
      %v5232 = vld [vmem:[%s4696 + $0x112] sm:$0xff]
      %v5233 = vld [vmem:[%s4696 + $0x122] sm:$0xff]
      %v5234 = vld [vmem:[%s4696 + $0x12a] sm:$0xff]
      %v5235 = vld [vmem:[%s4696 + $0x13a] sm:$0xff]
      %v5236 = vld [vmem:[%s4696 + $0x142] sm:$0xff]
      %v5237 = vld [vmem:[%s4696 + $0x152] sm:$0xff]
      %v5238 = vld [vmem:[%s4696 + $0x15a] sm:$0xff]
      %v5239 = vld [vmem:[%s4696 + $0x16a] sm:$0xff]
      %v5240 = vld [vmem:[%s4696 + $0x172] sm:$0xff]
      %v5241 = vpack.c.bf16 %v5210, %v5209
      %v5242 = vpack.c.bf16 %v5212, %v5211
      %v5243 = vpack.c.bf16 %v5214, %v5213
      %v5244 = vpack.c.bf16 %v5216, %v5215
      %v5245 = vpack.c.bf16 %v5218, %v5217
      %v5246 = vpack.c.bf16 %v5220, %v5219
      %v5247 = vpack.c.bf16 %v5222, %v5221
      %v5248 = vpack.c.bf16 %v5224, %v5223
      %v5249 = vpack.c.bf16 %v5226, %v5225
      %v5250 = vpack.c.bf16 %v5228, %v5227
      %v5251 = vpack.c.bf16 %v5230, %v5229
      %v5252 = vpack.c.bf16 %v5232, %v5231
      %v5253 = vpack.c.bf16 %v5234, %v5233
      %v5254 = vpack.c.bf16 %v5236, %v5235
      %v5255 = vpack.c.bf16 %v5238, %v5237
      %v5256 = vpack.c.bf16 %v5240, %v5239
      %v5273 = vunpack.c.l.b16 %v5241
      %v5274 = vunpack.c.h.b16 %v5241
      %v5275 = vunpack.c.l.b16 %v5242
      %v5276 = vunpack.c.h.b16 %v5242
      %v5277 = vunpack.c.l.b16 %v5243
      %v5278 = vunpack.c.h.b16 %v5243
      %v5279 = vunpack.c.l.b16 %v5244
      %v5280 = vunpack.c.h.b16 %v5244
      %v5281 = vunpack.c.l.b16 %v5245
      %v5282 = vunpack.c.h.b16 %v5245
      %v5283 = vunpack.c.l.b16 %v5246
      %v5284 = vunpack.c.h.b16 %v5246
      %v5285 = vunpack.c.l.b16 %v5247
      %v5286 = vunpack.c.h.b16 %v5247
      %v5287 = vunpack.c.l.b16 %v5248
      %v5288 = vunpack.c.h.b16 %v5248
      %v5289 = vunpack.c.l.b16 %v5249
      %v5290 = vunpack.c.h.b16 %v5249
      %v5291 = vunpack.c.l.b16 %v5250
      %v5292 = vunpack.c.h.b16 %v5250
      %v5293 = vunpack.c.l.b16 %v5251
      %v5294 = vunpack.c.h.b16 %v5251
      %v5295 = vunpack.c.l.b16 %v5252
      %v5296 = vunpack.c.h.b16 %v5252
      %v5297 = vunpack.c.l.b16 %v5253
      %v5298 = vunpack.c.h.b16 %v5253
      %v5299 = vunpack.c.l.b16 %v5254
      %v5300 = vunpack.c.h.b16 %v5254
      %v5301 = vunpack.c.l.b16 %v5255
      %v5302 = vunpack.c.h.b16 %v5255
      %v5303 = vunpack.c.l.b16 %v5256
      %v5304 = vunpack.c.h.b16 %v5256
      %v5305 = vpack.c.b16 %v5273, %v5273
      %v5306 = vpack.c.b16 %v5274, %v5274
      %v5307 = vpack.c.b16 %v5275, %v5275
      %v5308 = vpack.c.b16 %v5276, %v5276
      %v5309 = vpack.c.b16 %v5277, %v5277
      %v5310 = vpack.c.b16 %v5278, %v5278
      %v5311 = vpack.c.b16 %v5279, %v5279
      %v5312 = vpack.c.b16 %v5280, %v5280
      %v5313 = vpack.c.b16 %v5281, %v5281
      %v5314 = vpack.c.b16 %v5282, %v5282
      %v5315 = vpack.c.b16 %v5283, %v5283
      %v5316 = vpack.c.b16 %v5284, %v5284
      %v5317 = vpack.c.b16 %v5285, %v5285
      %v5318 = vpack.c.b16 %v5286, %v5286
      %v5319 = vpack.c.b16 %v5287, %v5287
      %v5320 = vpack.c.b16 %v5288, %v5288
      %v5321 = vpack.c.b16 %v5289, %v5289
      %v5322 = vpack.c.b16 %v5290, %v5290
      %v5323 = vpack.c.b16 %v5291, %v5291
      %v5324 = vpack.c.b16 %v5292, %v5292
      %v5325 = vpack.c.b16 %v5293, %v5293
      %v5326 = vpack.c.b16 %v5294, %v5294
      %v5327 = vpack.c.b16 %v5295, %v5295
      %v5328 = vpack.c.b16 %v5296, %v5296
      %v5329 = vpack.c.b16 %v5297, %v5297
      %v5330 = vpack.c.b16 %v5298, %v5298
      %v5331 = vpack.c.b16 %v5299, %v5299
      %v5332 = vpack.c.b16 %v5300, %v5300
      %v5333 = vpack.c.b16 %v5301, %v5301
      %v5334 = vpack.c.b16 %v5302, %v5302
      %v5335 = vpack.c.b16 %v5303, %v5303
      %v5336 = vpack.c.b16 %v5304, %v5304
      %5369 = vst.msk [vmem:[#allocation4 + $0x8] sm:$0xf] %vm3444, %v5305
      %5370 = vst.msk [vmem:[#allocation4 + $0x14] sm:$0xf] %vm3444, %v5306
      %5371 = vst.msk [vmem:[#allocation4 + $0x20] sm:$0xf] %vm3444, %v5307
      %5372 = vst.msk [vmem:[#allocation4 + $0x2c] sm:$0xf] %vm3444, %v5308
      %5373 = vst.msk [vmem:[#allocation4 + $0x38] sm:$0xf] %vm3444, %v5309
      %5374 = vst.msk [vmem:[#allocation4 + $0x44] sm:$0xf] %vm3444, %v5310
      %5375 = vst.msk [vmem:[#allocation4 + $0x50] sm:$0xf] %vm3444, %v5311
      %5376 = vst.msk [vmem:[#allocation4 + $0x5c] sm:$0xf] %vm3444, %v5312
      %5377 = vst.msk [vmem:[#allocation4 + $0x68] sm:$0xf] %vm3444, %v5313
      %5378 = vst.msk [vmem:[#allocation4 + $0x74] sm:$0xf] %vm3444, %v5314
      %5379 = vst.msk [vmem:[#allocation4 + $0x80] sm:$0xf] %vm3444, %v5315
      %5380 = vst.msk [vmem:[#allocation4 + $0x8c] sm:$0xf] %vm3444, %v5316
      %5381 = vst.msk [vmem:[#allocation4 + $0x98] sm:$0xf] %vm3444, %v5317
      %5382 = vst.msk [vmem:[#allocation4 + $0xa4] sm:$0xf] %vm3444, %v5318
      %5383 = vst.msk [vmem:[#allocation4 + $0xb0] sm:$0xf] %vm3444, %v5319
      %5384 = vst.msk [vmem:[#allocation4 + $0xbc] sm:$0xf] %vm3444, %v5320
      %5385 = vst.msk [vmem:[#allocation4 + $0xc8] sm:$0xf] %vm3444, %v5321
      %5386 = vst.msk [vmem:[#allocation4 + $0xd4] sm:$0xf] %vm3444, %v5322
      %5387 = vst.msk [vmem:[#allocation4 + $0xe0] sm:$0xf] %vm3444, %v5323
      %5388 = vst.msk [vmem:[#allocation4 + $0xec] sm:$0xf] %vm3444, %v5324
      %5389 = vst.msk [vmem:[#allocation4 + $0xf8] sm:$0xf] %vm3444, %v5325
      %5390 = vst.msk [vmem:[#allocation4 + $0x104] sm:$0xf] %vm3444, %v5326
      %5391 = vst.msk [vmem:[#allocation4 + $0x110] sm:$0xf] %vm3444, %v5327
      %5392 = vst.msk [vmem:[#allocation4 + $0x11c] sm:$0xf] %vm3444, %v5328
      %5393 = vst.msk [vmem:[#allocation4 + $0x128] sm:$0xf] %vm3444, %v5329
      %5394 = vst.msk [vmem:[#allocation4 + $0x134] sm:$0xf] %vm3444, %v5330
      %5395 = vst.msk [vmem:[#allocation4 + $0x140] sm:$0xf] %vm3444, %v5331
      %5396 = vst.msk [vmem:[#allocation4 + $0x14c] sm:$0xf] %vm3444, %v5332
      %5397 = vst.msk [vmem:[#allocation4 + $0x158] sm:$0xf] %vm3444, %v5333
      %5398 = vst.msk [vmem:[#allocation4 + $0x164] sm:$0xf] %vm3444, %v5334
      %5399 = vst.msk [vmem:[#allocation4 + $0x170] sm:$0xf] %vm3444, %v5335
      %5400 = vst.msk [vmem:[#allocation4 + $0x17c] sm:$0xf] %vm3444, %v5336
      %v5401 = vld [vmem:[#allocation4] sm:$0xff]
      %v5402 = vld [vmem:[#allocation4 + $0x8] sm:$0xf]
      %v5403 = vld [vmem:[#allocation4 + $0xc] sm:$0xff]
      %v5404 = vld [vmem:[#allocation4 + $0x14] sm:$0xf]
      %v5405 = vld [vmem:[#allocation4 + $0x18] sm:$0xff]
      %v5406 = vld [vmem:[#allocation4 + $0x20] sm:$0xf]
      %v5407 = vld [vmem:[#allocation4 + $0x24] sm:$0xff]
      %v5408 = vld [vmem:[#allocation4 + $0x2c] sm:$0xf]
      %v5409 = vld [vmem:[#allocation4 + $0x30] sm:$0xff]
      %v5410 = vld [vmem:[#allocation4 + $0x38] sm:$0xf]
      %v5411 = vld [vmem:[#allocation4 + $0x3c] sm:$0xff]
      %v5412 = vld [vmem:[#allocation4 + $0x44] sm:$0xf]
      %v5413 = vld [vmem:[#allocation4 + $0x48] sm:$0xff]
      %v5414 = vld [vmem:[#allocation4 + $0x50] sm:$0xf]
      %v5415 = vld [vmem:[#allocation4 + $0x54] sm:$0xff]
      %v5416 = vld [vmem:[#allocation4 + $0x5c] sm:$0xf]
      %v5417 = vld [vmem:[#allocation4 + $0x60] sm:$0xff]
      %v5418 = vld [vmem:[#allocation4 + $0x68] sm:$0xf]
      %v5419 = vld [vmem:[#allocation4 + $0x6c] sm:$0xff]
      %v5420 = vld [vmem:[#allocation4 + $0x74] sm:$0xf]
      %v5421 = vld [vmem:[#allocation4 + $0x78] sm:$0xff]
      %v5422 = vld [vmem:[#allocation4 + $0x80] sm:$0xf]
      %v5423 = vld [vmem:[#allocation4 + $0x84] sm:$0xff]
      %v5424 = vld [vmem:[#allocation4 + $0x8c] sm:$0xf]
      %v5425 = vld [vmem:[#allocation4 + $0x90] sm:$0xff]
      %v5426 = vld [vmem:[#allocation4 + $0x98] sm:$0xf]
      %v5427 = vld [vmem:[#allocation4 + $0x9c] sm:$0xff]
      %v5428 = vld [vmem:[#allocation4 + $0xa4] sm:$0xf]
      %v5429 = vld [vmem:[#allocation4 + $0xa8] sm:$0xff]
      %v5430 = vld [vmem:[#allocation4 + $0xb0] sm:$0xf]
      %v5431 = vld [vmem:[#allocation4 + $0xb4] sm:$0xff]
      %v5432 = vld [vmem:[#allocation4 + $0xbc] sm:$0xf]
      %v5433 = vld [vmem:[#allocation4 + $0xc0] sm:$0xff]
      %v5434 = vld [vmem:[#allocation4 + $0xc8] sm:$0xf]
      %v5435 = vld [vmem:[#allocation4 + $0xcc] sm:$0xff]
      %v5436 = vld [vmem:[#allocation4 + $0xd4] sm:$0xf]
      %v5437 = vld [vmem:[#allocation4 + $0xd8] sm:$0xff]
      %v5438 = vld [vmem:[#allocation4 + $0xe0] sm:$0xf]
      %v5439 = vld [vmem:[#allocation4 + $0xe4] sm:$0xff]
      %v5440 = vld [vmem:[#allocation4 + $0xec] sm:$0xf]
      %v5441 = vld [vmem:[#allocation4 + $0xf0] sm:$0xff]
      %v5442 = vld [vmem:[#allocation4 + $0xf8] sm:$0xf]
      %v5443 = vld [vmem:[#allocation4 + $0xfc] sm:$0xff]
      %v5444 = vld [vmem:[#allocation4 + $0x104] sm:$0xf]
      %v5445 = vld [vmem:[#allocation4 + $0x108] sm:$0xff]
      %v5446 = vld [vmem:[#allocation4 + $0x110] sm:$0xf]
      %v5447 = vld [vmem:[#allocation4 + $0x114] sm:$0xff]
      %v5448 = vld [vmem:[#allocation4 + $0x11c] sm:$0xf]
      %v5449 = vld [vmem:[#allocation4 + $0x120] sm:$0xff]
      %v5450 = vld [vmem:[#allocation4 + $0x128] sm:$0xf]
      %v5451 = vld [vmem:[#allocation4 + $0x12c] sm:$0xff]
      %v5452 = vld [vmem:[#allocation4 + $0x134] sm:$0xf]
      %v5453 = vld [vmem:[#allocation4 + $0x138] sm:$0xff]
      %v5454 = vld [vmem:[#allocation4 + $0x140] sm:$0xf]
      %v5455 = vld [vmem:[#allocation4 + $0x144] sm:$0xff]
      %v5456 = vld [vmem:[#allocation4 + $0x14c] sm:$0xf]
      %v5457 = vld [vmem:[#allocation4 + $0x150] sm:$0xff]
      %v5458 = vld [vmem:[#allocation4 + $0x158] sm:$0xf]
      %v5459 = vld [vmem:[#allocation4 + $0x15c] sm:$0xff]
      %v5460 = vld [vmem:[#allocation4 + $0x164] sm:$0xf]
      %v5461 = vld [vmem:[#allocation4 + $0x168] sm:$0xff]
      %v5462 = vld [vmem:[#allocation4 + $0x170] sm:$0xf]
      %v5463 = vld [vmem:[#allocation4 + $0x174] sm:$0xff]
      %v5464 = vld [vmem:[#allocation4 + $0x17c] sm:$0xf]
      %v5465 = vld [vmem:[%s3] sm:$0xf]
      %v5466 = vld [vmem:[%s3 + $0x4] sm:$0xf]
      %v5467 = vld [vmem:[%s3 + $0x8] sm:$0xf]
      %v5468 = vld [vmem:[%s3 + $0xc] sm:$0xf]
      %v5469 = vld [vmem:[%s3 + $0x10] sm:$0xf]
      %v5470 = vld [vmem:[%s3 + $0x14] sm:$0xf]
      %v5471 = vld [vmem:[%s3 + $0x18] sm:$0xf]
      %v5472 = vld [vmem:[%s3 + $0x1c] sm:$0xf]
      %v5473 = vld [vmem:[%s3 + $0x20] sm:$0xf]
      %v5474 = vld [vmem:[%s3 + $0x24] sm:$0xf]
      %v5475 = vld [vmem:[%s3 + $0x28] sm:$0xf]
      %v5476 = vld [vmem:[%s3 + $0x2c] sm:$0xf]
      %v5477 = vld [vmem:[%s3 + $0x30] sm:$0xf]
      %v5478 = vld [vmem:[%s3 + $0x34] sm:$0xf]
      %v5479 = vld [vmem:[%s3 + $0x38] sm:$0xf]
      %v5480 = vld [vmem:[%s3 + $0x3c] sm:$0xf]
      %v5481 = vld [vmem:[%s3 + $0x40] sm:$0xf]
      %v5482 = vld [vmem:[%s3 + $0x44] sm:$0xf]
      %v5483 = vld [vmem:[%s3 + $0x48] sm:$0xf]
      %v5484 = vld [vmem:[%s3 + $0x4c] sm:$0xf]
      %v5485 = vld [vmem:[%s3 + $0x50] sm:$0xf]
      %v5486 = vld [vmem:[%s3 + $0x54] sm:$0xf]
      %v5487 = vld [vmem:[%s3 + $0x58] sm:$0xf]
      %v5488 = vld [vmem:[%s3 + $0x5c] sm:$0xf]
      %v5489 = vld [vmem:[%s3 + $0x60] sm:$0xf]
      %v5490 = vld [vmem:[%s3 + $0x64] sm:$0xf]
      %v5491 = vld [vmem:[%s3 + $0x68] sm:$0xf]
      %v5492 = vld [vmem:[%s3 + $0x6c] sm:$0xf]
      %v5493 = vld [vmem:[%s3 + $0x70] sm:$0xf]
      %v5494 = vld [vmem:[%s3 + $0x74] sm:$0xf]
      %v5495 = vld [vmem:[%s3 + $0x78] sm:$0xf]
      %v5496 = vld [vmem:[%s3 + $0x7c] sm:$0xf]
      %v5497 = vld [vmem:[%s3 + $0x80] sm:$0xf]
      %v5498 = vld [vmem:[%s3 + $0x84] sm:$0xf]
      %v5499 = vld [vmem:[%s3 + $0x88] sm:$0xf]
      %v5500 = vld [vmem:[%s3 + $0x8c] sm:$0xf]
      %v5501 = vld [vmem:[%s12] sm:$0x1]
      %v5503 = vlaneseq
      %v5504 = vshrl.u32 %v5503, 7
      %v5505 = vsub.s32 0, %v5504
      %v5506 = vrot.slane %v5501, %v5505
      %v5572 = vunpack.c.l.b16 %v5401
      %v5573 = vunpack.c.h.b16 %v5401
      %v5574 = vunpack.c.l.b16 %v5402
      %v5575 = vunpack.c.l.b16 %v5403
      %v5576 = vunpack.c.h.b16 %v5403
      %v5577 = vunpack.c.l.b16 %v5404
      %v5578 = vunpack.c.l.b16 %v5405
      %v5579 = vunpack.c.h.b16 %v5405
      %v5580 = vunpack.c.l.b16 %v5406
      %v5581 = vunpack.c.l.b16 %v5407
      %v5582 = vunpack.c.h.b16 %v5407
      %v5583 = vunpack.c.l.b16 %v5408
      %v5584 = vunpack.c.l.b16 %v5409
      %v5585 = vunpack.c.h.b16 %v5409
      %v5586 = vunpack.c.l.b16 %v5410
      %v5587 = vunpack.c.l.b16 %v5411
      %v5588 = vunpack.c.h.b16 %v5411
      %v5589 = vunpack.c.l.b16 %v5412
      %v5590 = vunpack.c.l.b16 %v5413
      %v5591 = vunpack.c.h.b16 %v5413
      %v5592 = vunpack.c.l.b16 %v5414
      %v5593 = vunpack.c.l.b16 %v5415
      %v5594 = vunpack.c.h.b16 %v5415
      %v5595 = vunpack.c.l.b16 %v5416
      %v5596 = vunpack.c.l.b16 %v5417
      %v5597 = vunpack.c.h.b16 %v5417
      %v5598 = vunpack.c.l.b16 %v5418
      %v5599 = vunpack.c.l.b16 %v5419
      %v5600 = vunpack.c.h.b16 %v5419
      %v5601 = vunpack.c.l.b16 %v5420
      %v5602 = vunpack.c.l.b16 %v5421
      %v5603 = vunpack.c.h.b16 %v5421
      %v5604 = vunpack.c.l.b16 %v5422
      %v5605 = vunpack.c.l.b16 %v5423
      %v5606 = vunpack.c.h.b16 %v5423
      %v5607 = vunpack.c.l.b16 %v5424
      %v5608 = vunpack.c.l.b16 %v5425
      %v5609 = vunpack.c.h.b16 %v5425
      %v5610 = vunpack.c.l.b16 %v5426
      %v5611 = vunpack.c.l.b16 %v5427
      %v5612 = vunpack.c.h.b16 %v5427
      %v5613 = vunpack.c.l.b16 %v5428
      %v5614 = vunpack.c.l.b16 %v5429
      %v5615 = vunpack.c.h.b16 %v5429
      %v5616 = vunpack.c.l.b16 %v5430
      %v5617 = vunpack.c.l.b16 %v5431
      %v5618 = vunpack.c.h.b16 %v5431
      %v5619 = vunpack.c.l.b16 %v5432
      %v5620 = vunpack.c.l.b16 %v5433
      %v5621 = vunpack.c.h.b16 %v5433
      %v5622 = vunpack.c.l.b16 %v5434
      %v5623 = vunpack.c.l.b16 %v5435
      %v5624 = vunpack.c.h.b16 %v5435
      %v5625 = vunpack.c.l.b16 %v5436
      %v5626 = vunpack.c.l.b16 %v5437
      %v5627 = vunpack.c.h.b16 %v5437
      %v5628 = vunpack.c.l.b16 %v5438
      %v5629 = vunpack.c.l.b16 %v5439
      %v5630 = vunpack.c.h.b16 %v5439
      %v5631 = vunpack.c.l.b16 %v5440
      %v5632 = vunpack.c.l.b16 %v5441
      %v5633 = vunpack.c.h.b16 %v5441
      %v5634 = vunpack.c.l.b16 %v5442
      %v5635 = vunpack.c.l.b16 %v5443
      %v5636 = vunpack.c.h.b16 %v5443
      %v5637 = vunpack.c.l.b16 %v5444
      %v5638 = vunpack.c.l.b16 %v5445
      %v5639 = vunpack.c.h.b16 %v5445
      %v5640 = vunpack.c.l.b16 %v5446
      %v5641 = vunpack.c.l.b16 %v5447
      %v5642 = vunpack.c.h.b16 %v5447
      %v5643 = vunpack.c.l.b16 %v5448
      %v5644 = vunpack.c.l.b16 %v5449
      %v5645 = vunpack.c.h.b16 %v5449
      %v5646 = vunpack.c.l.b16 %v5450
      %v5647 = vunpack.c.l.b16 %v5451
      %v5648 = vunpack.c.h.b16 %v5451
      %v5649 = vunpack.c.l.b16 %v5452
      %v5650 = vunpack.c.l.b16 %v5453
      %v5651 = vunpack.c.h.b16 %v5453
      %v5652 = vunpack.c.l.b16 %v5454
      %v5653 = vunpack.c.l.b16 %v5455
      %v5654 = vunpack.c.h.b16 %v5455
      %v5655 = vunpack.c.l.b16 %v5456
      %v5656 = vunpack.c.l.b16 %v5457
      %v5657 = vunpack.c.h.b16 %v5457
      %v5658 = vunpack.c.l.b16 %v5458
      %v5659 = vunpack.c.l.b16 %v5459
      %v5660 = vunpack.c.h.b16 %v5459
      %v5661 = vunpack.c.l.b16 %v5460
      %v5662 = vunpack.c.l.b16 %v5461
      %v5663 = vunpack.c.h.b16 %v5461
      %v5664 = vunpack.c.l.b16 %v5462
      %v5665 = vunpack.c.l.b16 %v5463
      %v5666 = vunpack.c.h.b16 %v5463
      %v5667 = vunpack.c.l.b16 %v5464
      %v5668 = vpack.c.b16 %v5575, %v5572
      %v5669 = vpack.c.b16 %v5576, %v5573
      %v5670 = vpack.c.b16 %v5577, %v5574
      %v5671 = vpack.c.b16 %v5581, %v5578
      %v5672 = vpack.c.b16 %v5582, %v5579
      %v5673 = vpack.c.b16 %v5583, %v5580
      %v5674 = vpack.c.b16 %v5587, %v5584
      %v5675 = vpack.c.b16 %v5588, %v5585
      %v5676 = vpack.c.b16 %v5589, %v5586
      %v5677 = vpack.c.b16 %v5593, %v5590
      %v5678 = vpack.c.b16 %v5594, %v5591
      %v5679 = vpack.c.b16 %v5595, %v5592
      %v5680 = vpack.c.b16 %v5599, %v5596
      %v5681 = vpack.c.b16 %v5600, %v5597
      %v5682 = vpack.c.b16 %v5601, %v5598
      %v5683 = vpack.c.b16 %v5605, %v5602
      %v5684 = vpack.c.b16 %v5606, %v5603
      %v5685 = vpack.c.b16 %v5607, %v5604
      %v5686 = vpack.c.b16 %v5611, %v5608
      %v5687 = vpack.c.b16 %v5612, %v5609
      %v5688 = vpack.c.b16 %v5613, %v5610
      %v5689 = vpack.c.b16 %v5617, %v5614
      %v5690 = vpack.c.b16 %v5618, %v5615
      %v5691 = vpack.c.b16 %v5619, %v5616
      %v5692 = vpack.c.b16 %v5623, %v5620
      %v5693 = vpack.c.b16 %v5624, %v5621
      %v5694 = vpack.c.b16 %v5625, %v5622
      %v5695 = vpack.c.b16 %v5629, %v5626
      %v5696 = vpack.c.b16 %v5630, %v5627
      %v5697 = vpack.c.b16 %v5631, %v5628
      %v5698 = vpack.c.b16 %v5635, %v5632
      %v5699 = vpack.c.b16 %v5636, %v5633
      %v5700 = vpack.c.b16 %v5637, %v5634
      %v5701 = vpack.c.b16 %v5641, %v5638
      %v5702 = vpack.c.b16 %v5642, %v5639
      %v5703 = vpack.c.b16 %v5643, %v5640
      %v5704 = vpack.c.b16 %v5647, %v5644
      %v5705 = vpack.c.b16 %v5648, %v5645
      %v5706 = vpack.c.b16 %v5649, %v5646
      %v5707 = vpack.c.b16 %v5653, %v5650
      %v5708 = vpack.c.b16 %v5654, %v5651
      %v5709 = vpack.c.b16 %v5655, %v5652
      %v5710 = vpack.c.b16 %v5659, %v5656
      %v5711 = vpack.c.b16 %v5660, %v5657
      %v5712 = vpack.c.b16 %v5661, %v5658
      %v5713 = vpack.c.b16 %v5665, %v5662
      %v5714 = vpack.c.b16 %v5666, %v5663
      %v5715 = vpack.c.b16 %v5667, %v5664
      %v5784 = vunpack.c.l.b16 %v5465
      %v5785 = vunpack.c.l.b16 %v5466
      %v5786 = vunpack.c.l.b16 %v5467
      %v5787 = vunpack.c.l.b16 %v5468
      %v5788 = vunpack.c.l.b16 %v5469
      %v5789 = vunpack.c.l.b16 %v5470
      %v5790 = vunpack.c.l.b16 %v5471
      %v5791 = vunpack.c.l.b16 %v5472
      %v5792 = vunpack.c.l.b16 %v5473
      %v5793 = vunpack.c.l.b16 %v5474
      %v5794 = vunpack.c.l.b16 %v5475
      %v5795 = vunpack.c.l.b16 %v5476
      %v5796 = vunpack.c.l.b16 %v5477
      %v5797 = vunpack.c.l.b16 %v5478
      %v5798 = vunpack.c.l.b16 %v5479
      %v5799 = vunpack.c.l.b16 %v5480
      %v5800 = vunpack.c.l.b16 %v5481
      %v5801 = vunpack.c.l.b16 %v5482
      %v5802 = vunpack.c.l.b16 %v5483
      %v5803 = vunpack.c.l.b16 %v5484
      %v5804 = vunpack.c.l.b16 %v5485
      %v5805 = vunpack.c.l.b16 %v5486
      %v5806 = vunpack.c.l.b16 %v5487
      %v5807 = vunpack.c.l.b16 %v5488
      %v5808 = vunpack.c.l.b16 %v5489
      %v5809 = vunpack.c.l.b16 %v5490
      %v5810 = vunpack.c.l.b16 %v5491
      %v5811 = vunpack.c.l.b16 %v5492
      %v5812 = vunpack.c.l.b16 %v5493
      %v5813 = vunpack.c.l.b16 %v5494
      %v5814 = vunpack.c.l.b16 %v5495
      %v5815 = vunpack.c.l.b16 %v5496
      %v5816 = vunpack.c.l.b16 %v5497
      %v5817 = vunpack.c.l.b16 %v5498
      %v5818 = vunpack.c.l.b16 %v5499
      %v5819 = vunpack.c.l.b16 %v5500
      %v5820 = vpack.c.b16 %v5785, %v5784
      %v5821 = vpack.c.b16 %v5787, %v5786
      %v5822 = vpack.c.b16 %v5789, %v5788
      %v5823 = vpack.c.b16 %v5791, %v5790
      %v5824 = vpack.c.b16 %v5793, %v5792
      %v5825 = vpack.c.b16 %v5795, %v5794
      %v5826 = vpack.c.b16 %v5797, %v5796
      %v5827 = vpack.c.b16 %v5799, %v5798
      %v5828 = vpack.c.b16 %v5801, %v5800
      %v5829 = vpack.c.b16 %v5803, %v5802
      %v5830 = vpack.c.b16 %v5805, %v5804
      %v5831 = vpack.c.b16 %v5807, %v5806
      %v5832 = vpack.c.b16 %v5809, %v5808
      %v5833 = vpack.c.b16 %v5811, %v5810
      %v5834 = vpack.c.b16 %v5813, %v5812
      %v5835 = vpack.c.b16 %v5815, %v5814
      %v5836 = vpack.c.b16 %v5817, %v5816
      %v5837 = vpack.c.b16 %v5819, %v5818
      %v5857 = vsel %vm1075, %v5670, 0
      %v5860 = vsel %vm1075, %v5673, 0
      %v5863 = vsel %vm1075, %v5676, 0
      %v5866 = vsel %vm1075, %v5679, 0
      %v5869 = vsel %vm1075, %v5682, 0
      %v5872 = vsel %vm1075, %v5685, 0
      %v5875 = vsel %vm1075, %v5688, 0
      %v5878 = vsel %vm1075, %v5691, 0
      %v5881 = vsel %vm1075, %v5694, 0
      %v5884 = vsel %vm1075, %v5697, 0
      %v5887 = vsel %vm1075, %v5700, 0
      %v5890 = vsel %vm1075, %v5703, 0
      %v5893 = vsel %vm1075, %v5706, 0
      %v5896 = vsel %vm1075, %v5709, 0
      %v5899 = vsel %vm1075, %v5712, 0
      %v5902 = vsel %vm1075, %v5715, 0
      %5904 = vmatprep.subr.bf16.mxu0 0
      %5905 = vmatpush1.bf16.msra.mxu0 %v5827
      %5906 = vmatprep.subr.bf16.mxu0 0
      %5907 = vmatpush1.bf16.msra.mxu0 %v5826
      %5908 = vmatprep.subr.bf16.mxu0 0
      %5909 = vmatpush1.bf16.msra.mxu0 %v5825
      %5910 = vmatprep.subr.bf16.mxu0 0
      %5911 = vmatpush1.bf16.msra.mxu0 %v5824
      %5912 = vmatprep.subr.bf16.mxu0 0
      %5913 = vmatpush1.bf16.msra.mxu0 %v5823
      %5914 = vmatprep.subr.bf16.mxu0 0
      %5915 = vmatpush1.bf16.msra.mxu0 %v5822
      %5916 = vmatprep.subr.bf16.mxu0 0
      %5917 = vmatpush1.bf16.msra.mxu0 %v5821
      %5918 = vmatprep.subr.bf16.mxu0 0
      %5919 = vmatpush1.bf16.msra.mxu0 %v5820
      %5920 = vmatprep.subr.bf16.mxu0 0
      %5921 = vmatpush2.bf16.msra.mxu0 %v5835
      %5922 = vmatprep.subr.bf16.mxu0 0
      %5923 = vmatpush2.bf16.msra.mxu0 %v5834
      %5924 = vmatprep.subr.bf16.mxu0 0
      %5925 = vmatpush2.bf16.msra.mxu0 %v5833
      %5926 = vmatprep.subr.bf16.mxu0 0
      %5927 = vmatpush2.bf16.msra.mxu0 %v5832
      %5928 = vmatprep.subr.bf16.mxu0 0
      %5929 = vmatpush2.bf16.msra.mxu0 %v5831
      %5930 = vmatprep.subr.bf16.mxu0 0
      %5931 = vmatpush2.bf16.msra.mxu0 %v5830
      %5932 = vmatprep.subr.bf16.mxu0 0
      %5933 = vmatpush2.bf16.msra.mxu0 %v5829
      %5934 = vmatprep.subr.bf16.mxu0 0
      %5935 = vmatpush2.bf16.msra.mxu0 %v5828
      %5936 = vmatprep.mubr.bf16.mxu0 %v5669
      %5937 = vmatmul.mubr.bf16.gmra.mxu0 %v5668
      %v5938 = vpop.f32.mrf.mxu0
      %v5939 = vadd.f32 %v5506, %v5938
      %v5940 = vpop.f32.mrf.mxu0
      %v5941 = vpop.f32.mrf.mxu0
      %v5942 = vadd.f32 %v5506, %v5941
      %v5943 = vpop.f32.mrf.mxu0
      %5944 = vmatprep.mubr.bf16.mxu0 %v5672
      %5945 = vmatmul.mubr.bf16.gmra.mxu0 %v5671
      %v5946 = vpop.f32.mrf.mxu0
      %v5947 = vadd.f32 %v5506, %v5946
      %v5948 = vpop.f32.mrf.mxu0
      %v5949 = vpop.f32.mrf.mxu0
      %v5950 = vadd.f32 %v5506, %v5949
      %v5951 = vpop.f32.mrf.mxu0
      %5952 = vmatprep.mubr.bf16.mxu0 %v5675
      %5953 = vmatmul.mubr.bf16.gmra.mxu0 %v5674
      %v5954 = vpop.f32.mrf.mxu0
      %v5955 = vadd.f32 %v5506, %v5954
      %v5956 = vpop.f32.mrf.mxu0
      %v5957 = vpop.f32.mrf.mxu0
      %v5958 = vadd.f32 %v5506, %v5957
      %v5959 = vpop.f32.mrf.mxu0
      %5960 = vmatprep.mubr.bf16.mxu0 %v5678
      %5961 = vmatmul.mubr.bf16.gmra.mxu0 %v5677
      %v5962 = vpop.f32.mrf.mxu0
      %v5963 = vadd.f32 %v5506, %v5962
      %v5964 = vpop.f32.mrf.mxu0
      %v5965 = vpop.f32.mrf.mxu0
      %v5966 = vadd.f32 %v5506, %v5965
      %v5967 = vpop.f32.mrf.mxu0
      %5968 = vmatprep.mubr.bf16.mxu0 %v5681
      %5969 = vmatmul.mubr.bf16.gmra.mxu0 %v5680
      %v5970 = vpop.f32.mrf.mxu0
      %v5971 = vadd.f32 %v5506, %v5970
      %v5972 = vpop.f32.mrf.mxu0
      %v5973 = vpop.f32.mrf.mxu0
      %v5974 = vadd.f32 %v5506, %v5973
      %v5975 = vpop.f32.mrf.mxu0
      %5976 = vmatprep.mubr.bf16.mxu0 %v5684
      %5977 = vmatmul.mubr.bf16.gmra.mxu0 %v5683
      %v5978 = vpop.f32.mrf.mxu0
      %v5979 = vadd.f32 %v5506, %v5978
      %v5980 = vpop.f32.mrf.mxu0
      %v5981 = vpop.f32.mrf.mxu0
      %v5982 = vadd.f32 %v5506, %v5981
      %v5983 = vpop.f32.mrf.mxu0
      %5984 = vmatprep.mubr.bf16.mxu0 %v5687
      %5985 = vmatmul.mubr.bf16.gmra.mxu0 %v5686
      %v5986 = vpop.f32.mrf.mxu0
      %v5987 = vadd.f32 %v5506, %v5986
      %v5988 = vpop.f32.mrf.mxu0
      %v5989 = vpop.f32.mrf.mxu0
      %v5990 = vadd.f32 %v5506, %v5989
      %v5991 = vpop.f32.mrf.mxu0
      %5992 = vmatprep.mubr.bf16.mxu0 %v5690
      %5993 = vmatmul.mubr.bf16.gmra.mxu0 %v5689
      %v5994 = vpop.f32.mrf.mxu0
      %v5995 = vadd.f32 %v5506, %v5994
      %v5996 = vpop.f32.mrf.mxu0
      %v5997 = vpop.f32.mrf.mxu0
      %v5998 = vadd.f32 %v5506, %v5997
      %v5999 = vpop.f32.mrf.mxu0
      %6000 = vmatprep.mubr.bf16.mxu0 %v5693
      %6001 = vmatmul.mubr.bf16.gmra.mxu0 %v5692
      %v6002 = vpop.f32.mrf.mxu0
      %v6003 = vadd.f32 %v5506, %v6002
      %v6004 = vpop.f32.mrf.mxu0
      %v6005 = vpop.f32.mrf.mxu0
      %v6006 = vadd.f32 %v5506, %v6005
      %v6007 = vpop.f32.mrf.mxu0
      %6008 = vmatprep.mubr.bf16.mxu0 %v5696
      %6009 = vmatmul.mubr.bf16.gmra.mxu0 %v5695
      %v6010 = vpop.f32.mrf.mxu0
      %v6011 = vadd.f32 %v5506, %v6010
      %v6012 = vpop.f32.mrf.mxu0
      %v6013 = vpop.f32.mrf.mxu0
      %v6014 = vadd.f32 %v5506, %v6013
      %v6015 = vpop.f32.mrf.mxu0
      %6016 = vmatprep.mubr.bf16.mxu0 %v5699
      %6017 = vmatmul.mubr.bf16.gmra.mxu0 %v5698
      %v6018 = vpop.f32.mrf.mxu0
      %v6019 = vadd.f32 %v5506, %v6018
      %v6020 = vpop.f32.mrf.mxu0
      %v6021 = vpop.f32.mrf.mxu0
      %v6022 = vadd.f32 %v5506, %v6021
      %v6023 = vpop.f32.mrf.mxu0
      %6024 = vmatprep.mubr.bf16.mxu0 %v5702
      %6025 = vmatmul.mubr.bf16.gmra.mxu0 %v5701
      %v6026 = vpop.f32.mrf.mxu0
      %v6027 = vadd.f32 %v5506, %v6026
      %v6028 = vpop.f32.mrf.mxu0
      %v6029 = vpop.f32.mrf.mxu0
      %v6030 = vadd.f32 %v5506, %v6029
      %v6031 = vpop.f32.mrf.mxu0
      %6032 = vmatprep.mubr.bf16.mxu0 %v5705
      %6033 = vmatmul.mubr.bf16.gmra.mxu0 %v5704
      %v6034 = vpop.f32.mrf.mxu0
      %v6035 = vadd.f32 %v5506, %v6034
      %v6036 = vpop.f32.mrf.mxu0
      %v6037 = vpop.f32.mrf.mxu0
      %v6038 = vadd.f32 %v5506, %v6037
      %v6039 = vpop.f32.mrf.mxu0
      %6040 = vmatprep.mubr.bf16.mxu0 %v5708
      %6041 = vmatmul.mubr.bf16.gmra.mxu0 %v5707
      %v6042 = vpop.f32.mrf.mxu0
      %v6043 = vadd.f32 %v5506, %v6042
      %v6044 = vpop.f32.mrf.mxu0
      %v6045 = vpop.f32.mrf.mxu0
      %v6046 = vadd.f32 %v5506, %v6045
      %v6047 = vpop.f32.mrf.mxu0
      %6048 = vmatprep.mubr.bf16.mxu0 %v5711
      %6049 = vmatmul.mubr.bf16.gmra.mxu0 %v5710
      %v6050 = vpop.f32.mrf.mxu0
      %v6051 = vadd.f32 %v5506, %v6050
      %v6052 = vpop.f32.mrf.mxu0
      %v6053 = vpop.f32.mrf.mxu0
      %v6054 = vadd.f32 %v5506, %v6053
      %v6055 = vpop.f32.mrf.mxu0
      %6056 = vmatprep.mubr.bf16.mxu0 %v5714
      %6057 = vmatmul.mubr.bf16.gmra.mxu0 %v5713
      %v6058 = vpop.f32.mrf.mxu0
      %v6059 = vadd.f32 %v5506, %v6058
      %v6060 = vpop.f32.mrf.mxu0
      %v6061 = vpop.f32.mrf.mxu0
      %v6062 = vadd.f32 %v5506, %v6061
      %v6063 = vpop.f32.mrf.mxu0
      %6064 = vdwg.mxu0
      %6065 = vmatprep.subr.bf16.mxu0 0
      %6066 = vmatpush1.bf16.msra.mxu0 0
      %6067 = vmatprep.subr.bf16.mxu0 0
      %6068 = vmatpush1.bf16.msra.mxu0 0
      %6069 = vmatprep.subr.bf16.mxu0 0
      %6070 = vmatpush1.bf16.msra.mxu0 0
      %6071 = vmatprep.subr.bf16.mxu0 0
      %6072 = vmatpush1.bf16.msra.mxu0 0
      %6073 = vmatprep.subr.bf16.mxu0 0
      %6074 = vmatpush1.bf16.msra.mxu0 0
      %6075 = vmatprep.subr.bf16.mxu0 0
      %6076 = vmatpush1.bf16.msra.mxu0 0
      %6077 = vmatprep.subr.bf16.mxu0 0
      %6078 = vmatpush1.bf16.msra.mxu0 %v5837
      %6079 = vmatprep.subr.bf16.mxu0 0
      %6080 = vmatpush1.bf16.msra.mxu0 %v5836
      %6081 = vmatprep.subr.bf16.mxu0 0
      %6082 = vmatpush2.bf16.msra.mxu0 0
      %6083 = vmatprep.subr.bf16.mxu0 0
      %6084 = vmatpush2.bf16.msra.mxu0 0
      %6085 = vmatprep.subr.bf16.mxu0 0
      %6086 = vmatpush2.bf16.msra.mxu0 0
      %6087 = vmatprep.subr.bf16.mxu0 0
      %6088 = vmatpush2.bf16.msra.mxu0 0
      %6089 = vmatprep.subr.bf16.mxu0 0
      %6090 = vmatpush2.bf16.msra.mxu0 0
      %6091 = vmatprep.subr.bf16.mxu0 0
      %6092 = vmatpush2.bf16.msra.mxu0 0
      %6093 = vmatprep.subr.bf16.mxu0 0
      %6094 = vmatpush2.bf16.msra.mxu0 0
      %6095 = vmatprep.subr.bf16.mxu0 0
      %6096 = vmatpush2.bf16.msra.mxu0 0
      %6097 = vmatprep.mubr.bf16.mxu0 0
      %6098 = vmatmul.mubr.bf16.gmra.mxu0 %v5857
      %v6099 = vpop.f32.mrf.mxu0
      %v6100 = vadd.f32 %v5939, %v6099
      %v6101 = vpop.f32.mrf.mxu0
      %v6102 = vpop.f32.mrf.mxu0
      %v6103 = vadd.f32 %v5942, %v6102
      %v6104 = vpop.f32.mrf.mxu0
      %6105 = vmatprep.mubr.bf16.mxu0 0
      %6106 = vmatmul.mubr.bf16.gmra.mxu0 %v5860
      %v6107 = vpop.f32.mrf.mxu0
      %v6108 = vadd.f32 %v5947, %v6107
      %v6109 = vpop.f32.mrf.mxu0
      %v6110 = vpop.f32.mrf.mxu0
      %v6111 = vadd.f32 %v5950, %v6110
      %v6112 = vpop.f32.mrf.mxu0
      %6113 = vmatprep.mubr.bf16.mxu0 0
      %6114 = vmatmul.mubr.bf16.gmra.mxu0 %v5863
      %v6115 = vpop.f32.mrf.mxu0
      %v6116 = vadd.f32 %v5955, %v6115
      %v6117 = vpop.f32.mrf.mxu0
      %v6118 = vpop.f32.mrf.mxu0
      %v6119 = vadd.f32 %v5958, %v6118
      %v6120 = vpop.f32.mrf.mxu0
      %6121 = vmatprep.mubr.bf16.mxu0 0
      %6122 = vmatmul.mubr.bf16.gmra.mxu0 %v5866
      %v6123 = vpop.f32.mrf.mxu0
      %v6124 = vadd.f32 %v5963, %v6123
      %v6125 = vpop.f32.mrf.mxu0
      %v6126 = vpop.f32.mrf.mxu0
      %v6127 = vadd.f32 %v5966, %v6126
      %v6128 = vpop.f32.mrf.mxu0
      %6129 = vmatprep.mubr.bf16.mxu0 0
      %6130 = vmatmul.mubr.bf16.gmra.mxu0 %v5869
      %v6131 = vpop.f32.mrf.mxu0
      %v6132 = vadd.f32 %v5971, %v6131
      %v6133 = vpop.f32.mrf.mxu0
      %v6134 = vpop.f32.mrf.mxu0
      %v6135 = vadd.f32 %v5974, %v6134
      %v6136 = vpop.f32.mrf.mxu0
      %6137 = vmatprep.mubr.bf16.mxu0 0
      %6138 = vmatmul.mubr.bf16.gmra.mxu0 %v5872
      %v6139 = vpop.f32.mrf.mxu0
      %v6140 = vadd.f32 %v5979, %v6139
      %v6141 = vpop.f32.mrf.mxu0
      %v6142 = vpop.f32.mrf.mxu0
      %v6143 = vadd.f32 %v5982, %v6142
      %v6144 = vpop.f32.mrf.mxu0
      %6145 = vmatprep.mubr.bf16.mxu0 0
      %6146 = vmatmul.mubr.bf16.gmra.mxu0 %v5875
      %v6147 = vpop.f32.mrf.mxu0
      %v6148 = vadd.f32 %v5987, %v6147
      %v6149 = vpop.f32.mrf.mxu0
      %v6150 = vpop.f32.mrf.mxu0
      %v6151 = vadd.f32 %v5990, %v6150
      %v6152 = vpop.f32.mrf.mxu0
      %6153 = vmatprep.mubr.bf16.mxu0 0
      %6154 = vmatmul.mubr.bf16.gmra.mxu0 %v5878
      %v6155 = vpop.f32.mrf.mxu0
      %v6156 = vadd.f32 %v5995, %v6155
      %v6157 = vpop.f32.mrf.mxu0
      %v6158 = vpop.f32.mrf.mxu0
      %v6159 = vadd.f32 %v5998, %v6158
      %v6160 = vpop.f32.mrf.mxu0
      %6161 = vmatprep.mubr.bf16.mxu0 0
      %6162 = vmatmul.mubr.bf16.gmra.mxu0 %v5881
      %v6163 = vpop.f32.mrf.mxu0
      %v6164 = vadd.f32 %v6003, %v6163
      %v6165 = vpop.f32.mrf.mxu0
      %v6166 = vpop.f32.mrf.mxu0
      %v6167 = vadd.f32 %v6006, %v6166
      %v6168 = vpop.f32.mrf.mxu0
      %6169 = vmatprep.mubr.bf16.mxu0 0
      %6170 = vmatmul.mubr.bf16.gmra.mxu0 %v5884
      %v6171 = vpop.f32.mrf.mxu0
      %v6172 = vadd.f32 %v6011, %v6171
      %v6173 = vpop.f32.mrf.mxu0
      %v6174 = vpop.f32.mrf.mxu0
      %v6175 = vadd.f32 %v6014, %v6174
      %v6176 = vpop.f32.mrf.mxu0
      %6177 = vmatprep.mubr.bf16.mxu0 0
      %6178 = vmatmul.mubr.bf16.gmra.mxu0 %v5887
      %v6179 = vpop.f32.mrf.mxu0
      %v6180 = vadd.f32 %v6019, %v6179
      %v6181 = vpop.f32.mrf.mxu0
      %v6182 = vpop.f32.mrf.mxu0
      %v6183 = vadd.f32 %v6022, %v6182
      %v6184 = vpop.f32.mrf.mxu0
      %6185 = vmatprep.mubr.bf16.mxu0 0
      %6186 = vmatmul.mubr.bf16.gmra.mxu0 %v5890
      %v6187 = vpop.f32.mrf.mxu0
      %v6188 = vadd.f32 %v6027, %v6187
      %v6189 = vpop.f32.mrf.mxu0
      %v6190 = vpop.f32.mrf.mxu0
      %v6191 = vadd.f32 %v6030, %v6190
      %v6192 = vpop.f32.mrf.mxu0
      %6193 = vmatprep.mubr.bf16.mxu0 0
      %6194 = vmatmul.mubr.bf16.gmra.mxu0 %v5893
      %v6195 = vpop.f32.mrf.mxu0
      %v6196 = vadd.f32 %v6035, %v6195
      %v6197 = vpop.f32.mrf.mxu0
      %v6198 = vpop.f32.mrf.mxu0
      %v6199 = vadd.f32 %v6038, %v6198
      %v6200 = vpop.f32.mrf.mxu0
      %6201 = vmatprep.mubr.bf16.mxu0 0
      %6202 = vmatmul.mubr.bf16.gmra.mxu0 %v5896
      %v6203 = vpop.f32.mrf.mxu0
      %v6204 = vadd.f32 %v6043, %v6203
      %v6205 = vpop.f32.mrf.mxu0
      %v6206 = vpop.f32.mrf.mxu0
      %v6207 = vadd.f32 %v6046, %v6206
      %v6208 = vpop.f32.mrf.mxu0
      %6209 = vmatprep.mubr.bf16.mxu0 0
      %6210 = vmatmul.mubr.bf16.gmra.mxu0 %v5899
      %v6211 = vpop.f32.mrf.mxu0
      %v6212 = vadd.f32 %v6051, %v6211
      %v6213 = vpop.f32.mrf.mxu0
      %v6214 = vpop.f32.mrf.mxu0
      %v6215 = vadd.f32 %v6054, %v6214
      %v6216 = vpop.f32.mrf.mxu0
      %6217 = vmatprep.mubr.bf16.mxu0 0
      %6218 = vmatmul.mubr.bf16.gmra.mxu0 %v5902
      %v6219 = vpop.f32.mrf.mxu0
      %v6220 = vadd.f32 %v6059, %v6219
      %v6221 = vpop.f32.mrf.mxu0
      %v6222 = vpop.f32.mrf.mxu0
      %v6223 = vadd.f32 %v6062, %v6222
      %v6224 = vpop.f32.mrf.mxu0
      %6225 = vdwg.mxu0
      %6258 = vrot.lane.b32.xlu0 %v6100, 80
      %v6259 = vpop.permute.xlu0 %6258
      %6260 = vrot.lane.b32.xlu0 %v6103, 80
      %v6261 = vpop.permute.xlu0 %6260
      %6262 = vrot.lane.b32.xlu0 %v6108, 80
      %v6263 = vpop.permute.xlu0 %6262
      %6264 = vrot.lane.b32.xlu0 %v6111, 80
      %v6265 = vpop.permute.xlu0 %6264
      %6266 = vrot.lane.b32.xlu0 %v6116, 80
      %v6267 = vpop.permute.xlu0 %6266
      %6268 = vrot.lane.b32.xlu0 %v6119, 80
      %v6269 = vpop.permute.xlu0 %6268
      %6270 = vrot.lane.b32.xlu0 %v6124, 80
      %v6271 = vpop.permute.xlu0 %6270
      %6272 = vrot.lane.b32.xlu0 %v6127, 80
      %v6273 = vpop.permute.xlu0 %6272
      %6274 = vrot.lane.b32.xlu0 %v6132, 80
      %v6275 = vpop.permute.xlu0 %6274
      %6276 = vrot.lane.b32.xlu0 %v6135, 80
      %v6277 = vpop.permute.xlu0 %6276
      %6278 = vrot.lane.b32.xlu0 %v6140, 80
      %v6279 = vpop.permute.xlu0 %6278
      %6280 = vrot.lane.b32.xlu0 %v6143, 80
      %v6281 = vpop.permute.xlu0 %6280
      %6282 = vrot.lane.b32.xlu0 %v6148, 80
      %v6283 = vpop.permute.xlu0 %6282
      %6284 = vrot.lane.b32.xlu0 %v6151, 80
      %v6285 = vpop.permute.xlu0 %6284
      %6286 = vrot.lane.b32.xlu0 %v6156, 80
      %v6287 = vpop.permute.xlu0 %6286
      %6288 = vrot.lane.b32.xlu0 %v6159, 80
      %v6289 = vpop.permute.xlu0 %6288
      %6290 = vrot.lane.b32.xlu0 %v6164, 80
      %v6291 = vpop.permute.xlu0 %6290
      %6292 = vrot.lane.b32.xlu0 %v6167, 80
      %v6293 = vpop.permute.xlu0 %6292
      %6294 = vrot.lane.b32.xlu0 %v6172, 80
      %v6295 = vpop.permute.xlu0 %6294
      %6296 = vrot.lane.b32.xlu0 %v6175, 80
      %v6297 = vpop.permute.xlu0 %6296
      %6298 = vrot.lane.b32.xlu0 %v6180, 80
      %v6299 = vpop.permute.xlu0 %6298
      %6300 = vrot.lane.b32.xlu0 %v6183, 80
      %v6301 = vpop.permute.xlu0 %6300
      %6302 = vrot.lane.b32.xlu0 %v6188, 80
      %v6303 = vpop.permute.xlu0 %6302
      %6304 = vrot.lane.b32.xlu0 %v6191, 80
      %v6305 = vpop.permute.xlu0 %6304
      %6306 = vrot.lane.b32.xlu0 %v6196, 80
      %v6307 = vpop.permute.xlu0 %6306
      %6308 = vrot.lane.b32.xlu0 %v6199, 80
      %v6309 = vpop.permute.xlu0 %6308
      %6310 = vrot.lane.b32.xlu0 %v6204, 80
      %v6311 = vpop.permute.xlu0 %6310
      %6312 = vrot.lane.b32.xlu0 %v6207, 80
      %v6313 = vpop.permute.xlu0 %6312
      %6314 = vrot.lane.b32.xlu0 %v6212, 80
      %v6315 = vpop.permute.xlu0 %6314
      %6316 = vrot.lane.b32.xlu0 %v6215, 80
      %v6317 = vpop.permute.xlu0 %6316
      %6318 = vrot.lane.b32.xlu0 %v6220, 80
      %v6319 = vpop.permute.xlu0 %6318
      %6320 = vrot.lane.b32.xlu0 %v6223, 80
      %v6321 = vpop.permute.xlu0 %6320
      %v6354 = vmax.f32 %v6100, %v6259
      %v6355 = vmax.f32 %v6103, %v6261
      %v6356 = vmax.f32 %v6108, %v6263
      %v6357 = vmax.f32 %v6111, %v6265
      %v6358 = vmax.f32 %v6116, %v6267
      %v6359 = vmax.f32 %v6119, %v6269
      %v6360 = vmax.f32 %v6124, %v6271
      %v6361 = vmax.f32 %v6127, %v6273
      %v6362 = vmax.f32 %v6132, %v6275
      %v6363 = vmax.f32 %v6135, %v6277
      %v6364 = vmax.f32 %v6140, %v6279
      %v6365 = vmax.f32 %v6143, %v6281
      %v6366 = vmax.f32 %v6148, %v6283
      %v6367 = vmax.f32 %v6151, %v6285
      %v6368 = vmax.f32 %v6156, %v6287
      %v6369 = vmax.f32 %v6159, %v6289
      %v6370 = vmax.f32 %v6164, %v6291
      %v6371 = vmax.f32 %v6167, %v6293
      %v6372 = vmax.f32 %v6172, %v6295
      %v6373 = vmax.f32 %v6175, %v6297
      %v6374 = vmax.f32 %v6180, %v6299
      %v6375 = vmax.f32 %v6183, %v6301
      %v6376 = vmax.f32 %v6188, %v6303
      %v6377 = vmax.f32 %v6191, %v6305
      %v6378 = vmax.f32 %v6196, %v6307
      %v6379 = vmax.f32 %v6199, %v6309
      %v6380 = vmax.f32 %v6204, %v6311
      %v6381 = vmax.f32 %v6207, %v6313
      %v6382 = vmax.f32 %v6212, %v6315
      %v6383 = vmax.f32 %v6215, %v6317
      %v6384 = vmax.f32 %v6220, %v6319
      %v6385 = vmax.f32 %v6223, %v6321
      %v6386 = vmax.f32 %v6354, %v6356
      %v6387 = vmax.f32 %v6355, %v6357
      %v6388 = vmax.f32 %v6358, %v6360
      %v6389 = vmax.f32 %v6359, %v6361
      %v6390 = vmax.f32 %v6362, %v6364
      %v6391 = vmax.f32 %v6363, %v6365
      %v6392 = vmax.f32 %v6366, %v6368
      %v6393 = vmax.f32 %v6367, %v6369
      %v6394 = vmax.f32 %v6370, %v6372
      %v6395 = vmax.f32 %v6371, %v6373
      %v6396 = vmax.f32 %v6374, %v6376
      %v6397 = vmax.f32 %v6375, %v6377
      %v6398 = vmax.f32 %v6378, %v6380
      %v6399 = vmax.f32 %v6379, %v6381
      %v6400 = vmax.f32 %v6382, %v6384
      %v6401 = vmax.f32 %v6383, %v6385
      %vm6402 = vcmask 392192
      %6403 = vst.msk [vmem:[#allocation5] sm:$0xff] %vm6402, %v6386
      %6404 = vst.msk [vmem:[#allocation5 + $0x8] sm:$0xff] %vm6402, %v6387
      %6405 = vst.msk [vmem:[#allocation5 + $0x10] sm:$0xff] %vm6402, %v6388
      %6406 = vst.msk [vmem:[#allocation5 + $0x18] sm:$0xff] %vm6402, %v6389
      %6407 = vst.msk [vmem:[#allocation5 + $0x20] sm:$0xff] %vm6402, %v6390
      %6408 = vst.msk [vmem:[#allocation5 + $0x28] sm:$0xff] %vm6402, %v6391
      %6409 = vst.msk [vmem:[#allocation5 + $0x30] sm:$0xff] %vm6402, %v6392
      %6410 = vst.msk [vmem:[#allocation5 + $0x38] sm:$0xff] %vm6402, %v6393
      %6411 = vst.msk [vmem:[#allocation5 + $0x40] sm:$0xff] %vm6402, %v6394
      %6412 = vst.msk [vmem:[#allocation5 + $0x48] sm:$0xff] %vm6402, %v6395
      %6413 = vst.msk [vmem:[#allocation5 + $0x50] sm:$0xff] %vm6402, %v6396
      %6414 = vst.msk [vmem:[#allocation5 + $0x58] sm:$0xff] %vm6402, %v6397
      %6415 = vst.msk [vmem:[#allocation5 + $0x60] sm:$0xff] %vm6402, %v6398
      %6416 = vst.msk [vmem:[#allocation5 + $0x68] sm:$0xff] %vm6402, %v6399
      %6417 = vst.msk [vmem:[#allocation5 + $0x70] sm:$0xff] %vm6402, %v6400
      %6418 = vst.msk [vmem:[#allocation5 + $0x78] sm:$0xff] %vm6402, %v6401
      %v6419 = vld [vmem:[#allocation5] ss:$2 sm:$0xff]
      %s6420 = scalar_lea.vmem [#allocation5], 16
      %v6421 = vld [vmem:[%s6420] ss:$2 sm:$0xff]
      %s6422 = scalar_lea.vmem [#allocation5], 32
      %v6423 = vld [vmem:[%s6422] ss:$2 sm:$0xff]
      %s6424 = scalar_lea.vmem [#allocation5], 48
      %v6425 = vld [vmem:[%s6424] ss:$2 sm:$0xff]
      %s6426 = scalar_lea.vmem [#allocation5], 64
      %v6427 = vld [vmem:[%s6426] ss:$2 sm:$0xff]
      %s6428 = scalar_lea.vmem [#allocation5], 80
      %v6429 = vld [vmem:[%s6428] ss:$2 sm:$0xff]
      %s6430 = scalar_lea.vmem [#allocation5], 96
      %v6431 = vld [vmem:[%s6430] ss:$2 sm:$0xff]
      %s6432 = scalar_lea.vmem [#allocation5], 112
      %v6433 = vld [vmem:[%s6432] ss:$2 sm:$0xff]
      %s6434 = scalar_lea.vmem [#allocation5], 1
      %v6435 = vld [vmem:[%s6434] ss:$2 sm:$0xff]
      %s6436 = scalar_lea.vmem [#allocation5], 17
      %v6437 = vld [vmem:[%s6436] ss:$2 sm:$0xff]
      %s6438 = scalar_lea.vmem [#allocation5], 33
      %v6439 = vld [vmem:[%s6438] ss:$2 sm:$0xff]
      %s6440 = scalar_lea.vmem [#allocation5], 49
      %v6441 = vld [vmem:[%s6440] ss:$2 sm:$0xff]
      %s6442 = scalar_lea.vmem [#allocation5], 65
      %v6443 = vld [vmem:[%s6442] ss:$2 sm:$0xff]
      %s6444 = scalar_lea.vmem [#allocation5], 81
      %v6445 = vld [vmem:[%s6444] ss:$2 sm:$0xff]
      %s6446 = scalar_lea.vmem [#allocation5], 97
      %v6447 = vld [vmem:[%s6446] ss:$2 sm:$0xff]
      %s6448 = scalar_lea.vmem [#allocation5], 113
      %v6449 = vld [vmem:[%s6448] ss:$2 sm:$0xff]
      %v6450 = vmax.f32 %v6419, %v6435
      %v6451 = vmax.f32 %v6421, %v6437
      %v6452 = vmax.f32 %v6423, %v6439
      %v6453 = vmax.f32 %v6425, %v6441
      %v6454 = vmax.f32 %v6427, %v6443
      %v6455 = vmax.f32 %v6429, %v6445
      %v6456 = vmax.f32 %v6431, %v6447
      %v6457 = vmax.f32 %v6433, %v6449
      %v6458 = vpack.c.bf16 %v6451, %v6450
      %v6459 = vpack.c.bf16 %v6453, %v6452
      %v6460 = vpack.c.bf16 %v6455, %v6454
      %v6461 = vpack.c.bf16 %v6457, %v6456
      %v6462 = vld [vmem:[%s4] sm:$0xf]
      %v6463 = vld [vmem:[%s4 + $0x4] sm:$0xf]
      %v6464 = vld [vmem:[%s4 + $0x8] sm:$0xf]
      %v6465 = vld [vmem:[%s4 + $0xc] sm:$0xf]
      %v6466 = vld [vmem:[%s4 + $0x10] sm:$0xf]
      %v6467 = vld [vmem:[%s4 + $0x14] sm:$0xf]
      %v6468 = vld [vmem:[%s13] sm:$0x1]
      %v6470 = vlaneseq
      %v6471 = vshrl.u32 %v6470, 7
      %v6472 = vsub.s32 0, %v6471
      %v6473 = vrot.slane %v6468, %v6472
      %v6481 = vunpack.c.l.b16 %v6462
      %v6482 = vunpack.c.l.b16 %v6463
      %v6483 = vunpack.c.l.b16 %v6464
      %v6484 = vunpack.c.l.b16 %v6465
      %v6485 = vunpack.c.l.b16 %v6466
      %v6486 = vunpack.c.l.b16 %v6467
      %v6487 = vpack.c.b16 %v6482, %v6481
      %v6488 = vpack.c.b16 %v6484, %v6483
      %v6489 = vpack.c.b16 %v6486, %v6485
      %v6494 = vsel %vm6402, %v6458, 0
      %v6497 = vsel %vm6402, %v6459, 0
      %v6500 = vsel %vm6402, %v6460, 0
      %v6503 = vsel %vm6402, %v6461, 0
      %6505 = vmatprep.subr.bf16.mxu0 0
      %6506 = vmatpush1.bf16.msra.mxu0 0
      %6507 = vmatprep.subr.bf16.mxu0 0
      %6508 = vmatpush1.bf16.msra.mxu0 0
      %6509 = vmatprep.subr.bf16.mxu0 0
      %6510 = vmatpush1.bf16.msra.mxu0 0
      %6511 = vmatprep.subr.bf16.mxu0 0
      %6512 = vmatpush1.bf16.msra.mxu0 0
      %6513 = vmatprep.subr.bf16.mxu0 0
      %6514 = vmatpush1.bf16.msra.mxu0 0
      %6515 = vmatprep.subr.bf16.mxu0 0
      %6516 = vmatpush1.bf16.msra.mxu0 %v6489
      %6517 = vmatprep.subr.bf16.mxu0 0
      %6518 = vmatpush1.bf16.msra.mxu0 %v6488
      %6519 = vmatprep.subr.bf16.mxu0 0
      %6520 = vmatpush1.bf16.msra.mxu0 %v6487
      %6521 = vmatprep.subr.bf16.mxu0 0
      %6522 = vmatpush2.bf16.msra.mxu0 0
      %6523 = vmatprep.subr.bf16.mxu0 0
      %6524 = vmatpush2.bf16.msra.mxu0 0
      %6525 = vmatprep.subr.bf16.mxu0 0
      %6526 = vmatpush2.bf16.msra.mxu0 0
      %6527 = vmatprep.subr.bf16.mxu0 0
      %6528 = vmatpush2.bf16.msra.mxu0 0
      %6529 = vmatprep.subr.bf16.mxu0 0
      %6530 = vmatpush2.bf16.msra.mxu0 0
      %6531 = vmatprep.subr.bf16.mxu0 0
      %6532 = vmatpush2.bf16.msra.mxu0 0
      %6533 = vmatprep.subr.bf16.mxu0 0
      %6534 = vmatpush2.bf16.msra.mxu0 0
      %6535 = vmatprep.subr.bf16.mxu0 0
      %6536 = vmatpush2.bf16.msra.mxu0 0
      %6537 = vmatprep.mubr.bf16.mxu0 0
      %6538 = vmatmul.mubr.bf16.gmra.mxu0 %v6494
      %v6539 = vpop.f32.mrf.mxu0
      %v6540 = vadd.f32 %v6473, %v6539
      %v6541 = vpop.f32.mrf.mxu0
      %v6542 = vpop.f32.mrf.mxu0
      %v6543 = vadd.f32 %v6473, %v6542
      %v6544 = vpop.f32.mrf.mxu0
      %6545 = vmatprep.mubr.bf16.mxu0 0
      %6546 = vmatmul.mubr.bf16.gmra.mxu0 %v6497
      %v6547 = vpop.f32.mrf.mxu0
      %v6548 = vadd.f32 %v6473, %v6547
      %v6549 = vpop.f32.mrf.mxu0
      %v6550 = vpop.f32.mrf.mxu0
      %v6551 = vadd.f32 %v6473, %v6550
      %v6552 = vpop.f32.mrf.mxu0
      %6553 = vmatprep.mubr.bf16.mxu0 0
      %6554 = vmatmul.mubr.bf16.gmra.mxu0 %v6500
      %v6555 = vpop.f32.mrf.mxu0
      %v6556 = vadd.f32 %v6473, %v6555
      %v6557 = vpop.f32.mrf.mxu0
      %v6558 = vpop.f32.mrf.mxu0
      %v6559 = vadd.f32 %v6473, %v6558
      %v6560 = vpop.f32.mrf.mxu0
      %6561 = vmatprep.mubr.bf16.mxu0 0
      %6562 = vmatmul.mubr.bf16.gmra.mxu0 %v6503
      %v6563 = vpop.f32.mrf.mxu0
      %v6564 = vadd.f32 %v6473, %v6563
      %v6565 = vpop.f32.mrf.mxu0
      %v6566 = vpop.f32.mrf.mxu0
      %v6567 = vadd.f32 %v6473, %v6566
      %v6568 = vpop.f32.mrf.mxu0
      %6569 = vdwg.mxu0
      %6578 = vrot.lane.b32.xlu0 %v6540, 80
      %v6579 = vpop.permute.xlu0 %6578
      %6580 = vrot.lane.b32.xlu0 %v6543, 80
      %v6581 = vpop.permute.xlu0 %6580
      %6582 = vrot.lane.b32.xlu0 %v6548, 80
      %v6583 = vpop.permute.xlu0 %6582
      %6584 = vrot.lane.b32.xlu0 %v6551, 80
      %v6585 = vpop.permute.xlu0 %6584
      %6586 = vrot.lane.b32.xlu0 %v6556, 80
      %v6587 = vpop.permute.xlu0 %6586
      %6588 = vrot.lane.b32.xlu0 %v6559, 80
      %v6589 = vpop.permute.xlu0 %6588
      %6590 = vrot.lane.b32.xlu0 %v6564, 80
      %v6591 = vpop.permute.xlu0 %6590
      %6592 = vrot.lane.b32.xlu0 %v6567, 80
      %v6593 = vpop.permute.xlu0 %6592
      %v6602 = vmax.f32 %v6540, %v6579
      %v6603 = vmax.f32 %v6543, %v6581
      %v6604 = vmax.f32 %v6548, %v6583
      %v6605 = vmax.f32 %v6551, %v6585
      %v6606 = vmax.f32 %v6556, %v6587
      %v6607 = vmax.f32 %v6559, %v6589
      %v6608 = vmax.f32 %v6564, %v6591
      %v6609 = vmax.f32 %v6567, %v6593
      %v6610 = vpack.c.bf16 %v6603, %v6602
      %v6611 = vpack.c.bf16 %v6605, %v6604
      %v6612 = vpack.c.bf16 %v6607, %v6606
      %v6613 = vpack.c.bf16 %v6609, %v6608
      %6614 = vst.msk [vmem:[#allocation6] sm:$0xff] %vm6402, 0.0
      %vm6615 = vcmask 386048
      %6616 = vst.msk [vmem:[#allocation6 + $0x8] sm:$0x3] %vm6615, 0.0
      %6617 = vst.msk [vmem:[#allocation6 + $0x10] sm:$0xff] %vm6402, 0.0
      %6618 = vst.msk [vmem:[#allocation6 + $0x18] sm:$0x3] %vm6615, 0.0
      %6619 = vst.msk [vmem:[#allocation6 + $0x20] sm:$0xff] %vm6402, 0.0
      %6620 = vst.msk [vmem:[#allocation6 + $0x28] sm:$0x3] %vm6615, 0.0
      %6621 = vst.msk [vmem:[#allocation6 + $0x30] sm:$0xff] %vm6402, 0.0
      %6622 = vst.msk [vmem:[#allocation6 + $0x38] sm:$0x3] %vm6615, 0.0
      %6623 = vst.msk [vmem:[#allocation6 + $0x40] sm:$0xff] %vm6402, 0.0
      %6624 = vst.msk [vmem:[#allocation6 + $0x48] sm:$0x3] %vm6615, 0.0
      %6625 = vst.msk [vmem:[#allocation6 + $0x50] sm:$0xff] %vm6402, 0.0
      %6626 = vst.msk [vmem:[#allocation6 + $0x58] sm:$0x3] %vm6615, 0.0
      %6627 = vst.msk [vmem:[#allocation6 + $0x60] sm:$0xff] %vm6402, 0.0
      %6628 = vst.msk [vmem:[#allocation6 + $0x68] sm:$0x3] %vm6615, 0.0
      %6629 = vst.msk [vmem:[#allocation6 + $0x70] sm:$0xff] %vm6402, 0.0
      %6630 = vst.msk [vmem:[#allocation6 + $0x78] sm:$0x3] %vm6615, 0.0
      %6631 = vst.msk [vmem:[#allocation6 + $0x80] sm:$0xff] %vm6402, 0.0
      %6632 = vst.msk [vmem:[#allocation6 + $0x88] sm:$0x3] %vm6615, 0.0
      %6633 = vst.msk [vmem:[#allocation6 + $0x90] sm:$0xff] %vm6402, 0.0
      %6634 = vst.msk [vmem:[#allocation6 + $0x98] sm:$0x3] %vm6615, 0.0
      %v6639 = vunpack.c.l.b16 %v6610
      %v6640 = vunpack.c.h.b16 %v6610
      %v6641 = vunpack.c.l.b16 %v6611
      %v6642 = vunpack.c.h.b16 %v6611
      %v6643 = vunpack.c.l.b16 %v6612
      %v6644 = vunpack.c.h.b16 %v6612
      %v6645 = vunpack.c.l.b16 %v6613
      %v6646 = vunpack.c.h.b16 %v6613
      %v6647 = vpack.c.b16 %v6639, %v6639
      %v6648 = vpack.c.b16 %v6640, %v6640
      %v6649 = vpack.c.b16 %v6641, %v6641
      %v6650 = vpack.c.b16 %v6642, %v6642
      %v6651 = vpack.c.b16 %v6643, %v6643
      %v6652 = vpack.c.b16 %v6644, %v6644
      %v6653 = vpack.c.b16 %v6645, %v6645
      %v6654 = vpack.c.b16 %v6646, %v6646
      %v6663 = vunpack.c.l.bf16 %v6647
      %v6664 = vunpack.c.l.bf16 %v6648
      %v6665 = vunpack.c.l.bf16 %v6649
      %v6666 = vunpack.c.l.bf16 %v6650
      %v6667 = vunpack.c.l.bf16 %v6651
      %v6668 = vunpack.c.l.bf16 %v6652
      %v6669 = vunpack.c.l.bf16 %v6653
      %v6670 = vunpack.c.l.bf16 %v6654
      %s6671 = scalar_lea.vmem [#allocation6], 16
      %6672 = vst.msk [vmem:[%s6671 + $0x1] sm:$0xff] %vm6402, %v6663
      %6673 = vst.msk [vmem:[%s6671 + $0x11] sm:$0xff] %vm6402, %v6664
      %6674 = vst.msk [vmem:[%s6671 + $0x21] sm:$0xff] %vm6402, %v6665
      %6675 = vst.msk [vmem:[%s6671 + $0x31] sm:$0xff] %vm6402, %v6666
      %6676 = vst.msk [vmem:[%s6671 + $0x41] sm:$0xff] %vm6402, %v6667
      %6677 = vst.msk [vmem:[%s6671 + $0x51] sm:$0xff] %vm6402, %v6668
      %6678 = vst.msk [vmem:[%s6671 + $0x61] sm:$0xff] %vm6402, %v6669
      %6679 = vst.msk [vmem:[%s6671 + $0x71] sm:$0xff] %vm6402, %v6670
      %v6680 = vld [vmem:[#allocation6] sm:$0xff]
      %v6681 = vld [vmem:[#allocation6 + $0x10] sm:$0xff]
      %v6682 = vld [vmem:[#allocation6 + $0x20] sm:$0xff]
      %v6683 = vld [vmem:[#allocation6 + $0x30] sm:$0xff]
      %v6684 = vld [vmem:[#allocation6 + $0x40] sm:$0xff]
      %v6685 = vld [vmem:[#allocation6 + $0x50] sm:$0xff]
      %v6686 = vld [vmem:[#allocation6 + $0x60] sm:$0xff]
      %v6687 = vld [vmem:[#allocation6 + $0x70] sm:$0xff]
      %v6688 = vpack.c.bf16 %v6681, %v6680
      %v6689 = vpack.c.bf16 %v6683, %v6682
      %v6690 = vpack.c.bf16 %v6685, %v6684
      %v6691 = vpack.c.bf16 %v6687, %v6686
      %v6696 = vunpack.c.l.b16 %v6688
      %v6697 = vunpack.c.h.b16 %v6688
      %v6698 = vunpack.c.l.b16 %v6689
      %v6699 = vunpack.c.h.b16 %v6689
      %v6700 = vunpack.c.l.b16 %v6690
      %v6701 = vunpack.c.h.b16 %v6690
      %v6702 = vunpack.c.l.b16 %v6691
      %v6703 = vunpack.c.h.b16 %v6691
      %v6704 = vpack.c.b16 %v6696, %v6696
      %v6705 = vpack.c.b16 %v6697, %v6697
      %v6706 = vpack.c.b16 %v6698, %v6698
      %v6707 = vpack.c.b16 %v6699, %v6699
      %v6708 = vpack.c.b16 %v6700, %v6700
      %v6709 = vpack.c.b16 %v6701, %v6701
      %v6710 = vpack.c.b16 %v6702, %v6702
      %v6711 = vpack.c.b16 %v6703, %v6703
      %vm6720 = vcmask 388096
      %6721 = vst.msk [vmem:[#allocation7] sm:$0xf] %vm6720, %v6704
      %6722 = vst.msk [vmem:[#allocation7 + $0x10] sm:$0xf] %vm6720, %v6705
      %6723 = vst.msk [vmem:[#allocation7 + $0x20] sm:$0xf] %vm6720, %v6706
      %6724 = vst.msk [vmem:[#allocation7 + $0x30] sm:$0xf] %vm6720, %v6707
      %6725 = vst.msk [vmem:[#allocation7 + $0x40] sm:$0xf] %vm6720, %v6708
      %6726 = vst.msk [vmem:[#allocation7 + $0x50] sm:$0xf] %vm6720, %v6709
      %6727 = vst.msk [vmem:[#allocation7 + $0x60] sm:$0xf] %vm6720, %v6710
      %6728 = vst.msk [vmem:[#allocation7 + $0x70] sm:$0xf] %vm6720, %v6711
      %v6729 = vld [vmem:[#allocation6 + $0x1] sm:$0xff]
      %v6730 = vld [vmem:[#allocation6 + $0x11] sm:$0xff]
      %v6731 = vld [vmem:[#allocation6 + $0x21] sm:$0xff]
      %v6732 = vld [vmem:[#allocation6 + $0x31] sm:$0xff]
      %v6733 = vld [vmem:[#allocation6 + $0x41] sm:$0xff]
      %v6734 = vld [vmem:[#allocation6 + $0x51] sm:$0xff]
      %v6735 = vld [vmem:[#allocation6 + $0x61] sm:$0xff]
      %v6736 = vld [vmem:[#allocation6 + $0x71] sm:$0xff]
      %v6737 = vpack.c.bf16 %v6730, %v6729
      %v6738 = vpack.c.bf16 %v6732, %v6731
      %v6739 = vpack.c.bf16 %v6734, %v6733
      %v6740 = vpack.c.bf16 %v6736, %v6735
      %v6745 = vunpack.c.l.b16 %v6737
      %v6746 = vunpack.c.h.b16 %v6737
      %v6747 = vunpack.c.l.b16 %v6738
      %v6748 = vunpack.c.h.b16 %v6738
      %v6749 = vunpack.c.l.b16 %v6739
      %v6750 = vunpack.c.h.b16 %v6739
      %v6751 = vunpack.c.l.b16 %v6740
      %v6752 = vunpack.c.h.b16 %v6740
      %v6753 = vpack.c.b16 %v6745, %v6745
      %v6754 = vpack.c.b16 %v6746, %v6746
      %v6755 = vpack.c.b16 %v6747, %v6747
      %v6756 = vpack.c.b16 %v6748, %v6748
      %v6757 = vpack.c.b16 %v6749, %v6749
      %v6758 = vpack.c.b16 %v6750, %v6750
      %v6759 = vpack.c.b16 %v6751, %v6751
      %v6760 = vpack.c.b16 %v6752, %v6752
      %6761 = vrot.lane.b32.xlu0 %v6753, 48
      %v6762 = vpop.permute.xlu0 %6761
      %6763 = vrot.lane.b32.xlu0 %v6754, 48
      %v6764 = vpop.permute.xlu0 %6763
      %6765 = vrot.lane.b32.xlu0 %v6755, 48
      %v6766 = vpop.permute.xlu0 %6765
      %6767 = vrot.lane.b32.xlu0 %v6756, 48
      %v6768 = vpop.permute.xlu0 %6767
      %6769 = vrot.lane.b32.xlu0 %v6757, 48
      %v6770 = vpop.permute.xlu0 %6769
      %6771 = vrot.lane.b32.xlu0 %v6758, 48
      %v6772 = vpop.permute.xlu0 %6771
      %6773 = vrot.lane.b32.xlu0 %v6759, 48
      %v6774 = vpop.permute.xlu0 %6773
      %6775 = vrot.lane.b32.xlu0 %v6760, 48
      %v6776 = vpop.permute.xlu0 %6775
      %vm6785 = vcmask 781696
      %6786 = vst.msk [vmem:[#allocation7] sm:$0xf] %vm6785, %v6762
      %6787 = vst.msk [vmem:[#allocation7 + $0x10] sm:$0xf] %vm6785, %v6764
      %6788 = vst.msk [vmem:[#allocation7 + $0x20] sm:$0xf] %vm6785, %v6766
      %6789 = vst.msk [vmem:[#allocation7 + $0x30] sm:$0xf] %vm6785, %v6768
      %6790 = vst.msk [vmem:[#allocation7 + $0x40] sm:$0xf] %vm6785, %v6770
      %6791 = vst.msk [vmem:[#allocation7 + $0x50] sm:$0xf] %vm6785, %v6772
      %6792 = vst.msk [vmem:[#allocation7 + $0x60] sm:$0xf] %vm6785, %v6774
      %6793 = vst.msk [vmem:[#allocation7 + $0x70] sm:$0xf] %vm6785, %v6776
      %v6794 = vld [vmem:[#allocation6 + $0x2] sm:$0xff]
      %v6795 = vld [vmem:[#allocation6 + $0x12] sm:$0xff]
      %v6796 = vld [vmem:[#allocation6 + $0x22] sm:$0xff]
      %v6797 = vld [vmem:[#allocation6 + $0x32] sm:$0xff]
      %v6798 = vld [vmem:[#allocation6 + $0x42] sm:$0xff]
      %v6799 = vld [vmem:[#allocation6 + $0x52] sm:$0xff]
      %v6800 = vld [vmem:[#allocation6 + $0x62] sm:$0xff]
      %v6801 = vld [vmem:[#allocation6 + $0x72] sm:$0xff]
      %v6802 = vpack.c.bf16 %v6795, %v6794
      %v6803 = vpack.c.bf16 %v6797, %v6796
      %v6804 = vpack.c.bf16 %v6799, %v6798
      %v6805 = vpack.c.bf16 %v6801, %v6800
      %v6810 = vunpack.c.l.b16 %v6802
      %v6811 = vunpack.c.h.b16 %v6802
      %v6812 = vunpack.c.l.b16 %v6803
      %v6813 = vunpack.c.h.b16 %v6803
      %v6814 = vunpack.c.l.b16 %v6804
      %v6815 = vunpack.c.h.b16 %v6804
      %v6816 = vunpack.c.l.b16 %v6805
      %v6817 = vunpack.c.h.b16 %v6805
      %v6818 = vpack.c.b16 %v6810, %v6810
      %v6819 = vpack.c.b16 %v6811, %v6811
      %v6820 = vpack.c.b16 %v6812, %v6812
      %v6821 = vpack.c.b16 %v6813, %v6813
      %v6822 = vpack.c.b16 %v6814, %v6814
      %v6823 = vpack.c.b16 %v6815, %v6815
      %v6824 = vpack.c.b16 %v6816, %v6816
      %v6825 = vpack.c.b16 %v6817, %v6817
      %6826 = vrot.lane.b32.xlu0 %v6818, 96
      %v6827 = vpop.permute.xlu0 %6826
      %6828 = vrot.lane.b32.xlu0 %v6819, 96
      %v6829 = vpop.permute.xlu0 %6828
      %6830 = vrot.lane.b32.xlu0 %v6820, 96
      %v6831 = vpop.permute.xlu0 %6830
      %6832 = vrot.lane.b32.xlu0 %v6821, 96
      %v6833 = vpop.permute.xlu0 %6832
      %6834 = vrot.lane.b32.xlu0 %v6822, 96
      %v6835 = vpop.permute.xlu0 %6834
      %6836 = vrot.lane.b32.xlu0 %v6823, 96
      %v6837 = vpop.permute.xlu0 %6836
      %6838 = vrot.lane.b32.xlu0 %v6824, 96
      %v6839 = vpop.permute.xlu0 %6838
      %6840 = vrot.lane.b32.xlu0 %v6825, 96
      %v6841 = vpop.permute.xlu0 %6840
      %v6842 = vrot.slane %v6827, 4
      %v6843 = vrot.slane %v6829, 4
      %v6844 = vrot.slane %v6831, 4
      %v6845 = vrot.slane %v6833, 4
      %v6846 = vrot.slane %v6835, 4
      %v6847 = vrot.slane %v6837, 4
      %v6848 = vrot.slane %v6839, 4
      %v6849 = vrot.slane %v6841, 4
      %vm6850 = vcmask 785408
      %v6851 = vsel %vm6850, %v6842, %v6827
      %v6852 = vsel %vm6850, %v6843, %v6829
      %v6853 = vsel %vm6850, %v6844, %v6831
      %v6854 = vsel %vm6850, %v6845, %v6833
      %v6855 = vsel %vm6850, %v6846, %v6835
      %v6856 = vsel %vm6850, %v6847, %v6837
      %v6857 = vsel %vm6850, %v6848, %v6839
      %v6858 = vsel %vm6850, %v6849, %v6841
      %vm6867 = vcmask 130052
      %vm6868 = vmor %vm6867, %vm4215
      %6869 = vst.msk [vmem:[#allocation7] sm:$0xff] %vm6868, %v6851
      %6870 = vst.msk [vmem:[#allocation7 + $0x10] sm:$0xff] %vm6868, %v6852
      %6871 = vst.msk [vmem:[#allocation7 + $0x20] sm:$0xff] %vm6868, %v6853
      %6872 = vst.msk [vmem:[#allocation7 + $0x30] sm:$0xff] %vm6868, %v6854
      %6873 = vst.msk [vmem:[#allocation7 + $0x40] sm:$0xff] %vm6868, %v6855
      %6874 = vst.msk [vmem:[#allocation7 + $0x50] sm:$0xff] %vm6868, %v6856
      %6875 = vst.msk [vmem:[#allocation7 + $0x60] sm:$0xff] %vm6868, %v6857
      %6876 = vst.msk [vmem:[#allocation7 + $0x70] sm:$0xff] %vm6868, %v6858
      %v6877 = vld [vmem:[%s6671] sm:$0xff]
      %v6878 = vld [vmem:[%s6671 + $0x10] sm:$0xff]
      %v6879 = vld [vmem:[%s6671 + $0x20] sm:$0xff]
      %v6880 = vld [vmem:[%s6671 + $0x30] sm:$0xff]
      %v6881 = vld [vmem:[%s6671 + $0x40] sm:$0xff]
      %v6882 = vld [vmem:[%s6671 + $0x50] sm:$0xff]
      %v6883 = vld [vmem:[%s6671 + $0x60] sm:$0xff]
      %v6884 = vld [vmem:[%s6671 + $0x70] sm:$0xff]
      %v6885 = vpack.c.bf16 %v6878, %v6877
      %v6886 = vpack.c.bf16 %v6880, %v6879
      %v6887 = vpack.c.bf16 %v6882, %v6881
      %v6888 = vpack.c.bf16 %v6884, %v6883
      %v6893 = vunpack.c.l.b16 %v6885
      %v6894 = vunpack.c.h.b16 %v6885
      %v6895 = vunpack.c.l.b16 %v6886
      %v6896 = vunpack.c.h.b16 %v6886
      %v6897 = vunpack.c.l.b16 %v6887
      %v6898 = vunpack.c.h.b16 %v6887
      %v6899 = vunpack.c.l.b16 %v6888
      %v6900 = vunpack.c.h.b16 %v6888
      %v6901 = vpack.c.b16 %v6893, %v6893
      %v6902 = vpack.c.b16 %v6894, %v6894
      %v6903 = vpack.c.b16 %v6895, %v6895
      %v6904 = vpack.c.b16 %v6896, %v6896
      %v6905 = vpack.c.b16 %v6897, %v6897
      %v6906 = vpack.c.b16 %v6898, %v6898
      %v6907 = vpack.c.b16 %v6899, %v6899
      %v6908 = vpack.c.b16 %v6900, %v6900
      %6909 = vrot.lane.b32.xlu0 %v6901, 16
      %v6910 = vpop.permute.xlu0 %6909
      %6911 = vrot.lane.b32.xlu0 %v6902, 16
      %v6912 = vpop.permute.xlu0 %6911
      %6913 = vrot.lane.b32.xlu0 %v6903, 16
      %v6914 = vpop.permute.xlu0 %6913
      %6915 = vrot.lane.b32.xlu0 %v6904, 16
      %v6916 = vpop.permute.xlu0 %6915
      %6917 = vrot.lane.b32.xlu0 %v6905, 16
      %v6918 = vpop.permute.xlu0 %6917
      %6919 = vrot.lane.b32.xlu0 %v6906, 16
      %v6920 = vpop.permute.xlu0 %6919
      %6921 = vrot.lane.b32.xlu0 %v6907, 16
      %v6922 = vpop.permute.xlu0 %6921
      %6923 = vrot.lane.b32.xlu0 %v6908, 16
      %v6924 = vpop.permute.xlu0 %6923
      %vm6933 = vcmask 519296
      %6934 = vst.msk [vmem:[#allocation7 + $0x4] sm:$0xf] %vm6933, %v6910
      %6935 = vst.msk [vmem:[#allocation7 + $0x14] sm:$0xf] %vm6933, %v6912
      %6936 = vst.msk [vmem:[#allocation7 + $0x24] sm:$0xf] %vm6933, %v6914
      %6937 = vst.msk [vmem:[#allocation7 + $0x34] sm:$0xf] %vm6933, %v6916
      %6938 = vst.msk [vmem:[#allocation7 + $0x44] sm:$0xf] %vm6933, %v6918
      %6939 = vst.msk [vmem:[#allocation7 + $0x54] sm:$0xf] %vm6933, %v6920
      %6940 = vst.msk [vmem:[#allocation7 + $0x64] sm:$0xf] %vm6933, %v6922
      %6941 = vst.msk [vmem:[#allocation7 + $0x74] sm:$0xf] %vm6933, %v6924
      %v6942 = vld [vmem:[%s6671 + $0x1] sm:$0xff]
      %v6943 = vld [vmem:[%s6671 + $0x11] sm:$0xff]
      %v6944 = vld [vmem:[%s6671 + $0x21] sm:$0xff]
      %v6945 = vld [vmem:[%s6671 + $0x31] sm:$0xff]
      %v6946 = vld [vmem:[%s6671 + $0x41] sm:$0xff]
      %v6947 = vld [vmem:[%s6671 + $0x51] sm:$0xff]
      %v6948 = vld [vmem:[%s6671 + $0x61] sm:$0xff]
      %v6949 = vld [vmem:[%s6671 + $0x71] sm:$0xff]
      %v6950 = vpack.c.bf16 %v6943, %v6942
      %v6951 = vpack.c.bf16 %v6945, %v6944
      %v6952 = vpack.c.bf16 %v6947, %v6946
      %v6953 = vpack.c.bf16 %v6949, %v6948
      %v6958 = vunpack.c.l.b16 %v6950
      %v6959 = vunpack.c.h.b16 %v6950
      %v6960 = vunpack.c.l.b16 %v6951
      %v6961 = vunpack.c.h.b16 %v6951
      %v6962 = vunpack.c.l.b16 %v6952
      %v6963 = vunpack.c.h.b16 %v6952
      %v6964 = vunpack.c.l.b16 %v6953
      %v6965 = vunpack.c.h.b16 %v6953
      %v6966 = vpack.c.b16 %v6958, %v6958
      %v6967 = vpack.c.b16 %v6959, %v6959
      %v6968 = vpack.c.b16 %v6960, %v6960
      %v6969 = vpack.c.b16 %v6961, %v6961
      %v6970 = vpack.c.b16 %v6962, %v6962
      %v6971 = vpack.c.b16 %v6963, %v6963
      %v6972 = vpack.c.b16 %v6964, %v6964
      %v6973 = vpack.c.b16 %v6965, %v6965
      %6974 = vrot.lane.b32.xlu0 %v6966, 64
      %v6975 = vpop.permute.xlu0 %6974
      %6976 = vrot.lane.b32.xlu0 %v6967, 64
      %v6977 = vpop.permute.xlu0 %6976
      %6978 = vrot.lane.b32.xlu0 %v6968, 64
      %v6979 = vpop.permute.xlu0 %6978
      %6980 = vrot.lane.b32.xlu0 %v6969, 64
      %v6981 = vpop.permute.xlu0 %6980
      %6982 = vrot.lane.b32.xlu0 %v6970, 64
      %v6983 = vpop.permute.xlu0 %6982
      %6984 = vrot.lane.b32.xlu0 %v6971, 64
      %v6985 = vpop.permute.xlu0 %6984
      %6986 = vrot.lane.b32.xlu0 %v6972, 64
      %v6987 = vpop.permute.xlu0 %6986
      %6988 = vrot.lane.b32.xlu0 %v6973, 64
      %v6989 = vpop.permute.xlu0 %6988
      %vm6998 = vcmask 912896
      %6999 = vst.msk [vmem:[#allocation7 + $0x4] sm:$0xf] %vm6998, %v6975
      %7000 = vst.msk [vmem:[#allocation7 + $0x14] sm:$0xf] %vm6998, %v6977
      %7001 = vst.msk [vmem:[#allocation7 + $0x24] sm:$0xf] %vm6998, %v6979
      %7002 = vst.msk [vmem:[#allocation7 + $0x34] sm:$0xf] %vm6998, %v6981
      %7003 = vst.msk [vmem:[#allocation7 + $0x44] sm:$0xf] %vm6998, %v6983
      %7004 = vst.msk [vmem:[#allocation7 + $0x54] sm:$0xf] %vm6998, %v6985
      %7005 = vst.msk [vmem:[#allocation7 + $0x64] sm:$0xf] %vm6998, %v6987
      %7006 = vst.msk [vmem:[#allocation7 + $0x74] sm:$0xf] %vm6998, %v6989
      %v7007 = vld [vmem:[%s6671 + $0x2] sm:$0xff]
      %v7008 = vld [vmem:[%s6671 + $0x12] sm:$0xff]
      %v7009 = vld [vmem:[%s6671 + $0x22] sm:$0xff]
      %v7010 = vld [vmem:[%s6671 + $0x32] sm:$0xff]
      %v7011 = vld [vmem:[%s6671 + $0x42] sm:$0xff]
      %v7012 = vld [vmem:[%s6671 + $0x52] sm:$0xff]
      %v7013 = vld [vmem:[%s6671 + $0x62] sm:$0xff]
      %v7014 = vld [vmem:[%s6671 + $0x72] sm:$0xff]
      %v7015 = vpack.c.bf16 %v7008, %v7007
      %v7016 = vpack.c.bf16 %v7010, %v7009
      %v7017 = vpack.c.bf16 %v7012, %v7011
      %v7018 = vpack.c.bf16 %v7014, %v7013
      %v7023 = vunpack.c.l.b16 %v7015
      %v7024 = vunpack.c.h.b16 %v7015
      %v7025 = vunpack.c.l.b16 %v7016
      %v7026 = vunpack.c.h.b16 %v7016
      %v7027 = vunpack.c.l.b16 %v7017
      %v7028 = vunpack.c.h.b16 %v7017
      %v7029 = vunpack.c.l.b16 %v7018
      %v7030 = vunpack.c.h.b16 %v7018
      %v7031 = vpack.c.b16 %v7023, %v7023
      %v7032 = vpack.c.b16 %v7024, %v7024
      %v7033 = vpack.c.b16 %v7025, %v7025
      %v7034 = vpack.c.b16 %v7026, %v7026
      %v7035 = vpack.c.b16 %v7027, %v7027
      %v7036 = vpack.c.b16 %v7028, %v7028
      %v7037 = vpack.c.b16 %v7029, %v7029
      %v7038 = vpack.c.b16 %v7030, %v7030
      %7039 = vrot.lane.b32.xlu0 %v7031, 112
      %v7040 = vpop.permute.xlu0 %7039
      %7041 = vrot.lane.b32.xlu0 %v7032, 112
      %v7042 = vpop.permute.xlu0 %7041
      %7043 = vrot.lane.b32.xlu0 %v7033, 112
      %v7044 = vpop.permute.xlu0 %7043
      %7045 = vrot.lane.b32.xlu0 %v7034, 112
      %v7046 = vpop.permute.xlu0 %7045
      %7047 = vrot.lane.b32.xlu0 %v7035, 112
      %v7048 = vpop.permute.xlu0 %7047
      %7049 = vrot.lane.b32.xlu0 %v7036, 112
      %v7050 = vpop.permute.xlu0 %7049
      %7051 = vrot.lane.b32.xlu0 %v7037, 112
      %v7052 = vpop.permute.xlu0 %7051
      %7053 = vrot.lane.b32.xlu0 %v7038, 112
      %v7054 = vpop.permute.xlu0 %7053
      %v7055 = vrot.slane %v7040, 4
      %v7056 = vrot.slane %v7042, 4
      %v7057 = vrot.slane %v7044, 4
      %v7058 = vrot.slane %v7046, 4
      %v7059 = vrot.slane %v7048, 4
      %v7060 = vrot.slane %v7050, 4
      %v7061 = vrot.slane %v7052, 4
      %v7062 = vrot.slane %v7054, 4
      %vm7063 = vcmask 916480
      %v7064 = vsel %vm7063, %v7055, %v7040
      %v7065 = vsel %vm7063, %v7056, %v7042
      %v7066 = vsel %vm7063, %v7057, %v7044
      %v7067 = vsel %vm7063, %v7058, %v7046
      %v7068 = vsel %vm7063, %v7059, %v7048
      %v7069 = vsel %vm7063, %v7060, %v7050
      %v7070 = vsel %vm7063, %v7061, %v7052
      %v7071 = vsel %vm7063, %v7062, %v7054
      %vm7080 = vcmask 1044352
      %vm7081 = vcmask 261124
      %vm7082 = vmor %vm7081, %vm7080
      %7083 = vst.msk [vmem:[#allocation7 + $0x4] sm:$0xff] %vm7082, %v7064
      %7084 = vst.msk [vmem:[#allocation7 + $0x14] sm:$0xff] %vm7082, %v7065
      %7085 = vst.msk [vmem:[#allocation7 + $0x24] sm:$0xff] %vm7082, %v7066
      %7086 = vst.msk [vmem:[#allocation7 + $0x34] sm:$0xff] %vm7082, %v7067
      %7087 = vst.msk [vmem:[#allocation7 + $0x44] sm:$0xff] %vm7082, %v7068
      %7088 = vst.msk [vmem:[#allocation7 + $0x54] sm:$0xff] %vm7082, %v7069
      %7089 = vst.msk [vmem:[#allocation7 + $0x64] sm:$0xff] %vm7082, %v7070
      %7090 = vst.msk [vmem:[#allocation7 + $0x74] sm:$0xff] %vm7082, %v7071
      %s7091 = scalar_lea.vmem [#allocation6], 32
      %v7092 = vld [vmem:[%s7091] sm:$0xff]
      %v7093 = vld [vmem:[%s7091 + $0x10] sm:$0xff]
      %v7094 = vld [vmem:[%s7091 + $0x20] sm:$0xff]
      %v7095 = vld [vmem:[%s7091 + $0x30] sm:$0xff]
      %v7096 = vld [vmem:[%s7091 + $0x40] sm:$0xff]
      %v7097 = vld [vmem:[%s7091 + $0x50] sm:$0xff]
      %v7098 = vld [vmem:[%s7091 + $0x60] sm:$0xff]
      %v7099 = vld [vmem:[%s7091 + $0x70] sm:$0xff]
      %v7100 = vpack.c.bf16 %v7093, %v7092
      %v7101 = vpack.c.bf16 %v7095, %v7094
      %v7102 = vpack.c.bf16 %v7097, %v7096
      %v7103 = vpack.c.bf16 %v7099, %v7098
      %v7108 = vunpack.c.l.b16 %v7100
      %v7109 = vunpack.c.h.b16 %v7100
      %v7110 = vunpack.c.l.b16 %v7101
      %v7111 = vunpack.c.h.b16 %v7101
      %v7112 = vunpack.c.l.b16 %v7102
      %v7113 = vunpack.c.h.b16 %v7102
      %v7114 = vunpack.c.l.b16 %v7103
      %v7115 = vunpack.c.h.b16 %v7103
      %v7116 = vpack.c.b16 %v7108, %v7108
      %v7117 = vpack.c.b16 %v7109, %v7109
      %v7118 = vpack.c.b16 %v7110, %v7110
      %v7119 = vpack.c.b16 %v7111, %v7111
      %v7120 = vpack.c.b16 %v7112, %v7112
      %v7121 = vpack.c.b16 %v7113, %v7113
      %v7122 = vpack.c.b16 %v7114, %v7114
      %v7123 = vpack.c.b16 %v7115, %v7115
      %7124 = vrot.lane.b32.xlu0 %v7116, 32
      %v7125 = vpop.permute.xlu0 %7124
      %7126 = vrot.lane.b32.xlu0 %v7117, 32
      %v7127 = vpop.permute.xlu0 %7126
      %7128 = vrot.lane.b32.xlu0 %v7118, 32
      %v7129 = vpop.permute.xlu0 %7128
      %7130 = vrot.lane.b32.xlu0 %v7119, 32
      %v7131 = vpop.permute.xlu0 %7130
      %7132 = vrot.lane.b32.xlu0 %v7120, 32
      %v7133 = vpop.permute.xlu0 %7132
      %7134 = vrot.lane.b32.xlu0 %v7121, 32
      %v7135 = vpop.permute.xlu0 %7134
      %7136 = vrot.lane.b32.xlu0 %v7122, 32
      %v7137 = vpop.permute.xlu0 %7136
      %7138 = vrot.lane.b32.xlu0 %v7123, 32
      %v7139 = vpop.permute.xlu0 %7138
      %vm7148 = vcmask 650496
      %7149 = vst.msk [vmem:[#allocation7 + $0x8] sm:$0xf] %vm7148, %v7125
      %7150 = vst.msk [vmem:[#allocation7 + $0x18] sm:$0xf] %vm7148, %v7127
      %7151 = vst.msk [vmem:[#allocation7 + $0x28] sm:$0xf] %vm7148, %v7129
      %7152 = vst.msk [vmem:[#allocation7 + $0x38] sm:$0xf] %vm7148, %v7131
      %7153 = vst.msk [vmem:[#allocation7 + $0x48] sm:$0xf] %vm7148, %v7133
      %7154 = vst.msk [vmem:[#allocation7 + $0x58] sm:$0xf] %vm7148, %v7135
      %7155 = vst.msk [vmem:[#allocation7 + $0x68] sm:$0xf] %vm7148, %v7137
      %7156 = vst.msk [vmem:[#allocation7 + $0x78] sm:$0xf] %vm7148, %v7139
      %v7157 = vld [vmem:[%s7091 + $0x1] sm:$0xff]
      %v7158 = vld [vmem:[%s7091 + $0x11] sm:$0xff]
      %v7159 = vld [vmem:[%s7091 + $0x21] sm:$0xff]
      %v7160 = vld [vmem:[%s7091 + $0x31] sm:$0xff]
      %v7161 = vld [vmem:[%s7091 + $0x41] sm:$0xff]
      %v7162 = vld [vmem:[%s7091 + $0x51] sm:$0xff]
      %v7163 = vld [vmem:[%s7091 + $0x61] sm:$0xff]
      %v7164 = vld [vmem:[%s7091 + $0x71] sm:$0xff]
      %v7165 = vpack.c.bf16 %v7158, %v7157
      %v7166 = vpack.c.bf16 %v7160, %v7159
      %v7167 = vpack.c.bf16 %v7162, %v7161
      %v7168 = vpack.c.bf16 %v7164, %v7163
      %v7173 = vunpack.c.l.b16 %v7165
      %v7174 = vunpack.c.h.b16 %v7165
      %v7175 = vunpack.c.l.b16 %v7166
      %v7176 = vunpack.c.h.b16 %v7166
      %v7177 = vunpack.c.l.b16 %v7167
      %v7178 = vunpack.c.h.b16 %v7167
      %v7179 = vunpack.c.l.b16 %v7168
      %v7180 = vunpack.c.h.b16 %v7168
      %v7181 = vpack.c.b16 %v7173, %v7173
      %v7182 = vpack.c.b16 %v7174, %v7174
      %v7183 = vpack.c.b16 %v7175, %v7175
      %v7184 = vpack.c.b16 %v7176, %v7176
      %v7185 = vpack.c.b16 %v7177, %v7177
      %v7186 = vpack.c.b16 %v7178, %v7178
      %v7187 = vpack.c.b16 %v7179, %v7179
      %v7188 = vpack.c.b16 %v7180, %v7180
      %7189 = vrot.lane.b32.xlu0 %v7181, 80
      %v7190 = vpop.permute.xlu0 %7189
      %7191 = vrot.lane.b32.xlu0 %v7182, 80
      %v7192 = vpop.permute.xlu0 %7191
      %7193 = vrot.lane.b32.xlu0 %v7183, 80
      %v7194 = vpop.permute.xlu0 %7193
      %7195 = vrot.lane.b32.xlu0 %v7184, 80
      %v7196 = vpop.permute.xlu0 %7195
      %7197 = vrot.lane.b32.xlu0 %v7185, 80
      %v7198 = vpop.permute.xlu0 %7197
      %7199 = vrot.lane.b32.xlu0 %v7186, 80
      %v7200 = vpop.permute.xlu0 %7199
      %7201 = vrot.lane.b32.xlu0 %v7187, 80
      %v7202 = vpop.permute.xlu0 %7201
      %7203 = vrot.lane.b32.xlu0 %v7188, 80
      %v7204 = vpop.permute.xlu0 %7203
      %vm7213 = vcmask 1044096
      %7214 = vst.msk [vmem:[#allocation7 + $0x8] sm:$0xf] %vm7213, %v7190
      %7215 = vst.msk [vmem:[#allocation7 + $0x18] sm:$0xf] %vm7213, %v7192
      %7216 = vst.msk [vmem:[#allocation7 + $0x28] sm:$0xf] %vm7213, %v7194
      %7217 = vst.msk [vmem:[#allocation7 + $0x38] sm:$0xf] %vm7213, %v7196
      %7218 = vst.msk [vmem:[#allocation7 + $0x48] sm:$0xf] %vm7213, %v7198
      %7219 = vst.msk [vmem:[#allocation7 + $0x58] sm:$0xf] %vm7213, %v7200
      %7220 = vst.msk [vmem:[#allocation7 + $0x68] sm:$0xf] %vm7213, %v7202
      %7221 = vst.msk [vmem:[#allocation7 + $0x78] sm:$0xf] %vm7213, %v7204
      %v7222 = vld [vmem:[%s7091 + $0x2] sm:$0xff]
      %v7223 = vld [vmem:[%s7091 + $0x12] sm:$0xff]
      %v7224 = vld [vmem:[%s7091 + $0x22] sm:$0xff]
      %v7225 = vld [vmem:[%s7091 + $0x32] sm:$0xff]
      %v7226 = vld [vmem:[%s7091 + $0x42] sm:$0xff]
      %v7227 = vld [vmem:[%s7091 + $0x52] sm:$0xff]
      %v7228 = vld [vmem:[%s7091 + $0x62] sm:$0xff]
      %v7229 = vld [vmem:[%s7091 + $0x72] sm:$0xff]
      %v7230 = vpack.c.bf16 %v7223, %v7222
      %v7231 = vpack.c.bf16 %v7225, %v7224
      %v7232 = vpack.c.bf16 %v7227, %v7226
      %v7233 = vpack.c.bf16 %v7229, %v7228
      %v7238 = vunpack.c.l.b16 %v7230
      %v7239 = vunpack.c.h.b16 %v7230
      %v7240 = vunpack.c.l.b16 %v7231
      %v7241 = vunpack.c.h.b16 %v7231
      %v7242 = vunpack.c.l.b16 %v7232
      %v7243 = vunpack.c.h.b16 %v7232
      %v7244 = vunpack.c.l.b16 %v7233
      %v7245 = vunpack.c.h.b16 %v7233
      %v7246 = vpack.c.b16 %v7238, %v7238
      %v7247 = vpack.c.b16 %v7239, %v7239
      %v7248 = vpack.c.b16 %v7240, %v7240
      %v7249 = vpack.c.b16 %v7241, %v7241
      %v7250 = vpack.c.b16 %v7242, %v7242
      %v7251 = vpack.c.b16 %v7243, %v7243
      %v7252 = vpack.c.b16 %v7244, %v7244
      %v7253 = vpack.c.b16 %v7245, %v7245
      %7262 = vst.msk [vmem:[#allocation7 + $0xc] sm:$0xf] %vm6720, %v7246
      %7263 = vst.msk [vmem:[#allocation7 + $0x1c] sm:$0xf] %vm6720, %v7247
      %7264 = vst.msk [vmem:[#allocation7 + $0x2c] sm:$0xf] %vm6720, %v7248
      %7265 = vst.msk [vmem:[#allocation7 + $0x3c] sm:$0xf] %vm6720, %v7249
      %7266 = vst.msk [vmem:[#allocation7 + $0x4c] sm:$0xf] %vm6720, %v7250
      %7267 = vst.msk [vmem:[#allocation7 + $0x5c] sm:$0xf] %vm6720, %v7251
      %7268 = vst.msk [vmem:[#allocation7 + $0x6c] sm:$0xf] %vm6720, %v7252
      %7269 = vst.msk [vmem:[#allocation7 + $0x7c] sm:$0xf] %vm6720, %v7253
      %v7270 = vld [vmem:[#allocation7] sm:$0xff]
      %v7271 = vld [vmem:[#allocation7 + $0x8] sm:$0xff]
      %v7272 = vld [vmem:[#allocation7 + $0x10] sm:$0xff]
      %v7273 = vld [vmem:[#allocation7 + $0x18] sm:$0xff]
      %v7274 = vld [vmem:[#allocation7 + $0x20] sm:$0xff]
      %v7275 = vld [vmem:[#allocation7 + $0x28] sm:$0xff]
      %v7276 = vld [vmem:[#allocation7 + $0x30] sm:$0xff]
      %v7277 = vld [vmem:[#allocation7 + $0x38] sm:$0xff]
      %v7278 = vld [vmem:[#allocation7 + $0x40] sm:$0xff]
      %v7279 = vld [vmem:[#allocation7 + $0x48] sm:$0xff]
      %v7280 = vld [vmem:[#allocation7 + $0x50] sm:$0xff]
      %v7281 = vld [vmem:[#allocation7 + $0x58] sm:$0xff]
      %v7282 = vld [vmem:[#allocation7 + $0x60] sm:$0xff]
      %v7283 = vld [vmem:[#allocation7 + $0x68] sm:$0xff]
      %v7284 = vld [vmem:[#allocation7 + $0x70] sm:$0xff]
      %v7285 = vld [vmem:[#allocation7 + $0x78] sm:$0xff]
      %v7286 = vld [vmem:[%s5] sm:$0xf]
      %v7287 = vld [vmem:[%s5 + $0x4] sm:$0xf]
      %v7288 = vld [vmem:[%s5 + $0x8] sm:$0xf]
      %v7289 = vld [vmem:[%s5 + $0xc] sm:$0xf]
      %v7290 = vld [vmem:[%s5 + $0x10] sm:$0xf]
      %v7291 = vld [vmem:[%s5 + $0x14] sm:$0xf]
      %v7292 = vld [vmem:[%s5 + $0x18] sm:$0xf]
      %v7293 = vld [vmem:[%s5 + $0x1c] sm:$0xf]
      %v7294 = vld [vmem:[%s5 + $0x20] sm:$0xf]
      %v7295 = vld [vmem:[%s5 + $0x24] sm:$0xf]
      %v7296 = vld [vmem:[%s5 + $0x28] sm:$0xf]
      %v7297 = vld [vmem:[%s5 + $0x2c] sm:$0xf]
      %v7298 = vld [vmem:[%s5 + $0x30] sm:$0xf]
      %v7299 = vld [vmem:[%s5 + $0x34] sm:$0xf]
      %v7300 = vld [vmem:[%s5 + $0x38] sm:$0xf]
      %v7301 = vld [vmem:[%s5 + $0x3c] sm:$0xf]
      %v7302 = vld [vmem:[%s5 + $0x40] sm:$0xf]
      %v7303 = vld [vmem:[%s5 + $0x44] sm:$0xf]
      %v7304 = vld [vmem:[%s5 + $0x48] sm:$0xf]
      %v7305 = vld [vmem:[%s5 + $0x4c] sm:$0xf]
      %v7306 = vld [vmem:[%s5 + $0x50] sm:$0xf]
      %v7307 = vld [vmem:[%s5 + $0x54] sm:$0xf]
      %v7308 = vld [vmem:[%s5 + $0x58] sm:$0xf]
      %v7309 = vld [vmem:[%s5 + $0x5c] sm:$0xf]
      %v7310 = vld [vmem:[%s5 + $0x60] sm:$0xf]
      %v7311 = vld [vmem:[%s5 + $0x64] sm:$0xf]
      %v7312 = vld [vmem:[%s5 + $0x68] sm:$0xf]
      %v7313 = vld [vmem:[%s5 + $0x6c] sm:$0xf]
      %v7314 = vld [vmem:[%s5 + $0x70] sm:$0xf]
      %v7315 = vld [vmem:[%s5 + $0x74] sm:$0xf]
      %v7316 = vld [vmem:[%s5 + $0x78] sm:$0xf]
      %v7317 = vld [vmem:[%s5 + $0x7c] sm:$0xf]
      %v7318 = vld [vmem:[%s5 + $0x80] sm:$0xf]
      %v7319 = vld [vmem:[%s5 + $0x84] sm:$0xf]
      %v7320 = vld [vmem:[%s5 + $0x88] sm:$0xf]
      %v7321 = vld [vmem:[%s5 + $0x8c] sm:$0xf]
      %v7322 = vld [vmem:[%s5 + $0x90] sm:$0xf]
      %v7323 = vld [vmem:[%s5 + $0x94] sm:$0xf]
      %v7324 = vld [vmem:[%s5 + $0x98] sm:$0xf]
      %v7325 = vld [vmem:[%s5 + $0x9c] sm:$0xf]
      %v7326 = vld [vmem:[%s5 + $0xa0] sm:$0xf]
      %v7327 = vld [vmem:[%s5 + $0xa4] sm:$0xf]
      %v7328 = vld [vmem:[%s5 + $0xa8] sm:$0xf]
      %v7329 = vld [vmem:[%s5 + $0xac] sm:$0xf]
      %v7330 = vld [vmem:[%s5 + $0xb0] sm:$0xf]
      %v7331 = vld [vmem:[%s5 + $0xb4] sm:$0xf]
      %v7332 = vld [vmem:[%s5 + $0xb8] sm:$0xf]
      %v7333 = vld [vmem:[%s5 + $0xbc] sm:$0xf]
      %v7334 = vld [vmem:[%s5 + $0xc0] sm:$0xf]
      %v7335 = vld [vmem:[%s5 + $0xc4] sm:$0xf]
      %v7336 = vld [vmem:[%s5 + $0xc8] sm:$0xf]
      %v7337 = vld [vmem:[%s5 + $0xcc] sm:$0xf]
      %v7338 = vld [vmem:[%s5 + $0xd0] sm:$0xf]
      %v7339 = vld [vmem:[%s5 + $0xd4] sm:$0xf]
      %v7340 = vld [vmem:[%s14] sm:$0x1]
      %v7342 = vlaneseq
      %v7343 = vshrl.u32 %v7342, 7
      %v7344 = vsub.s32 0, %v7343
      %v7345 = vrot.slane %v7340, %v7344
      %v7363 = vunpack.c.l.b16 %v7270
      %v7364 = vunpack.c.h.b16 %v7270
      %v7365 = vunpack.c.l.b16 %v7271
      %v7366 = vunpack.c.h.b16 %v7271
      %v7367 = vunpack.c.l.b16 %v7272
      %v7368 = vunpack.c.h.b16 %v7272
      %v7369 = vunpack.c.l.b16 %v7273
      %v7370 = vunpack.c.h.b16 %v7273
      %v7371 = vunpack.c.l.b16 %v7274
      %v7372 = vunpack.c.h.b16 %v7274
      %v7373 = vunpack.c.l.b16 %v7275
      %v7374 = vunpack.c.h.b16 %v7275
      %v7375 = vunpack.c.l.b16 %v7276
      %v7376 = vunpack.c.h.b16 %v7276
      %v7377 = vunpack.c.l.b16 %v7277
      %v7378 = vunpack.c.h.b16 %v7277
      %v7379 = vunpack.c.l.b16 %v7278
      %v7380 = vunpack.c.h.b16 %v7278
      %v7381 = vunpack.c.l.b16 %v7279
      %v7382 = vunpack.c.h.b16 %v7279
      %v7383 = vunpack.c.l.b16 %v7280
      %v7384 = vunpack.c.h.b16 %v7280
      %v7385 = vunpack.c.l.b16 %v7281
      %v7386 = vunpack.c.h.b16 %v7281
      %v7387 = vunpack.c.l.b16 %v7282
      %v7388 = vunpack.c.h.b16 %v7282
      %v7389 = vunpack.c.l.b16 %v7283
      %v7390 = vunpack.c.h.b16 %v7283
      %v7391 = vunpack.c.l.b16 %v7284
      %v7392 = vunpack.c.h.b16 %v7284
      %v7393 = vunpack.c.l.b16 %v7285
      %v7394 = vunpack.c.h.b16 %v7285
      %v7395 = vpack.c.b16 %v7367, %v7363
      %v7396 = vpack.c.b16 %v7368, %v7364
      %v7397 = vpack.c.b16 %v7369, %v7365
      %v7398 = vpack.c.b16 %v7370, %v7366
      %v7399 = vpack.c.b16 %v7375, %v7371
      %v7400 = vpack.c.b16 %v7376, %v7372
      %v7401 = vpack.c.b16 %v7377, %v7373
      %v7402 = vpack.c.b16 %v7378, %v7374
      %v7403 = vpack.c.b16 %v7383, %v7379
      %v7404 = vpack.c.b16 %v7384, %v7380
      %v7405 = vpack.c.b16 %v7385, %v7381
      %v7406 = vpack.c.b16 %v7386, %v7382
      %v7407 = vpack.c.b16 %v7391, %v7387
      %v7408 = vpack.c.b16 %v7392, %v7388
      %v7409 = vpack.c.b16 %v7393, %v7389
      %v7410 = vpack.c.b16 %v7394, %v7390
      %v7477 = vunpack.c.l.b16 %v7286
      %v7478 = vunpack.c.l.b16 %v7287
      %v7479 = vunpack.c.l.b16 %v7288
      %v7480 = vunpack.c.l.b16 %v7289
      %v7481 = vunpack.c.l.b16 %v7290
      %v7482 = vunpack.c.l.b16 %v7291
      %v7483 = vunpack.c.l.b16 %v7292
      %v7484 = vunpack.c.l.b16 %v7293
      %v7485 = vunpack.c.l.b16 %v7294
      %v7486 = vunpack.c.l.b16 %v7295
      %v7487 = vunpack.c.l.b16 %v7296
      %v7488 = vunpack.c.l.b16 %v7297
      %v7489 = vunpack.c.l.b16 %v7298
      %v7490 = vunpack.c.l.b16 %v7299
      %v7491 = vunpack.c.l.b16 %v7300
      %v7492 = vunpack.c.l.b16 %v7301
      %v7493 = vunpack.c.l.b16 %v7302
      %v7494 = vunpack.c.l.b16 %v7303
      %v7495 = vunpack.c.l.b16 %v7304
      %v7496 = vunpack.c.l.b16 %v7305
      %v7497 = vunpack.c.l.b16 %v7306
      %v7498 = vunpack.c.l.b16 %v7307
      %v7499 = vunpack.c.l.b16 %v7308
      %v7500 = vunpack.c.l.b16 %v7309
      %v7501 = vunpack.c.l.b16 %v7310
      %v7502 = vunpack.c.l.b16 %v7311
      %v7503 = vunpack.c.l.b16 %v7312
      %v7504 = vunpack.c.l.b16 %v7313
      %v7505 = vunpack.c.l.b16 %v7314
      %v7506 = vunpack.c.l.b16 %v7315
      %v7507 = vunpack.c.l.b16 %v7316
      %v7508 = vunpack.c.l.b16 %v7317
      %v7509 = vunpack.c.l.b16 %v7318
      %v7510 = vunpack.c.l.b16 %v7319
      %v7511 = vunpack.c.l.b16 %v7320
      %v7512 = vunpack.c.l.b16 %v7321
      %v7513 = vunpack.c.l.b16 %v7322
      %v7514 = vunpack.c.l.b16 %v7323
      %v7515 = vunpack.c.l.b16 %v7324
      %v7516 = vunpack.c.l.b16 %v7325
      %v7517 = vunpack.c.l.b16 %v7326
      %v7518 = vunpack.c.l.b16 %v7327
      %v7519 = vunpack.c.l.b16 %v7328
      %v7520 = vunpack.c.l.b16 %v7329
      %v7521 = vunpack.c.l.b16 %v7330
      %v7522 = vunpack.c.l.b16 %v7331
      %v7523 = vunpack.c.l.b16 %v7332
      %v7524 = vunpack.c.l.b16 %v7333
      %v7525 = vunpack.c.l.b16 %v7334
      %v7526 = vunpack.c.l.b16 %v7335
      %v7527 = vunpack.c.l.b16 %v7336
      %v7528 = vunpack.c.l.b16 %v7337
      %v7529 = vunpack.c.l.b16 %v7338
      %v7530 = vunpack.c.l.b16 %v7339
      %v7531 = vpack.c.b16 %v7478, %v7477
      %v7532 = vpack.c.b16 %v7480, %v7479
      %v7533 = vpack.c.b16 %v7482, %v7481
      %v7534 = vpack.c.b16 %v7484, %v7483
      %v7535 = vpack.c.b16 %v7486, %v7485
      %v7536 = vpack.c.b16 %v7488, %v7487
      %v7537 = vpack.c.b16 %v7490, %v7489
      %v7538 = vpack.c.b16 %v7492, %v7491
      %v7539 = vpack.c.b16 %v7494, %v7493
      %v7540 = vpack.c.b16 %v7496, %v7495
      %v7541 = vpack.c.b16 %v7498, %v7497
      %v7542 = vpack.c.b16 %v7500, %v7499
      %v7543 = vpack.c.b16 %v7502, %v7501
      %v7544 = vpack.c.b16 %v7504, %v7503
      %v7545 = vpack.c.b16 %v7506, %v7505
      %v7546 = vpack.c.b16 %v7508, %v7507
      %v7547 = vpack.c.b16 %v7510, %v7509
      %v7548 = vpack.c.b16 %v7512, %v7511
      %v7549 = vpack.c.b16 %v7514, %v7513
      %v7550 = vpack.c.b16 %v7516, %v7515
      %v7551 = vpack.c.b16 %v7518, %v7517
      %v7552 = vpack.c.b16 %v7520, %v7519
      %v7553 = vpack.c.b16 %v7522, %v7521
      %v7554 = vpack.c.b16 %v7524, %v7523
      %v7555 = vpack.c.b16 %v7526, %v7525
      %v7556 = vpack.c.b16 %v7528, %v7527
      %v7557 = vpack.c.b16 %v7530, %v7529
      %v7586 = vsel %vm6402, %v7398, 0
      %v7589 = vsel %vm6402, %v7402, 0
      %v7592 = vsel %vm6402, %v7406, 0
      %v7595 = vsel %vm6402, %v7410, 0
      %7597 = vmatprep.subr.bf16.mxu0 0
      %7598 = vmatpush1.bf16.msra.mxu0 %v7538
      %7599 = vmatprep.subr.bf16.mxu0 0
      %7600 = vmatpush1.bf16.msra.mxu0 %v7537
      %7601 = vmatprep.subr.bf16.mxu0 0
      %7602 = vmatpush1.bf16.msra.mxu0 %v7536
      %7603 = vmatprep.subr.bf16.mxu0 0
      %7604 = vmatpush1.bf16.msra.mxu0 %v7535
      %7605 = vmatprep.subr.bf16.mxu0 0
      %7606 = vmatpush1.bf16.msra.mxu0 %v7534
      %7607 = vmatprep.subr.bf16.mxu0 0
      %7608 = vmatpush1.bf16.msra.mxu0 %v7533
      %7609 = vmatprep.subr.bf16.mxu0 0
      %7610 = vmatpush1.bf16.msra.mxu0 %v7532
      %7611 = vmatprep.subr.bf16.mxu0 0
      %7612 = vmatpush1.bf16.msra.mxu0 %v7531
      %7613 = vmatprep.subr.bf16.mxu0 0
      %7614 = vmatpush2.bf16.msra.mxu0 %v7546
      %7615 = vmatprep.subr.bf16.mxu0 0
      %7616 = vmatpush2.bf16.msra.mxu0 %v7545
      %7617 = vmatprep.subr.bf16.mxu0 0
      %7618 = vmatpush2.bf16.msra.mxu0 %v7544
      %7619 = vmatprep.subr.bf16.mxu0 0
      %7620 = vmatpush2.bf16.msra.mxu0 %v7543
      %7621 = vmatprep.subr.bf16.mxu0 0
      %7622 = vmatpush2.bf16.msra.mxu0 %v7542
      %7623 = vmatprep.subr.bf16.mxu0 0
      %7624 = vmatpush2.bf16.msra.mxu0 %v7541
      %7625 = vmatprep.subr.bf16.mxu0 0
      %7626 = vmatpush2.bf16.msra.mxu0 %v7540
      %7627 = vmatprep.subr.bf16.mxu0 0
      %7628 = vmatpush2.bf16.msra.mxu0 %v7539
      %7629 = vmatprep.mubr.bf16.mxu0 %v7396
      %7630 = vmatmul.mubr.bf16.gmra.mxu0 %v7395
      %v7631 = vpop.f32.mrf.mxu0
      %v7632 = vadd.f32 %v7345, %v7631
      %v7633 = vpop.f32.mrf.mxu0
      %v7634 = vpop.f32.mrf.mxu0
      %v7635 = vadd.f32 %v7345, %v7634
      %v7636 = vpop.f32.mrf.mxu0
      %7637 = vmatprep.mubr.bf16.mxu0 %v7400
      %7638 = vmatmul.mubr.bf16.gmra.mxu0 %v7399
      %v7639 = vpop.f32.mrf.mxu0
      %v7640 = vadd.f32 %v7345, %v7639
      %v7641 = vpop.f32.mrf.mxu0
      %v7642 = vpop.f32.mrf.mxu0
      %v7643 = vadd.f32 %v7345, %v7642
      %v7644 = vpop.f32.mrf.mxu0
      %7645 = vmatprep.mubr.bf16.mxu0 %v7404
      %7646 = vmatmul.mubr.bf16.gmra.mxu0 %v7403
      %v7647 = vpop.f32.mrf.mxu0
      %v7648 = vadd.f32 %v7345, %v7647
      %v7649 = vpop.f32.mrf.mxu0
      %v7650 = vpop.f32.mrf.mxu0
      %v7651 = vadd.f32 %v7345, %v7650
      %v7652 = vpop.f32.mrf.mxu0
      %7653 = vmatprep.mubr.bf16.mxu0 %v7408
      %7654 = vmatmul.mubr.bf16.gmra.mxu0 %v7407
      %v7655 = vpop.f32.mrf.mxu0
      %v7656 = vadd.f32 %v7345, %v7655
      %v7657 = vpop.f32.mrf.mxu0
      %v7658 = vpop.f32.mrf.mxu0
      %v7659 = vadd.f32 %v7345, %v7658
      %v7660 = vpop.f32.mrf.mxu0
      %7661 = vdwg.mxu0
      %7662 = vmatprep.subr.bf16.mxu0 0
      %7663 = vmatpush1.bf16.msra.mxu0 %v7554
      %7664 = vmatprep.subr.bf16.mxu0 0
      %7665 = vmatpush1.bf16.msra.mxu0 %v7553
      %7666 = vmatprep.subr.bf16.mxu0 0
      %7667 = vmatpush1.bf16.msra.mxu0 %v7552
      %7668 = vmatprep.subr.bf16.mxu0 0
      %7669 = vmatpush1.bf16.msra.mxu0 %v7551
      %7670 = vmatprep.subr.bf16.mxu0 0
      %7671 = vmatpush1.bf16.msra.mxu0 %v7550
      %7672 = vmatprep.subr.bf16.mxu0 0
      %7673 = vmatpush1.bf16.msra.mxu0 %v7549
      %7674 = vmatprep.subr.bf16.mxu0 0
      %7675 = vmatpush1.bf16.msra.mxu0 %v7548
      %7676 = vmatprep.subr.bf16.mxu0 0
      %7677 = vmatpush1.bf16.msra.mxu0 %v7547
      %7678 = vmatprep.subr.bf16.mxu0 0
      %7679 = vmatpush2.bf16.msra.mxu0 0
      %7680 = vmatprep.subr.bf16.mxu0 0
      %7681 = vmatpush2.bf16.msra.mxu0 0
      %7682 = vmatprep.subr.bf16.mxu0 0
      %7683 = vmatpush2.bf16.msra.mxu0 0
      %7684 = vmatprep.subr.bf16.mxu0 0
      %7685 = vmatpush2.bf16.msra.mxu0 0
      %7686 = vmatprep.subr.bf16.mxu0 0
      %7687 = vmatpush2.bf16.msra.mxu0 0
      %7688 = vmatprep.subr.bf16.mxu0 0
      %7689 = vmatpush2.bf16.msra.mxu0 %v7557
      %7690 = vmatprep.subr.bf16.mxu0 0
      %7691 = vmatpush2.bf16.msra.mxu0 %v7556
      %7692 = vmatprep.subr.bf16.mxu0 0
      %7693 = vmatpush2.bf16.msra.mxu0 %v7555
      %7694 = vmatprep.mubr.bf16.mxu0 %v7586
      %7695 = vmatmul.mubr.bf16.gmra.mxu0 %v7397
      %v7696 = vpop.f32.mrf.mxu0
      %v7697 = vadd.f32 %v7632, %v7696
      %v7698 = vpop.f32.mrf.mxu0
      %v7699 = vpop.f32.mrf.mxu0
      %v7700 = vadd.f32 %v7635, %v7699
      %v7701 = vpop.f32.mrf.mxu0
      %7702 = vmatprep.mubr.bf16.mxu0 %v7589
      %7703 = vmatmul.mubr.bf16.gmra.mxu0 %v7401
      %v7704 = vpop.f32.mrf.mxu0
      %v7705 = vadd.f32 %v7640, %v7704
      %v7706 = vpop.f32.mrf.mxu0
      %v7707 = vpop.f32.mrf.mxu0
      %v7708 = vadd.f32 %v7643, %v7707
      %v7709 = vpop.f32.mrf.mxu0
      %7710 = vmatprep.mubr.bf16.mxu0 %v7592
      %7711 = vmatmul.mubr.bf16.gmra.mxu0 %v7405
      %v7712 = vpop.f32.mrf.mxu0
      %v7713 = vadd.f32 %v7648, %v7712
      %v7714 = vpop.f32.mrf.mxu0
      %v7715 = vpop.f32.mrf.mxu0
      %v7716 = vadd.f32 %v7651, %v7715
      %v7717 = vpop.f32.mrf.mxu0
      %7718 = vmatprep.mubr.bf16.mxu0 %v7595
      %7719 = vmatmul.mubr.bf16.gmra.mxu0 %v7409
      %v7720 = vpop.f32.mrf.mxu0
      %v7721 = vadd.f32 %v7656, %v7720
      %v7722 = vpop.f32.mrf.mxu0
      %v7723 = vpop.f32.mrf.mxu0
      %v7724 = vadd.f32 %v7659, %v7723
      %v7725 = vpop.f32.mrf.mxu0
      %7726 = vdwg.mxu0
      %7735 = vrot.lane.b32.xlu0 %v7697, 64
      %v7736 = vpop.permute.xlu0 %7735
      %7737 = vrot.lane.b32.xlu0 %v7700, 64
      %v7738 = vpop.permute.xlu0 %7737
      %7739 = vrot.lane.b32.xlu0 %v7705, 64
      %v7740 = vpop.permute.xlu0 %7739
      %7741 = vrot.lane.b32.xlu0 %v7708, 64
      %v7742 = vpop.permute.xlu0 %7741
      %7743 = vrot.lane.b32.xlu0 %v7713, 64
      %v7744 = vpop.permute.xlu0 %7743
      %7745 = vrot.lane.b32.xlu0 %v7716, 64
      %v7746 = vpop.permute.xlu0 %7745
      %7747 = vrot.lane.b32.xlu0 %v7721, 64
      %v7748 = vpop.permute.xlu0 %7747
      %7749 = vrot.lane.b32.xlu0 %v7724, 64
      %v7750 = vpop.permute.xlu0 %7749
      %v7759 = vmax.f32 %v7697, %v7736
      %v7760 = vmax.f32 %v7700, %v7738
      %v7761 = vmax.f32 %v7705, %v7740
      %v7762 = vmax.f32 %v7708, %v7742
      %v7763 = vmax.f32 %v7713, %v7744
      %v7764 = vmax.f32 %v7716, %v7746
      %v7765 = vmax.f32 %v7721, %v7748
      %v7766 = vmax.f32 %v7724, %v7750
      %v7767 = vmax.f32 %v7759, %v7760
      %v7768 = vmax.f32 %v7761, %v7762
      %v7769 = vmax.f32 %v7763, %v7764
      %v7770 = vmax.f32 %v7765, %v7766
      %vm7771 = vcmask 523264
      %7772 = vst.msk [vmem:[#allocation8] sm:$0xff] %vm7771, %v7767
      %7773 = vst.msk [vmem:[#allocation8 + $0x8] sm:$0xff] %vm7771, %v7768
      %7774 = vst.msk [vmem:[#allocation8 + $0x10] sm:$0xff] %vm7771, %v7769
      %7775 = vst.msk [vmem:[#allocation8 + $0x18] sm:$0xff] %vm7771, %v7770
      %v7776 = vld [vmem:[#allocation8] ss:$2 sm:$0xff]
      %s7777 = scalar_lea.vmem [#allocation8], 16
      %v7778 = vld [vmem:[%s7777] ss:$2 sm:$0xff]
      %s7779 = scalar_lea.vmem [#allocation8], 1
      %v7780 = vld [vmem:[%s7779] ss:$2 sm:$0xff]
      %s7781 = scalar_lea.vmem [#allocation8], 17
      %v7782 = vld [vmem:[%s7781] ss:$2 sm:$0xff]
      %v7783 = vmax.f32 %v7776, %v7780
      %v7784 = vmax.f32 %v7778, %v7782
      %v7785 = vpack.c.bf16 %v7784, %v7783
      %v7786 = vld [vmem:[%s6] sm:$0xf]
      %v7787 = vld [vmem:[%s6 + $0x4] sm:$0xf]
      %v7788 = vld [vmem:[%s6 + $0x8] sm:$0xf]
      %v7789 = vld [vmem:[%s6 + $0xc] sm:$0xf]
      %v7790 = vld [vmem:[%s6 + $0x10] sm:$0xf]
      %v7791 = vld [vmem:[%s6 + $0x14] sm:$0xf]
      %v7792 = vld [vmem:[%s6 + $0x18] sm:$0xf]
      %v7793 = vld [vmem:[%s6 + $0x1c] sm:$0xf]
      %v7794 = vld [vmem:[%s15] sm:$0x1]
      %v7796 = vlaneseq
      %v7797 = vshrl.u32 %v7796, 7
      %v7798 = vsub.s32 0, %v7797
      %v7799 = vrot.slane %v7794, %v7798
      %v7809 = vunpack.c.l.b16 %v7786
      %v7810 = vunpack.c.l.b16 %v7787
      %v7811 = vunpack.c.l.b16 %v7788
      %v7812 = vunpack.c.l.b16 %v7789
      %v7813 = vunpack.c.l.b16 %v7790
      %v7814 = vunpack.c.l.b16 %v7791
      %v7815 = vunpack.c.l.b16 %v7792
      %v7816 = vunpack.c.l.b16 %v7793
      %v7817 = vpack.c.b16 %v7810, %v7809
      %v7818 = vpack.c.b16 %v7812, %v7811
      %v7819 = vpack.c.b16 %v7814, %v7813
      %v7820 = vpack.c.b16 %v7816, %v7815
      %v7826 = vsel %vm7771, %v7785, 0
      %7828 = vmatprep.subr.bf16.mxu0 0
      %7829 = vmatpush1.bf16.msra.mxu0 0
      %7830 = vmatprep.subr.bf16.mxu0 0
      %7831 = vmatpush1.bf16.msra.mxu0 0
      %7832 = vmatprep.subr.bf16.mxu0 0
      %7833 = vmatpush1.bf16.msra.mxu0 0
      %7834 = vmatprep.subr.bf16.mxu0 0
      %7835 = vmatpush1.bf16.msra.mxu0 0
      %7836 = vmatprep.subr.bf16.mxu0 0
      %7837 = vmatpush1.bf16.msra.mxu0 %v7820
      %7838 = vmatprep.subr.bf16.mxu0 0
      %7839 = vmatpush1.bf16.msra.mxu0 %v7819
      %7840 = vmatprep.subr.bf16.mxu0 0
      %7841 = vmatpush1.bf16.msra.mxu0 %v7818
      %7842 = vmatprep.subr.bf16.mxu0 0
      %7843 = vmatpush1.bf16.msra.mxu0 %v7817
      %7844 = vmatprep.subr.bf16.mxu0 0
      %7845 = vmatpush2.bf16.msra.mxu0 0
      %7846 = vmatprep.subr.bf16.mxu0 0
      %7847 = vmatpush2.bf16.msra.mxu0 0
      %7848 = vmatprep.subr.bf16.mxu0 0
      %7849 = vmatpush2.bf16.msra.mxu0 0
      %7850 = vmatprep.subr.bf16.mxu0 0
      %7851 = vmatpush2.bf16.msra.mxu0 0
      %7852 = vmatprep.subr.bf16.mxu0 0
      %7853 = vmatpush2.bf16.msra.mxu0 0
      %7854 = vmatprep.subr.bf16.mxu0 0
      %7855 = vmatpush2.bf16.msra.mxu0 0
      %7856 = vmatprep.subr.bf16.mxu0 0
      %7857 = vmatpush2.bf16.msra.mxu0 0
      %7858 = vmatprep.subr.bf16.mxu0 0
      %7859 = vmatpush2.bf16.msra.mxu0 0
      %7860 = vmatprep.mubr.bf16.mxu0 0
      %7861 = vmatmul.mubr.bf16.gmra.mxu0 %v7826
      %v7862 = vpop.f32.mrf.mxu0
      %v7863 = vadd.f32 %v7799, %v7862
      %v7864 = vpop.f32.mrf.mxu0
      %v7865 = vpop.f32.mrf.mxu0
      %v7866 = vadd.f32 %v7799, %v7865
      %v7867 = vpop.f32.mrf.mxu0
      %7868 = vdwg.mxu0
      %7871 = vrot.lane.b32.xlu0 %v7863, 64
      %v7872 = vpop.permute.xlu0 %7871
      %7873 = vrot.lane.b32.xlu0 %v7866, 64
      %v7874 = vpop.permute.xlu0 %7873
      %v7877 = vmax.f32 %v7863, %v7872
      %v7878 = vmax.f32 %v7866, %v7874
      %v7879 = vpack.c.bf16 %v7878, %v7877
      %vm7880 = vcmask 521216
      %7881 = vst.msk [vmem:[#allocation9] sm:$0x3f] %vm7880, 0.0
      %7882 = vst.msk [vmem:[#allocation9 + $0x8] sm:$0x3f] %vm7880, 0.0
      %7883 = vst.msk [vmem:[#allocation9 + $0x10] sm:$0x3f] %vm7880, 0.0
      %7884 = vst.msk [vmem:[#allocation9 + $0x18] sm:$0x3f] %vm7880, 0.0
      %7885 = vst.msk [vmem:[#allocation9 + $0x20] sm:$0x3f] %vm7880, 0.0
      %7886 = vst.msk [vmem:[#allocation9 + $0x28] sm:$0x3f] %vm7880, 0.0
      %v7888 = vcombine.high %v7879, %v7879
      %v7890 = vunpack.c.l.s4 1983009808
      %v7891 = vunpack.c.0.s8 %v7890
      %v7892 = vlaneseq
      %v7893 = vshrl.u32 %v7892, 7
      %v7894 = vsub.s32 %v7891, %v7893
      %v7895 = vrot.slane %v7879, %v7894
      %v7897 = vunpack.c.l.s4 1983009808
      %v7898 = vunpack.c.0.s8 %v7897
      %v7899 = vlaneseq
      %v7900 = vshrl.u32 %v7899, 7
      %v7901 = vsub.s32 %v7898, %v7900
      %v7902 = vrot.slane %v7888, %v7901
      %v7903 = vcombine.high %v7895, %v7895
      %v7904 = vcombine.high %v7902, %v7902
      %v7909 = vunpack.c.l.bf16 %v7895
      %v7910 = vunpack.c.l.bf16 %v7903
      %v7911 = vunpack.c.l.bf16 %v7902
      %v7912 = vunpack.c.l.bf16 %v7904
      %s7913 = scalar_lea.vmem [#allocation9], 8
      %vm7914 = vcmask 519168
      %7915 = vst.msk [vmem:[%s7913 + $0x1] sm:$0xf] %vm7914, %v7909
      %7916 = vst.msk [vmem:[%s7913 + $0x9] sm:$0xf] %vm7914, %v7910
      %7917 = vst.msk [vmem:[%s7913 + $0x11] sm:$0xf] %vm7914, %v7911
      %7918 = vst.msk [vmem:[%s7913 + $0x19] sm:$0xf] %vm7914, %v7912
      %v7919 = vld [vmem:[#allocation9] sm:$0xf]
      %v7920 = vld [vmem:[#allocation9 + $0x8] sm:$0xf]
      %v7921 = vld [vmem:[#allocation9 + $0x10] sm:$0xf]
      %v7922 = vld [vmem:[#allocation9 + $0x18] sm:$0xf]
      %v7927 = vcombine.low %v7919, %v7920
      %v7928 = vcombine.low %v7921, %v7922
      %v7931 = vpack.c.bf16 %v7928, %v7927
      %v7933 = vunpack.c.l.b16 %v7931
      %v7934 = vunpack.c.h.b16 %v7931
      %v7935 = vpack.c.b16 %v7933, %v7933
      %v7936 = vpack.c.b16 %v7934, %v7934
      %7939 = vst.msk [vmem:[#allocation10] sm:$0xf] %vm7914, %v7935
      %7940 = vst.msk [vmem:[#allocation10 + $0x14] sm:$0xf] %vm7914, %v7936
      %v7941 = vld [vmem:[#allocation9 + $0x1] sm:$0xf]
      %v7942 = vld [vmem:[#allocation9 + $0x9] sm:$0xf]
      %v7943 = vld [vmem:[#allocation9 + $0x11] sm:$0xf]
      %v7944 = vld [vmem:[#allocation9 + $0x19] sm:$0xf]
      %v7949 = vcombine.low %v7941, %v7942
      %v7950 = vcombine.low %v7943, %v7944
      %v7953 = vpack.c.bf16 %v7950, %v7949
      %v7955 = vunpack.c.l.b16 %v7953
      %v7956 = vunpack.c.h.b16 %v7953
      %v7957 = vpack.c.b16 %v7955, %v7955
      %v7958 = vpack.c.b16 %v7956, %v7956
      %7959 = vrot.lane.b32.xlu0 %v7957, 64
      %v7960 = vpop.permute.xlu0 %7959
      %7961 = vrot.lane.b32.xlu0 %v7958, 64
      %v7962 = vpop.permute.xlu0 %7961
      %vm7965 = vcmask 1043968
      %7966 = vst.msk [vmem:[#allocation10] sm:$0xf] %vm7965, %v7960
      %7967 = vst.msk [vmem:[#allocation10 + $0x14] sm:$0xf] %vm7965, %v7962
      %v7968 = vld [vmem:[#allocation9 + $0x2] sm:$0xf]
      %v7969 = vld [vmem:[#allocation9 + $0xa] sm:$0xf]
      %v7970 = vld [vmem:[#allocation9 + $0x12] sm:$0xf]
      %v7971 = vld [vmem:[#allocation9 + $0x1a] sm:$0xf]
      %v7976 = vcombine.low %v7968, %v7969
      %v7977 = vcombine.low %v7970, %v7971
      %v7980 = vpack.c.bf16 %v7977, %v7976
      %v7982 = vunpack.c.l.b16 %v7980
      %v7983 = vunpack.c.h.b16 %v7980
      %v7984 = vpack.c.b16 %v7982, %v7982
      %v7985 = vpack.c.b16 %v7983, %v7983
      %7988 = vst.msk [vmem:[#allocation10 + $0x4] sm:$0xf] %vm7914, %v7984
      %7989 = vst.msk [vmem:[#allocation10 + $0x18] sm:$0xf] %vm7914, %v7985
      %v7990 = vld [vmem:[%s7913] sm:$0xf]
      %v7991 = vld [vmem:[%s7913 + $0x8] sm:$0xf]
      %v7992 = vld [vmem:[%s7913 + $0x10] sm:$0xf]
      %v7993 = vld [vmem:[%s7913 + $0x18] sm:$0xf]
      %v7998 = vcombine.low %v7990, %v7991
      %v7999 = vcombine.low %v7992, %v7993
      %v8002 = vpack.c.bf16 %v7999, %v7998
      %v8004 = vunpack.c.l.b16 %v8002
      %v8005 = vunpack.c.h.b16 %v8002
      %v8006 = vpack.c.b16 %v8004, %v8004
      %v8007 = vpack.c.b16 %v8005, %v8005
      %8008 = vrot.lane.b32.xlu0 %v8006, 64
      %v8009 = vpop.permute.xlu0 %8008
      %8010 = vrot.lane.b32.xlu0 %v8007, 64
      %v8011 = vpop.permute.xlu0 %8010
      %8014 = vst.msk [vmem:[#allocation10 + $0x4] sm:$0xf] %vm7965, %v8009
      %8015 = vst.msk [vmem:[#allocation10 + $0x18] sm:$0xf] %vm7965, %v8011
      %v8016 = vld [vmem:[%s7913 + $0x1] sm:$0xf]
      %v8017 = vld [vmem:[%s7913 + $0x9] sm:$0xf]
      %v8018 = vld [vmem:[%s7913 + $0x11] sm:$0xf]
      %v8019 = vld [vmem:[%s7913 + $0x19] sm:$0xf]
      %v8024 = vcombine.low %v8016, %v8017
      %v8025 = vcombine.low %v8018, %v8019
      %v8028 = vpack.c.bf16 %v8025, %v8024
      %v8030 = vunpack.c.l.b16 %v8028
      %v8031 = vunpack.c.h.b16 %v8028
      %v8032 = vpack.c.b16 %v8030, %v8030
      %v8033 = vpack.c.b16 %v8031, %v8031
      %8036 = vst.msk [vmem:[#allocation10 + $0x8] sm:$0xf] %vm7914, %v8032
      %8037 = vst.msk [vmem:[#allocation10 + $0x1c] sm:$0xf] %vm7914, %v8033
      %v8038 = vld [vmem:[%s7913 + $0x2] sm:$0xf]
      %v8039 = vld [vmem:[%s7913 + $0xa] sm:$0xf]
      %v8040 = vld [vmem:[%s7913 + $0x12] sm:$0xf]
      %v8041 = vld [vmem:[%s7913 + $0x1a] sm:$0xf]
      %v8046 = vcombine.low %v8038, %v8039
      %v8047 = vcombine.low %v8040, %v8041
      %v8050 = vpack.c.bf16 %v8047, %v8046
      %v8052 = vunpack.c.l.b16 %v8050
      %v8053 = vunpack.c.h.b16 %v8050
      %v8054 = vpack.c.b16 %v8052, %v8052
      %v8055 = vpack.c.b16 %v8053, %v8053
      %8056 = vrot.lane.b32.xlu0 %v8054, 64
      %v8057 = vpop.permute.xlu0 %8056
      %8058 = vrot.lane.b32.xlu0 %v8055, 64
      %v8059 = vpop.permute.xlu0 %8058
      %8062 = vst.msk [vmem:[#allocation10 + $0x8] sm:$0xf] %vm7965, %v8057
      %8063 = vst.msk [vmem:[#allocation10 + $0x1c] sm:$0xf] %vm7965, %v8059
      %s8064 = scalar_lea.vmem [#allocation9], 16
      %v8065 = vld [vmem:[%s8064] sm:$0xf]
      %v8066 = vld [vmem:[%s8064 + $0x8] sm:$0xf]
      %v8067 = vld [vmem:[%s8064 + $0x10] sm:$0xf]
      %v8068 = vld [vmem:[%s8064 + $0x18] sm:$0xf]
      %v8073 = vcombine.low %v8065, %v8066
      %v8074 = vcombine.low %v8067, %v8068
      %v8077 = vpack.c.bf16 %v8074, %v8073
      %v8079 = vunpack.c.l.b16 %v8077
      %v8080 = vunpack.c.h.b16 %v8077
      %v8081 = vpack.c.b16 %v8079, %v8079
      %v8082 = vpack.c.b16 %v8080, %v8080
      %8085 = vst.msk [vmem:[#allocation10 + $0xc] sm:$0xf] %vm7914, %v8081
      %8086 = vst.msk [vmem:[#allocation10 + $0x20] sm:$0xf] %vm7914, %v8082
      %v8087 = vld [vmem:[%s8064 + $0x1] sm:$0xf]
      %v8088 = vld [vmem:[%s8064 + $0x9] sm:$0xf]
      %v8089 = vld [vmem:[%s8064 + $0x11] sm:$0xf]
      %v8090 = vld [vmem:[%s8064 + $0x19] sm:$0xf]
      %v8095 = vcombine.low %v8087, %v8088
      %v8096 = vcombine.low %v8089, %v8090
      %v8099 = vpack.c.bf16 %v8096, %v8095
      %v8101 = vunpack.c.l.b16 %v8099
      %v8102 = vunpack.c.h.b16 %v8099
      %v8103 = vpack.c.b16 %v8101, %v8101
      %v8104 = vpack.c.b16 %v8102, %v8102
      %8105 = vrot.lane.b32.xlu0 %v8103, 64
      %v8106 = vpop.permute.xlu0 %8105
      %8107 = vrot.lane.b32.xlu0 %v8104, 64
      %v8108 = vpop.permute.xlu0 %8107
      %8111 = vst.msk [vmem:[#allocation10 + $0xc] sm:$0xf] %vm7965, %v8106
      %8112 = vst.msk [vmem:[#allocation10 + $0x20] sm:$0xf] %vm7965, %v8108
      %v8113 = vld [vmem:[%s8064 + $0x2] sm:$0xf]
      %v8114 = vld [vmem:[%s8064 + $0xa] sm:$0xf]
      %v8115 = vld [vmem:[%s8064 + $0x12] sm:$0xf]
      %v8116 = vld [vmem:[%s8064 + $0x1a] sm:$0xf]
      %v8121 = vcombine.low %v8113, %v8114
      %v8122 = vcombine.low %v8115, %v8116
      %v8125 = vpack.c.bf16 %v8122, %v8121
      %v8127 = vunpack.c.l.b16 %v8125
      %v8128 = vunpack.c.h.b16 %v8125
      %v8129 = vpack.c.b16 %v8127, %v8127
      %v8130 = vpack.c.b16 %v8128, %v8128
      %8133 = vst.msk [vmem:[#allocation10 + $0x10] sm:$0xf] %vm7914, %v8129
      %8134 = vst.msk [vmem:[#allocation10 + $0x24] sm:$0xf] %vm7914, %v8130
      %v8135 = vld [vmem:[#allocation10] sm:$0xff]
      %v8136 = vld [vmem:[#allocation10 + $0x8] sm:$0xff]
      %v8137 = vld [vmem:[#allocation10 + $0x10] sm:$0xf]
      %v8138 = vld [vmem:[#allocation10 + $0x14] sm:$0xff]
      %v8139 = vld [vmem:[#allocation10 + $0x1c] sm:$0xff]
      %v8140 = vld [vmem:[#allocation10 + $0x24] sm:$0xf]
      %v8141 = vld [vmem:[%s7] sm:$0xf]
      %v8142 = vld [vmem:[%s7 + $0x4] sm:$0xf]
      %v8143 = vld [vmem:[%s7 + $0x8] sm:$0xf]
      %v8144 = vld [vmem:[%s7 + $0xc] sm:$0xf]
      %v8145 = vld [vmem:[%s7 + $0x10] sm:$0xf]
      %v8146 = vld [vmem:[%s7 + $0x14] sm:$0xf]
      %v8147 = vld [vmem:[%s7 + $0x18] sm:$0xf]
      %v8148 = vld [vmem:[%s7 + $0x1c] sm:$0xf]
      %v8149 = vld [vmem:[%s7 + $0x20] sm:$0xf]
      %v8150 = vld [vmem:[%s7 + $0x24] sm:$0xf]
      %v8151 = vld [vmem:[%s7 + $0x28] sm:$0xf]
      %v8152 = vld [vmem:[%s7 + $0x2c] sm:$0xf]
      %v8153 = vld [vmem:[%s7 + $0x30] sm:$0xf]
      %v8154 = vld [vmem:[%s7 + $0x34] sm:$0xf]
      %v8155 = vld [vmem:[%s7 + $0x38] sm:$0xf]
      %v8156 = vld [vmem:[%s7 + $0x3c] sm:$0xf]
      %v8157 = vld [vmem:[%s7 + $0x40] sm:$0xf]
      %v8158 = vld [vmem:[%s7 + $0x44] sm:$0xf]
      %v8159 = vld [vmem:[%s7 + $0x48] sm:$0xf]
      %v8160 = vld [vmem:[%s7 + $0x4c] sm:$0xf]
      %v8161 = vld [vmem:[%s7 + $0x50] sm:$0xf]
      %v8162 = vld [vmem:[%s7 + $0x54] sm:$0xf]
      %v8163 = vld [vmem:[%s7 + $0x58] sm:$0xf]
      %v8164 = vld [vmem:[%s7 + $0x5c] sm:$0xf]
      %v8165 = vld [vmem:[%s7 + $0x60] sm:$0xf]
      %v8166 = vld [vmem:[%s7 + $0x64] sm:$0xf]
      %v8167 = vld [vmem:[%s7 + $0x68] sm:$0xf]
      %v8168 = vld [vmem:[%s7 + $0x6c] sm:$0xf]
      %v8169 = vld [vmem:[%s7 + $0x70] sm:$0xf]
      %v8170 = vld [vmem:[%s7 + $0x74] sm:$0xf]
      %v8171 = vld [vmem:[%s7 + $0x78] sm:$0xf]
      %v8172 = vld [vmem:[%s7 + $0x7c] sm:$0xf]
      %v8173 = vld [vmem:[%s7 + $0x80] sm:$0xf]
      %v8174 = vld [vmem:[%s7 + $0x84] sm:$0xf]
      %v8175 = vld [vmem:[%s7 + $0x88] sm:$0xf]
      %v8176 = vld [vmem:[%s7 + $0x8c] sm:$0xf]
      %v8177 = vld [vmem:[%s7 + $0x90] sm:$0xf]
      %v8178 = vld [vmem:[%s7 + $0x94] sm:$0xf]
      %v8179 = vld [vmem:[%s7 + $0x98] sm:$0xf]
      %v8180 = vld [vmem:[%s7 + $0x9c] sm:$0xf]
      %v8181 = vld [vmem:[%s7 + $0xa0] sm:$0xf]
      %v8182 = vld [vmem:[%s7 + $0xa4] sm:$0xf]
      %v8183 = vld [vmem:[%s7 + $0xa8] sm:$0xf]
      %v8184 = vld [vmem:[%s7 + $0xac] sm:$0xf]
      %v8185 = vld [vmem:[%s7 + $0xb0] sm:$0xf]
      %v8186 = vld [vmem:[%s7 + $0xb4] sm:$0xf]
      %v8187 = vld [vmem:[%s7 + $0xb8] sm:$0xf]
      %v8188 = vld [vmem:[%s7 + $0xbc] sm:$0xf]
      %v8189 = vld [vmem:[%s7 + $0xc0] sm:$0xf]
      %v8190 = vld [vmem:[%s7 + $0xc4] sm:$0xf]
      %v8191 = vld [vmem:[%s7 + $0xc8] sm:$0xf]
      %v8192 = vld [vmem:[%s7 + $0xcc] sm:$0xf]
      %v8193 = vld [vmem:[%s7 + $0xd0] sm:$0xf]
      %v8194 = vld [vmem:[%s7 + $0xd4] sm:$0xf]
      %v8195 = vld [vmem:[%s7 + $0xd8] sm:$0xf]
      %v8196 = vld [vmem:[%s7 + $0xdc] sm:$0xf]
      %v8197 = vld [vmem:[%s7 + $0xe0] sm:$0xf]
      %v8198 = vld [vmem:[%s7 + $0xe4] sm:$0xf]
      %v8199 = vld [vmem:[%s7 + $0xe8] sm:$0xf]
      %v8200 = vld [vmem:[%s7 + $0xec] sm:$0xf]
      %v8201 = vld [vmem:[%s7 + $0xf0] sm:$0xf]
      %v8202 = vld [vmem:[%s7 + $0xf4] sm:$0xf]
      %v8203 = vld [vmem:[%s7 + $0xf8] sm:$0xf]
      %v8204 = vld [vmem:[%s7 + $0xfc] sm:$0xf]
      %v8205 = vld [vmem:[%s7 + $0x100] sm:$0xf]
      %v8206 = vld [vmem:[%s7 + $0x104] sm:$0xf]
      %v8207 = vld [vmem:[%s7 + $0x108] sm:$0xf]
      %v8208 = vld [vmem:[%s7 + $0x10c] sm:$0xf]
      %v8209 = vld [vmem:[%s7 + $0x110] sm:$0xf]
      %v8210 = vld [vmem:[%s7 + $0x114] sm:$0xf]
      %v8211 = vld [vmem:[%s7 + $0x118] sm:$0xf]
      %v8212 = vld [vmem:[%s7 + $0x11c] sm:$0xf]
      %v8213 = vld [vmem:[%s16] sm:$0x1]
      %v8215 = vlaneseq
      %v8216 = vshrl.u32 %v8215, 7
      %v8217 = vsub.s32 0, %v8216
      %v8218 = vrot.slane %v8213, %v8217
      %v8226 = vunpack.c.l.b16 %v8135
      %v8227 = vunpack.c.h.b16 %v8135
      %v8228 = vunpack.c.l.b16 %v8136
      %v8229 = vunpack.c.h.b16 %v8136
      %v8230 = vunpack.c.l.b16 %v8137
      %v8231 = vunpack.c.l.b16 %v8138
      %v8232 = vunpack.c.h.b16 %v8138
      %v8233 = vunpack.c.l.b16 %v8139
      %v8234 = vunpack.c.h.b16 %v8139
      %v8235 = vunpack.c.l.b16 %v8140
      %v8236 = vpack.c.b16 %v8231, %v8226
      %v8237 = vpack.c.b16 %v8232, %v8227
      %v8238 = vpack.c.b16 %v8233, %v8228
      %v8239 = vpack.c.b16 %v8234, %v8229
      %v8240 = vpack.c.b16 %v8235, %v8230
      %v8317 = vunpack.c.l.b16 %v8141
      %v8318 = vunpack.c.l.b16 %v8142
      %v8319 = vunpack.c.l.b16 %v8143
      %v8320 = vunpack.c.l.b16 %v8144
      %v8321 = vunpack.c.l.b16 %v8145
      %v8322 = vunpack.c.l.b16 %v8146
      %v8323 = vunpack.c.l.b16 %v8147
      %v8324 = vunpack.c.l.b16 %v8148
      %v8325 = vunpack.c.l.b16 %v8149
      %v8326 = vunpack.c.l.b16 %v8150
      %v8327 = vunpack.c.l.b16 %v8151
      %v8328 = vunpack.c.l.b16 %v8152
      %v8329 = vunpack.c.l.b16 %v8153
      %v8330 = vunpack.c.l.b16 %v8154
      %v8331 = vunpack.c.l.b16 %v8155
      %v8332 = vunpack.c.l.b16 %v8156
      %v8333 = vunpack.c.l.b16 %v8157
      %v8334 = vunpack.c.l.b16 %v8158
      %v8335 = vunpack.c.l.b16 %v8159
      %v8336 = vunpack.c.l.b16 %v8160
      %v8337 = vunpack.c.l.b16 %v8161
      %v8338 = vunpack.c.l.b16 %v8162
      %v8339 = vunpack.c.l.b16 %v8163
      %v8340 = vunpack.c.l.b16 %v8164
      %v8341 = vunpack.c.l.b16 %v8165
      %v8342 = vunpack.c.l.b16 %v8166
      %v8343 = vunpack.c.l.b16 %v8167
      %v8344 = vunpack.c.l.b16 %v8168
      %v8345 = vunpack.c.l.b16 %v8169
      %v8346 = vunpack.c.l.b16 %v8170
      %v8347 = vunpack.c.l.b16 %v8171
      %v8348 = vunpack.c.l.b16 %v8172
      %v8349 = vunpack.c.l.b16 %v8173
      %v8350 = vunpack.c.l.b16 %v8174
      %v8351 = vunpack.c.l.b16 %v8175
      %v8352 = vunpack.c.l.b16 %v8176
      %v8353 = vunpack.c.l.b16 %v8177
      %v8354 = vunpack.c.l.b16 %v8178
      %v8355 = vunpack.c.l.b16 %v8179
      %v8356 = vunpack.c.l.b16 %v8180
      %v8357 = vunpack.c.l.b16 %v8181
      %v8358 = vunpack.c.l.b16 %v8182
      %v8359 = vunpack.c.l.b16 %v8183
      %v8360 = vunpack.c.l.b16 %v8184
      %v8361 = vunpack.c.l.b16 %v8185
      %v8362 = vunpack.c.l.b16 %v8186
      %v8363 = vunpack.c.l.b16 %v8187
      %v8364 = vunpack.c.l.b16 %v8188
      %v8365 = vunpack.c.l.b16 %v8189
      %v8366 = vunpack.c.l.b16 %v8190
      %v8367 = vunpack.c.l.b16 %v8191
      %v8368 = vunpack.c.l.b16 %v8192
      %v8369 = vunpack.c.l.b16 %v8193
      %v8370 = vunpack.c.l.b16 %v8194
      %v8371 = vunpack.c.l.b16 %v8195
      %v8372 = vunpack.c.l.b16 %v8196
      %v8373 = vunpack.c.l.b16 %v8197
      %v8374 = vunpack.c.l.b16 %v8198
      %v8375 = vunpack.c.l.b16 %v8199
      %v8376 = vunpack.c.l.b16 %v8200
      %v8377 = vunpack.c.l.b16 %v8201
      %v8378 = vunpack.c.l.b16 %v8202
      %v8379 = vunpack.c.l.b16 %v8203
      %v8380 = vunpack.c.l.b16 %v8204
      %v8381 = vunpack.c.l.b16 %v8205
      %v8382 = vunpack.c.l.b16 %v8206
      %v8383 = vunpack.c.l.b16 %v8207
      %v8384 = vunpack.c.l.b16 %v8208
      %v8385 = vunpack.c.l.b16 %v8209
      %v8386 = vunpack.c.l.b16 %v8210
      %v8387 = vunpack.c.l.b16 %v8211
      %v8388 = vunpack.c.l.b16 %v8212
      %v8389 = vpack.c.b16 %v8318, %v8317
      %v8390 = vpack.c.b16 %v8320, %v8319
      %v8391 = vpack.c.b16 %v8322, %v8321
      %v8392 = vpack.c.b16 %v8324, %v8323
      %v8393 = vpack.c.b16 %v8326, %v8325
      %v8394 = vpack.c.b16 %v8328, %v8327
      %v8395 = vpack.c.b16 %v8330, %v8329
      %v8396 = vpack.c.b16 %v8332, %v8331
      %v8397 = vpack.c.b16 %v8334, %v8333
      %v8398 = vpack.c.b16 %v8336, %v8335
      %v8399 = vpack.c.b16 %v8338, %v8337
      %v8400 = vpack.c.b16 %v8340, %v8339
      %v8401 = vpack.c.b16 %v8342, %v8341
      %v8402 = vpack.c.b16 %v8344, %v8343
      %v8403 = vpack.c.b16 %v8346, %v8345
      %v8404 = vpack.c.b16 %v8348, %v8347
      %v8405 = vpack.c.b16 %v8350, %v8349
      %v8406 = vpack.c.b16 %v8352, %v8351
      %v8407 = vpack.c.b16 %v8354, %v8353
      %v8408 = vpack.c.b16 %v8356, %v8355
      %v8409 = vpack.c.b16 %v8358, %v8357
      %v8410 = vpack.c.b16 %v8360, %v8359
      %v8411 = vpack.c.b16 %v8362, %v8361
      %v8412 = vpack.c.b16 %v8364, %v8363
      %v8413 = vpack.c.b16 %v8366, %v8365
      %v8414 = vpack.c.b16 %v8368, %v8367
      %v8415 = vpack.c.b16 %v8370, %v8369
      %v8416 = vpack.c.b16 %v8372, %v8371
      %v8417 = vpack.c.b16 %v8374, %v8373
      %v8418 = vpack.c.b16 %v8376, %v8375
      %v8419 = vpack.c.b16 %v8378, %v8377
      %v8420 = vpack.c.b16 %v8380, %v8379
      %v8421 = vpack.c.b16 %v8382, %v8381
      %v8422 = vpack.c.b16 %v8384, %v8383
      %v8423 = vpack.c.b16 %v8386, %v8385
      %v8424 = vpack.c.b16 %v8388, %v8387
      %v8462 = vsel %vm7771, %v8240, 0
      %8464 = vmatprep.subr.bf16.mxu0 0
      %8465 = vmatpush1.bf16.msra.mxu0 %v8396
      %8466 = vmatprep.subr.bf16.mxu0 0
      %8467 = vmatpush1.bf16.msra.mxu0 %v8395
      %8468 = vmatprep.subr.bf16.mxu0 0
      %8469 = vmatpush1.bf16.msra.mxu0 %v8394
      %8470 = vmatprep.subr.bf16.mxu0 0
      %8471 = vmatpush1.bf16.msra.mxu0 %v8393
      %8472 = vmatprep.subr.bf16.mxu0 0
      %8473 = vmatpush1.bf16.msra.mxu0 %v8392
      %8474 = vmatprep.subr.bf16.mxu0 0
      %8475 = vmatpush1.bf16.msra.mxu0 %v8391
      %8476 = vmatprep.subr.bf16.mxu0 0
      %8477 = vmatpush1.bf16.msra.mxu0 %v8390
      %8478 = vmatprep.subr.bf16.mxu0 0
      %8479 = vmatpush1.bf16.msra.mxu0 %v8389
      %8480 = vmatprep.subr.bf16.mxu0 0
      %8481 = vmatpush2.bf16.msra.mxu0 %v8404
      %8482 = vmatprep.subr.bf16.mxu0 0
      %8483 = vmatpush2.bf16.msra.mxu0 %v8403
      %8484 = vmatprep.subr.bf16.mxu0 0
      %8485 = vmatpush2.bf16.msra.mxu0 %v8402
      %8486 = vmatprep.subr.bf16.mxu0 0
      %8487 = vmatpush2.bf16.msra.mxu0 %v8401
      %8488 = vmatprep.subr.bf16.mxu0 0
      %8489 = vmatpush2.bf16.msra.mxu0 %v8400
      %8490 = vmatprep.subr.bf16.mxu0 0
      %8491 = vmatpush2.bf16.msra.mxu0 %v8399
      %8492 = vmatprep.subr.bf16.mxu0 0
      %8493 = vmatpush2.bf16.msra.mxu0 %v8398
      %8494 = vmatprep.subr.bf16.mxu0 0
      %8495 = vmatpush2.bf16.msra.mxu0 %v8397
      %8496 = vmatprep.mubr.bf16.mxu0 %v8237
      %8497 = vmatmul.mubr.bf16.gmra.mxu0 %v8236
      %v8498 = vpop.f32.mrf.mxu0
      %v8499 = vadd.f32 %v8218, %v8498
      %v8500 = vpop.f32.mrf.mxu0
      %v8501 = vpop.f32.mrf.mxu0
      %v8502 = vadd.f32 %v8218, %v8501
      %v8503 = vpop.f32.mrf.mxu0
      %8504 = vdwg.mxu0
      %8505 = vmatprep.subr.bf16.mxu0 0
      %8506 = vmatpush1.bf16.msra.mxu0 %v8412
      %8507 = vmatprep.subr.bf16.mxu0 0
      %8508 = vmatpush1.bf16.msra.mxu0 %v8411
      %8509 = vmatprep.subr.bf16.mxu0 0
      %8510 = vmatpush1.bf16.msra.mxu0 %v8410
      %8511 = vmatprep.subr.bf16.mxu0 0
      %8512 = vmatpush1.bf16.msra.mxu0 %v8409
      %8513 = vmatprep.subr.bf16.mxu0 0
      %8514 = vmatpush1.bf16.msra.mxu0 %v8408
      %8515 = vmatprep.subr.bf16.mxu0 0
      %8516 = vmatpush1.bf16.msra.mxu0 %v8407
      %8517 = vmatprep.subr.bf16.mxu0 0
      %8518 = vmatpush1.bf16.msra.mxu0 %v8406
      %8519 = vmatprep.subr.bf16.mxu0 0
      %8520 = vmatpush1.bf16.msra.mxu0 %v8405
      %8521 = vmatprep.subr.bf16.mxu0 0
      %8522 = vmatpush2.bf16.msra.mxu0 %v8420
      %8523 = vmatprep.subr.bf16.mxu0 0
      %8524 = vmatpush2.bf16.msra.mxu0 %v8419
      %8525 = vmatprep.subr.bf16.mxu0 0
      %8526 = vmatpush2.bf16.msra.mxu0 %v8418
      %8527 = vmatprep.subr.bf16.mxu0 0
      %8528 = vmatpush2.bf16.msra.mxu0 %v8417
      %8529 = vmatprep.subr.bf16.mxu0 0
      %8530 = vmatpush2.bf16.msra.mxu0 %v8416
      %8531 = vmatprep.subr.bf16.mxu0 0
      %8532 = vmatpush2.bf16.msra.mxu0 %v8415
      %8533 = vmatprep.subr.bf16.mxu0 0
      %8534 = vmatpush2.bf16.msra.mxu0 %v8414
      %8535 = vmatprep.subr.bf16.mxu0 0
      %8536 = vmatpush2.bf16.msra.mxu0 %v8413
      %8537 = vmatprep.mubr.bf16.mxu0 %v8239
      %8538 = vmatmul.mubr.bf16.gmra.mxu0 %v8238
      %v8539 = vpop.f32.mrf.mxu0
      %v8540 = vadd.f32 %v8499, %v8539
      %v8541 = vpop.f32.mrf.mxu0
      %v8542 = vpop.f32.mrf.mxu0
      %v8543 = vadd.f32 %v8502, %v8542
      %v8544 = vpop.f32.mrf.mxu0
      %8545 = vdwg.mxu0
      %8546 = vmatprep.subr.bf16.mxu0 0
      %8547 = vmatpush1.bf16.msra.mxu0 0
      %8548 = vmatprep.subr.bf16.mxu0 0
      %8549 = vmatpush1.bf16.msra.mxu0 0
      %8550 = vmatprep.subr.bf16.mxu0 0
      %8551 = vmatpush1.bf16.msra.mxu0 0
      %8552 = vmatprep.subr.bf16.mxu0 0
      %8553 = vmatpush1.bf16.msra.mxu0 0
      %8554 = vmatprep.subr.bf16.mxu0 0
      %8555 = vmatpush1.bf16.msra.mxu0 %v8424
      %8556 = vmatprep.subr.bf16.mxu0 0
      %8557 = vmatpush1.bf16.msra.mxu0 %v8423
      %8558 = vmatprep.subr.bf16.mxu0 0
      %8559 = vmatpush1.bf16.msra.mxu0 %v8422
      %8560 = vmatprep.subr.bf16.mxu0 0
      %8561 = vmatpush1.bf16.msra.mxu0 %v8421
      %8562 = vmatprep.subr.bf16.mxu0 0
      %8563 = vmatpush2.bf16.msra.mxu0 0
      %8564 = vmatprep.subr.bf16.mxu0 0
      %8565 = vmatpush2.bf16.msra.mxu0 0
      %8566 = vmatprep.subr.bf16.mxu0 0
      %8567 = vmatpush2.bf16.msra.mxu0 0
      %8568 = vmatprep.subr.bf16.mxu0 0
      %8569 = vmatpush2.bf16.msra.mxu0 0
      %8570 = vmatprep.subr.bf16.mxu0 0
      %8571 = vmatpush2.bf16.msra.mxu0 0
      %8572 = vmatprep.subr.bf16.mxu0 0
      %8573 = vmatpush2.bf16.msra.mxu0 0
      %8574 = vmatprep.subr.bf16.mxu0 0
      %8575 = vmatpush2.bf16.msra.mxu0 0
      %8576 = vmatprep.subr.bf16.mxu0 0
      %8577 = vmatpush2.bf16.msra.mxu0 0
      %8578 = vmatprep.mubr.bf16.mxu0 0
      %8579 = vmatmul.mubr.bf16.gmra.mxu0 %v8462
      %v8580 = vpop.f32.mrf.mxu0
      %v8581 = vadd.f32 %v8540, %v8580
      %v8582 = vpop.f32.mrf.mxu0
      %v8583 = vpop.f32.mrf.mxu0
      %v8584 = vadd.f32 %v8543, %v8583
      %v8585 = vpop.f32.mrf.mxu0
      %8586 = vdwg.mxu0
      %8589 = vrot.lane.b32.xlu0 %v8581, 96
      %v8590 = vpop.permute.xlu0 %8589
      %8591 = vrot.lane.b32.xlu0 %v8584, 96
      %v8592 = vpop.permute.xlu0 %8591
      %v8595 = vmax.f32 %v8581, %v8590
      %v8596 = vmax.f32 %v8584, %v8592
      %v8597 = vpack.c.bf16 %v8596, %v8595
      %v8598 = vld [vmem:[%s8] sm:$0xf]
      %v8599 = vld [vmem:[%s8 + $0x4] sm:$0xf]
      %v8600 = vld [vmem:[%s8 + $0x8] sm:$0xf]
      %v8601 = vld [vmem:[%s8 + $0xc] sm:$0xf]
      %v8602 = vld [vmem:[%s17] sm:$0x1]
      %v8604 = vlaneseq
      %v8605 = vshrl.u32 %v8604, 7
      %v8606 = vsub.s32 0, %v8605
      %v8607 = vrot.slane %v8602, %v8606
      %v8613 = vunpack.c.l.b16 %v8598
      %v8614 = vunpack.c.l.b16 %v8599
      %v8615 = vunpack.c.l.b16 %v8600
      %v8616 = vunpack.c.l.b16 %v8601
      %v8617 = vpack.c.b16 %v8614, %v8613
      %v8618 = vpack.c.b16 %v8616, %v8615
      %v8622 = vsel %vm1075, %v8597, 0
      %8624 = vmatprep.subr.bf16.mxu0 0
      %8625 = vmatpush1.bf16.msra.mxu0 0
      %8626 = vmatprep.subr.bf16.mxu0 0
      %8627 = vmatpush1.bf16.msra.mxu0 0
      %8628 = vmatprep.subr.bf16.mxu0 0
      %8629 = vmatpush1.bf16.msra.mxu0 0
      %8630 = vmatprep.subr.bf16.mxu0 0
      %8631 = vmatpush1.bf16.msra.mxu0 0
      %8632 = vmatprep.subr.bf16.mxu0 0
      %8633 = vmatpush1.bf16.msra.mxu0 0
      %8634 = vmatprep.subr.bf16.mxu0 0
      %8635 = vmatpush1.bf16.msra.mxu0 0
      %8636 = vmatprep.subr.bf16.mxu0 0
      %8637 = vmatpush1.bf16.msra.mxu0 %v8618
      %8638 = vmatprep.subr.bf16.mxu0 0
      %8639 = vmatpush1.bf16.msra.mxu0 %v8617
      %8640 = vmatprep.subr.bf16.mxu0 0
      %8641 = vmatpush2.bf16.msra.mxu0 0
      %8642 = vmatprep.subr.bf16.mxu0 0
      %8643 = vmatpush2.bf16.msra.mxu0 0
      %8644 = vmatprep.subr.bf16.mxu0 0
      %8645 = vmatpush2.bf16.msra.mxu0 0
      %8646 = vmatprep.subr.bf16.mxu0 0
      %8647 = vmatpush2.bf16.msra.mxu0 0
      %8648 = vmatprep.subr.bf16.mxu0 0
      %8649 = vmatpush2.bf16.msra.mxu0 0
      %8650 = vmatprep.subr.bf16.mxu0 0
      %8651 = vmatpush2.bf16.msra.mxu0 0
      %8652 = vmatprep.subr.bf16.mxu0 0
      %8653 = vmatpush2.bf16.msra.mxu0 0
      %8654 = vmatprep.subr.bf16.mxu0 0
      %8655 = vmatpush2.bf16.msra.mxu0 0
      %8656 = vmatprep.mubr.bf16.mxu0 0
      %8657 = vmatmul.mubr.bf16.gmra.mxu0 %v8622
      %v8658 = vpop.f32.mrf.mxu0
      %v8659 = vadd.f32 %v8607, %v8658
      %v8660 = vpop.f32.mrf.mxu0
      %v8661 = vpop.f32.mrf.mxu0
      %v8662 = vadd.f32 %v8607, %v8661
      %v8663 = vpop.f32.mrf.mxu0
      %8664 = vdwg.mxu0
      %8667 = vrot.lane.b32.xlu0 %v8659, 96
      %v8668 = vpop.permute.xlu0 %8667
      %8669 = vrot.lane.b32.xlu0 %v8662, 96
      %v8670 = vpop.permute.xlu0 %8669
      %v8673 = vmax.f32 %v8659, %v8668
      %v8674 = vmax.f32 %v8662, %v8670
      %v8675 = vpack.c.bf16 %v8674, %v8673
      %vm8676 = vcmask 259072
      %8677 = vst.msk [vmem:[#allocation11] sm:$0x3f] %vm8676, 0.0
      %8678 = vst.msk [vmem:[#allocation11 + $0x8] sm:$0x3f] %vm8676, 0.0
      %8679 = vst.msk [vmem:[#allocation11 + $0x10] sm:$0x3f] %vm8676, 0.0
      %8680 = vst.msk [vmem:[#allocation11 + $0x18] sm:$0x3f] %vm8676, 0.0
      %8681 = vst.msk [vmem:[#allocation11 + $0x20] sm:$0x3f] %vm8676, 0.0
      %8682 = vst.msk [vmem:[#allocation11 + $0x28] sm:$0x3f] %vm8676, 0.0
      %v8684 = vcombine.high %v8675, %v8675
      %v8686 = vunpack.c.l.s4 1983009808
      %v8687 = vunpack.c.0.s8 %v8686
      %v8688 = vlaneseq
      %v8689 = vshrl.u32 %v8688, 7
      %v8690 = vsub.s32 %v8687, %v8689
      %v8691 = vrot.slane %v8675, %v8690
      %v8693 = vunpack.c.l.s4 1983009808
      %v8694 = vunpack.c.0.s8 %v8693
      %v8695 = vlaneseq
      %v8696 = vshrl.u32 %v8695, 7
      %v8697 = vsub.s32 %v8694, %v8696
      %v8698 = vrot.slane %v8684, %v8697
      %v8699 = vcombine.high %v8691, %v8691
      %v8700 = vcombine.high %v8698, %v8698
      %v8705 = vunpack.c.l.bf16 %v8691
      %v8706 = vunpack.c.l.bf16 %v8699
      %v8707 = vunpack.c.l.bf16 %v8698
      %v8708 = vunpack.c.l.bf16 %v8700
      %s8709 = scalar_lea.vmem [#allocation11], 8
      %8710 = vst.msk [vmem:[%s8709 + $0x1] sm:$0xf] %vm3444, %v8705
      %8711 = vst.msk [vmem:[%s8709 + $0x9] sm:$0xf] %vm3444, %v8706
      %8712 = vst.msk [vmem:[%s8709 + $0x11] sm:$0xf] %vm3444, %v8707
      %8713 = vst.msk [vmem:[%s8709 + $0x19] sm:$0xf] %vm3444, %v8708
      %v8714 = vld [vmem:[#allocation11] sm:$0xf]
      %v8715 = vld [vmem:[#allocation11 + $0x8] sm:$0xf]
      %v8716 = vld [vmem:[#allocation11 + $0x10] sm:$0xf]
      %v8717 = vld [vmem:[#allocation11 + $0x18] sm:$0xf]
      %v8722 = vcombine.low %v8714, %v8715
      %v8723 = vcombine.low %v8716, %v8717
      %v8726 = vpack.c.bf16 %v8723, %v8722
      %v8728 = vunpack.c.l.b16 %v8726
      %v8729 = vunpack.c.h.b16 %v8726
      %v8730 = vpack.c.b16 %v8728, %v8728
      %v8731 = vpack.c.b16 %v8729, %v8729
      %8734 = vst.msk [vmem:[#allocation12] sm:$0xf] %vm3444, %v8730
      %8735 = vst.msk [vmem:[#allocation12 + $0xc] sm:$0xf] %vm3444, %v8731
      %v8736 = vld [vmem:[#allocation11 + $0x1] sm:$0xf]
      %v8737 = vld [vmem:[#allocation11 + $0x9] sm:$0xf]
      %v8738 = vld [vmem:[#allocation11 + $0x11] sm:$0xf]
      %v8739 = vld [vmem:[#allocation11 + $0x19] sm:$0xf]
      %v8744 = vcombine.low %v8736, %v8737
      %v8745 = vcombine.low %v8738, %v8739
      %v8748 = vpack.c.bf16 %v8745, %v8744
      %v8750 = vunpack.c.l.b16 %v8748
      %v8751 = vunpack.c.h.b16 %v8748
      %v8752 = vpack.c.b16 %v8750, %v8750
      %v8753 = vpack.c.b16 %v8751, %v8751
      %8754 = vrot.lane.b32.xlu0 %v8752, 32
      %v8755 = vpop.permute.xlu0 %8754
      %8756 = vrot.lane.b32.xlu0 %v8753, 32
      %v8757 = vpop.permute.xlu0 %8756
      %8760 = vst.msk [vmem:[#allocation12] sm:$0xf] %vm3701, %v8755
      %8761 = vst.msk [vmem:[#allocation12 + $0xc] sm:$0xf] %vm3701, %v8757
      %v8762 = vld [vmem:[#allocation11 + $0x2] sm:$0xf]
      %v8763 = vld [vmem:[#allocation11 + $0xa] sm:$0xf]
      %v8764 = vld [vmem:[#allocation11 + $0x12] sm:$0xf]
      %v8765 = vld [vmem:[#allocation11 + $0x1a] sm:$0xf]
      %v8770 = vcombine.low %v8762, %v8763
      %v8771 = vcombine.low %v8764, %v8765
      %v8774 = vpack.c.bf16 %v8771, %v8770
      %v8776 = vunpack.c.l.b16 %v8774
      %v8777 = vunpack.c.h.b16 %v8774
      %v8778 = vpack.c.b16 %v8776, %v8776
      %v8779 = vpack.c.b16 %v8777, %v8777
      %8780 = vrot.lane.b32.xlu0 %v8778, 64
      %v8781 = vpop.permute.xlu0 %8780
      %8782 = vrot.lane.b32.xlu0 %v8779, 64
      %v8783 = vpop.permute.xlu0 %8782
      %8786 = vst.msk [vmem:[#allocation12] sm:$0xf] %vm3958, %v8781
      %8787 = vst.msk [vmem:[#allocation12 + $0xc] sm:$0xf] %vm3958, %v8783
      %v8788 = vld [vmem:[%s8709] sm:$0xf]
      %v8789 = vld [vmem:[%s8709 + $0x8] sm:$0xf]
      %v8790 = vld [vmem:[%s8709 + $0x10] sm:$0xf]
      %v8791 = vld [vmem:[%s8709 + $0x18] sm:$0xf]
      %v8796 = vcombine.low %v8788, %v8789
      %v8797 = vcombine.low %v8790, %v8791
      %v8800 = vpack.c.bf16 %v8797, %v8796
      %v8802 = vunpack.c.l.b16 %v8800
      %v8803 = vunpack.c.h.b16 %v8800
      %v8804 = vpack.c.b16 %v8802, %v8802
      %v8805 = vpack.c.b16 %v8803, %v8803
      %8806 = vrot.lane.b32.xlu0 %v8804, 96
      %v8807 = vpop.permute.xlu0 %8806
      %8808 = vrot.lane.b32.xlu0 %v8805, 96
      %v8809 = vpop.permute.xlu0 %8808
      %8812 = vst.msk [vmem:[#allocation12] sm:$0xf] %vm4215, %v8807
      %8813 = vst.msk [vmem:[#allocation12 + $0xc] sm:$0xf] %vm4215, %v8809
      %v8814 = vld [vmem:[%s8709 + $0x1] sm:$0xf]
      %v8815 = vld [vmem:[%s8709 + $0x9] sm:$0xf]
      %v8816 = vld [vmem:[%s8709 + $0x11] sm:$0xf]
      %v8817 = vld [vmem:[%s8709 + $0x19] sm:$0xf]
      %v8822 = vcombine.low %v8814, %v8815
      %v8823 = vcombine.low %v8816, %v8817
      %v8826 = vpack.c.bf16 %v8823, %v8822
      %v8828 = vunpack.c.l.b16 %v8826
      %v8829 = vunpack.c.h.b16 %v8826
      %v8830 = vpack.c.b16 %v8828, %v8828
      %v8831 = vpack.c.b16 %v8829, %v8829
      %8834 = vst.msk [vmem:[#allocation12 + $0x4] sm:$0xf] %vm3444, %v8830
      %8835 = vst.msk [vmem:[#allocation12 + $0x10] sm:$0xf] %vm3444, %v8831
      %v8836 = vld [vmem:[%s8709 + $0x2] sm:$0xf]
      %v8837 = vld [vmem:[%s8709 + $0xa] sm:$0xf]
      %v8838 = vld [vmem:[%s8709 + $0x12] sm:$0xf]
      %v8839 = vld [vmem:[%s8709 + $0x1a] sm:$0xf]
      %v8844 = vcombine.low %v8836, %v8837
      %v8845 = vcombine.low %v8838, %v8839
      %v8848 = vpack.c.bf16 %v8845, %v8844
      %v8850 = vunpack.c.l.b16 %v8848
      %v8851 = vunpack.c.h.b16 %v8848
      %v8852 = vpack.c.b16 %v8850, %v8850
      %v8853 = vpack.c.b16 %v8851, %v8851
      %8854 = vrot.lane.b32.xlu0 %v8852, 32
      %v8855 = vpop.permute.xlu0 %8854
      %8856 = vrot.lane.b32.xlu0 %v8853, 32
      %v8857 = vpop.permute.xlu0 %8856
      %8860 = vst.msk [vmem:[#allocation12 + $0x4] sm:$0xf] %vm3701, %v8855
      %8861 = vst.msk [vmem:[#allocation12 + $0x10] sm:$0xf] %vm3701, %v8857
      %s8862 = scalar_lea.vmem [#allocation11], 16
      %v8863 = vld [vmem:[%s8862] sm:$0xf]
      %v8864 = vld [vmem:[%s8862 + $0x8] sm:$0xf]
      %v8865 = vld [vmem:[%s8862 + $0x10] sm:$0xf]
      %v8866 = vld [vmem:[%s8862 + $0x18] sm:$0xf]
      %v8871 = vcombine.low %v8863, %v8864
      %v8872 = vcombine.low %v8865, %v8866
      %v8875 = vpack.c.bf16 %v8872, %v8871
      %v8877 = vunpack.c.l.b16 %v8875
      %v8878 = vunpack.c.h.b16 %v8875
      %v8879 = vpack.c.b16 %v8877, %v8877
      %v8880 = vpack.c.b16 %v8878, %v8878
      %8881 = vrot.lane.b32.xlu0 %v8879, 64
      %v8882 = vpop.permute.xlu0 %8881
      %8883 = vrot.lane.b32.xlu0 %v8880, 64
      %v8884 = vpop.permute.xlu0 %8883
      %8887 = vst.msk [vmem:[#allocation12 + $0x4] sm:$0xf] %vm3958, %v8882
      %8888 = vst.msk [vmem:[#allocation12 + $0x10] sm:$0xf] %vm3958, %v8884
      %v8889 = vld [vmem:[%s8862 + $0x1] sm:$0xf]
      %v8890 = vld [vmem:[%s8862 + $0x9] sm:$0xf]
      %v8891 = vld [vmem:[%s8862 + $0x11] sm:$0xf]
      %v8892 = vld [vmem:[%s8862 + $0x19] sm:$0xf]
      %v8897 = vcombine.low %v8889, %v8890
      %v8898 = vcombine.low %v8891, %v8892
      %v8901 = vpack.c.bf16 %v8898, %v8897
      %v8903 = vunpack.c.l.b16 %v8901
      %v8904 = vunpack.c.h.b16 %v8901
      %v8905 = vpack.c.b16 %v8903, %v8903
      %v8906 = vpack.c.b16 %v8904, %v8904
      %8907 = vrot.lane.b32.xlu0 %v8905, 96
      %v8908 = vpop.permute.xlu0 %8907
      %8909 = vrot.lane.b32.xlu0 %v8906, 96
      %v8910 = vpop.permute.xlu0 %8909
      %8913 = vst.msk [vmem:[#allocation12 + $0x4] sm:$0xf] %vm4215, %v8908
      %8914 = vst.msk [vmem:[#allocation12 + $0x10] sm:$0xf] %vm4215, %v8910
      %v8915 = vld [vmem:[%s8862 + $0x2] sm:$0xf]
      %v8916 = vld [vmem:[%s8862 + $0xa] sm:$0xf]
      %v8917 = vld [vmem:[%s8862 + $0x12] sm:$0xf]
      %v8918 = vld [vmem:[%s8862 + $0x1a] sm:$0xf]
      %v8923 = vcombine.low %v8915, %v8916
      %v8924 = vcombine.low %v8917, %v8918
      %v8927 = vpack.c.bf16 %v8924, %v8923
      %v8929 = vunpack.c.l.b16 %v8927
      %v8930 = vunpack.c.h.b16 %v8927
      %v8931 = vpack.c.b16 %v8929, %v8929
      %v8932 = vpack.c.b16 %v8930, %v8930
      %8935 = vst.msk [vmem:[#allocation12 + $0x8] sm:$0xf] %vm3444, %v8931
      %8936 = vst.msk [vmem:[#allocation12 + $0x14] sm:$0xf] %vm3444, %v8932
      %v8937 = vld [vmem:[#allocation12] sm:$0xff]
      %v8938 = vld [vmem:[#allocation12 + $0x8] sm:$0xf]
      %v8939 = vld [vmem:[#allocation12 + $0xc] sm:$0xff]
      %v8940 = vld [vmem:[#allocation12 + $0x14] sm:$0xf]
      %v8941 = vld [vmem:[%s9] sm:$0xf]
      %v8942 = vld [vmem:[%s9 + $0x4] sm:$0xf]
      %v8943 = vld [vmem:[%s9 + $0x8] sm:$0xf]
      %v8944 = vld [vmem:[%s9 + $0xc] sm:$0xf]
      %v8945 = vld [vmem:[%s9 + $0x10] sm:$0xf]
      %v8946 = vld [vmem:[%s9 + $0x14] sm:$0xf]
      %v8947 = vld [vmem:[%s9 + $0x18] sm:$0xf]
      %v8948 = vld [vmem:[%s9 + $0x1c] sm:$0xf]
      %v8949 = vld [vmem:[%s9 + $0x20] sm:$0xf]
      %v8950 = vld [vmem:[%s9 + $0x24] sm:$0xf]
      %v8951 = vld [vmem:[%s9 + $0x28] sm:$0xf]
      %v8952 = vld [vmem:[%s9 + $0x2c] sm:$0xf]
      %v8953 = vld [vmem:[%s9 + $0x30] sm:$0xf]
      %v8954 = vld [vmem:[%s9 + $0x34] sm:$0xf]
      %v8955 = vld [vmem:[%s9 + $0x38] sm:$0xf]
      %v8956 = vld [vmem:[%s9 + $0x3c] sm:$0xf]
      %v8957 = vld [vmem:[%s9 + $0x40] sm:$0xf]
      %v8958 = vld [vmem:[%s9 + $0x44] sm:$0xf]
      %v8959 = vld [vmem:[%s9 + $0x48] sm:$0xf]
      %v8960 = vld [vmem:[%s9 + $0x4c] sm:$0xf]
      %v8961 = vld [vmem:[%s9 + $0x50] sm:$0xf]
      %v8962 = vld [vmem:[%s9 + $0x54] sm:$0xf]
      %v8963 = vld [vmem:[%s9 + $0x58] sm:$0xf]
      %v8964 = vld [vmem:[%s9 + $0x5c] sm:$0xf]
      %v8965 = vld [vmem:[%s9 + $0x60] sm:$0xf]
      %v8966 = vld [vmem:[%s9 + $0x64] sm:$0xf]
      %v8967 = vld [vmem:[%s9 + $0x68] sm:$0xf]
      %v8968 = vld [vmem:[%s9 + $0x6c] sm:$0xf]
      %v8969 = vld [vmem:[%s9 + $0x70] sm:$0xf]
      %v8970 = vld [vmem:[%s9 + $0x74] sm:$0xf]
      %v8971 = vld [vmem:[%s9 + $0x78] sm:$0xf]
      %v8972 = vld [vmem:[%s9 + $0x7c] sm:$0xf]
      %v8973 = vld [vmem:[%s9 + $0x80] sm:$0xf]
      %v8974 = vld [vmem:[%s9 + $0x84] sm:$0xf]
      %v8975 = vld [vmem:[%s9 + $0x88] sm:$0xf]
      %v8976 = vld [vmem:[%s9 + $0x8c] sm:$0xf]
      %v8977 = vld [vmem:[%s18] sm:$0x1]
      %v8979 = vlaneseq
      %v8980 = vshrl.u32 %v8979, 7
      %v8981 = vsub.s32 0, %v8980
      %v8982 = vrot.slane %v8977, %v8981
      %v8988 = vunpack.c.l.b16 %v8937
      %v8989 = vunpack.c.h.b16 %v8937
      %v8990 = vunpack.c.l.b16 %v8938
      %v8991 = vunpack.c.l.b16 %v8939
      %v8992 = vunpack.c.h.b16 %v8939
      %v8993 = vunpack.c.l.b16 %v8940
      %v8994 = vpack.c.b16 %v8991, %v8988
      %v8995 = vpack.c.b16 %v8992, %v8989
      %v8996 = vpack.c.b16 %v8993, %v8990
      %v9035 = vunpack.c.l.b16 %v8941
      %v9036 = vunpack.c.l.b16 %v8942
      %v9037 = vunpack.c.l.b16 %v8943
      %v9038 = vunpack.c.l.b16 %v8944
      %v9039 = vunpack.c.l.b16 %v8945
      %v9040 = vunpack.c.l.b16 %v8946
      %v9041 = vunpack.c.l.b16 %v8947
      %v9042 = vunpack.c.l.b16 %v8948
      %v9043 = vunpack.c.l.b16 %v8949
      %v9044 = vunpack.c.l.b16 %v8950
      %v9045 = vunpack.c.l.b16 %v8951
      %v9046 = vunpack.c.l.b16 %v8952
      %v9047 = vunpack.c.l.b16 %v8953
      %v9048 = vunpack.c.l.b16 %v8954
      %v9049 = vunpack.c.l.b16 %v8955
      %v9050 = vunpack.c.l.b16 %v8956
      %v9051 = vunpack.c.l.b16 %v8957
      %v9052 = vunpack.c.l.b16 %v8958
      %v9053 = vunpack.c.l.b16 %v8959
      %v9054 = vunpack.c.l.b16 %v8960
      %v9055 = vunpack.c.l.b16 %v8961
      %v9056 = vunpack.c.l.b16 %v8962
      %v9057 = vunpack.c.l.b16 %v8963
      %v9058 = vunpack.c.l.b16 %v8964
      %v9059 = vunpack.c.l.b16 %v8965
      %v9060 = vunpack.c.l.b16 %v8966
      %v9061 = vunpack.c.l.b16 %v8967
      %v9062 = vunpack.c.l.b16 %v8968
      %v9063 = vunpack.c.l.b16 %v8969
      %v9064 = vunpack.c.l.b16 %v8970
      %v9065 = vunpack.c.l.b16 %v8971
      %v9066 = vunpack.c.l.b16 %v8972
      %v9067 = vunpack.c.l.b16 %v8973
      %v9068 = vunpack.c.l.b16 %v8974
      %v9069 = vunpack.c.l.b16 %v8975
      %v9070 = vunpack.c.l.b16 %v8976
      %v9071 = vpack.c.b16 %v9036, %v9035
      %v9072 = vpack.c.b16 %v9038, %v9037
      %v9073 = vpack.c.b16 %v9040, %v9039
      %v9074 = vpack.c.b16 %v9042, %v9041
      %v9075 = vpack.c.b16 %v9044, %v9043
      %v9076 = vpack.c.b16 %v9046, %v9045
      %v9077 = vpack.c.b16 %v9048, %v9047
      %v9078 = vpack.c.b16 %v9050, %v9049
      %v9079 = vpack.c.b16 %v9052, %v9051
      %v9080 = vpack.c.b16 %v9054, %v9053
      %v9081 = vpack.c.b16 %v9056, %v9055
      %v9082 = vpack.c.b16 %v9058, %v9057
      %v9083 = vpack.c.b16 %v9060, %v9059
      %v9084 = vpack.c.b16 %v9062, %v9061
      %v9085 = vpack.c.b16 %v9064, %v9063
      %v9086 = vpack.c.b16 %v9066, %v9065
      %v9087 = vpack.c.b16 %v9068, %v9067
      %v9088 = vpack.c.b16 %v9070, %v9069
      %v9108 = vsel %vm1075, %v8996, 0
      %9110 = vmatprep.subr.bf16.mxu0 0
      %9111 = vmatpush1.bf16.msra.mxu0 %v9078
      %9112 = vmatprep.subr.bf16.mxu0 0
      %9113 = vmatpush1.bf16.msra.mxu0 %v9077
      %9114 = vmatprep.subr.bf16.mxu0 0
      %9115 = vmatpush1.bf16.msra.mxu0 %v9076
      %9116 = vmatprep.subr.bf16.mxu0 0
      %9117 = vmatpush1.bf16.msra.mxu0 %v9075
      %9118 = vmatprep.subr.bf16.mxu0 0
      %9119 = vmatpush1.bf16.msra.mxu0 %v9074
      %9120 = vmatprep.subr.bf16.mxu0 0
      %9121 = vmatpush1.bf16.msra.mxu0 %v9073
      %9122 = vmatprep.subr.bf16.mxu0 0
      %9123 = vmatpush1.bf16.msra.mxu0 %v9072
      %9124 = vmatprep.subr.bf16.mxu0 0
      %9125 = vmatpush1.bf16.msra.mxu0 %v9071
      %9126 = vmatprep.subr.bf16.mxu0 0
      %9127 = vmatpush2.bf16.msra.mxu0 %v9086
      %9128 = vmatprep.subr.bf16.mxu0 0
      %9129 = vmatpush2.bf16.msra.mxu0 %v9085
      %9130 = vmatprep.subr.bf16.mxu0 0
      %9131 = vmatpush2.bf16.msra.mxu0 %v9084
      %9132 = vmatprep.subr.bf16.mxu0 0
      %9133 = vmatpush2.bf16.msra.mxu0 %v9083
      %9134 = vmatprep.subr.bf16.mxu0 0
      %9135 = vmatpush2.bf16.msra.mxu0 %v9082
      %9136 = vmatprep.subr.bf16.mxu0 0
      %9137 = vmatpush2.bf16.msra.mxu0 %v9081
      %9138 = vmatprep.subr.bf16.mxu0 0
      %9139 = vmatpush2.bf16.msra.mxu0 %v9080
      %9140 = vmatprep.subr.bf16.mxu0 0
      %9141 = vmatpush2.bf16.msra.mxu0 %v9079
      %9142 = vmatprep.mubr.bf16.mxu0 %v8995
      %9143 = vmatmul.mubr.bf16.gmra.mxu0 %v8994
      %v9144 = vpop.f32.mrf.mxu0
      %v9145 = vadd.f32 %v8982, %v9144
      %v9146 = vpop.f32.mrf.mxu0
      %v9147 = vpop.f32.mrf.mxu0
      %v9148 = vadd.f32 %v8982, %v9147
      %v9149 = vpop.f32.mrf.mxu0
      %9150 = vdwg.mxu0
      %9151 = vmatprep.subr.bf16.mxu0 0
      %9152 = vmatpush1.bf16.msra.mxu0 0
      %9153 = vmatprep.subr.bf16.mxu0 0
      %9154 = vmatpush1.bf16.msra.mxu0 0
      %9155 = vmatprep.subr.bf16.mxu0 0
      %9156 = vmatpush1.bf16.msra.mxu0 0
      %9157 = vmatprep.subr.bf16.mxu0 0
      %9158 = vmatpush1.bf16.msra.mxu0 0
      %9159 = vmatprep.subr.bf16.mxu0 0
      %9160 = vmatpush1.bf16.msra.mxu0 0
      %9161 = vmatprep.subr.bf16.mxu0 0
      %9162 = vmatpush1.bf16.msra.mxu0 0
      %9163 = vmatprep.subr.bf16.mxu0 0
      %9164 = vmatpush1.bf16.msra.mxu0 %v9088
      %9165 = vmatprep.subr.bf16.mxu0 0
      %9166 = vmatpush1.bf16.msra.mxu0 %v9087
      %9167 = vmatprep.subr.bf16.mxu0 0
      %9168 = vmatpush2.bf16.msra.mxu0 0
      %9169 = vmatprep.subr.bf16.mxu0 0
      %9170 = vmatpush2.bf16.msra.mxu0 0
      %9171 = vmatprep.subr.bf16.mxu0 0
      %9172 = vmatpush2.bf16.msra.mxu0 0
      %9173 = vmatprep.subr.bf16.mxu0 0
      %9174 = vmatpush2.bf16.msra.mxu0 0
      %9175 = vmatprep.subr.bf16.mxu0 0
      %9176 = vmatpush2.bf16.msra.mxu0 0
      %9177 = vmatprep.subr.bf16.mxu0 0
      %9178 = vmatpush2.bf16.msra.mxu0 0
      %9179 = vmatprep.subr.bf16.mxu0 0
      %9180 = vmatpush2.bf16.msra.mxu0 0
      %9181 = vmatprep.subr.bf16.mxu0 0
      %9182 = vmatpush2.bf16.msra.mxu0 0
      %9183 = vmatprep.mubr.bf16.mxu0 0
      %9184 = vmatmul.mubr.bf16.gmra.mxu0 %v9108
      %v9185 = vpop.f32.mrf.mxu0
      %v9186 = vadd.f32 %v9145, %v9185
      %v9187 = vpop.f32.mrf.mxu0
      %v9188 = vpop.f32.mrf.mxu0
      %v9189 = vadd.f32 %v9148, %v9188
      %v9190 = vpop.f32.mrf.mxu0
      %9191 = vdwg.mxu0
      %9194 = vrot.lane.b32.xlu0 %v9186, 96
      %v9195 = vpop.permute.xlu0 %9194
      %9196 = vrot.lane.b32.xlu0 %v9189, 96
      %v9197 = vpop.permute.xlu0 %9196
      %v9200 = vmax.f32 %v9186, %v9195
      %v9201 = vmax.f32 %v9189, %v9197
      %v9204 = vcombine.high %v9200, %v9200
      %v9205 = vcombine.high %v9201, %v9201
      %v9208 = vmax.f32 %v9200, %v9204
      %v9209 = vmax.f32 %v9201, %v9205
      %v9212 = vcombine.low %v9208, %v9209
      %9214 = vst.msk [vmem:[#allocation13] sm:$0xff] %vm1075, %v9212
      %v9215 = vld [vmem:[#allocation13] ss:$2 sm:$0xf]
      %s9216 = scalar_lea.vmem [#allocation13], 1
      %v9217 = vld [vmem:[%s9216] ss:$2 sm:$0xf]
      %v9218 = vmax.f32 %v9215, %v9217
      %v9221 = vunpack.c.l.s4 1983009808
      %v9222 = vunpack.c.0.s8 %v9221
      %v9223 = vlaneseq
      %v9224 = vshrl.u32 %v9223, 7
      %v9225 = vsub.s32 %v9222, %v9224
      %v9226 = vrot.slane %v9218, %v9225
      %v9227 = vcombine.high %v9226, %v9226
      %9230 = vst.msk [vmem:[%s602] sm:$0x3] %vm3166, %v9226
      %9231 = vst.msk [vmem:[%s602 + $0x2] sm:$0x3] %vm3166, %v9227
      %p9232 = scmp.lt.s32.totalorder %s30, 1
      %s9233 = scalar_select %p9232, %s30, 1
      %s9234 = smul.addr %s9233, 2
      %s9235 = smul.addr %s9234, 2
      %s9236 = scalar_lea.vmem %s19, %s9235
      // Predicated region
      $region97: #{lcnn_forward.1} parent=95 // pred_check
        %p9237 = pneg %p452
      $region98: #{lcnn_forward.1} parent=95 // pred_check_branch
        %9239 = sbr.rel (%p9237) target = $region100
      $region99: #{lcnn_forward.1} parent=95 // pred_region
        _
      $region100: #{lcnn_forward.1} parent=95 // pred_fallthru
        _
    $region96: #{lcnn_forward.1} parent=5 // pred_fallthru
      _
    %p9240 = scmp.le.s32.totalorder 2, %s25
    // Predicated region
    $region101: #{lcnn_forward.1} parent=5 // pred_check
      %p9241 = pneg %p9240
    $region102: #{lcnn_forward.1} parent=5 // pred_check_branch
      %9243 = sbr.rel (%p9241) target = $region104
    $region103: #{lcnn_forward.1} parent=5 // pred_region
      %s9244 = ssub.s32 %s25, 2
      // Predicated region
      $region105: #{lcnn_forward.1} parent=103 // pred_check
        %p9245 = pneg %p458
      $region106: #{lcnn_forward.1} parent=103 // pred_check_branch
        %9247 = sbr.rel (%p9245) target = $region108
      $region107: #{lcnn_forward.1} parent=103 // pred_region
        %p9248 = scmp.lt.s32.totalorder %s31, 1
        %s9249 = scalar_select %p9248, %s31, 1
        %s9250 = smul.addr %s9249, 2
        %s9251 = smul.addr %s9250, 2
        %s9252 = scalar_lea.vmem %s19, %s9251
      $region108: #{lcnn_forward.1} parent=103 // pred_fallthru
        _
    $region104: #{lcnn_forward.1} parent=5 // pred_fallthru
      _
  $region6: #{lcnn_forward.1} parent=0 // loop_footer
    %s29 = sadd.s32 1, %s25
  $region7: #{lcnn_forward.1} parent=0 // loop_footer_branch
    %24 = sbr.rel target = $region3
  $region8: #{lcnn_forward.1} parent=0 // loop_exit
    _

</llo_original>
